<compile_context>
chip_gen: v5e
topology: v5e:2x2
jax: 0.10.0
libtpu: 0.0.40
codegen_flags: <defaults>
</compile_context>

<pallas_src>
import math

import jax
import jax.numpy as jnp
from jax import lax
from jax.experimental import pallas as pl
from jax.experimental.pallas import tpu as pltpu

SEQ_LEN = 45  # fixed by `vocal.repeat(45, 1)` in the PyTorch forward

_VMEM = pl.BlockSpec(memory_space=pltpu.MemorySpace.VMEM)


# ------------------------------ fused kernel ------------------------------- #
def make_fused_kernel(num_layers, S, H):
    """Gating + wavefront-interleaved LSTM layers + final Linear, fused."""
    L = num_layers
    TOTAL = S + L - 1  # wavefront steps

    def kernel(*refs):
        # refs: vocal, vision, w_ih0, w_hh0, b0, (w_cat_l, b_l)*{L-1},
        #       w_lin, b_lin | out | gates (scratch)
        vocal_ref, vision_ref = refs[0], refs[1]
        w_ih0_ref, w_hh0_ref, b0_ref = refs[2], refs[3], refs[4]
        layer_refs = refs[5:5 + 2 * (L - 1)]
        w_lin_ref = refs[5 + 2 * (L - 1)]
        b_lin_ref = refs[6 + 2 * (L - 1)]
        out_ref = refs[7 + 2 * (L - 1)]
        gates_ref = refs[8 + 2 * (L - 1)]

        # ---- Layer-0 input projection for every timestep: one MXU matmul. --
        # fusion = vocal.repeat(S,1) * vision  -> broadcast (1,D)*(S,D)
        x0 = vocal_ref[...] * vision_ref[...]
        gates_ref[...] = (
            jnp.dot(x0, w_ih0_ref[...], preferred_element_type=jnp.float32)
            + b0_ref[...]
        )

        # ---- Loop invariants, hoisted once (stay vreg-resident). -----------
        w_hh0 = w_hh0_ref[...]                                       # (H, 4H)
        layer_w = [layer_refs[2 * i][...] for i in range(L - 1)]     # (2H, 4H)
        layer_b = [layer_refs[2 * i + 1][...] for i in range(L - 1)]  # (1, 4H)

        # Lane mask selecting the "g" (cell-candidate) block [2H, 3H).
        lane = lax.broadcasted_iota(jnp.int32, (1, 4 * H), 1)
        g_mask = (lane >= 2 * H) & (lane < 3 * H)

        def lstm_cell(g, c):
            # One EUP pass for all four gates:
            #   sigmoid(x) == 0.5 * tanh(0.5 * x) + 0.5  (i, f, o lanes)
            #   tanh(x)                                   (g lanes)
            t = jnp.tanh(jnp.where(g_mask, g, 0.5 * g))
            act = jnp.where(g_mask, t, 0.5 * t + 0.5)
            i_g = act[:, 0 * H:1 * H]
            f_g = act[:, 1 * H:2 * H]
            g_g = act[:, 2 * H:3 * H]
            o_g = act[:, 3 * H:4 * H]
            c_new = f_g * c + i_g * g_g
            h_new = o_g * jnp.tanh(c_new)
            return h_new, c_new

        # ---- Wavefront recurrence: layer l runs timestep (s - l) at step s. -
        def step(s, carry):
            hs, cs = carry
            hs, cs = list(hs), list(cs)
            # Reverse layer order so layer l reads layer (l-1)'s hidden from
            # the *previous* wavefront step (i.e. h_{l-1}[s-l]).
            for l in range(L - 1, 0, -1):
                x_in = jnp.concatenate([hs[l - 1], hs[l]], axis=1)   # (1, 2H)
                g = jnp.dot(x_in, layer_w[l - 1],
                            preferred_element_type=jnp.float32) + layer_b[l - 1]
                h_new, c_new = lstm_cell(g, cs[l])
                valid = (s >= l) & (s < S + l)
                hs[l] = jnp.where(valid, h_new, hs[l])
                cs[l] = jnp.where(valid, c_new, cs[l])
            # Layer 0: precomputed input-gate row + recurrent matmul.
            t0 = jnp.minimum(s, S - 1)            # clamp; update masked if s>=S
            g0 = gates_ref[pl.ds(t0, 1), :] + jnp.dot(
                hs[0], w_hh0, preferred_element_type=jnp.float32)
            h_new, c_new = lstm_cell(g0, cs[0])
            valid0 = s < S
            hs[0] = jnp.where(valid0, h_new, hs[0])
            cs[0] = jnp.where(valid0, c_new, cs[0])
            return (tuple(hs), tuple(cs))

        zeros = jnp.zeros((1, H), jnp.float32)    # h0 = c0 = 0 (PyTorch default)
        init = (tuple(zeros for _ in range(L)), tuple(zeros for _ in range(L)))
        hs, _ = lax.fori_loop(0, TOTAL, step, init, unroll=True)

        # Final Linear on hiddens[-1] of the last layer.
        out_ref[...] = (
            jnp.dot(hs[L - 1], w_lin_ref[...], preferred_element_type=jnp.float32)
            + b_lin_ref[...]
        )

    return kernel


# -------------------------------- wrapper ---------------------------------- #
def gated_attention_forward(vocal, vision, params):
    S = SEQ_LEN
    num_layers = len(params["w_ih"])
    D = vocal.shape[1]
    H = params["w_hh"][0].shape[0]
    E = params["w_lin"].shape[1]

    # vision.squeeze(2).squeeze(2): (S, D, 1, 1) -> (S, D)   (glue)
    vision2d = vision.reshape(vision.shape[0], vision.shape[1])

    args = [vocal, vision2d,
            params["w_ih"][0], params["w_hh"][0], params["b"][0]]
    for l in range(1, num_layers):
        # Fuse input + recurrent projections of layer l into one (2H, 4H) RHS.
        w_cat = jnp.concatenate([params["w_ih"][l], params["w_hh"][l]], axis=0)
        args += [w_cat, params["b"][l]]
    args += [params["w_lin"], params["b_lin"]]

    kernel = make_fused_kernel(num_layers, S, H)

    flops = 2 * S * (D * 4 * H + H * 4 * H
                     + (num_layers - 1) * 2 * H * 4 * H) + 2 * H * E
    transcendentals = num_layers * S * (4 * H + H)
    bytes_accessed = sum(int(a.size) * 4 for a in args) + 4 * E

    return pl.pallas_call(
        kernel,
        out_shape=jax.ShapeDtypeStruct((1, E), jnp.float32),
        in_specs=[_VMEM] * len(args),
        out_specs=_VMEM,
        scratch_shapes=[
            pltpu.VMEM((S, 4 * H), jnp.float32),   # layer-0 input-gate rows
        ],
        cost_estimate=pl.CostEstimate(flops=flops,
                                      transcendentals=transcendentals,
                                      bytes_accessed=bytes_accessed),
    )(*args)


# ------------------------ deterministic params ----------------------------- #
def init_params(key, att_input_size, att_hidden_size, att_num_layers, num_emotions):
    D, H, E = att_input_size, att_hidden_size, num_emotions
    bound = 1.0 / math.sqrt(H)
    params = {"w_ih": [], "w_hh": [], "b": []}
    for l in range(att_num_layers):
        d_in = D if l == 0 else H
        key, k1, k2, k3, k4 = jax.random.split(key, 5)
        w_ih = jax.random.uniform(k1, (4 * H, d_in), jnp.float32, -bound, bound)
        w_hh = jax.random.uniform(k2, (4 * H, H), jnp.float32, -bound, bound)
        b_ih = jax.random.uniform(k3, (4 * H,), jnp.float32, -bound, bound)
        b_hh = jax.random.uniform(k4, (4 * H,), jnp.float32, -bound, bound)
        params["w_ih"].append(w_ih.T)                        # (d_in, 4H)
        params["w_hh"].append(w_hh.T)                        # (H, 4H)
        params["b"].append((b_ih + b_hh).reshape(1, 4 * H))  # combined bias
    key, k1, k2 = jax.random.split(key, 3)
    w_lin = jax.random.uniform(k1, (E, H), jnp.float32, -bound, bound)
    b_lin = jax.random.uniform(k2, (E,), jnp.float32, -bound, bound)
    params["w_lin"] = w_lin.T            # (H, E)
    params["b_lin"] = b_lin.reshape(1, E)
    return params


# --------------------------- pure-JAX reference ---------------------------- #
def reference_forward(vocal, vision, params):
    x = vocal * vision.reshape(vision.shape[0], vision.shape[1])  # (S, D)
    for w_ih_t, w_hh_t, b in zip(params["w_ih"], params["w_hh"], params["b"]):
        H = w_hh_t.shape[0]

        def step(carry, xt):
            h, c = carry
            g = xt[None, :] @ w_ih_t + h @ w_hh_t + b
            i = jax.nn.sigmoid(g[:, 0:H])
            f = jax.nn.sigmoid(g[:, H:2 * H])
            gg = jnp.tanh(g[:, 2 * H:3 * H])
            o = jax.nn.sigmoid(g[:, 3 * H:4 * H])
            c = f * c + i * gg
            h = o * jnp.tanh(c)
            return (h, c), h[0]

        zeros = jnp.zeros((1, H), jnp.float32)
        _, x = lax.scan(step, (zeros, zeros), x)
    return x[-1:, :] @ params["w_lin"] + params["b_lin"]


# --------------------------------- main ------------------------------------ #
if __name__ == "__main__":
    att_input_size = 32
    att_hidden_size = 32
    att_num_layers = 2
    no_of_emotions = 6

    key = jax.random.PRNGKey(0)
    k_params, k_vocal, k_vision = jax.random.split(key, 3)
    params = init_params(k_params, att_input_size, att_hidden_size,
                         att_num_layers, no_of_emotions)

    vocal = jax.random.normal(k_vocal, (1, att_input_size), jnp.float32)
    vision = jax.random.normal(k_vision, (SEQ_LEN, att_input_size, 1, 1),
                               jnp.float32)

    fwd = jax.jit(gated_attention_forward)
    out = fwd(vocal, vision, params)
    out = jax.block_until_ready(out)

    ref = reference_forward(vocal, vision, params)
    assert out.shape == (1, no_of_emotions), out.shape
    assert jnp.allclose(out, ref, atol=1e-4, rtol=1e-4), (out, ref)

    print("KERNEL_OK")
</pallas_src>

<mosaic_0001>
module attributes {stable_mosaic.version = 11 : i64} {
  func.func @kernel(%arg0: memref<1x32xf32, #tpu.memory_space<vmem>>, %arg1: memref<45x32xf32, #tpu.memory_space<vmem>>, %arg2: memref<32x128xf32, #tpu.memory_space<vmem>>, %arg3: memref<32x128xf32, #tpu.memory_space<vmem>>, %arg4: memref<1x128xf32, #tpu.memory_space<vmem>>, %arg5: memref<64x128xf32, #tpu.memory_space<vmem>>, %arg6: memref<1x128xf32, #tpu.memory_space<vmem>>, %arg7: memref<32x6xf32, #tpu.memory_space<vmem>>, %arg8: memref<1x6xf32, #tpu.memory_space<vmem>>, %arg9: memref<1x6xf32, #tpu.memory_space<vmem>>, %arg10: memref<45x128xf32, #tpu.memory_space<vmem>>) attributes {dimension_semantics = [], scalar_prefetch = 0 : i64, scratch_operands = 1 : i64, tpu.core_type = #tpu.core_type<tc>} {
    %c0 = arith.constant 0 : index
    %c0_0 = arith.constant 0 : index
    %0 = vector.load %arg0[%c0, %c0_0] : memref<1x32xf32, #tpu.memory_space<vmem>>, vector<1x32xf32>
    %c0_1 = arith.constant 0 : index
    %c0_2 = arith.constant 0 : index
    %1 = vector.load %arg1[%c0_1, %c0_2] : memref<45x32xf32, #tpu.memory_space<vmem>>, vector<45x32xf32>
    %2 = vector.broadcast %0 : vector<1x32xf32> to vector<45x32xf32>
    %3 = arith.mulf %2, %1 : vector<45x32xf32>
    %c0_3 = arith.constant 0 : index
    %c0_4 = arith.constant 0 : index
    %4 = vector.load %arg2[%c0_3, %c0_4] : memref<32x128xf32, #tpu.memory_space<vmem>>, vector<32x128xf32>
    %cst = arith.constant dense<0.000000e+00> : vector<45x128xf32>
    %5 = tpu.matmul %3, %4, %cst {dimension_numbers = #tpu.dot_dimension_numbers<[1], [0], [0], [1], [0, 0, 1, 1], [], []>} : vector<45x32xf32>, vector<32x128xf32>, vector<45x128xf32> -> vector<45x128xf32>
    %c0_5 = arith.constant 0 : index
    %c0_6 = arith.constant 0 : index
    %6 = vector.load %arg4[%c0_5, %c0_6] : memref<1x128xf32, #tpu.memory_space<vmem>>, vector<1x128xf32>
    %7 = vector.broadcast %6 : vector<1x128xf32> to vector<45x128xf32>
    %8 = arith.addf %5, %7 : vector<45x128xf32>
    %c0_7 = arith.constant 0 : index
    %c0_8 = arith.constant 0 : index
    %9 = vector.load %arg10[%c0_7, %c0_8] : memref<45x128xf32, #tpu.memory_space<vmem>>, vector<45x128xf32>
    tpu.vector_store %arg10[%c0_7, %c0_8], %8 {strides = array<i32>} : memref<45x128xf32, #tpu.memory_space<vmem>>, vector<45x128xf32>,
    %c0_9 = arith.constant 0 : index
    %c0_10 = arith.constant 0 : index
    %10 = vector.load %arg3[%c0_9, %c0_10] : memref<32x128xf32, #tpu.memory_space<vmem>>, vector<32x128xf32>
    %c0_11 = arith.constant 0 : index
    %c0_12 = arith.constant 0 : index
    %11 = vector.load %arg5[%c0_11, %c0_12] : memref<64x128xf32, #tpu.memory_space<vmem>>, vector<64x128xf32>
    %c0_13 = arith.constant 0 : index
    %c0_14 = arith.constant 0 : index
    %12 = vector.load %arg6[%c0_13, %c0_14] : memref<1x128xf32, #tpu.memory_space<vmem>>, vector<1x128xf32>
    %13 = tpu.iota {dimensions = array<i32: 1>} : vector<1x128xi32>
    %c64_i32 = arith.constant 64 : i32
    %14 = vector.broadcast %c64_i32 : i32 to vector<1x128xi32>
    %15 = arith.cmpi sge, %13, %14 : vector<1x128xi32>
    %c96_i32 = arith.constant 96 : i32
    %16 = vector.broadcast %c96_i32 : i32 to vector<1x128xi32>
    %17 = arith.cmpi slt, %13, %16 : vector<1x128xi32>
    %18 = arith.andi %15, %17 : vector<1x128xi1>
    %cst_15 = arith.constant 0.000000e+00 : f32
    %19 = vector.broadcast %cst_15 : f32 to vector<1x32xf32>
    %c0_i32 = arith.constant 0 : i32
    %20 = tpu.concatenate %19, %19 in 1 : vector<1x32xf32>, vector<1x32xf32> -> vector<1x64xf32>
    %cst_16 = arith.constant dense<0.000000e+00> : vector<1x128xf32>
    %21 = tpu.matmul %20, %11, %cst_16 {dimension_numbers = #tpu.dot_dimension_numbers<[1], [0], [0], [1], [0, 0, 1, 1], [], []>} : vector<1x64xf32>, vector<64x128xf32>, vector<1x128xf32> -> vector<1x128xf32>
    %22 = arith.addf %21, %12 : vector<1x128xf32>
    %cst_17 = arith.constant 5.000000e-01 : f32
    %23 = vector.broadcast %cst_17 : f32 to vector<1x128xf32>
    %24 = arith.mulf %23, %22 : vector<1x128xf32>
    %25 = arith.select %18, %22, %24 : vector<1x128xi1>, vector<1x128xf32>
    %26 = math.tanh %25 : vector<1x128xf32>
    %cst_18 = arith.constant 5.000000e-01 : f32
    %27 = vector.broadcast %cst_18 : f32 to vector<1x128xf32>
    %28 = arith.mulf %27, %26 : vector<1x128xf32>
    %cst_19 = arith.constant 5.000000e-01 : f32
    %29 = vector.broadcast %cst_19 : f32 to vector<1x128xf32>
    %30 = arith.addf %28, %29 : vector<1x128xf32>
    %31 = arith.select %18, %26, %30 : vector<1x128xi1>, vector<1x128xf32>
    %32 = vector.extract_strided_slice %31 {offsets = [0, 0], sizes = [1, 32], strides = [1, 1]} : vector<1x128xf32> to vector<1x32xf32>
    %33 = vector.extract_strided_slice %31 {offsets = [0, 32], sizes = [1, 32], strides = [1, 1]} : vector<1x128xf32> to vector<1x32xf32>
    %34 = vector.extract_strided_slice %31 {offsets = [0, 64], sizes = [1, 32], strides = [1, 1]} : vector<1x128xf32> to vector<1x32xf32>
    %35 = vector.extract_strided_slice %31 {offsets = [0, 96], sizes = [1, 32], strides = [1, 1]} : vector<1x128xf32> to vector<1x32xf32>
    %36 = arith.mulf %33, %19 : vector<1x32xf32>
    %37 = arith.mulf %32, %34 : vector<1x32xf32>
    %38 = arith.addf %36, %37 : vector<1x32xf32>
    %39 = math.tanh %38 : vector<1x32xf32>
    %40 = arith.mulf %35, %39 : vector<1x32xf32>
    %c1_i32 = arith.constant 1 : i32
    %41 = arith.cmpi sge, %c0_i32, %c1_i32 : i32
    %c46_i32 = arith.constant 46 : i32
    %42 = arith.cmpi slt, %c0_i32, %c46_i32 : i32
    %43 = arith.andi %41, %42 : i1
    %44 = arith.select %43, %40, %19 : vector<1x32xf32>
    %45 = arith.select %43, %38, %19 : vector<1x32xf32>
    %c44_i32 = arith.constant 44 : i32
    %46 = arith.minsi %c0_i32, %c44_i32 : i32
    %47 = arith.index_cast %46 : i32 to index
    %c0_20 = arith.constant 0 : index
    %48 = vector.load %arg10[%47, %c0_20] : memref<45x128xf32, #tpu.memory_space<vmem>>, vector<1x128xf32>
    %cst_21 = arith.constant dense<0.000000e+00> : vector<1x128xf32>
    %49 = tpu.matmul %19, %10, %cst_21 {dimension_numbers = #tpu.dot_dimension_numbers<[1], [0], [0], [1], [0, 0, 1, 1], [], []>} : vector<1x32xf32>, vector<32x128xf32>, vector<1x128xf32> -> vector<1x128xf32>
    %50 = arith.addf %48, %49 : vector<1x128xf32>
    %cst_22 = arith.constant 5.000000e-01 : f32
    %51 = vector.broadcast %cst_22 : f32 to vector<1x128xf32>
    %52 = arith.mulf %51, %50 : vector<1x128xf32>
    %53 = arith.select %18, %50, %52 : vector<1x128xi1>, vector<1x128xf32>
    %54 = math.tanh %53 : vector<1x128xf32>
    %cst_23 = arith.constant 5.000000e-01 : f32
    %55 = vector.broadcast %cst_23 : f32 to vector<1x128xf32>
    %56 = arith.mulf %55, %54 : vector<1x128xf32>
    %cst_24 = arith.constant 5.000000e-01 : f32
    %57 = vector.broadcast %cst_24 : f32 to vector<1x128xf32>
    %58 = arith.addf %56, %57 : vector<1x128xf32>
    %59 = arith.select %18, %54, %58 : vector<1x128xi1>, vector<1x128xf32>
    %60 = vector.extract_strided_slice %59 {offsets = [0, 0], sizes = [1, 32], strides = [1, 1]} : vector<1x128xf32> to vector<1x32xf32>
    %61 = vector.extract_strided_slice %59 {offsets = [0, 32], sizes = [1, 32], strides = [1, 1]} : vector<1x128xf32> to vector<1x32xf32>
    %62 = vector.extract_strided_slice %59 {offsets = [0, 64], sizes = [1, 32], strides = [1, 1]} : vector<1x128xf32> to vector<1x32xf32>
    %63 = vector.extract_strided_slice %59 {offsets = [0, 96], sizes = [1, 32], strides = [1, 1]} : vector<1x128xf32> to vector<1x32xf32>
    %64 = arith.mulf %61, %19 : vector<1x32xf32>
    %65 = arith.mulf %60, %62 : vector<1x32xf32>
    %66 = arith.addf %64, %65 : vector<1x32xf32>
    %67 = math.tanh %66 : vector<1x32xf32>
    %68 = arith.mulf %63, %67 : vector<1x32xf32>
    %c45_i32 = arith.constant 45 : i32
    %69 = arith.cmpi slt, %c0_i32, %c45_i32 : i32
    %70 = arith.select %69, %68, %19 : vector<1x32xf32>
    %71 = arith.select %69, %66, %19 : vector<1x32xf32>
    %c1_i32_25 = arith.constant 1 : i32
    %72 = tpu.concatenate %70, %44 in 1 : vector<1x32xf32>, vector<1x32xf32> -> vector<1x64xf32>
    %cst_26 = arith.constant dense<0.000000e+00> : vector<1x128xf32>
    %73 = tpu.matmul %72, %11, %cst_26 {dimension_numbers = #tpu.dot_dimension_numbers<[1], [0], [0], [1], [0, 0, 1, 1], [], []>} : vector<1x64xf32>, vector<64x128xf32>, vector<1x128xf32> -> vector<1x128xf32>
    %74 = arith.addf %73, %12 : vector<1x128xf32>
    %cst_27 = arith.constant 5.000000e-01 : f32
    %75 = vector.broadcast %cst_27 : f32 to vector<1x128xf32>
    %76 = arith.mulf %75, %74 : vector<1x128xf32>
    %77 = arith.select %18, %74, %76 : vector<1x128xi1>, vector<1x128xf32>
    %78 = math.tanh %77 : vector<1x128xf32>
    %cst_28 = arith.constant 5.000000e-01 : f32
    %79 = vector.broadcast %cst_28 : f32 to vector<1x128xf32>
    %80 = arith.mulf %79, %78 : vector<1x128xf32>
    %cst_29 = arith.constant 5.000000e-01 : f32
    %81 = vector.broadcast %cst_29 : f32 to vector<1x128xf32>
    %82 = arith.addf %80, %81 : vector<1x128xf32>
    %83 = arith.select %18, %78, %82 : vector<1x128xi1>, vector<1x128xf32>
    %84 = vector.extract_strided_slice %83 {offsets = [0, 0], sizes = [1, 32], strides = [1, 1]} : vector<1x128xf32> to vector<1x32xf32>
    %85 = vector.extract_strided_slice %83 {offsets = [0, 32], sizes = [1, 32], strides = [1, 1]} : vector<1x128xf32> to vector<1x32xf32>
    %86 = vector.extract_strided_slice %83 {offsets = [0, 64], sizes = [1, 32], strides = [1, 1]} : vector<1x128xf32> to vector<1x32xf32>
    %87 = vector.extract_strided_slice %83 {offsets = [0, 96], sizes = [1, 32], strides = [1, 1]} : vector<1x128xf32> to vector<1x32xf32>
    %88 = arith.mulf %85, %45 : vector<1x32xf32>
    %89 = arith.mulf %84, %86 : vector<1x32xf32>
    %90 = arith.addf %88, %89 : vector<1x32xf32>
    %91 = math.tanh %90 : vector<1x32xf32>
    %92 = arith.mulf %87, %91 : vector<1x32xf32>
    %c1_i32_30 = arith.constant 1 : i32
    %93 = arith.cmpi sge, %c1_i32_25, %c1_i32_30 : i32
    %c46_i32_31 = arith.constant 46 : i32
    %94 = arith.cmpi slt, %c1_i32_25, %c46_i32_31 : i32
    %95 = arith.andi %93, %94 : i1
    %96 = arith.select %95, %92, %44 : vector<1x32xf32>
    %97 = arith.select %95, %90, %45 : vector<1x32xf32>
    %c44_i32_32 = arith.constant 44 : i32
    %98 = arith.minsi %c1_i32_25, %c44_i32_32 : i32
    %99 = arith.index_cast %98 : i32 to index
    %c0_33 = arith.constant 0 : index
    %100 = vector.load %arg10[%99, %c0_33] : memref<45x128xf32, #tpu.memory_space<vmem>>, vector<1x128xf32>
    %cst_34 = arith.constant dense<0.000000e+00> : vector<1x128xf32>
    %101 = tpu.matmul %70, %10, %cst_34 {dimension_numbers = #tpu.dot_dimension_numbers<[1], [0], [0], [1], [0, 0, 1, 1], [], []>} : vector<1x32xf32>, vector<32x128xf32>, vector<1x128xf32> -> vector<1x128xf32>
    %102 = arith.addf %100, %101 : vector<1x128xf32>
    %cst_35 = arith.constant 5.000000e-01 : f32
    %103 = vector.broadcast %cst_35 : f32 to vector<1x128xf32>
    %104 = arith.mulf %103, %102 : vector<1x128xf32>
    %105 = arith.select %18, %102, %104 : vector<1x128xi1>, vector<1x128xf32>
    %106 = math.tanh %105 : vector<1x128xf32>
    %cst_36 = arith.constant 5.000000e-01 : f32
    %107 = vector.broadcast %cst_36 : f32 to vector<1x128xf32>
    %108 = arith.mulf %107, %106 : vector<1x128xf32>
    %cst_37 = arith.constant 5.000000e-01 : f32
    %109 = vector.broadcast %cst_37 : f32 to vector<1x128xf32>
    %110 = arith.addf %108, %109 : vector<1x128xf32>
    %111 = arith.select %18, %106, %110 : vector<1x128xi1>, vector<1x128xf32>
    %112 = vector.extract_strided_slice %111 {offsets = [0, 0], sizes = [1, 32], strides = [1, 1]} : vector<1x128xf32> to vector<1x32xf32>
    %113 = vector.extract_strided_slice %111 {offsets = [0, 32], sizes = [1, 32], strides = [1, 1]} : vector<1x128xf32> to vector<1x32xf32>
    %114 = vector.extract_strided_slice %111 {offsets = [0, 64], sizes = [1, 32], strides = [1, 1]} : vector<1x128xf32> to vector<1x32xf32>
    %115 = vector.extract_strided_slice %111 {offsets = [0, 96], sizes = [1, 32], strides = [1, 1]} : vector<1x128xf32> to vector<1x32xf32>
    %116 = arith.mulf %113, %71 : vector<1x32xf32>
    %117 = arith.mulf %112, %114 : vector<1x32xf32>
    %118 = arith.addf %116, %117 : vector<1x32xf32>
    %119 = math.tanh %118 : vector<1x32xf32>
    %120 = arith.mulf %115, %119 : vector<1x32xf32>
    %c45_i32_38 = arith.constant 45 : i32
    %121 = arith.cmpi slt, %c1_i32_25, %c45_i32_38 : i32
    %122 = arith.select %121, %120, %70 : vector<1x32xf32>
    %123 = arith.select %121, %118, %71 : vector<1x32xf32>
    %c2_i32 = arith.constant 2 : i32
    %124 = tpu.concatenate %122, %96 in 1 : vector<1x32xf32>, vector<1x32xf32> -> vector<1x64xf32>
    %cst_39 = arith.constant dense<0.000000e+00> : vector<1x128xf32>
    %125 = tpu.matmul %124, %11, %cst_39 {dimension_numbers = #tpu.dot_dimension_numbers<[1], [0], [0], [1], [0, 0, 1, 1], [], []>} : vector<1x64xf32>, vector<64x128xf32>, vector<1x128xf32> -> vector<1x128xf32>
    %126 = arith.addf %125, %12 : vector<1x128xf32>
    %cst_40 = arith.constant 5.000000e-01 : f32
    %127 = vector.broadcast %cst_40 : f32 to vector<1x128xf32>
    %128 = arith.mulf %127, %126 : vector<1x128xf32>
    %129 = arith.select %18, %126, %128 : vector<1x128xi1>, vector<1x128xf32>
    %130 = math.tanh %129 : vector<1x128xf32>
    %cst_41 = arith.constant 5.000000e-01 : f32
    %131 = vector.broadcast %cst_41 : f32 to vector<1x128xf32>
    %132 = arith.mulf %131, %130 : vector<1x128xf32>
    %cst_42 = arith.constant 5.000000e-01 : f32
    %133 = vector.broadcast %cst_42 : f32 to vector<1x128xf32>
    %134 = arith.addf %132, %133 : vector<1x128xf32>
    %135 = arith.select %18, %130, %134 : vector<1x128xi1>, vector<1x128xf32>
    %136 = vector.extract_strided_slice %135 {offsets = [0, 0], sizes = [1, 32], strides = [1, 1]} : vector<1x128xf32> to vector<1x32xf32>
    %137 = vector.extract_strided_slice %135 {offsets = [0, 32], sizes = [1, 32], strides = [1, 1]} : vector<1x128xf32> to vector<1x32xf32>
    %138 = vector.extract_strided_slice %135 {offsets = [0, 64], sizes = [1, 32], strides = [1, 1]} : vector<1x128xf32> to vector<1x32xf32>
    %139 = vector.extract_strided_slice %135 {offsets = [0, 96], sizes = [1, 32], strides = [1, 1]} : vector<1x128xf32> to vector<1x32xf32>
    %140 = arith.mulf %137, %97 : vector<1x32xf32>
    %141 = arith.mulf %136, %138 : vector<1x32xf32>
    %142 = arith.addf %140, %141 : vector<1x32xf32>
    %143 = math.tanh %142 : vector<1x32xf32>
    %144 = arith.mulf %139, %143 : vector<1x32xf32>
    %c1_i32_43 = arith.constant 1 : i32
    %145 = arith.cmpi sge, %c2_i32, %c1_i32_43 : i32
    %c46_i32_44 = arith.constant 46 : i32
    %146 = arith.cmpi slt, %c2_i32, %c46_i32_44 : i32
    %147 = arith.andi %145, %146 : i1
    %148 = arith.select %147, %144, %96 : vector<1x32xf32>
    %149 = arith.select %147, %142, %97 : vector<1x32xf32>
    %c44_i32_45 = arith.constant 44 : i32
    %150 = arith.minsi %c2_i32, %c44_i32_45 : i32
    %151 = arith.index_cast %150 : i32 to index
    %c0_46 = arith.constant 0 : index
    %152 = vector.load %arg10[%151, %c0_46] : memref<45x128xf32, #tpu.memory_space<vmem>>, vector<1x128xf32>
    %cst_47 = arith.constant dense<0.000000e+00> : vector<1x128xf32>
    %153 = tpu.matmul %122, %10, %cst_47 {dimension_numbers = #tpu.dot_dimension_numbers<[1], [0], [0], [1], [0, 0, 1, 1], [], []>} : vector<1x32xf32>, vector<32x128xf32>, vector<1x128xf32> -> vector<1x128xf32>
    %154 = arith.addf %152, %153 : vector<1x128xf32>
    %cst_48 = arith.constant 5.000000e-01 : f32
    %155 = vector.broadcast %cst_48 : f32 to vector<1x128xf32>
    %156 = arith.mulf %155, %154 : vector<1x128xf32>
    %157 = arith.select %18, %154, %156 : vector<1x128xi1>, vector<1x128xf32>
    %158 = math.tanh %157 : vector<1x128xf32>
    %cst_49 = arith.constant 5.000000e-01 : f32
    %159 = vector.broadcast %cst_49 : f32 to vector<1x128xf32>
    %160 = arith.mulf %159, %158 : vector<1x128xf32>
    %cst_50 = arith.constant 5.000000e-01 : f32
    %161 = vector.broadcast %cst_50 : f32 to vector<1x128xf32>
    %162 = arith.addf %160, %161 : vector<1x128xf32>
    %163 = arith.select %18, %158, %162 : vector<1x128xi1>, vector<1x128xf32>
    %164 = vector.extract_strided_slice %163 {offsets = [0, 0], sizes = [1, 32], strides = [1, 1]} : vector<1x128xf32> to vector<1x32xf32>
    %165 = vector.extract_strided_slice %163 {offsets = [0, 32], sizes = [1, 32], strides = [1, 1]} : vector<1x128xf32> to vector<1x32xf32>
    %166 = vector.extract_strided_slice %163 {offsets = [0, 64], sizes = [1, 32], strides = [1, 1]} : vector<1x128xf32> to vector<1x32xf32>
    %167 = vector.extract_strided_slice %163 {offsets = [0, 96], sizes = [1, 32], strides = [1, 1]} : vector<1x128xf32> to vector<1x32xf32>
    %168 = arith.mulf %165, %123 : vector<1x32xf32>
    %169 = arith.mulf %164, %166 : vector<1x32xf32>
    %170 = arith.addf %168, %169 : vector<1x32xf32>
    %171 = math.tanh %170 : vector<1x32xf32>
    %172 = arith.mulf %167, %171 : vector<1x32xf32>
    %c45_i32_51 = arith.constant 45 : i32
    %173 = arith.cmpi slt, %c2_i32, %c45_i32_51 : i32
    %174 = arith.select %173, %172, %122 : vector<1x32xf32>
    %175 = arith.select %173, %170, %123 : vector<1x32xf32>
    %c3_i32 = arith.constant 3 : i32
    %176 = tpu.concatenate %174, %148 in 1 : vector<1x32xf32>, vector<1x32xf32> -> vector<1x64xf32>
    %cst_52 = arith.constant dense<0.000000e+00> : vector<1x128xf32>
    %177 = tpu.matmul %176, %11, %cst_52 {dimension_numbers = #tpu.dot_dimension_numbers<[1], [0], [0], [1], [0, 0, 1, 1], [], []>} : vector<1x64xf32>, vector<64x128xf32>, vector<1x128xf32> -> vector<1x128xf32>
    %178 = arith.addf %177, %12 : vector<1x128xf32>
    %cst_53 = arith.constant 5.000000e-01 : f32
    %179 = vector.broadcast %cst_53 : f32 to vector<1x128xf32>
    %180 = arith.mulf %179, %178 : vector<1x128xf32>
    %181 = arith.select %18, %178, %180 : vector<1x128xi1>, vector<1x128xf32>
    %182 = math.tanh %181 : vector<1x128xf32>
    %cst_54 = arith.constant 5.000000e-01 : f32
    %183 = vector.broadcast %cst_54 : f32 to vector<1x128xf32>
    %184 = arith.mulf %183, %182 : vector<1x128xf32>
    %cst_55 = arith.constant 5.000000e-01 : f32
    %185 = vector.broadcast %cst_55 : f32 to vector<1x128xf32>
    %186 = arith.addf %184, %185 : vector<1x128xf32>
    %187 = arith.select %18, %182, %186 : vector<1x128xi1>, vector<1x128xf32>
    %188 = vector.extract_strided_slice %187 {offsets = [0, 0], sizes = [1, 32], strides = [1, 1]} : vector<1x128xf32> to vector<1x32xf32>
    %189 = vector.extract_strided_slice %187 {offsets = [0, 32], sizes = [1, 32], strides = [1, 1]} : vector<1x128xf32> to vector<1x32xf32>
    %190 = vector.extract_strided_slice %187 {offsets = [0, 64], sizes = [1, 32], strides = [1, 1]} : vector<1x128xf32> to vector<1x32xf32>
    %191 = vector.extract_strided_slice %187 {offsets = [0, 96], sizes = [1, 32], strides = [1, 1]} : vector<1x128xf32> to vector<1x32xf32>
    %192 = arith.mulf %189, %149 : vector<1x32xf32>
    %193 = arith.mulf %188, %190 : vector<1x32xf32>
    %194 = arith.addf %192, %193 : vector<1x32xf32>
    %195 = math.tanh %194 : vector<1x32xf32>
    %196 = arith.mulf %191, %195 : vector<1x32xf32>
    %c1_i32_56 = arith.constant 1 : i32
    %197 = arith.cmpi sge, %c3_i32, %c1_i32_56 : i32
    %c46_i32_57 = arith.constant 46 : i32
    %198 = arith.cmpi slt, %c3_i32, %c46_i32_57 : i32
    %199 = arith.andi %197, %198 : i1
    %200 = arith.select %199, %196, %148 : vector<1x32xf32>
    %201 = arith.select %199, %194, %149 : vector<1x32xf32>
    %c44_i32_58 = arith.constant 44 : i32
    %202 = arith.minsi %c3_i32, %c44_i32_58 : i32
    %203 = arith.index_cast %202 : i32 to index
    %c0_59 = arith.constant 0 : index
    %204 = vector.load %arg10[%203, %c0_59] : memref<45x128xf32, #tpu.memory_space<vmem>>, vector<1x128xf32>
    %cst_60 = arith.constant dense<0.000000e+00> : vector<1x128xf32>
    %205 = tpu.matmul %174, %10, %cst_60 {dimension_numbers = #tpu.dot_dimension_numbers<[1], [0], [0], [1], [0, 0, 1, 1], [], []>} : vector<1x32xf32>, vector<32x128xf32>, vector<1x128xf32> -> vector<1x128xf32>
    %206 = arith.addf %204, %205 : vector<1x128xf32>
    %cst_61 = arith.constant 5.000000e-01 : f32
    %207 = vector.broadcast %cst_61 : f32 to vector<1x128xf32>
    %208 = arith.mulf %207, %206 : vector<1x128xf32>
    %209 = arith.select %18, %206, %208 : vector<1x128xi1>, vector<1x128xf32>
    %210 = math.tanh %209 : vector<1x128xf32>
    %cst_62 = arith.constant 5.000000e-01 : f32
    %211 = vector.broadcast %cst_62 : f32 to vector<1x128xf32>
    %212 = arith.mulf %211, %210 : vector<1x128xf32>
    %cst_63 = arith.constant 5.000000e-01 : f32
    %213 = vector.broadcast %cst_63 : f32 to vector<1x128xf32>
    %214 = arith.addf %212, %213 : vector<1x128xf32>
    %215 = arith.select %18, %210, %214 : vector<1x128xi1>, vector<1x128xf32>
    %216 = vector.extract_strided_slice %215 {offsets = [0, 0], sizes = [1, 32], strides = [1, 1]} : vector<1x128xf32> to vector<1x32xf32>
    %217 = vector.extract_strided_slice %215 {offsets = [0, 32], sizes = [1, 32], strides = [1, 1]} : vector<1x128xf32> to vector<1x32xf32>
    %218 = vector.extract_strided_slice %215 {offsets = [0, 64], sizes = [1, 32], strides = [1, 1]} : vector<1x128xf32> to vector<1x32xf32>
    %219 = vector.extract_strided_slice %215 {offsets = [0, 96], sizes = [1, 32], strides = [1, 1]} : vector<1x128xf32> to vector<1x32xf32>
    %220 = arith.mulf %217, %175 : vector<1x32xf32>
    %221 = arith.mulf %216, %218 : vector<1x32xf32>
    %222 = arith.addf %220, %221 : vector<1x32xf32>
    %223 = math.tanh %222 : vector<1x32xf32>
    %224 = arith.mulf %219, %223 : vector<1x32xf32>
    %c45_i32_64 = arith.constant 45 : i32
    %225 = arith.cmpi slt, %c3_i32, %c45_i32_64 : i32
    %226 = arith.select %225, %224, %174 : vector<1x32xf32>
    %227 = arith.select %225, %222, %175 : vector<1x32xf32>
    %c4_i32 = arith.constant 4 : i32
    %228 = tpu.concatenate %226, %200 in 1 : vector<1x32xf32>, vector<1x32xf32> -> vector<1x64xf32>
    %cst_65 = arith.constant dense<0.000000e+00> : vector<1x128xf32>
    %229 = tpu.matmul %228, %11, %cst_65 {dimension_numbers = #tpu.dot_dimension_numbers<[1], [0], [0], [1], [0, 0, 1, 1], [], []>} : vector<1x64xf32>, vector<64x128xf32>, vector<1x128xf32> -> vector<1x128xf32>
    %230 = arith.addf %229, %12 : vector<1x128xf32>
    %cst_66 = arith.constant 5.000000e-01 : f32
    %231 = vector.broadcast %cst_66 : f32 to vector<1x128xf32>
    %232 = arith.mulf %231, %230 : vector<1x128xf32>
    %233 = arith.select %18, %230, %232 : vector<1x128xi1>, vector<1x128xf32>
    %234 = math.tanh %233 : vector<1x128xf32>
    %cst_67 = arith.constant 5.000000e-01 : f32
    %235 = vector.broadcast %cst_67 : f32 to vector<1x128xf32>
    %236 = arith.mulf %235, %234 : vector<1x128xf32>
    %cst_68 = arith.constant 5.000000e-01 : f32
    %237 = vector.broadcast %cst_68 : f32 to vector<1x128xf32>
    %238 = arith.addf %236, %237 : vector<1x128xf32>
    %239 = arith.select %18, %234, %238 : vector<1x128xi1>, vector<1x128xf32>
    %240 = vector.extract_strided_slice %239 {offsets = [0, 0], sizes = [1, 32], strides = [1, 1]} : vector<1x128xf32> to vector<1x32xf32>
    %241 = vector.extract_strided_slice %239 {offsets = [0, 32], sizes = [1, 32], strides = [1, 1]} : vector<1x128xf32> to vector<1x32xf32>
    %242 = vector.extract_strided_slice %239 {offsets = [0, 64], sizes = [1, 32], strides = [1, 1]} : vector<1x128xf32> to vector<1x32xf32>
    %243 = vector.extract_strided_slice %239 {offsets = [0, 96], sizes = [1, 32], strides = [1, 1]} : vector<1x128xf32> to vector<1x32xf32>
    %244 = arith.mulf %241, %201 : vector<1x32xf32>
    %245 = arith.mulf %240, %242 : vector<1x32xf32>
    %246 = arith.addf %244, %245 : vector<1x32xf32>
    %247 = math.tanh %246 : vector<1x32xf32>
    %248 = arith.mulf %243, %247 : vector<1x32xf32>
    %c1_i32_69 = arith.constant 1 : i32
    %249 = arith.cmpi sge, %c4_i32, %c1_i32_69 : i32
    %c46_i32_70 = arith.constant 46 : i32
    %250 = arith.cmpi slt, %c4_i32, %c46_i32_70 : i32
    %251 = arith.andi %249, %250 : i1
    %252 = arith.select %251, %248, %200 : vector<1x32xf32>
    %253 = arith.select %251, %246, %201 : vector<1x32xf32>
    %c44_i32_71 = arith.constant 44 : i32
    %254 = arith.minsi %c4_i32, %c44_i32_71 : i32
    %255 = arith.index_cast %254 : i32 to index
    %c0_72 = arith.constant 0 : index
    %256 = vector.load %arg10[%255, %c0_72] : memref<45x128xf32, #tpu.memory_space<vmem>>, vector<1x128xf32>
    %cst_73 = arith.constant dense<0.000000e+00> : vector<1x128xf32>
    %257 = tpu.matmul %226, %10, %cst_73 {dimension_numbers = #tpu.dot_dimension_numbers<[1], [0], [0], [1], [0, 0, 1, 1], [], []>} : vector<1x32xf32>, vector<32x128xf32>, vector<1x128xf32> -> vector<1x128xf32>
    %258 = arith.addf %256, %257 : vector<1x128xf32>
    %cst_74 = arith.constant 5.000000e-01 : f32
    %259 = vector.broadcast %cst_74 : f32 to vector<1x128xf32>
    %260 = arith.mulf %259, %258 : vector<1x128xf32>
    %261 = arith.select %18, %258, %260 : vector<1x128xi1>, vector<1x128xf32>
    %262 = math.tanh %261 : vector<1x128xf32>
    %cst_75 = arith.constant 5.000000e-01 : f32
    %263 = vector.broadcast %cst_75 : f32 to vector<1x128xf32>
    %264 = arith.mulf %263, %262 : vector<1x128xf32>
    %cst_76 = arith.constant 5.000000e-01 : f32
    %265 = vector.broadcast %cst_76 : f32 to vector<1x128xf32>
    %266 = arith.addf %264, %265 : vector<1x128xf32>
    %267 = arith.select %18, %262, %266 : vector<1x128xi1>, vector<1x128xf32>
    %268 = vector.extract_strided_slice %267 {offsets = [0, 0], sizes = [1, 32], strides = [1, 1]} : vector<1x128xf32> to vector<1x32xf32>
    %269 = vector.extract_strided_slice %267 {offsets = [0, 32], sizes = [1, 32], strides = [1, 1]} : vector<1x128xf32> to vector<1x32xf32>
    %270 = vector.extract_strided_slice %267 {offsets = [0, 64], sizes = [1, 32], strides = [1, 1]} : vector<1x128xf32> to vector<1x32xf32>
    %271 = vector.extract_strided_slice %267 {offsets = [0, 96], sizes = [1, 32], strides = [1, 1]} : vector<1x128xf32> to vector<1x32xf32>
    %272 = arith.mulf %269, %227 : vector<1x32xf32>
    %273 = arith.mulf %268, %270 : vector<1x32xf32>
    %274 = arith.addf %272, %273 : vector<1x32xf32>
    %275 = math.tanh %274 : vector<1x32xf32>
    %276 = arith.mulf %271, %275 : vector<1x32xf32>
    %c45_i32_77 = arith.constant 45 : i32
    %277 = arith.cmpi slt, %c4_i32, %c45_i32_77 : i32
    %278 = arith.select %277, %276, %226 : vector<1x32xf32>
    %279 = arith.select %277, %274, %227 : vector<1x32xf32>
    %c5_i32 = arith.constant 5 : i32
    %280 = tpu.concatenate %278, %252 in 1 : vector<1x32xf32>, vector<1x32xf32> -> vector<1x64xf32>
    %cst_78 = arith.constant dense<0.000000e+00> : vector<1x128xf32>
    %281 = tpu.matmul %280, %11, %cst_78 {dimension_numbers = #tpu.dot_dimension_numbers<[1], [0], [0], [1], [0, 0, 1, 1], [], []>} : vector<1x64xf32>, vector<64x128xf32>, vector<1x128xf32> -> vector<1x128xf32>
    %282 = arith.addf %281, %12 : vector<1x128xf32>
    %cst_79 = arith.constant 5.000000e-01 : f32
    %283 = vector.broadcast %cst_79 : f32 to vector<1x128xf32>
    %284 = arith.mulf %283, %282 : vector<1x128xf32>
    %285 = arith.select %18, %282, %284 : vector<1x128xi1>, vector<1x128xf32>
    %286 = math.tanh %285 : vector<1x128xf32>
    %cst_80 = arith.constant 5.000000e-01 : f32
    %287 = vector.broadcast %cst_80 : f32 to vector<1x128xf32>
    %288 = arith.mulf %287, %286 : vector<1x128xf32>
    %cst_81 = arith.constant 5.000000e-01 : f32
    %289 = vector.broadcast %cst_81 : f32 to vector<1x128xf32>
    %290 = arith.addf %288, %289 : vector<1x128xf32>
    %291 = arith.select %18, %286, %290 : vector<1x128xi1>, vector<1x128xf32>
    %292 = vector.extract_strided_slice %291 {offsets = [0, 0], sizes = [1, 32], strides = [1, 1]} : vector<1x128xf32> to vector<1x32xf32>
    %293 = vector.extract_strided_slice %291 {offsets = [0, 32], sizes = [1, 32], strides = [1, 1]} : vector<1x128xf32> to vector<1x32xf32>
    %294 = vector.extract_strided_slice %291 {offsets = [0, 64], sizes = [1, 32], strides = [1, 1]} : vector<1x128xf32> to vector<1x32xf32>
    %295 = vector.extract_strided_slice %291 {offsets = [0, 96], sizes = [1, 32], strides = [1, 1]} : vector<1x128xf32> to vector<1x32xf32>
    %296 = arith.mulf %293, %253 : vector<1x32xf32>
    %297 = arith.mulf %292, %294 : vector<1x32xf32>
    %298 = arith.addf %296, %297 : vector<1x32xf32>
    %299 = math.tanh %298 : vector<1x32xf32>
    %300 = arith.mulf %295, %299 : vector<1x32xf32>
    %c1_i32_82 = arith.constant 1 : i32
    %301 = arith.cmpi sge, %c5_i32, %c1_i32_82 : i32
    %c46_i32_83 = arith.constant 46 : i32
    %302 = arith.cmpi slt, %c5_i32, %c46_i32_83 : i32
    %303 = arith.andi %301, %302 : i1
    %304 = arith.select %303, %300, %252 : vector<1x32xf32>
    %305 = arith.select %303, %298, %253 : vector<1x32xf32>
    %c44_i32_84 = arith.constant 44 : i32
    %306 = arith.minsi %c5_i32, %c44_i32_84 : i32
    %307 = arith.index_cast %306 : i32 to index
    %c0_85 = arith.constant 0 : index
    %308 = vector.load %arg10[%307, %c0_85] : memref<45x128xf32, #tpu.memory_space<vmem>>, vector<1x128xf32>
    %cst_86 = arith.constant dense<0.000000e+00> : vector<1x128xf32>
    %309 = tpu.matmul %278, %10, %cst_86 {dimension_numbers = #tpu.dot_dimension_numbers<[1], [0], [0], [1], [0, 0, 1, 1], [], []>} : vector<1x32xf32>, vector<32x128xf32>, vector<1x128xf32> -> vector<1x128xf32>
    %310 = arith.addf %308, %309 : vector<1x128xf32>
    %cst_87 = arith.constant 5.000000e-01 : f32
    %311 = vector.broadcast %cst_87 : f32 to vector<1x128xf32>
    %312 = arith.mulf %311, %310 : vector<1x128xf32>
    %313 = arith.select %18, %310, %312 : vector<1x128xi1>, vector<1x128xf32>
    %314 = math.tanh %313 : vector<1x128xf32>
    %cst_88 = arith.constant 5.000000e-01 : f32
    %315 = vector.broadcast %cst_88 : f32 to vector<1x128xf32>
    %316 = arith.mulf %315, %314 : vector<1x128xf32>
    %cst_89 = arith.constant 5.000000e-01 : f32
    %317 = vector.broadcast %cst_89 : f32 to vector<1x128xf32>
    %318 = arith.addf %316, %317 : vector<1x128xf32>
    %319 = arith.select %18, %314, %318 : vector<1x128xi1>, vector<1x128xf32>
    %320 = vector.extract_strided_slice %319 {offsets = [0, 0], sizes = [1, 32], strides = [1, 1]} : vector<1x128xf32> to vector<1x32xf32>
    %321 = vector.extract_strided_slice %319 {offsets = [0, 32], sizes = [1, 32], strides = [1, 1]} : vector<1x128xf32> to vector<1x32xf32>
    %322 = vector.extract_strided_slice %319 {offsets = [0, 64], sizes = [1, 32], strides = [1, 1]} : vector<1x128xf32> to vector<1x32xf32>
    %323 = vector.extract_strided_slice %319 {offsets = [0, 96], sizes = [1, 32], strides = [1, 1]} : vector<1x128xf32> to vector<1x32xf32>
    %324 = arith.mulf %321, %279 : vector<1x32xf32>
    %325 = arith.mulf %320, %322 : vector<1x32xf32>
    %326 = arith.addf %324, %325 : vector<1x32xf32>
    %327 = math.tanh %326 : vector<1x32xf32>
    %328 = arith.mulf %323, %327 : vector<1x32xf32>
    %c45_i32_90 = arith.constant 45 : i32
    %329 = arith.cmpi slt, %c5_i32, %c45_i32_90 : i32
    %330 = arith.select %329, %328, %278 : vector<1x32xf32>
    %331 = arith.select %329, %326, %279 : vector<1x32xf32>
    %c6_i32 = arith.constant 6 : i32
    %332 = tpu.concatenate %330, %304 in 1 : vector<1x32xf32>, vector<1x32xf32> -> vector<1x64xf32>
    %cst_91 = arith.constant dense<0.000000e+00> : vector<1x128xf32>
    %333 = tpu.matmul %332, %11, %cst_91 {dimension_numbers = #tpu.dot_dimension_numbers<[1], [0], [0], [1], [0, 0, 1, 1], [], []>} : vector<1x64xf32>, vector<64x128xf32>, vector<1x128xf32> -> vector<1x128xf32>
    %334 = arith.addf %333, %12 : vector<1x128xf32>
    %cst_92 = arith.constant 5.000000e-01 : f32
    %335 = vector.broadcast %cst_92 : f32 to vector<1x128xf32>
    %336 = arith.mulf %335, %334 : vector<1x128xf32>
    %337 = arith.select %18, %334, %336 : vector<1x128xi1>, vector<1x128xf32>
    %338 = math.tanh %337 : vector<1x128xf32>
    %cst_93 = arith.constant 5.000000e-01 : f32
    %339 = vector.broadcast %cst_93 : f32 to vector<1x128xf32>
    %340 = arith.mulf %339, %338 : vector<1x128xf32>
    %cst_94 = arith.constant 5.000000e-01 : f32
    %341 = vector.broadcast %cst_94 : f32 to vector<1x128xf32>
    %342 = arith.addf %340, %341 : vector<1x128xf32>
    %343 = arith.select %18, %338, %342 : vector<1x128xi1>, vector<1x128xf32>
    %344 = vector.extract_strided_slice %343 {offsets = [0, 0], sizes = [1, 32], strides = [1, 1]} : vector<1x128xf32> to vector<1x32xf32>
    %345 = vector.extract_strided_slice %343 {offsets = [0, 32], sizes = [1, 32], strides = [1, 1]} : vector<1x128xf32> to vector<1x32xf32>
    %346 = vector.extract_strided_slice %343 {offsets = [0, 64], sizes = [1, 32], strides = [1, 1]} : vector<1x128xf32> to vector<1x32xf32>
    %347 = vector.extract_strided_slice %343 {offsets = [0, 96], sizes = [1, 32], strides = [1, 1]} : vector<1x128xf32> to vector<1x32xf32>
    %348 = arith.mulf %345, %305 : vector<1x32xf32>
    %349 = arith.mulf %344, %346 : vector<1x32xf32>
    %350 = arith.addf %348, %349 : vector<1x32xf32>
    %351 = math.tanh %350 : vector<1x32xf32>
    %352 = arith.mulf %347, %351 : vector<1x32xf32>
    %c1_i32_95 = arith.constant 1 : i32
    %353 = arith.cmpi sge, %c6_i32, %c1_i32_95 : i32
    %c46_i32_96 = arith.constant 46 : i32
    %354 = arith.cmpi slt, %c6_i32, %c46_i32_96 : i32
    %355 = arith.andi %353, %354 : i1
    %356 = arith.select %355, %352, %304 : vector<1x32xf32>
    %357 = arith.select %355, %350, %305 : vector<1x32xf32>
    %c44_i32_97 = arith.constant 44 : i32
    %358 = arith.minsi %c6_i32, %c44_i32_97 : i32
    %359 = arith.index_cast %358 : i32 to index
    %c0_98 = arith.constant 0 : index
    %360 = vector.load %arg10[%359, %c0_98] : memref<45x128xf32, #tpu.memory_space<vmem>>, vector<1x128xf32>
    %cst_99 = arith.constant dense<0.000000e+00> : vector<1x128xf32>
    %361 = tpu.matmul %330, %10, %cst_99 {dimension_numbers = #tpu.dot_dimension_numbers<[1], [0], [0], [1], [0, 0, 1, 1], [], []>} : vector<1x32xf32>, vector<32x128xf32>, vector<1x128xf32> -> vector<1x128xf32>
    %362 = arith.addf %360, %361 : vector<1x128xf32>
    %cst_100 = arith.constant 5.000000e-01 : f32
    %363 = vector.broadcast %cst_100 : f32 to vector<1x128xf32>
    %364 = arith.mulf %363, %362 : vector<1x128xf32>
    %365 = arith.select %18, %362, %364 : vector<1x128xi1>, vector<1x128xf32>
    %366 = math.tanh %365 : vector<1x128xf32>
    %cst_101 = arith.constant 5.000000e-01 : f32
    %367 = vector.broadcast %cst_101 : f32 to vector<1x128xf32>
    %368 = arith.mulf %367, %366 : vector<1x128xf32>
    %cst_102 = arith.constant 5.000000e-01 : f32
    %369 = vector.broadcast %cst_102 : f32 to vector<1x128xf32>
    %370 = arith.addf %368, %369 : vector<1x128xf32>
    %371 = arith.select %18, %366, %370 : vector<1x128xi1>, vector<1x128xf32>
    %372 = vector.extract_strided_slice %371 {offsets = [0, 0], sizes = [1, 32], strides = [1, 1]} : vector<1x128xf32> to vector<1x32xf32>
    %373 = vector.extract_strided_slice %371 {offsets = [0, 32], sizes = [1, 32], strides = [1, 1]} : vector<1x128xf32> to vector<1x32xf32>
    %374 = vector.extract_strided_slice %371 {offsets = [0, 64], sizes = [1, 32], strides = [1, 1]} : vector<1x128xf32> to vector<1x32xf32>
    %375 = vector.extract_strided_slice %371 {offsets = [0, 96], sizes = [1, 32], strides = [1, 1]} : vector<1x128xf32> to vector<1x32xf32>
    %376 = arith.mulf %373, %331 : vector<1x32xf32>
    %377 = arith.mulf %372, %374 : vector<1x32xf32>
    %378 = arith.addf %376, %377 : vector<1x32xf32>
    %379 = math.tanh %378 : vector<1x32xf32>
    %380 = arith.mulf %375, %379 : vector<1x32xf32>
    %c45_i32_103 = arith.constant 45 : i32
    %381 = arith.cmpi slt, %c6_i32, %c45_i32_103 : i32
    %382 = arith.select %381, %380, %330 : vector<1x32xf32>
    %383 = arith.select %381, %378, %331 : vector<1x32xf32>
    %c7_i32 = arith.constant 7 : i32
    %384 = tpu.concatenate %382, %356 in 1 : vector<1x32xf32>, vector<1x32xf32> -> vector<1x64xf32>
    %cst_104 = arith.constant dense<0.000000e+00> : vector<1x128xf32>
    %385 = tpu.matmul %384, %11, %cst_104 {dimension_numbers = #tpu.dot_dimension_numbers<[1], [0], [0], [1], [0, 0, 1, 1], [], []>} : vector<1x64xf32>, vector<64x128xf32>, vector<1x128xf32> -> vector<1x128xf32>
    %386 = arith.addf %385, %12 : vector<1x128xf32>
    %cst_105 = arith.constant 5.000000e-01 : f32
    %387 = vector.broadcast %cst_105 : f32 to vector<1x128xf32>
    %388 = arith.mulf %387, %386 : vector<1x128xf32>
    %389 = arith.select %18, %386, %388 : vector<1x128xi1>, vector<1x128xf32>
    %390 = math.tanh %389 : vector<1x128xf32>
    %cst_106 = arith.constant 5.000000e-01 : f32
    %391 = vector.broadcast %cst_106 : f32 to vector<1x128xf32>
    %392 = arith.mulf %391, %390 : vector<1x128xf32>
    %cst_107 = arith.constant 5.000000e-01 : f32
    %393 = vector.broadcast %cst_107 : f32 to vector<1x128xf32>
    %394 = arith.addf %392, %393 : vector<1x128xf32>
    %395 = arith.select %18, %390, %394 : vector<1x128xi1>, vector<1x128xf32>
    %396 = vector.extract_strided_slice %395 {offsets = [0, 0], sizes = [1, 32], strides = [1, 1]} : vector<1x128xf32> to vector<1x32xf32>
    %397 = vector.extract_strided_slice %395 {offsets = [0, 32], sizes = [1, 32], strides = [1, 1]} : vector<1x128xf32> to vector<1x32xf32>
    %398 = vector.extract_strided_slice %395 {offsets = [0, 64], sizes = [1, 32], strides = [1, 1]} : vector<1x128xf32> to vector<1x32xf32>
    %399 = vector.extract_strided_slice %395 {offsets = [0, 96], sizes = [1, 32], strides = [1, 1]} : vector<1x128xf32> to vector<1x32xf32>
    %400 = arith.mulf %397, %357 : vector<1x32xf32>
    %401 = arith.mulf %396, %398 : vector<1x32xf32>
    %402 = arith.addf %400, %401 : vector<1x32xf32>
    %403 = math.tanh %402 : vector<1x32xf32>
    %404 = arith.mulf %399, %403 : vector<1x32xf32>
    %c1_i32_108 = arith.constant 1 : i32
    %405 = arith.cmpi sge, %c7_i32, %c1_i32_108 : i32
    %c46_i32_109 = arith.constant 46 : i32
    %406 = arith.cmpi slt, %c7_i32, %c46_i32_109 : i32
    %407 = arith.andi %405, %406 : i1
    %408 = arith.select %407, %404, %356 : vector<1x32xf32>
    %409 = arith.select %407, %402, %357 : vector<1x32xf32>
    %c44_i32_110 = arith.constant 44 : i32
    %410 = arith.minsi %c7_i32, %c44_i32_110 : i32
    %411 = arith.index_cast %410 : i32 to index
    %c0_111 = arith.constant 0 : index
    %412 = vector.load %arg10[%411, %c0_111] : memref<45x128xf32, #tpu.memory_space<vmem>>, vector<1x128xf32>
    %cst_112 = arith.constant dense<0.000000e+00> : vector<1x128xf32>
    %413 = tpu.matmul %382, %10, %cst_112 {dimension_numbers = #tpu.dot_dimension_numbers<[1], [0], [0], [1], [0, 0, 1, 1], [], []>} : vector<1x32xf32>, vector<32x128xf32>, vector<1x128xf32> -> vector<1x128xf32>
    %414 = arith.addf %412, %413 : vector<1x128xf32>
    %cst_113 = arith.constant 5.000000e-01 : f32
    %415 = vector.broadcast %cst_113 : f32 to vector<1x128xf32>
    %416 = arith.mulf %415, %414 : vector<1x128xf32>
    %417 = arith.select %18, %414, %416 : vector<1x128xi1>, vector<1x128xf32>
    %418 = math.tanh %417 : vector<1x128xf32>
    %cst_114 = arith.constant 5.000000e-01 : f32
    %419 = vector.broadcast %cst_114 : f32 to vector<1x128xf32>
    %420 = arith.mulf %419, %418 : vector<1x128xf32>
    %cst_115 = arith.constant 5.000000e-01 : f32
    %421 = vector.broadcast %cst_115 : f32 to vector<1x128xf32>
    %422 = arith.addf %420, %421 : vector<1x128xf32>
    %423 = arith.select %18, %418, %422 : vector<1x128xi1>, vector<1x128xf32>
    %424 = vector.extract_strided_slice %423 {offsets = [0, 0], sizes = [1, 32], strides = [1, 1]} : vector<1x128xf32> to vector<1x32xf32>
    %425 = vector.extract_strided_slice %423 {offsets = [0, 32], sizes = [1, 32], strides = [1, 1]} : vector<1x128xf32> to vector<1x32xf32>
    %426 = vector.extract_strided_slice %423 {offsets = [0, 64], sizes = [1, 32], strides = [1, 1]} : vector<1x128xf32> to vector<1x32xf32>
    %427 = vector.extract_strided_slice %423 {offsets = [0, 96], sizes = [1, 32], strides = [1, 1]} : vector<1x128xf32> to vector<1x32xf32>
    %428 = arith.mulf %425, %383 : vector<1x32xf32>
    %429 = arith.mulf %424, %426 : vector<1x32xf32>
    %430 = arith.addf %428, %429 : vector<1x32xf32>
    %431 = math.tanh %430 : vector<1x32xf32>
    %432 = arith.mulf %427, %431 : vector<1x32xf32>
    %c45_i32_116 = arith.constant 45 : i32
    %433 = arith.cmpi slt, %c7_i32, %c45_i32_116 : i32
    %434 = arith.select %433, %432, %382 : vector<1x32xf32>
    %435 = arith.select %433, %430, %383 : vector<1x32xf32>
    %c8_i32 = arith.constant 8 : i32
    %436 = tpu.concatenate %434, %408 in 1 : vector<1x32xf32>, vector<1x32xf32> -> vector<1x64xf32>
    %cst_117 = arith.constant dense<0.000000e+00> : vector<1x128xf32>
    %437 = tpu.matmul %436, %11, %cst_117 {dimension_numbers = #tpu.dot_dimension_numbers<[1], [0], [0], [1], [0, 0, 1, 1], [], []>} : vector<1x64xf32>, vector<64x128xf32>, vector<1x128xf32> -> vector<1x128xf32>
    %438 = arith.addf %437, %12 : vector<1x128xf32>
    %cst_118 = arith.constant 5.000000e-01 : f32
    %439 = vector.broadcast %cst_118 : f32 to vector<1x128xf32>
    %440 = arith.mulf %439, %438 : vector<1x128xf32>
    %441 = arith.select %18, %438, %440 : vector<1x128xi1>, vector<1x128xf32>
    %442 = math.tanh %441 : vector<1x128xf32>
    %cst_119 = arith.constant 5.000000e-01 : f32
    %443 = vector.broadcast %cst_119 : f32 to vector<1x128xf32>
    %444 = arith.mulf %443, %442 : vector<1x128xf32>
    %cst_120 = arith.constant 5.000000e-01 : f32
    %445 = vector.broadcast %cst_120 : f32 to vector<1x128xf32>
    %446 = arith.addf %444, %445 : vector<1x128xf32>
    %447 = arith.select %18, %442, %446 : vector<1x128xi1>, vector<1x128xf32>
    %448 = vector.extract_strided_slice %447 {offsets = [0, 0], sizes = [1, 32], strides = [1, 1]} : vector<1x128xf32> to vector<1x32xf32>
    %449 = vector.extract_strided_slice %447 {offsets = [0, 32], sizes = [1, 32], strides = [1, 1]} : vector<1x128xf32> to vector<1x32xf32>
    %450 = vector.extract_strided_slice %447 {offsets = [0, 64], sizes = [1, 32], strides = [1, 1]} : vector<1x128xf32> to vector<1x32xf32>
    %451 = vector.extract_strided_slice %447 {offsets = [0, 96], sizes = [1, 32], strides = [1, 1]} : vector<1x128xf32> to vector<1x32xf32>
    %452 = arith.mulf %449, %409 : vector<1x32xf32>
    %453 = arith.mulf %448, %450 : vector<1x32xf32>
    %454 = arith.addf %452, %453 : vector<1x32xf32>
    %455 = math.tanh %454 : vector<1x32xf32>
    %456 = arith.mulf %451, %455 : vector<1x32xf32>
    %c1_i32_121 = arith.constant 1 : i32
    %457 = arith.cmpi sge, %c8_i32, %c1_i32_121 : i32
    %c46_i32_122 = arith.constant 46 : i32
    %458 = arith.cmpi slt, %c8_i32, %c46_i32_122 : i32
    %459 = arith.andi %457, %458 : i1
    %460 = arith.select %459, %456, %408 : vector<1x32xf32>
    %461 = arith.select %459, %454, %409 : vector<1x32xf32>
    %c44_i32_123 = arith.constant 44 : i32
    %462 = arith.minsi %c8_i32, %c44_i32_123 : i32
    %463 = arith.index_cast %462 : i32 to index
    %c0_124 = arith.constant 0 : index
    %464 = vector.load %arg10[%463, %c0_124] : memref<45x128xf32, #tpu.memory_space<vmem>>, vector<1x128xf32>
    %cst_125 = arith.constant dense<0.000000e+00> : vector<1x128xf32>
    %465 = tpu.matmul %434, %10, %cst_125 {dimension_numbers = #tpu.dot_dimension_numbers<[1], [0], [0], [1], [0, 0, 1, 1], [], []>} : vector<1x32xf32>, vector<32x128xf32>, vector<1x128xf32> -> vector<1x128xf32>
    %466 = arith.addf %464, %465 : vector<1x128xf32>
    %cst_126 = arith.constant 5.000000e-01 : f32
    %467 = vector.broadcast %cst_126 : f32 to vector<1x128xf32>
    %468 = arith.mulf %467, %466 : vector<1x128xf32>
    %469 = arith.select %18, %466, %468 : vector<1x128xi1>, vector<1x128xf32>
    %470 = math.tanh %469 : vector<1x128xf32>
    %cst_127 = arith.constant 5.000000e-01 : f32
    %471 = vector.broadcast %cst_127 : f32 to vector<1x128xf32>
    %472 = arith.mulf %471, %470 : vector<1x128xf32>
    %cst_128 = arith.constant 5.000000e-01 : f32
    %473 = vector.broadcast %cst_128 : f32 to vector<1x128xf32>
    %474 = arith.addf %472, %473 : vector<1x128xf32>
    %475 = arith.select %18, %470, %474 : vector<1x128xi1>, vector<1x128xf32>
    %476 = vector.extract_strided_slice %475 {offsets = [0, 0], sizes = [1, 32], strides = [1, 1]} : vector<1x128xf32> to vector<1x32xf32>
    %477 = vector.extract_strided_slice %475 {offsets = [0, 32], sizes = [1, 32], strides = [1, 1]} : vector<1x128xf32> to vector<1x32xf32>
    %478 = vector.extract_strided_slice %475 {offsets = [0, 64], sizes = [1, 32], strides = [1, 1]} : vector<1x128xf32> to vector<1x32xf32>
    %479 = vector.extract_strided_slice %475 {offsets = [0, 96], sizes = [1, 32], strides = [1, 1]} : vector<1x128xf32> to vector<1x32xf32>
    %480 = arith.mulf %477, %435 : vector<1x32xf32>
    %481 = arith.mulf %476, %478 : vector<1x32xf32>
    %482 = arith.addf %480, %481 : vector<1x32xf32>
    %483 = math.tanh %482 : vector<1x32xf32>
    %484 = arith.mulf %479, %483 : vector<1x32xf32>
    %c45_i32_129 = arith.constant 45 : i32
    %485 = arith.cmpi slt, %c8_i32, %c45_i32_129 : i32
    %486 = arith.select %485, %484, %434 : vector<1x32xf32>
    %487 = arith.select %485, %482, %435 : vector<1x32xf32>
    %c9_i32 = arith.constant 9 : i32
    %488 = tpu.concatenate %486, %460 in 1 : vector<1x32xf32>, vector<1x32xf32> -> vector<1x64xf32>
    %cst_130 = arith.constant dense<0.000000e+00> : vector<1x128xf32>
    %489 = tpu.matmul %488, %11, %cst_130 {dimension_numbers = #tpu.dot_dimension_numbers<[1], [0], [0], [1], [0, 0, 1, 1], [], []>} : vector<1x64xf32>, vector<64x128xf32>, vector<1x128xf32> -> vector<1x128xf32>
    %490 = arith.addf %489, %12 : vector<1x128xf32>
    %cst_131 = arith.constant 5.000000e-01 : f32
    %491 = vector.broadcast %cst_131 : f32 to vector<1x128xf32>
    %492 = arith.mulf %491, %490 : vector<1x128xf32>
    %493 = arith.select %18, %490, %492 : vector<1x128xi1>, vector<1x128xf32>
    %494 = math.tanh %493 : vector<1x128xf32>
    %cst_132 = arith.constant 5.000000e-01 : f32
    %495 = vector.broadcast %cst_132 : f32 to vector<1x128xf32>
    %496 = arith.mulf %495, %494 : vector<1x128xf32>
    %cst_133 = arith.constant 5.000000e-01 : f32
    %497 = vector.broadcast %cst_133 : f32 to vector<1x128xf32>
    %498 = arith.addf %496, %497 : vector<1x128xf32>
    %499 = arith.select %18, %494, %498 : vector<1x128xi1>, vector<1x128xf32>
    %500 = vector.extract_strided_slice %499 {offsets = [0, 0], sizes = [1, 32], strides = [1, 1]} : vector<1x128xf32> to vector<1x32xf32>
    %501 = vector.extract_strided_slice %499 {offsets = [0, 32], sizes = [1, 32], strides = [1, 1]} : vector<1x128xf32> to vector<1x32xf32>
    %502 = vector.extract_strided_slice %499 {offsets = [0, 64], sizes = [1, 32], strides = [1, 1]} : vector<1x128xf32> to vector<1x32xf32>
    %503 = vector.extract_strided_slice %499 {offsets = [0, 96], sizes = [1, 32], strides = [1, 1]} : vector<1x128xf32> to vector<1x32xf32>
    %504 = arith.mulf %501, %461 : vector<1x32xf32>
    %505 = arith.mulf %500, %502 : vector<1x32xf32>
    %506 = arith.addf %504, %505 : vector<1x32xf32>
    %507 = math.tanh %506 : vector<1x32xf32>
    %508 = arith.mulf %503, %507 : vector<1x32xf32>
    %c1_i32_134 = arith.constant 1 : i32
    %509 = arith.cmpi sge, %c9_i32, %c1_i32_134 : i32
    %c46_i32_135 = arith.constant 46 : i32
    %510 = arith.cmpi slt, %c9_i32, %c46_i32_135 : i32
    %511 = arith.andi %509, %510 : i1
    %512 = arith.select %511, %508, %460 : vector<1x32xf32>
    %513 = arith.select %511, %506, %461 : vector<1x32xf32>
    %c44_i32_136 = arith.constant 44 : i32
    %514 = arith.minsi %c9_i32, %c44_i32_136 : i32
    %515 = arith.index_cast %514 : i32 to index
    %c0_137 = arith.constant 0 : index
    %516 = vector.load %arg10[%515, %c0_137] : memref<45x128xf32, #tpu.memory_space<vmem>>, vector<1x128xf32>
    %cst_138 = arith.constant dense<0.000000e+00> : vector<1x128xf32>
    %517 = tpu.matmul %486, %10, %cst_138 {dimension_numbers = #tpu.dot_dimension_numbers<[1], [0], [0], [1], [0, 0, 1, 1], [], []>} : vector<1x32xf32>, vector<32x128xf32>, vector<1x128xf32> -> vector<1x128xf32>
    %518 = arith.addf %516, %517 : vector<1x128xf32>
    %cst_139 = arith.constant 5.000000e-01 : f32
    %519 = vector.broadcast %cst_139 : f32 to vector<1x128xf32>
    %520 = arith.mulf %519, %518 : vector<1x128xf32>
    %521 = arith.select %18, %518, %520 : vector<1x128xi1>, vector<1x128xf32>
    %522 = math.tanh %521 : vector<1x128xf32>
    %cst_140 = arith.constant 5.000000e-01 : f32
    %523 = vector.broadcast %cst_140 : f32 to vector<1x128xf32>
    %524 = arith.mulf %523, %522 : vector<1x128xf32>
    %cst_141 = arith.constant 5.000000e-01 : f32
    %525 = vector.broadcast %cst_141 : f32 to vector<1x128xf32>
    %526 = arith.addf %524, %525 : vector<1x128xf32>
    %527 = arith.select %18, %522, %526 : vector<1x128xi1>, vector<1x128xf32>
    %528 = vector.extract_strided_slice %527 {offsets = [0, 0], sizes = [1, 32], strides = [1, 1]} : vector<1x128xf32> to vector<1x32xf32>
    %529 = vector.extract_strided_slice %527 {offsets = [0, 32], sizes = [1, 32], strides = [1, 1]} : vector<1x128xf32> to vector<1x32xf32>
    %530 = vector.extract_strided_slice %527 {offsets = [0, 64], sizes = [1, 32], strides = [1, 1]} : vector<1x128xf32> to vector<1x32xf32>
    %531 = vector.extract_strided_slice %527 {offsets = [0, 96], sizes = [1, 32], strides = [1, 1]} : vector<1x128xf32> to vector<1x32xf32>
    %532 = arith.mulf %529, %487 : vector<1x32xf32>
    %533 = arith.mulf %528, %530 : vector<1x32xf32>
    %534 = arith.addf %532, %533 : vector<1x32xf32>
    %535 = math.tanh %534 : vector<1x32xf32>
    %536 = arith.mulf %531, %535 : vector<1x32xf32>
    %c45_i32_142 = arith.constant 45 : i32
    %537 = arith.cmpi slt, %c9_i32, %c45_i32_142 : i32
    %538 = arith.select %537, %536, %486 : vector<1x32xf32>
    %539 = arith.select %537, %534, %487 : vector<1x32xf32>
    %c10_i32 = arith.constant 10 : i32
    %540 = tpu.concatenate %538, %512 in 1 : vector<1x32xf32>, vector<1x32xf32> -> vector<1x64xf32>
    %cst_143 = arith.constant dense<0.000000e+00> : vector<1x128xf32>
    %541 = tpu.matmul %540, %11, %cst_143 {dimension_numbers = #tpu.dot_dimension_numbers<[1], [0], [0], [1], [0, 0, 1, 1], [], []>} : vector<1x64xf32>, vector<64x128xf32>, vector<1x128xf32> -> vector<1x128xf32>
    %542 = arith.addf %541, %12 : vector<1x128xf32>
    %cst_144 = arith.constant 5.000000e-01 : f32
    %543 = vector.broadcast %cst_144 : f32 to vector<1x128xf32>
    %544 = arith.mulf %543, %542 : vector<1x128xf32>
    %545 = arith.select %18, %542, %544 : vector<1x128xi1>, vector<1x128xf32>
    %546 = math.tanh %545 : vector<1x128xf32>
    %cst_145 = arith.constant 5.000000e-01 : f32
    %547 = vector.broadcast %cst_145 : f32 to vector<1x128xf32>
    %548 = arith.mulf %547, %546 : vector<1x128xf32>
    %cst_146 = arith.constant 5.000000e-01 : f32
    %549 = vector.broadcast %cst_146 : f32 to vector<1x128xf32>
    %550 = arith.addf %548, %549 : vector<1x128xf32>
    %551 = arith.select %18, %546, %550 : vector<1x128xi1>, vector<1x128xf32>
    %552 = vector.extract_strided_slice %551 {offsets = [0, 0], sizes = [1, 32], strides = [1, 1]} : vector<1x128xf32> to vector<1x32xf32>
    %553 = vector.extract_strided_slice %551 {offsets = [0, 32], sizes = [1, 32], strides = [1, 1]} : vector<1x128xf32> to vector<1x32xf32>
    %554 = vector.extract_strided_slice %551 {offsets = [0, 64], sizes = [1, 32], strides = [1, 1]} : vector<1x128xf32> to vector<1x32xf32>
    %555 = vector.extract_strided_slice %551 {offsets = [0, 96], sizes = [1, 32], strides = [1, 1]} : vector<1x128xf32> to vector<1x32xf32>
    %556 = arith.mulf %553, %513 : vector<1x32xf32>
    %557 = arith.mulf %552, %554 : vector<1x32xf32>
    %558 = arith.addf %556, %557 : vector<1x32xf32>
    %559 = math.tanh %558 : vector<1x32xf32>
    %560 = arith.mulf %555, %559 : vector<1x32xf32>
    %c1_i32_147 = arith.constant 1 : i32
    %561 = arith.cmpi sge, %c10_i32, %c1_i32_147 : i32
    %c46_i32_148 = arith.constant 46 : i32
    %562 = arith.cmpi slt, %c10_i32, %c46_i32_148 : i32
    %563 = arith.andi %561, %562 : i1
    %564 = arith.select %563, %560, %512 : vector<1x32xf32>
    %565 = arith.select %563, %558, %513 : vector<1x32xf32>
    %c44_i32_149 = arith.constant 44 : i32
    %566 = arith.minsi %c10_i32, %c44_i32_149 : i32
    %567 = arith.index_cast %566 : i32 to index
    %c0_150 = arith.constant 0 : index
    %568 = vector.load %arg10[%567, %c0_150] : memref<45x128xf32, #tpu.memory_space<vmem>>, vector<1x128xf32>
    %cst_151 = arith.constant dense<0.000000e+00> : vector<1x128xf32>
    %569 = tpu.matmul %538, %10, %cst_151 {dimension_numbers = #tpu.dot_dimension_numbers<[1], [0], [0], [1], [0, 0, 1, 1], [], []>} : vector<1x32xf32>, vector<32x128xf32>, vector<1x128xf32> -> vector<1x128xf32>
    %570 = arith.addf %568, %569 : vector<1x128xf32>
    %cst_152 = arith.constant 5.000000e-01 : f32
    %571 = vector.broadcast %cst_152 : f32 to vector<1x128xf32>
    %572 = arith.mulf %571, %570 : vector<1x128xf32>
    %573 = arith.select %18, %570, %572 : vector<1x128xi1>, vector<1x128xf32>
    %574 = math.tanh %573 : vector<1x128xf32>
    %cst_153 = arith.constant 5.000000e-01 : f32
    %575 = vector.broadcast %cst_153 : f32 to vector<1x128xf32>
    %576 = arith.mulf %575, %574 : vector<1x128xf32>
    %cst_154 = arith.constant 5.000000e-01 : f32
    %577 = vector.broadcast %cst_154 : f32 to vector<1x128xf32>
    %578 = arith.addf %576, %577 : vector<1x128xf32>
    %579 = arith.select %18, %574, %578 : vector<1x128xi1>, vector<1x128xf32>
    %580 = vector.extract_strided_slice %579 {offsets = [0, 0], sizes = [1, 32], strides = [1, 1]} : vector<1x128xf32> to vector<1x32xf32>
    %581 = vector.extract_strided_slice %579 {offsets = [0, 32], sizes = [1, 32], strides = [1, 1]} : vector<1x128xf32> to vector<1x32xf32>
    %582 = vector.extract_strided_slice %579 {offsets = [0, 64], sizes = [1, 32], strides = [1, 1]} : vector<1x128xf32> to vector<1x32xf32>
    %583 = vector.extract_strided_slice %579 {offsets = [0, 96], sizes = [1, 32], strides = [1, 1]} : vector<1x128xf32> to vector<1x32xf32>
    %584 = arith.mulf %581, %539 : vector<1x32xf32>
    %585 = arith.mulf %580, %582 : vector<1x32xf32>
    %586 = arith.addf %584, %585 : vector<1x32xf32>
    %587 = math.tanh %586 : vector<1x32xf32>
    %588 = arith.mulf %583, %587 : vector<1x32xf32>
    %c45_i32_155 = arith.constant 45 : i32
    %589 = arith.cmpi slt, %c10_i32, %c45_i32_155 : i32
    %590 = arith.select %589, %588, %538 : vector<1x32xf32>
    %591 = arith.select %589, %586, %539 : vector<1x32xf32>
    %c11_i32 = arith.constant 11 : i32
    %592 = tpu.concatenate %590, %564 in 1 : vector<1x32xf32>, vector<1x32xf32> -> vector<1x64xf32>
    %cst_156 = arith.constant dense<0.000000e+00> : vector<1x128xf32>
    %593 = tpu.matmul %592, %11, %cst_156 {dimension_numbers = #tpu.dot_dimension_numbers<[1], [0], [0], [1], [0, 0, 1, 1], [], []>} : vector<1x64xf32>, vector<64x128xf32>, vector<1x128xf32> -> vector<1x128xf32>
    %594 = arith.addf %593, %12 : vector<1x128xf32>
    %cst_157 = arith.constant 5.000000e-01 : f32
    %595 = vector.broadcast %cst_157 : f32 to vector<1x128xf32>
    %596 = arith.mulf %595, %594 : vector<1x128xf32>
    %597 = arith.select %18, %594, %596 : vector<1x128xi1>, vector<1x128xf32>
    %598 = math.tanh %597 : vector<1x128xf32>
    %cst_158 = arith.constant 5.000000e-01 : f32
    %599 = vector.broadcast %cst_158 : f32 to vector<1x128xf32>
    %600 = arith.mulf %599, %598 : vector<1x128xf32>
    %cst_159 = arith.constant 5.000000e-01 : f32
    %601 = vector.broadcast %cst_159 : f32 to vector<1x128xf32>
    %602 = arith.addf %600, %601 : vector<1x128xf32>
    %603 = arith.select %18, %598, %602 : vector<1x128xi1>, vector<1x128xf32>
    %604 = vector.extract_strided_slice %603 {offsets = [0, 0], sizes = [1, 32], strides = [1, 1]} : vector<1x128xf32> to vector<1x32xf32>
    %605 = vector.extract_strided_slice %603 {offsets = [0, 32], sizes = [1, 32], strides = [1, 1]} : vector<1x128xf32> to vector<1x32xf32>
    %606 = vector.extract_strided_slice %603 {offsets = [0, 64], sizes = [1, 32], strides = [1, 1]} : vector<1x128xf32> to vector<1x32xf32>
    %607 = vector.extract_strided_slice %603 {offsets = [0, 96], sizes = [1, 32], strides = [1, 1]} : vector<1x128xf32> to vector<1x32xf32>
    %608 = arith.mulf %605, %565 : vector<1x32xf32>
    %609 = arith.mulf %604, %606 : vector<1x32xf32>
    %610 = arith.addf %608, %609 : vector<1x32xf32>
    %611 = math.tanh %610 : vector<1x32xf32>
    %612 = arith.mulf %607, %611 : vector<1x32xf32>
    %c1_i32_160 = arith.constant 1 : i32
    %613 = arith.cmpi sge, %c11_i32, %c1_i32_160 : i32
    %c46_i32_161 = arith.constant 46 : i32
    %614 = arith.cmpi slt, %c11_i32, %c46_i32_161 : i32
    %615 = arith.andi %613, %614 : i1
    %616 = arith.select %615, %612, %564 : vector<1x32xf32>
    %617 = arith.select %615, %610, %565 : vector<1x32xf32>
    %c44_i32_162 = arith.constant 44 : i32
    %618 = arith.minsi %c11_i32, %c44_i32_162 : i32
    %619 = arith.index_cast %618 : i32 to index
    %c0_163 = arith.constant 0 : index
    %620 = vector.load %arg10[%619, %c0_163] : memref<45x128xf32, #tpu.memory_space<vmem>>, vector<1x128xf32>
    %cst_164 = arith.constant dense<0.000000e+00> : vector<1x128xf32>
    %621 = tpu.matmul %590, %10, %cst_164 {dimension_numbers = #tpu.dot_dimension_numbers<[1], [0], [0], [1], [0, 0, 1, 1], [], []>} : vector<1x32xf32>, vector<32x128xf32>, vector<1x128xf32> -> vector<1x128xf32>
    %622 = arith.addf %620, %621 : vector<1x128xf32>
    %cst_165 = arith.constant 5.000000e-01 : f32
    %623 = vector.broadcast %cst_165 : f32 to vector<1x128xf32>
    %624 = arith.mulf %623, %622 : vector<1x128xf32>
    %625 = arith.select %18, %622, %624 : vector<1x128xi1>, vector<1x128xf32>
    %626 = math.tanh %625 : vector<1x128xf32>
    %cst_166 = arith.constant 5.000000e-01 : f32
    %627 = vector.broadcast %cst_166 : f32 to vector<1x128xf32>
    %628 = arith.mulf %627, %626 : vector<1x128xf32>
    %cst_167 = arith.constant 5.000000e-01 : f32
    %629 = vector.broadcast %cst_167 : f32 to vector<1x128xf32>
    %630 = arith.addf %628, %629 : vector<1x128xf32>
    %631 = arith.select %18, %626, %630 : vector<1x128xi1>, vector<1x128xf32>
    %632 = vector.extract_strided_slice %631 {offsets = [0, 0], sizes = [1, 32], strides = [1, 1]} : vector<1x128xf32> to vector<1x32xf32>
    %633 = vector.extract_strided_slice %631 {offsets = [0, 32], sizes = [1, 32], strides = [1, 1]} : vector<1x128xf32> to vector<1x32xf32>
    %634 = vector.extract_strided_slice %631 {offsets = [0, 64], sizes = [1, 32], strides = [1, 1]} : vector<1x128xf32> to vector<1x32xf32>
    %635 = vector.extract_strided_slice %631 {offsets = [0, 96], sizes = [1, 32], strides = [1, 1]} : vector<1x128xf32> to vector<1x32xf32>
    %636 = arith.mulf %633, %591 : vector<1x32xf32>
    %637 = arith.mulf %632, %634 : vector<1x32xf32>
    %638 = arith.addf %636, %637 : vector<1x32xf32>
    %639 = math.tanh %638 : vector<1x32xf32>
    %640 = arith.mulf %635, %639 : vector<1x32xf32>
    %c45_i32_168 = arith.constant 45 : i32
    %641 = arith.cmpi slt, %c11_i32, %c45_i32_168 : i32
    %642 = arith.select %641, %640, %590 : vector<1x32xf32>
    %643 = arith.select %641, %638, %591 : vector<1x32xf32>
    %c12_i32 = arith.constant 12 : i32
    %644 = tpu.concatenate %642, %616 in 1 : vector<1x32xf32>, vector<1x32xf32> -> vector<1x64xf32>
    %cst_169 = arith.constant dense<0.000000e+00> : vector<1x128xf32>
    %645 = tpu.matmul %644, %11, %cst_169 {dimension_numbers = #tpu.dot_dimension_numbers<[1], [0], [0], [1], [0, 0, 1, 1], [], []>} : vector<1x64xf32>, vector<64x128xf32>, vector<1x128xf32> -> vector<1x128xf32>
    %646 = arith.addf %645, %12 : vector<1x128xf32>
    %cst_170 = arith.constant 5.000000e-01 : f32
    %647 = vector.broadcast %cst_170 : f32 to vector<1x128xf32>
    %648 = arith.mulf %647, %646 : vector<1x128xf32>
    %649 = arith.select %18, %646, %648 : vector<1x128xi1>, vector<1x128xf32>
    %650 = math.tanh %649 : vector<1x128xf32>
    %cst_171 = arith.constant 5.000000e-01 : f32
    %651 = vector.broadcast %cst_171 : f32 to vector<1x128xf32>
    %652 = arith.mulf %651, %650 : vector<1x128xf32>
    %cst_172 = arith.constant 5.000000e-01 : f32
    %653 = vector.broadcast %cst_172 : f32 to vector<1x128xf32>
    %654 = arith.addf %652, %653 : vector<1x128xf32>
    %655 = arith.select %18, %650, %654 : vector<1x128xi1>, vector<1x128xf32>
    %656 = vector.extract_strided_slice %655 {offsets = [0, 0], sizes = [1, 32], strides = [1, 1]} : vector<1x128xf32> to vector<1x32xf32>
    %657 = vector.extract_strided_slice %655 {offsets = [0, 32], sizes = [1, 32], strides = [1, 1]} : vector<1x128xf32> to vector<1x32xf32>
    %658 = vector.extract_strided_slice %655 {offsets = [0, 64], sizes = [1, 32], strides = [1, 1]} : vector<1x128xf32> to vector<1x32xf32>
    %659 = vector.extract_strided_slice %655 {offsets = [0, 96], sizes = [1, 32], strides = [1, 1]} : vector<1x128xf32> to vector<1x32xf32>
    %660 = arith.mulf %657, %617 : vector<1x32xf32>
    %661 = arith.mulf %656, %658 : vector<1x32xf32>
    %662 = arith.addf %660, %661 : vector<1x32xf32>
    %663 = math.tanh %662 : vector<1x32xf32>
    %664 = arith.mulf %659, %663 : vector<1x32xf32>
    %c1_i32_173 = arith.constant 1 : i32
    %665 = arith.cmpi sge, %c12_i32, %c1_i32_173 : i32
    %c46_i32_174 = arith.constant 46 : i32
    %666 = arith.cmpi slt, %c12_i32, %c46_i32_174 : i32
    %667 = arith.andi %665, %666 : i1
    %668 = arith.select %667, %664, %616 : vector<1x32xf32>
    %669 = arith.select %667, %662, %617 : vector<1x32xf32>
    %c44_i32_175 = arith.constant 44 : i32
    %670 = arith.minsi %c12_i32, %c44_i32_175 : i32
    %671 = arith.index_cast %670 : i32 to index
    %c0_176 = arith.constant 0 : index
    %672 = vector.load %arg10[%671, %c0_176] : memref<45x128xf32, #tpu.memory_space<vmem>>, vector<1x128xf32>
    %cst_177 = arith.constant dense<0.000000e+00> : vector<1x128xf32>
    %673 = tpu.matmul %642, %10, %cst_177 {dimension_numbers = #tpu.dot_dimension_numbers<[1], [0], [0], [1], [0, 0, 1, 1], [], []>} : vector<1x32xf32>, vector<32x128xf32>, vector<1x128xf32> -> vector<1x128xf32>
    %674 = arith.addf %672, %673 : vector<1x128xf32>
    %cst_178 = arith.constant 5.000000e-01 : f32
    %675 = vector.broadcast %cst_178 : f32 to vector<1x128xf32>
    %676 = arith.mulf %675, %674 : vector<1x128xf32>
    %677 = arith.select %18, %674, %676 : vector<1x128xi1>, vector<1x128xf32>
    %678 = math.tanh %677 : vector<1x128xf32>
    %cst_179 = arith.constant 5.000000e-01 : f32
    %679 = vector.broadcast %cst_179 : f32 to vector<1x128xf32>
    %680 = arith.mulf %679, %678 : vector<1x128xf32>
    %cst_180 = arith.constant 5.000000e-01 : f32
    %681 = vector.broadcast %cst_180 : f32 to vector<1x128xf32>
    %682 = arith.addf %680, %681 : vector<1x128xf32>
    %683 = arith.select %18, %678, %682 : vector<1x128xi1>, vector<1x128xf32>
    %684 = vector.extract_strided_slice %683 {offsets = [0, 0], sizes = [1, 32], strides = [1, 1]} : vector<1x128xf32> to vector<1x32xf32>
    %685 = vector.extract_strided_slice %683 {offsets = [0, 32], sizes = [1, 32], strides = [1, 1]} : vector<1x128xf32> to vector<1x32xf32>
    %686 = vector.extract_strided_slice %683 {offsets = [0, 64], sizes = [1, 32], strides = [1, 1]} : vector<1x128xf32> to vector<1x32xf32>
    %687 = vector.extract_strided_slice %683 {offsets = [0, 96], sizes = [1, 32], strides = [1, 1]} : vector<1x128xf32> to vector<1x32xf32>
    %688 = arith.mulf %685, %643 : vector<1x32xf32>
    %689 = arith.mulf %684, %686 : vector<1x32xf32>
    %690 = arith.addf %688, %689 : vector<1x32xf32>
    %691 = math.tanh %690 : vector<1x32xf32>
    %692 = arith.mulf %687, %691 : vector<1x32xf32>
    %c45_i32_181 = arith.constant 45 : i32
    %693 = arith.cmpi slt, %c12_i32, %c45_i32_181 : i32
    %694 = arith.select %693, %692, %642 : vector<1x32xf32>
    %695 = arith.select %693, %690, %643 : vector<1x32xf32>
    %c13_i32 = arith.constant 13 : i32
    %696 = tpu.concatenate %694, %668 in 1 : vector<1x32xf32>, vector<1x32xf32> -> vector<1x64xf32>
    %cst_182 = arith.constant dense<0.000000e+00> : vector<1x128xf32>
    %697 = tpu.matmul %696, %11, %cst_182 {dimension_numbers = #tpu.dot_dimension_numbers<[1], [0], [0], [1], [0, 0, 1, 1], [], []>} : vector<1x64xf32>, vector<64x128xf32>, vector<1x128xf32> -> vector<1x128xf32>
    %698 = arith.addf %697, %12 : vector<1x128xf32>
    %cst_183 = arith.constant 5.000000e-01 : f32
    %699 = vector.broadcast %cst_183 : f32 to vector<1x128xf32>
    %700 = arith.mulf %699, %698 : vector<1x128xf32>
    %701 = arith.select %18, %698, %700 : vector<1x128xi1>, vector<1x128xf32>
    %702 = math.tanh %701 : vector<1x128xf32>
    %cst_184 = arith.constant 5.000000e-01 : f32
    %703 = vector.broadcast %cst_184 : f32 to vector<1x128xf32>
    %704 = arith.mulf %703, %702 : vector<1x128xf32>
    %cst_185 = arith.constant 5.000000e-01 : f32
    %705 = vector.broadcast %cst_185 : f32 to vector<1x128xf32>
    %706 = arith.addf %704, %705 : vector<1x128xf32>
    %707 = arith.select %18, %702, %706 : vector<1x128xi1>, vector<1x128xf32>
    %708 = vector.extract_strided_slice %707 {offsets = [0, 0], sizes = [1, 32], strides = [1, 1]} : vector<1x128xf32> to vector<1x32xf32>
    %709 = vector.extract_strided_slice %707 {offsets = [0, 32], sizes = [1, 32], strides = [1, 1]} : vector<1x128xf32> to vector<1x32xf32>
    %710 = vector.extract_strided_slice %707 {offsets = [0, 64], sizes = [1, 32], strides = [1, 1]} : vector<1x128xf32> to vector<1x32xf32>
    %711 = vector.extract_strided_slice %707 {offsets = [0, 96], sizes = [1, 32], strides = [1, 1]} : vector<1x128xf32> to vector<1x32xf32>
    %712 = arith.mulf %709, %669 : vector<1x32xf32>
    %713 = arith.mulf %708, %710 : vector<1x32xf32>
    %714 = arith.addf %712, %713 : vector<1x32xf32>
    %715 = math.tanh %714 : vector<1x32xf32>
    %716 = arith.mulf %711, %715 : vector<1x32xf32>
    %c1_i32_186 = arith.constant 1 : i32
    %717 = arith.cmpi sge, %c13_i32, %c1_i32_186 : i32
    %c46_i32_187 = arith.constant 46 : i32
    %718 = arith.cmpi slt, %c13_i32, %c46_i32_187 : i32
    %719 = arith.andi %717, %718 : i1
    %720 = arith.select %719, %716, %668 : vector<1x32xf32>
    %721 = arith.select %719, %714, %669 : vector<1x32xf32>
    %c44_i32_188 = arith.constant 44 : i32
    %722 = arith.minsi %c13_i32, %c44_i32_188 : i32
    %723 = arith.index_cast %722 : i32 to index
    %c0_189 = arith.constant 0 : index
    %724 = vector.load %arg10[%723, %c0_189] : memref<45x128xf32, #tpu.memory_space<vmem>>, vector<1x128xf32>
    %cst_190 = arith.constant dense<0.000000e+00> : vector<1x128xf32>
    %725 = tpu.matmul %694, %10, %cst_190 {dimension_numbers = #tpu.dot_dimension_numbers<[1], [0], [0], [1], [0, 0, 1, 1], [], []>} : vector<1x32xf32>, vector<32x128xf32>, vector<1x128xf32> -> vector<1x128xf32>
    %726 = arith.addf %724, %725 : vector<1x128xf32>
    %cst_191 = arith.constant 5.000000e-01 : f32
    %727 = vector.broadcast %cst_191 : f32 to vector<1x128xf32>
    %728 = arith.mulf %727, %726 : vector<1x128xf32>
    %729 = arith.select %18, %726, %728 : vector<1x128xi1>, vector<1x128xf32>
    %730 = math.tanh %729 : vector<1x128xf32>
    %cst_192 = arith.constant 5.000000e-01 : f32
    %731 = vector.broadcast %cst_192 : f32 to vector<1x128xf32>
    %732 = arith.mulf %731, %730 : vector<1x128xf32>
    %cst_193 = arith.constant 5.000000e-01 : f32
    %733 = vector.broadcast %cst_193 : f32 to vector<1x128xf32>
    %734 = arith.addf %732, %733 : vector<1x128xf32>
    %735 = arith.select %18, %730, %734 : vector<1x128xi1>, vector<1x128xf32>
    %736 = vector.extract_strided_slice %735 {offsets = [0, 0], sizes = [1, 32], strides = [1, 1]} : vector<1x128xf32> to vector<1x32xf32>
    %737 = vector.extract_strided_slice %735 {offsets = [0, 32], sizes = [1, 32], strides = [1, 1]} : vector<1x128xf32> to vector<1x32xf32>
    %738 = vector.extract_strided_slice %735 {offsets = [0, 64], sizes = [1, 32], strides = [1, 1]} : vector<1x128xf32> to vector<1x32xf32>
    %739 = vector.extract_strided_slice %735 {offsets = [0, 96], sizes = [1, 32], strides = [1, 1]} : vector<1x128xf32> to vector<1x32xf32>
    %740 = arith.mulf %737, %695 : vector<1x32xf32>
    %741 = arith.mulf %736, %738 : vector<1x32xf32>
    %742 = arith.addf %740, %741 : vector<1x32xf32>
    %743 = math.tanh %742 : vector<1x32xf32>
    %744 = arith.mulf %739, %743 : vector<1x32xf32>
    %c45_i32_194 = arith.constant 45 : i32
    %745 = arith.cmpi slt, %c13_i32, %c45_i32_194 : i32
    %746 = arith.select %745, %744, %694 : vector<1x32xf32>
    %747 = arith.select %745, %742, %695 : vector<1x32xf32>
    %c14_i32 = arith.constant 14 : i32
    %748 = tpu.concatenate %746, %720 in 1 : vector<1x32xf32>, vector<1x32xf32> -> vector<1x64xf32>
    %cst_195 = arith.constant dense<0.000000e+00> : vector<1x128xf32>
    %749 = tpu.matmul %748, %11, %cst_195 {dimension_numbers = #tpu.dot_dimension_numbers<[1], [0], [0], [1], [0, 0, 1, 1], [], []>} : vector<1x64xf32>, vector<64x128xf32>, vector<1x128xf32> -> vector<1x128xf32>
    %750 = arith.addf %749, %12 : vector<1x128xf32>
    %cst_196 = arith.constant 5.000000e-01 : f32
    %751 = vector.broadcast %cst_196 : f32 to vector<1x128xf32>
    %752 = arith.mulf %751, %750 : vector<1x128xf32>
    %753 = arith.select %18, %750, %752 : vector<1x128xi1>, vector<1x128xf32>
    %754 = math.tanh %753 : vector<1x128xf32>
    %cst_197 = arith.constant 5.000000e-01 : f32
    %755 = vector.broadcast %cst_197 : f32 to vector<1x128xf32>
    %756 = arith.mulf %755, %754 : vector<1x128xf32>
    %cst_198 = arith.constant 5.000000e-01 : f32
    %757 = vector.broadcast %cst_198 : f32 to vector<1x128xf32>
    %758 = arith.addf %756, %757 : vector<1x128xf32>
    %759 = arith.select %18, %754, %758 : vector<1x128xi1>, vector<1x128xf32>
    %760 = vector.extract_strided_slice %759 {offsets = [0, 0], sizes = [1, 32], strides = [1, 1]} : vector<1x128xf32> to vector<1x32xf32>
    %761 = vector.extract_strided_slice %759 {offsets = [0, 32], sizes = [1, 32], strides = [1, 1]} : vector<1x128xf32> to vector<1x32xf32>
    %762 = vector.extract_strided_slice %759 {offsets = [0, 64], sizes = [1, 32], strides = [1, 1]} : vector<1x128xf32> to vector<1x32xf32>
    %763 = vector.extract_strided_slice %759 {offsets = [0, 96], sizes = [1, 32], strides = [1, 1]} : vector<1x128xf32> to vector<1x32xf32>
    %764 = arith.mulf %761, %721 : vector<1x32xf32>
    %765 = arith.mulf %760, %762 : vector<1x32xf32>
    %766 = arith.addf %764, %765 : vector<1x32xf32>
    %767 = math.tanh %766 : vector<1x32xf32>
    %768 = arith.mulf %763, %767 : vector<1x32xf32>
    %c1_i32_199 = arith.constant 1 : i32
    %769 = arith.cmpi sge, %c14_i32, %c1_i32_199 : i32
    %c46_i32_200 = arith.constant 46 : i32
    %770 = arith.cmpi slt, %c14_i32, %c46_i32_200 : i32
    %771 = arith.andi %769, %770 : i1
    %772 = arith.select %771, %768, %720 : vector<1x32xf32>
    %773 = arith.select %771, %766, %721 : vector<1x32xf32>
    %c44_i32_201 = arith.constant 44 : i32
    %774 = arith.minsi %c14_i32, %c44_i32_201 : i32
    %775 = arith.index_cast %774 : i32 to index
    %c0_202 = arith.constant 0 : index
    %776 = vector.load %arg10[%775, %c0_202] : memref<45x128xf32, #tpu.memory_space<vmem>>, vector<1x128xf32>
    %cst_203 = arith.constant dense<0.000000e+00> : vector<1x128xf32>
    %777 = tpu.matmul %746, %10, %cst_203 {dimension_numbers = #tpu.dot_dimension_numbers<[1], [0], [0], [1], [0, 0, 1, 1], [], []>} : vector<1x32xf32>, vector<32x128xf32>, vector<1x128xf32> -> vector<1x128xf32>
    %778 = arith.addf %776, %777 : vector<1x128xf32>
    %cst_204 = arith.constant 5.000000e-01 : f32
    %779 = vector.broadcast %cst_204 : f32 to vector<1x128xf32>
    %780 = arith.mulf %779, %778 : vector<1x128xf32>
    %781 = arith.select %18, %778, %780 : vector<1x128xi1>, vector<1x128xf32>
    %782 = math.tanh %781 : vector<1x128xf32>
    %cst_205 = arith.constant 5.000000e-01 : f32
    %783 = vector.broadcast %cst_205 : f32 to vector<1x128xf32>
    %784 = arith.mulf %783, %782 : vector<1x128xf32>
    %cst_206 = arith.constant 5.000000e-01 : f32
    %785 = vector.broadcast %cst_206 : f32 to vector<1x128xf32>
    %786 = arith.addf %784, %785 : vector<1x128xf32>
    %787 = arith.select %18, %782, %786 : vector<1x128xi1>, vector<1x128xf32>
    %788 = vector.extract_strided_slice %787 {offsets = [0, 0], sizes = [1, 32], strides = [1, 1]} : vector<1x128xf32> to vector<1x32xf32>
    %789 = vector.extract_strided_slice %787 {offsets = [0, 32], sizes = [1, 32], strides = [1, 1]} : vector<1x128xf32> to vector<1x32xf32>
    %790 = vector.extract_strided_slice %787 {offsets = [0, 64], sizes = [1, 32], strides = [1, 1]} : vector<1x128xf32> to vector<1x32xf32>
    %791 = vector.extract_strided_slice %787 {offsets = [0, 96], sizes = [1, 32], strides = [1, 1]} : vector<1x128xf32> to vector<1x32xf32>
    %792 = arith.mulf %789, %747 : vector<1x32xf32>
    %793 = arith.mulf %788, %790 : vector<1x32xf32>
    %794 = arith.addf %792, %793 : vector<1x32xf32>
    %795 = math.tanh %794 : vector<1x32xf32>
    %796 = arith.mulf %791, %795 : vector<1x32xf32>
    %c45_i32_207 = arith.constant 45 : i32
    %797 = arith.cmpi slt, %c14_i32, %c45_i32_207 : i32
    %798 = arith.select %797, %796, %746 : vector<1x32xf32>
    %799 = arith.select %797, %794, %747 : vector<1x32xf32>
    %c15_i32 = arith.constant 15 : i32
    %800 = tpu.concatenate %798, %772 in 1 : vector<1x32xf32>, vector<1x32xf32> -> vector<1x64xf32>
    %cst_208 = arith.constant dense<0.000000e+00> : vector<1x128xf32>
    %801 = tpu.matmul %800, %11, %cst_208 {dimension_numbers = #tpu.dot_dimension_numbers<[1], [0], [0], [1], [0, 0, 1, 1], [], []>} : vector<1x64xf32>, vector<64x128xf32>, vector<1x128xf32> -> vector<1x128xf32>
    %802 = arith.addf %801, %12 : vector<1x128xf32>
    %cst_209 = arith.constant 5.000000e-01 : f32
    %803 = vector.broadcast %cst_209 : f32 to vector<1x128xf32>
    %804 = arith.mulf %803, %802 : vector<1x128xf32>
    %805 = arith.select %18, %802, %804 : vector<1x128xi1>, vector<1x128xf32>
    %806 = math.tanh %805 : vector<1x128xf32>
    %cst_210 = arith.constant 5.000000e-01 : f32
    %807 = vector.broadcast %cst_210 : f32 to vector<1x128xf32>
    %808 = arith.mulf %807, %806 : vector<1x128xf32>
    %cst_211 = arith.constant 5.000000e-01 : f32
    %809 = vector.broadcast %cst_211 : f32 to vector<1x128xf32>
    %810 = arith.addf %808, %809 : vector<1x128xf32>
    %811 = arith.select %18, %806, %810 : vector<1x128xi1>, vector<1x128xf32>
    %812 = vector.extract_strided_slice %811 {offsets = [0, 0], sizes = [1, 32], strides = [1, 1]} : vector<1x128xf32> to vector<1x32xf32>
    %813 = vector.extract_strided_slice %811 {offsets = [0, 32], sizes = [1, 32], strides = [1, 1]} : vector<1x128xf32> to vector<1x32xf32>
    %814 = vector.extract_strided_slice %811 {offsets = [0, 64], sizes = [1, 32], strides = [1, 1]} : vector<1x128xf32> to vector<1x32xf32>
    %815 = vector.extract_strided_slice %811 {offsets = [0, 96], sizes = [1, 32], strides = [1, 1]} : vector<1x128xf32> to vector<1x32xf32>
    %816 = arith.mulf %813, %773 : vector<1x32xf32>
    %817 = arith.mulf %812, %814 : vector<1x32xf32>
    %818 = arith.addf %816, %817 : vector<1x32xf32>
    %819 = math.tanh %818 : vector<1x32xf32>
    %820 = arith.mulf %815, %819 : vector<1x32xf32>
    %c1_i32_212 = arith.constant 1 : i32
    %821 = arith.cmpi sge, %c15_i32, %c1_i32_212 : i32
    %c46_i32_213 = arith.constant 46 : i32
    %822 = arith.cmpi slt, %c15_i32, %c46_i32_213 : i32
    %823 = arith.andi %821, %822 : i1
    %824 = arith.select %823, %820, %772 : vector<1x32xf32>
    %825 = arith.select %823, %818, %773 : vector<1x32xf32>
    %c44_i32_214 = arith.constant 44 : i32
    %826 = arith.minsi %c15_i32, %c44_i32_214 : i32
    %827 = arith.index_cast %826 : i32 to index
    %c0_215 = arith.constant 0 : index
    %828 = vector.load %arg10[%827, %c0_215] : memref<45x128xf32, #tpu.memory_space<vmem>>, vector<1x128xf32>
    %cst_216 = arith.constant dense<0.000000e+00> : vector<1x128xf32>
    %829 = tpu.matmul %798, %10, %cst_216 {dimension_numbers = #tpu.dot_dimension_numbers<[1], [0], [0], [1], [0, 0, 1, 1], [], []>} : vector<1x32xf32>, vector<32x128xf32>, vector<1x128xf32> -> vector<1x128xf32>
    %830 = arith.addf %828, %829 : vector<1x128xf32>
    %cst_217 = arith.constant 5.000000e-01 : f32
    %831 = vector.broadcast %cst_217 : f32 to vector<1x128xf32>
    %832 = arith.mulf %831, %830 : vector<1x128xf32>
    %833 = arith.select %18, %830, %832 : vector<1x128xi1>, vector<1x128xf32>
    %834 = math.tanh %833 : vector<1x128xf32>
    %cst_218 = arith.constant 5.000000e-01 : f32
    %835 = vector.broadcast %cst_218 : f32 to vector<1x128xf32>
    %836 = arith.mulf %835, %834 : vector<1x128xf32>
    %cst_219 = arith.constant 5.000000e-01 : f32
    %837 = vector.broadcast %cst_219 : f32 to vector<1x128xf32>
    %838 = arith.addf %836, %837 : vector<1x128xf32>
    %839 = arith.select %18, %834, %838 : vector<1x128xi1>, vector<1x128xf32>
    %840 = vector.extract_strided_slice %839 {offsets = [0, 0], sizes = [1, 32], strides = [1, 1]} : vector<1x128xf32> to vector<1x32xf32>
    %841 = vector.extract_strided_slice %839 {offsets = [0, 32], sizes = [1, 32], strides = [1, 1]} : vector<1x128xf32> to vector<1x32xf32>
    %842 = vector.extract_strided_slice %839 {offsets = [0, 64], sizes = [1, 32], strides = [1, 1]} : vector<1x128xf32> to vector<1x32xf32>
    %843 = vector.extract_strided_slice %839 {offsets = [0, 96], sizes = [1, 32], strides = [1, 1]} : vector<1x128xf32> to vector<1x32xf32>
    %844 = arith.mulf %841, %799 : vector<1x32xf32>
    %845 = arith.mulf %840, %842 : vector<1x32xf32>
    %846 = arith.addf %844, %845 : vector<1x32xf32>
    %847 = math.tanh %846 : vector<1x32xf32>
    %848 = arith.mulf %843, %847 : vector<1x32xf32>
    %c45_i32_220 = arith.constant 45 : i32
    %849 = arith.cmpi slt, %c15_i32, %c45_i32_220 : i32
    %850 = arith.select %849, %848, %798 : vector<1x32xf32>
    %851 = arith.select %849, %846, %799 : vector<1x32xf32>
    %c16_i32 = arith.constant 16 : i32
    %852 = tpu.concatenate %850, %824 in 1 : vector<1x32xf32>, vector<1x32xf32> -> vector<1x64xf32>
    %cst_221 = arith.constant dense<0.000000e+00> : vector<1x128xf32>
    %853 = tpu.matmul %852, %11, %cst_221 {dimension_numbers = #tpu.dot_dimension_numbers<[1], [0], [0], [1], [0, 0, 1, 1], [], []>} : vector<1x64xf32>, vector<64x128xf32>, vector<1x128xf32> -> vector<1x128xf32>
    %854 = arith.addf %853, %12 : vector<1x128xf32>
    %cst_222 = arith.constant 5.000000e-01 : f32
    %855 = vector.broadcast %cst_222 : f32 to vector<1x128xf32>
    %856 = arith.mulf %855, %854 : vector<1x128xf32>
    %857 = arith.select %18, %854, %856 : vector<1x128xi1>, vector<1x128xf32>
    %858 = math.tanh %857 : vector<1x128xf32>
    %cst_223 = arith.constant 5.000000e-01 : f32
    %859 = vector.broadcast %cst_223 : f32 to vector<1x128xf32>
    %860 = arith.mulf %859, %858 : vector<1x128xf32>
    %cst_224 = arith.constant 5.000000e-01 : f32
    %861 = vector.broadcast %cst_224 : f32 to vector<1x128xf32>
    %862 = arith.addf %860, %861 : vector<1x128xf32>
    %863 = arith.select %18, %858, %862 : vector<1x128xi1>, vector<1x128xf32>
    %864 = vector.extract_strided_slice %863 {offsets = [0, 0], sizes = [1, 32], strides = [1, 1]} : vector<1x128xf32> to vector<1x32xf32>
    %865 = vector.extract_strided_slice %863 {offsets = [0, 32], sizes = [1, 32], strides = [1, 1]} : vector<1x128xf32> to vector<1x32xf32>
    %866 = vector.extract_strided_slice %863 {offsets = [0, 64], sizes = [1, 32], strides = [1, 1]} : vector<1x128xf32> to vector<1x32xf32>
    %867 = vector.extract_strided_slice %863 {offsets = [0, 96], sizes = [1, 32], strides = [1, 1]} : vector<1x128xf32> to vector<1x32xf32>
    %868 = arith.mulf %865, %825 : vector<1x32xf32>
    %869 = arith.mulf %864, %866 : vector<1x32xf32>
    %870 = arith.addf %868, %869 : vector<1x32xf32>
    %871 = math.tanh %870 : vector<1x32xf32>
    %872 = arith.mulf %867, %871 : vector<1x32xf32>
    %c1_i32_225 = arith.constant 1 : i32
    %873 = arith.cmpi sge, %c16_i32, %c1_i32_225 : i32
    %c46_i32_226 = arith.constant 46 : i32
    %874 = arith.cmpi slt, %c16_i32, %c46_i32_226 : i32
    %875 = arith.andi %873, %874 : i1
    %876 = arith.select %875, %872, %824 : vector<1x32xf32>
    %877 = arith.select %875, %870, %825 : vector<1x32xf32>
    %c44_i32_227 = arith.constant 44 : i32
    %878 = arith.minsi %c16_i32, %c44_i32_227 : i32
    %879 = arith.index_cast %878 : i32 to index
    %c0_228 = arith.constant 0 : index
    %880 = vector.load %arg10[%879, %c0_228] : memref<45x128xf32, #tpu.memory_space<vmem>>, vector<1x128xf32>
    %cst_229 = arith.constant dense<0.000000e+00> : vector<1x128xf32>
    %881 = tpu.matmul %850, %10, %cst_229 {dimension_numbers = #tpu.dot_dimension_numbers<[1], [0], [0], [1], [0, 0, 1, 1], [], []>} : vector<1x32xf32>, vector<32x128xf32>, vector<1x128xf32> -> vector<1x128xf32>
    %882 = arith.addf %880, %881 : vector<1x128xf32>
    %cst_230 = arith.constant 5.000000e-01 : f32
    %883 = vector.broadcast %cst_230 : f32 to vector<1x128xf32>
    %884 = arith.mulf %883, %882 : vector<1x128xf32>
    %885 = arith.select %18, %882, %884 : vector<1x128xi1>, vector<1x128xf32>
    %886 = math.tanh %885 : vector<1x128xf32>
    %cst_231 = arith.constant 5.000000e-01 : f32
    %887 = vector.broadcast %cst_231 : f32 to vector<1x128xf32>
    %888 = arith.mulf %887, %886 : vector<1x128xf32>
    %cst_232 = arith.constant 5.000000e-01 : f32
    %889 = vector.broadcast %cst_232 : f32 to vector<1x128xf32>
    %890 = arith.addf %888, %889 : vector<1x128xf32>
    %891 = arith.select %18, %886, %890 : vector<1x128xi1>, vector<1x128xf32>
    %892 = vector.extract_strided_slice %891 {offsets = [0, 0], sizes = [1, 32], strides = [1, 1]} : vector<1x128xf32> to vector<1x32xf32>
    %893 = vector.extract_strided_slice %891 {offsets = [0, 32], sizes = [1, 32], strides = [1, 1]} : vector<1x128xf32> to vector<1x32xf32>
    %894 = vector.extract_strided_slice %891 {offsets = [0, 64], sizes = [1, 32], strides = [1, 1]} : vector<1x128xf32> to vector<1x32xf32>
    %895 = vector.extract_strided_slice %891 {offsets = [0, 96], sizes = [1, 32], strides = [1, 1]} : vector<1x128xf32> to vector<1x32xf32>
    %896 = arith.mulf %893, %851 : vector<1x32xf32>
    %897 = arith.mulf %892, %894 : vector<1x32xf32>
    %898 = arith.addf %896, %897 : vector<1x32xf32>
    %899 = math.tanh %898 : vector<1x32xf32>
    %900 = arith.mulf %895, %899 : vector<1x32xf32>
    %c45_i32_233 = arith.constant 45 : i32
    %901 = arith.cmpi slt, %c16_i32, %c45_i32_233 : i32
    %902 = arith.select %901, %900, %850 : vector<1x32xf32>
    %903 = arith.select %901, %898, %851 : vector<1x32xf32>
    %c17_i32 = arith.constant 17 : i32
    %904 = tpu.concatenate %902, %876 in 1 : vector<1x32xf32>, vector<1x32xf32> -> vector<1x64xf32>
    %cst_234 = arith.constant dense<0.000000e+00> : vector<1x128xf32>
    %905 = tpu.matmul %904, %11, %cst_234 {dimension_numbers = #tpu.dot_dimension_numbers<[1], [0], [0], [1], [0, 0, 1, 1], [], []>} : vector<1x64xf32>, vector<64x128xf32>, vector<1x128xf32> -> vector<1x128xf32>
    %906 = arith.addf %905, %12 : vector<1x128xf32>
    %cst_235 = arith.constant 5.000000e-01 : f32
    %907 = vector.broadcast %cst_235 : f32 to vector<1x128xf32>
    %908 = arith.mulf %907, %906 : vector<1x128xf32>
    %909 = arith.select %18, %906, %908 : vector<1x128xi1>, vector<1x128xf32>
    %910 = math.tanh %909 : vector<1x128xf32>
    %cst_236 = arith.constant 5.000000e-01 : f32
    %911 = vector.broadcast %cst_236 : f32 to vector<1x128xf32>
    %912 = arith.mulf %911, %910 : vector<1x128xf32>
    %cst_237 = arith.constant 5.000000e-01 : f32
    %913 = vector.broadcast %cst_237 : f32 to vector<1x128xf32>
    %914 = arith.addf %912, %913 : vector<1x128xf32>
    %915 = arith.select %18, %910, %914 : vector<1x128xi1>, vector<1x128xf32>
    %916 = vector.extract_strided_slice %915 {offsets = [0, 0], sizes = [1, 32], strides = [1, 1]} : vector<1x128xf32> to vector<1x32xf32>
    %917 = vector.extract_strided_slice %915 {offsets = [0, 32], sizes = [1, 32], strides = [1, 1]} : vector<1x128xf32> to vector<1x32xf32>
    %918 = vector.extract_strided_slice %915 {offsets = [0, 64], sizes = [1, 32], strides = [1, 1]} : vector<1x128xf32> to vector<1x32xf32>
    %919 = vector.extract_strided_slice %915 {offsets = [0, 96], sizes = [1, 32], strides = [1, 1]} : vector<1x128xf32> to vector<1x32xf32>
    %920 = arith.mulf %917, %877 : vector<1x32xf32>
    %921 = arith.mulf %916, %918 : vector<1x32xf32>
    %922 = arith.addf %920, %921 : vector<1x32xf32>
    %923 = math.tanh %922 : vector<1x32xf32>
    %924 = arith.mulf %919, %923 : vector<1x32xf32>
    %c1_i32_238 = arith.constant 1 : i32
    %925 = arith.cmpi sge, %c17_i32, %c1_i32_238 : i32
    %c46_i32_239 = arith.constant 46 : i32
    %926 = arith.cmpi slt, %c17_i32, %c46_i32_239 : i32
    %927 = arith.andi %925, %926 : i1
    %928 = arith.select %927, %924, %876 : vector<1x32xf32>
    %929 = arith.select %927, %922, %877 : vector<1x32xf32>
    %c44_i32_240 = arith.constant 44 : i32
    %930 = arith.minsi %c17_i32, %c44_i32_240 : i32
    %931 = arith.index_cast %930 : i32 to index
    %c0_241 = arith.constant 0 : index
    %932 = vector.load %arg10[%931, %c0_241] : memref<45x128xf32, #tpu.memory_space<vmem>>, vector<1x128xf32>
    %cst_242 = arith.constant dense<0.000000e+00> : vector<1x128xf32>
    %933 = tpu.matmul %902, %10, %cst_242 {dimension_numbers = #tpu.dot_dimension_numbers<[1], [0], [0], [1], [0, 0, 1, 1], [], []>} : vector<1x32xf32>, vector<32x128xf32>, vector<1x128xf32> -> vector<1x128xf32>
    %934 = arith.addf %932, %933 : vector<1x128xf32>
    %cst_243 = arith.constant 5.000000e-01 : f32
    %935 = vector.broadcast %cst_243 : f32 to vector<1x128xf32>
    %936 = arith.mulf %935, %934 : vector<1x128xf32>
    %937 = arith.select %18, %934, %936 : vector<1x128xi1>, vector<1x128xf32>
    %938 = math.tanh %937 : vector<1x128xf32>
    %cst_244 = arith.constant 5.000000e-01 : f32
    %939 = vector.broadcast %cst_244 : f32 to vector<1x128xf32>
    %940 = arith.mulf %939, %938 : vector<1x128xf32>
    %cst_245 = arith.constant 5.000000e-01 : f32
    %941 = vector.broadcast %cst_245 : f32 to vector<1x128xf32>
    %942 = arith.addf %940, %941 : vector<1x128xf32>
    %943 = arith.select %18, %938, %942 : vector<1x128xi1>, vector<1x128xf32>
    %944 = vector.extract_strided_slice %943 {offsets = [0, 0], sizes = [1, 32], strides = [1, 1]} : vector<1x128xf32> to vector<1x32xf32>
    %945 = vector.extract_strided_slice %943 {offsets = [0, 32], sizes = [1, 32], strides = [1, 1]} : vector<1x128xf32> to vector<1x32xf32>
    %946 = vector.extract_strided_slice %943 {offsets = [0, 64], sizes = [1, 32], strides = [1, 1]} : vector<1x128xf32> to vector<1x32xf32>
    %947 = vector.extract_strided_slice %943 {offsets = [0, 96], sizes = [1, 32], strides = [1, 1]} : vector<1x128xf32> to vector<1x32xf32>
    %948 = arith.mulf %945, %903 : vector<1x32xf32>
    %949 = arith.mulf %944, %946 : vector<1x32xf32>
    %950 = arith.addf %948, %949 : vector<1x32xf32>
    %951 = math.tanh %950 : vector<1x32xf32>
    %952 = arith.mulf %947, %951 : vector<1x32xf32>
    %c45_i32_246 = arith.constant 45 : i32
    %953 = arith.cmpi slt, %c17_i32, %c45_i32_246 : i32
    %954 = arith.select %953, %952, %902 : vector<1x32xf32>
    %955 = arith.select %953, %950, %903 : vector<1x32xf32>
    %c18_i32 = arith.constant 18 : i32
    %956 = tpu.concatenate %954, %928 in 1 : vector<1x32xf32>, vector<1x32xf32> -> vector<1x64xf32>
    %cst_247 = arith.constant dense<0.000000e+00> : vector<1x128xf32>
    %957 = tpu.matmul %956, %11, %cst_247 {dimension_numbers = #tpu.dot_dimension_numbers<[1], [0], [0], [1], [0, 0, 1, 1], [], []>} : vector<1x64xf32>, vector<64x128xf32>, vector<1x128xf32> -> vector<1x128xf32>
    %958 = arith.addf %957, %12 : vector<1x128xf32>
    %cst_248 = arith.constant 5.000000e-01 : f32
    %959 = vector.broadcast %cst_248 : f32 to vector<1x128xf32>
    %960 = arith.mulf %959, %958 : vector<1x128xf32>
    %961 = arith.select %18, %958, %960 : vector<1x128xi1>, vector<1x128xf32>
    %962 = math.tanh %961 : vector<1x128xf32>
    %cst_249 = arith.constant 5.000000e-01 : f32
    %963 = vector.broadcast %cst_249 : f32 to vector<1x128xf32>
    %964 = arith.mulf %963, %962 : vector<1x128xf32>
    %cst_250 = arith.constant 5.000000e-01 : f32
    %965 = vector.broadcast %cst_250 : f32 to vector<1x128xf32>
    %966 = arith.addf %964, %965 : vector<1x128xf32>
    %967 = arith.select %18, %962, %966 : vector<1x128xi1>, vector<1x128xf32>
    %968 = vector.extract_strided_slice %967 {offsets = [0, 0], sizes = [1, 32], strides = [1, 1]} : vector<1x128xf32> to vector<1x32xf32>
    %969 = vector.extract_strided_slice %967 {offsets = [0, 32], sizes = [1, 32], strides = [1, 1]} : vector<1x128xf32> to vector<1x32xf32>
    %970 = vector.extract_strided_slice %967 {offsets = [0, 64], sizes = [1, 32], strides = [1, 1]} : vector<1x128xf32> to vector<1x32xf32>
    %971 = vector.extract_strided_slice %967 {offsets = [0, 96], sizes = [1, 32], strides = [1, 1]} : vector<1x128xf32> to vector<1x32xf32>
    %972 = arith.mulf %969, %929 : vector<1x32xf32>
    %973 = arith.mulf %968, %970 : vector<1x32xf32>
    %974 = arith.addf %972, %973 : vector<1x32xf32>
    %975 = math.tanh %974 : vector<1x32xf32>
    %976 = arith.mulf %971, %975 : vector<1x32xf32>
    %c1_i32_251 = arith.constant 1 : i32
    %977 = arith.cmpi sge, %c18_i32, %c1_i32_251 : i32
    %c46_i32_252 = arith.constant 46 : i32
    %978 = arith.cmpi slt, %c18_i32, %c46_i32_252 : i32
    %979 = arith.andi %977, %978 : i1
    %980 = arith.select %979, %976, %928 : vector<1x32xf32>
    %981 = arith.select %979, %974, %929 : vector<1x32xf32>
    %c44_i32_253 = arith.constant 44 : i32
    %982 = arith.minsi %c18_i32, %c44_i32_253 : i32
    %983 = arith.index_cast %982 : i32 to index
    %c0_254 = arith.constant 0 : index
    %984 = vector.load %arg10[%983, %c0_254] : memref<45x128xf32, #tpu.memory_space<vmem>>, vector<1x128xf32>
    %cst_255 = arith.constant dense<0.000000e+00> : vector<1x128xf32>
    %985 = tpu.matmul %954, %10, %cst_255 {dimension_numbers = #tpu.dot_dimension_numbers<[1], [0], [0], [1], [0, 0, 1, 1], [], []>} : vector<1x32xf32>, vector<32x128xf32>, vector<1x128xf32> -> vector<1x128xf32>
    %986 = arith.addf %984, %985 : vector<1x128xf32>
    %cst_256 = arith.constant 5.000000e-01 : f32
    %987 = vector.broadcast %cst_256 : f32 to vector<1x128xf32>
    %988 = arith.mulf %987, %986 : vector<1x128xf32>
    %989 = arith.select %18, %986, %988 : vector<1x128xi1>, vector<1x128xf32>
    %990 = math.tanh %989 : vector<1x128xf32>
    %cst_257 = arith.constant 5.000000e-01 : f32
    %991 = vector.broadcast %cst_257 : f32 to vector<1x128xf32>
    %992 = arith.mulf %991, %990 : vector<1x128xf32>
    %cst_258 = arith.constant 5.000000e-01 : f32
    %993 = vector.broadcast %cst_258 : f32 to vector<1x128xf32>
    %994 = arith.addf %992, %993 : vector<1x128xf32>
    %995 = arith.select %18, %990, %994 : vector<1x128xi1>, vector<1x128xf32>
    %996 = vector.extract_strided_slice %995 {offsets = [0, 0], sizes = [1, 32], strides = [1, 1]} : vector<1x128xf32> to vector<1x32xf32>
    %997 = vector.extract_strided_slice %995 {offsets = [0, 32], sizes = [1, 32], strides = [1, 1]} : vector<1x128xf32> to vector<1x32xf32>
    %998 = vector.extract_strided_slice %995 {offsets = [0, 64], sizes = [1, 32], strides = [1, 1]} : vector<1x128xf32> to vector<1x32xf32>
    %999 = vector.extract_strided_slice %995 {offsets = [0, 96], sizes = [1, 32], strides = [1, 1]} : vector<1x128xf32> to vector<1x32xf32>
    %1000 = arith.mulf %997, %955 : vector<1x32xf32>
    %1001 = arith.mulf %996, %998 : vector<1x32xf32>
    %1002 = arith.addf %1000, %1001 : vector<1x32xf32>
    %1003 = math.tanh %1002 : vector<1x32xf32>
    %1004 = arith.mulf %999, %1003 : vector<1x32xf32>
    %c45_i32_259 = arith.constant 45 : i32
    %1005 = arith.cmpi slt, %c18_i32, %c45_i32_259 : i32
    %1006 = arith.select %1005, %1004, %954 : vector<1x32xf32>
    %1007 = arith.select %1005, %1002, %955 : vector<1x32xf32>
    %c19_i32 = arith.constant 19 : i32
    %1008 = tpu.concatenate %1006, %980 in 1 : vector<1x32xf32>, vector<1x32xf32> -> vector<1x64xf32>
    %cst_260 = arith.constant dense<0.000000e+00> : vector<1x128xf32>
    %1009 = tpu.matmul %1008, %11, %cst_260 {dimension_numbers = #tpu.dot_dimension_numbers<[1], [0], [0], [1], [0, 0, 1, 1], [], []>} : vector<1x64xf32>, vector<64x128xf32>, vector<1x128xf32> -> vector<1x128xf32>
    %1010 = arith.addf %1009, %12 : vector<1x128xf32>
    %cst_261 = arith.constant 5.000000e-01 : f32
    %1011 = vector.broadcast %cst_261 : f32 to vector<1x128xf32>
    %1012 = arith.mulf %1011, %1010 : vector<1x128xf32>
    %1013 = arith.select %18, %1010, %1012 : vector<1x128xi1>, vector<1x128xf32>
    %1014 = math.tanh %1013 : vector<1x128xf32>
    %cst_262 = arith.constant 5.000000e-01 : f32
    %1015 = vector.broadcast %cst_262 : f32 to vector<1x128xf32>
    %1016 = arith.mulf %1015, %1014 : vector<1x128xf32>
    %cst_263 = arith.constant 5.000000e-01 : f32
    %1017 = vector.broadcast %cst_263 : f32 to vector<1x128xf32>
    %1018 = arith.addf %1016, %1017 : vector<1x128xf32>
    %1019 = arith.select %18, %1014, %1018 : vector<1x128xi1>, vector<1x128xf32>
    %1020 = vector.extract_strided_slice %1019 {offsets = [0, 0], sizes = [1, 32], strides = [1, 1]} : vector<1x128xf32> to vector<1x32xf32>
    %1021 = vector.extract_strided_slice %1019 {offsets = [0, 32], sizes = [1, 32], strides = [1, 1]} : vector<1x128xf32> to vector<1x32xf32>
    %1022 = vector.extract_strided_slice %1019 {offsets = [0, 64], sizes = [1, 32], strides = [1, 1]} : vector<1x128xf32> to vector<1x32xf32>
    %1023 = vector.extract_strided_slice %1019 {offsets = [0, 96], sizes = [1, 32], strides = [1, 1]} : vector<1x128xf32> to vector<1x32xf32>
    %1024 = arith.mulf %1021, %981 : vector<1x32xf32>
    %1025 = arith.mulf %1020, %1022 : vector<1x32xf32>
    %1026 = arith.addf %1024, %1025 : vector<1x32xf32>
    %1027 = math.tanh %1026 : vector<1x32xf32>
    %1028 = arith.mulf %1023, %1027 : vector<1x32xf32>
    %c1_i32_264 = arith.constant 1 : i32
    %1029 = arith.cmpi sge, %c19_i32, %c1_i32_264 : i32
    %c46_i32_265 = arith.constant 46 : i32
    %1030 = arith.cmpi slt, %c19_i32, %c46_i32_265 : i32
    %1031 = arith.andi %1029, %1030 : i1
    %1032 = arith.select %1031, %1028, %980 : vector<1x32xf32>
    %1033 = arith.select %1031, %1026, %981 : vector<1x32xf32>
    %c44_i32_266 = arith.constant 44 : i32
    %1034 = arith.minsi %c19_i32, %c44_i32_266 : i32
    %1035 = arith.index_cast %1034 : i32 to index
    %c0_267 = arith.constant 0 : index
    %1036 = vector.load %arg10[%1035, %c0_267] : memref<45x128xf32, #tpu.memory_space<vmem>>, vector<1x128xf32>
    %cst_268 = arith.constant dense<0.000000e+00> : vector<1x128xf32>
    %1037 = tpu.matmul %1006, %10, %cst_268 {dimension_numbers = #tpu.dot_dimension_numbers<[1], [0], [0], [1], [0, 0, 1, 1], [], []>} : vector<1x32xf32>, vector<32x128xf32>, vector<1x128xf32> -> vector<1x128xf32>
    %1038 = arith.addf %1036, %1037 : vector<1x128xf32>
    %cst_269 = arith.constant 5.000000e-01 : f32
    %1039 = vector.broadcast %cst_269 : f32 to vector<1x128xf32>
    %1040 = arith.mulf %1039, %1038 : vector<1x128xf32>
    %1041 = arith.select %18, %1038, %1040 : vector<1x128xi1>, vector<1x128xf32>
    %1042 = math.tanh %1041 : vector<1x128xf32>
    %cst_270 = arith.constant 5.000000e-01 : f32
    %1043 = vector.broadcast %cst_270 : f32 to vector<1x128xf32>
    %1044 = arith.mulf %1043, %1042 : vector<1x128xf32>
    %cst_271 = arith.constant 5.000000e-01 : f32
    %1045 = vector.broadcast %cst_271 : f32 to vector<1x128xf32>
    %1046 = arith.addf %1044, %1045 : vector<1x128xf32>
    %1047 = arith.select %18, %1042, %1046 : vector<1x128xi1>, vector<1x128xf32>
    %1048 = vector.extract_strided_slice %1047 {offsets = [0, 0], sizes = [1, 32], strides = [1, 1]} : vector<1x128xf32> to vector<1x32xf32>
    %1049 = vector.extract_strided_slice %1047 {offsets = [0, 32], sizes = [1, 32], strides = [1, 1]} : vector<1x128xf32> to vector<1x32xf32>
    %1050 = vector.extract_strided_slice %1047 {offsets = [0, 64], sizes = [1, 32], strides = [1, 1]} : vector<1x128xf32> to vector<1x32xf32>
    %1051 = vector.extract_strided_slice %1047 {offsets = [0, 96], sizes = [1, 32], strides = [1, 1]} : vector<1x128xf32> to vector<1x32xf32>
    %1052 = arith.mulf %1049, %1007 : vector<1x32xf32>
    %1053 = arith.mulf %1048, %1050 : vector<1x32xf32>
    %1054 = arith.addf %1052, %1053 : vector<1x32xf32>
    %1055 = math.tanh %1054 : vector<1x32xf32>
    %1056 = arith.mulf %1051, %1055 : vector<1x32xf32>
    %c45_i32_272 = arith.constant 45 : i32
    %1057 = arith.cmpi slt, %c19_i32, %c45_i32_272 : i32
    %1058 = arith.select %1057, %1056, %1006 : vector<1x32xf32>
    %1059 = arith.select %1057, %1054, %1007 : vector<1x32xf32>
    %c20_i32 = arith.constant 20 : i32
    %1060 = tpu.concatenate %1058, %1032 in 1 : vector<1x32xf32>, vector<1x32xf32> -> vector<1x64xf32>
    %cst_273 = arith.constant dense<0.000000e+00> : vector<1x128xf32>
    %1061 = tpu.matmul %1060, %11, %cst_273 {dimension_numbers = #tpu.dot_dimension_numbers<[1], [0], [0], [1], [0, 0, 1, 1], [], []>} : vector<1x64xf32>, vector<64x128xf32>, vector<1x128xf32> -> vector<1x128xf32>
    %1062 = arith.addf %1061, %12 : vector<1x128xf32>
    %cst_274 = arith.constant 5.000000e-01 : f32
    %1063 = vector.broadcast %cst_274 : f32 to vector<1x128xf32>
    %1064 = arith.mulf %1063, %1062 : vector<1x128xf32>
    %1065 = arith.select %18, %1062, %1064 : vector<1x128xi1>, vector<1x128xf32>
    %1066 = math.tanh %1065 : vector<1x128xf32>
    %cst_275 = arith.constant 5.000000e-01 : f32
    %1067 = vector.broadcast %cst_275 : f32 to vector<1x128xf32>
    %1068 = arith.mulf %1067, %1066 : vector<1x128xf32>
    %cst_276 = arith.constant 5.000000e-01 : f32
    %1069 = vector.broadcast %cst_276 : f32 to vector<1x128xf32>
    %1070 = arith.addf %1068, %1069 : vector<1x128xf32>
    %1071 = arith.select %18, %1066, %1070 : vector<1x128xi1>, vector<1x128xf32>
    %1072 = vector.extract_strided_slice %1071 {offsets = [0, 0], sizes = [1, 32], strides = [1, 1]} : vector<1x128xf32> to vector<1x32xf32>
    %1073 = vector.extract_strided_slice %1071 {offsets = [0, 32], sizes = [1, 32], strides = [1, 1]} : vector<1x128xf32> to vector<1x32xf32>
    %1074 = vector.extract_strided_slice %1071 {offsets = [0, 64], sizes = [1, 32], strides = [1, 1]} : vector<1x128xf32> to vector<1x32xf32>
    %1075 = vector.extract_strided_slice %1071 {offsets = [0, 96], sizes = [1, 32], strides = [1, 1]} : vector<1x128xf32> to vector<1x32xf32>
    %1076 = arith.mulf %1073, %1033 : vector<1x32xf32>
    %1077 = arith.mulf %1072, %1074 : vector<1x32xf32>
    %1078 = arith.addf %1076, %1077 : vector<1x32xf32>
    %1079 = math.tanh %1078 : vector<1x32xf32>
    %1080 = arith.mulf %1075, %1079 : vector<1x32xf32>
    %c1_i32_277 = arith.constant 1 : i32
    %1081 = arith.cmpi sge, %c20_i32, %c1_i32_277 : i32
    %c46_i32_278 = arith.constant 46 : i32
    %1082 = arith.cmpi slt, %c20_i32, %c46_i32_278 : i32
    %1083 = arith.andi %1081, %1082 : i1
    %1084 = arith.select %1083, %1080, %1032 : vector<1x32xf32>
    %1085 = arith.select %1083, %1078, %1033 : vector<1x32xf32>
    %c44_i32_279 = arith.constant 44 : i32
    %1086 = arith.minsi %c20_i32, %c44_i32_279 : i32
    %1087 = arith.index_cast %1086 : i32 to index
    %c0_280 = arith.constant 0 : index
    %1088 = vector.load %arg10[%1087, %c0_280] : memref<45x128xf32, #tpu.memory_space<vmem>>, vector<1x128xf32>
    %cst_281 = arith.constant dense<0.000000e+00> : vector<1x128xf32>
    %1089 = tpu.matmul %1058, %10, %cst_281 {dimension_numbers = #tpu.dot_dimension_numbers<[1], [0], [0], [1], [0, 0, 1, 1], [], []>} : vector<1x32xf32>, vector<32x128xf32>, vector<1x128xf32> -> vector<1x128xf32>
    %1090 = arith.addf %1088, %1089 : vector<1x128xf32>
    %cst_282 = arith.constant 5.000000e-01 : f32
    %1091 = vector.broadcast %cst_282 : f32 to vector<1x128xf32>
    %1092 = arith.mulf %1091, %1090 : vector<1x128xf32>
    %1093 = arith.select %18, %1090, %1092 : vector<1x128xi1>, vector<1x128xf32>
    %1094 = math.tanh %1093 : vector<1x128xf32>
    %cst_283 = arith.constant 5.000000e-01 : f32
    %1095 = vector.broadcast %cst_283 : f32 to vector<1x128xf32>
    %1096 = arith.mulf %1095, %1094 : vector<1x128xf32>
    %cst_284 = arith.constant 5.000000e-01 : f32
    %1097 = vector.broadcast %cst_284 : f32 to vector<1x128xf32>
    %1098 = arith.addf %1096, %1097 : vector<1x128xf32>
    %1099 = arith.select %18, %1094, %1098 : vector<1x128xi1>, vector<1x128xf32>
    %1100 = vector.extract_strided_slice %1099 {offsets = [0, 0], sizes = [1, 32], strides = [1, 1]} : vector<1x128xf32> to vector<1x32xf32>
    %1101 = vector.extract_strided_slice %1099 {offsets = [0, 32], sizes = [1, 32], strides = [1, 1]} : vector<1x128xf32> to vector<1x32xf32>
    %1102 = vector.extract_strided_slice %1099 {offsets = [0, 64], sizes = [1, 32], strides = [1, 1]} : vector<1x128xf32> to vector<1x32xf32>
    %1103 = vector.extract_strided_slice %1099 {offsets = [0, 96], sizes = [1, 32], strides = [1, 1]} : vector<1x128xf32> to vector<1x32xf32>
    %1104 = arith.mulf %1101, %1059 : vector<1x32xf32>
    %1105 = arith.mulf %1100, %1102 : vector<1x32xf32>
    %1106 = arith.addf %1104, %1105 : vector<1x32xf32>
    %1107 = math.tanh %1106 : vector<1x32xf32>
    %1108 = arith.mulf %1103, %1107 : vector<1x32xf32>
    %c45_i32_285 = arith.constant 45 : i32
    %1109 = arith.cmpi slt, %c20_i32, %c45_i32_285 : i32
    %1110 = arith.select %1109, %1108, %1058 : vector<1x32xf32>
    %1111 = arith.select %1109, %1106, %1059 : vector<1x32xf32>
    %c21_i32 = arith.constant 21 : i32
    %1112 = tpu.concatenate %1110, %1084 in 1 : vector<1x32xf32>, vector<1x32xf32> -> vector<1x64xf32>
    %cst_286 = arith.constant dense<0.000000e+00> : vector<1x128xf32>
    %1113 = tpu.matmul %1112, %11, %cst_286 {dimension_numbers = #tpu.dot_dimension_numbers<[1], [0], [0], [1], [0, 0, 1, 1], [], []>} : vector<1x64xf32>, vector<64x128xf32>, vector<1x128xf32> -> vector<1x128xf32>
    %1114 = arith.addf %1113, %12 : vector<1x128xf32>
    %cst_287 = arith.constant 5.000000e-01 : f32
    %1115 = vector.broadcast %cst_287 : f32 to vector<1x128xf32>
    %1116 = arith.mulf %1115, %1114 : vector<1x128xf32>
    %1117 = arith.select %18, %1114, %1116 : vector<1x128xi1>, vector<1x128xf32>
    %1118 = math.tanh %1117 : vector<1x128xf32>
    %cst_288 = arith.constant 5.000000e-01 : f32
    %1119 = vector.broadcast %cst_288 : f32 to vector<1x128xf32>
    %1120 = arith.mulf %1119, %1118 : vector<1x128xf32>
    %cst_289 = arith.constant 5.000000e-01 : f32
    %1121 = vector.broadcast %cst_289 : f32 to vector<1x128xf32>
    %1122 = arith.addf %1120, %1121 : vector<1x128xf32>
    %1123 = arith.select %18, %1118, %1122 : vector<1x128xi1>, vector<1x128xf32>
    %1124 = vector.extract_strided_slice %1123 {offsets = [0, 0], sizes = [1, 32], strides = [1, 1]} : vector<1x128xf32> to vector<1x32xf32>
    %1125 = vector.extract_strided_slice %1123 {offsets = [0, 32], sizes = [1, 32], strides = [1, 1]} : vector<1x128xf32> to vector<1x32xf32>
    %1126 = vector.extract_strided_slice %1123 {offsets = [0, 64], sizes = [1, 32], strides = [1, 1]} : vector<1x128xf32> to vector<1x32xf32>
    %1127 = vector.extract_strided_slice %1123 {offsets = [0, 96], sizes = [1, 32], strides = [1, 1]} : vector<1x128xf32> to vector<1x32xf32>
    %1128 = arith.mulf %1125, %1085 : vector<1x32xf32>
    %1129 = arith.mulf %1124, %1126 : vector<1x32xf32>
    %1130 = arith.addf %1128, %1129 : vector<1x32xf32>
    %1131 = math.tanh %1130 : vector<1x32xf32>
    %1132 = arith.mulf %1127, %1131 : vector<1x32xf32>
    %c1_i32_290 = arith.constant 1 : i32
    %1133 = arith.cmpi sge, %c21_i32, %c1_i32_290 : i32
    %c46_i32_291 = arith.constant 46 : i32
    %1134 = arith.cmpi slt, %c21_i32, %c46_i32_291 : i32
    %1135 = arith.andi %1133, %1134 : i1
    %1136 = arith.select %1135, %1132, %1084 : vector<1x32xf32>
    %1137 = arith.select %1135, %1130, %1085 : vector<1x32xf32>
    %c44_i32_292 = arith.constant 44 : i32
    %1138 = arith.minsi %c21_i32, %c44_i32_292 : i32
    %1139 = arith.index_cast %1138 : i32 to index
    %c0_293 = arith.constant 0 : index
    %1140 = vector.load %arg10[%1139, %c0_293] : memref<45x128xf32, #tpu.memory_space<vmem>>, vector<1x128xf32>
    %cst_294 = arith.constant dense<0.000000e+00> : vector<1x128xf32>
    %1141 = tpu.matmul %1110, %10, %cst_294 {dimension_numbers = #tpu.dot_dimension_numbers<[1], [0], [0], [1], [0, 0, 1, 1], [], []>} : vector<1x32xf32>, vector<32x128xf32>, vector<1x128xf32> -> vector<1x128xf32>
    %1142 = arith.addf %1140, %1141 : vector<1x128xf32>
    %cst_295 = arith.constant 5.000000e-01 : f32
    %1143 = vector.broadcast %cst_295 : f32 to vector<1x128xf32>
    %1144 = arith.mulf %1143, %1142 : vector<1x128xf32>
    %1145 = arith.select %18, %1142, %1144 : vector<1x128xi1>, vector<1x128xf32>
    %1146 = math.tanh %1145 : vector<1x128xf32>
    %cst_296 = arith.constant 5.000000e-01 : f32
    %1147 = vector.broadcast %cst_296 : f32 to vector<1x128xf32>
    %1148 = arith.mulf %1147, %1146 : vector<1x128xf32>
    %cst_297 = arith.constant 5.000000e-01 : f32
    %1149 = vector.broadcast %cst_297 : f32 to vector<1x128xf32>
    %1150 = arith.addf %1148, %1149 : vector<1x128xf32>
    %1151 = arith.select %18, %1146, %1150 : vector<1x128xi1>, vector<1x128xf32>
    %1152 = vector.extract_strided_slice %1151 {offsets = [0, 0], sizes = [1, 32], strides = [1, 1]} : vector<1x128xf32> to vector<1x32xf32>
    %1153 = vector.extract_strided_slice %1151 {offsets = [0, 32], sizes = [1, 32], strides = [1, 1]} : vector<1x128xf32> to vector<1x32xf32>
    %1154 = vector.extract_strided_slice %1151 {offsets = [0, 64], sizes = [1, 32], strides = [1, 1]} : vector<1x128xf32> to vector<1x32xf32>
    %1155 = vector.extract_strided_slice %1151 {offsets = [0, 96], sizes = [1, 32], strides = [1, 1]} : vector<1x128xf32> to vector<1x32xf32>
    %1156 = arith.mulf %1153, %1111 : vector<1x32xf32>
    %1157 = arith.mulf %1152, %1154 : vector<1x32xf32>
    %1158 = arith.addf %1156, %1157 : vector<1x32xf32>
    %1159 = math.tanh %1158 : vector<1x32xf32>
    %1160 = arith.mulf %1155, %1159 : vector<1x32xf32>
    %c45_i32_298 = arith.constant 45 : i32
    %1161 = arith.cmpi slt, %c21_i32, %c45_i32_298 : i32
    %1162 = arith.select %1161, %1160, %1110 : vector<1x32xf32>
    %1163 = arith.select %1161, %1158, %1111 : vector<1x32xf32>
    %c22_i32 = arith.constant 22 : i32
    %1164 = tpu.concatenate %1162, %1136 in 1 : vector<1x32xf32>, vector<1x32xf32> -> vector<1x64xf32>
    %cst_299 = arith.constant dense<0.000000e+00> : vector<1x128xf32>
    %1165 = tpu.matmul %1164, %11, %cst_299 {dimension_numbers = #tpu.dot_dimension_numbers<[1], [0], [0], [1], [0, 0, 1, 1], [], []>} : vector<1x64xf32>, vector<64x128xf32>, vector<1x128xf32> -> vector<1x128xf32>
    %1166 = arith.addf %1165, %12 : vector<1x128xf32>
    %cst_300 = arith.constant 5.000000e-01 : f32
    %1167 = vector.broadcast %cst_300 : f32 to vector<1x128xf32>
    %1168 = arith.mulf %1167, %1166 : vector<1x128xf32>
    %1169 = arith.select %18, %1166, %1168 : vector<1x128xi1>, vector<1x128xf32>
    %1170 = math.tanh %1169 : vector<1x128xf32>
    %cst_301 = arith.constant 5.000000e-01 : f32
    %1171 = vector.broadcast %cst_301 : f32 to vector<1x128xf32>
    %1172 = arith.mulf %1171, %1170 : vector<1x128xf32>
    %cst_302 = arith.constant 5.000000e-01 : f32
    %1173 = vector.broadcast %cst_302 : f32 to vector<1x128xf32>
    %1174 = arith.addf %1172, %1173 : vector<1x128xf32>
    %1175 = arith.select %18, %1170, %1174 : vector<1x128xi1>, vector<1x128xf32>
    %1176 = vector.extract_strided_slice %1175 {offsets = [0, 0], sizes = [1, 32], strides = [1, 1]} : vector<1x128xf32> to vector<1x32xf32>
    %1177 = vector.extract_strided_slice %1175 {offsets = [0, 32], sizes = [1, 32], strides = [1, 1]} : vector<1x128xf32> to vector<1x32xf32>
    %1178 = vector.extract_strided_slice %1175 {offsets = [0, 64], sizes = [1, 32], strides = [1, 1]} : vector<1x128xf32> to vector<1x32xf32>
    %1179 = vector.extract_strided_slice %1175 {offsets = [0, 96], sizes = [1, 32], strides = [1, 1]} : vector<1x128xf32> to vector<1x32xf32>
    %1180 = arith.mulf %1177, %1137 : vector<1x32xf32>
    %1181 = arith.mulf %1176, %1178 : vector<1x32xf32>
    %1182 = arith.addf %1180, %1181 : vector<1x32xf32>
    %1183 = math.tanh %1182 : vector<1x32xf32>
    %1184 = arith.mulf %1179, %1183 : vector<1x32xf32>
    %c1_i32_303 = arith.constant 1 : i32
    %1185 = arith.cmpi sge, %c22_i32, %c1_i32_303 : i32
    %c46_i32_304 = arith.constant 46 : i32
    %1186 = arith.cmpi slt, %c22_i32, %c46_i32_304 : i32
    %1187 = arith.andi %1185, %1186 : i1
    %1188 = arith.select %1187, %1184, %1136 : vector<1x32xf32>
    %1189 = arith.select %1187, %1182, %1137 : vector<1x32xf32>
    %c44_i32_305 = arith.constant 44 : i32
    %1190 = arith.minsi %c22_i32, %c44_i32_305 : i32
    %1191 = arith.index_cast %1190 : i32 to index
    %c0_306 = arith.constant 0 : index
    %1192 = vector.load %arg10[%1191, %c0_306] : memref<45x128xf32, #tpu.memory_space<vmem>>, vector<1x128xf32>
    %cst_307 = arith.constant dense<0.000000e+00> : vector<1x128xf32>
    %1193 = tpu.matmul %1162, %10, %cst_307 {dimension_numbers = #tpu.dot_dimension_numbers<[1], [0], [0], [1], [0, 0, 1, 1], [], []>} : vector<1x32xf32>, vector<32x128xf32>, vector<1x128xf32> -> vector<1x128xf32>
    %1194 = arith.addf %1192, %1193 : vector<1x128xf32>
    %cst_308 = arith.constant 5.000000e-01 : f32
    %1195 = vector.broadcast %cst_308 : f32 to vector<1x128xf32>
    %1196 = arith.mulf %1195, %1194 : vector<1x128xf32>
    %1197 = arith.select %18, %1194, %1196 : vector<1x128xi1>, vector<1x128xf32>
    %1198 = math.tanh %1197 : vector<1x128xf32>
    %cst_309 = arith.constant 5.000000e-01 : f32
    %1199 = vector.broadcast %cst_309 : f32 to vector<1x128xf32>
    %1200 = arith.mulf %1199, %1198 : vector<1x128xf32>
    %cst_310 = arith.constant 5.000000e-01 : f32
    %1201 = vector.broadcast %cst_310 : f32 to vector<1x128xf32>
    %1202 = arith.addf %1200, %1201 : vector<1x128xf32>
    %1203 = arith.select %18, %1198, %1202 : vector<1x128xi1>, vector<1x128xf32>
    %1204 = vector.extract_strided_slice %1203 {offsets = [0, 0], sizes = [1, 32], strides = [1, 1]} : vector<1x128xf32> to vector<1x32xf32>
    %1205 = vector.extract_strided_slice %1203 {offsets = [0, 32], sizes = [1, 32], strides = [1, 1]} : vector<1x128xf32> to vector<1x32xf32>
    %1206 = vector.extract_strided_slice %1203 {offsets = [0, 64], sizes = [1, 32], strides = [1, 1]} : vector<1x128xf32> to vector<1x32xf32>
    %1207 = vector.extract_strided_slice %1203 {offsets = [0, 96], sizes = [1, 32], strides = [1, 1]} : vector<1x128xf32> to vector<1x32xf32>
    %1208 = arith.mulf %1205, %1163 : vector<1x32xf32>
    %1209 = arith.mulf %1204, %1206 : vector<1x32xf32>
    %1210 = arith.addf %1208, %1209 : vector<1x32xf32>
    %1211 = math.tanh %1210 : vector<1x32xf32>
    %1212 = arith.mulf %1207, %1211 : vector<1x32xf32>
    %c45_i32_311 = arith.constant 45 : i32
    %1213 = arith.cmpi slt, %c22_i32, %c45_i32_311 : i32
    %1214 = arith.select %1213, %1212, %1162 : vector<1x32xf32>
    %1215 = arith.select %1213, %1210, %1163 : vector<1x32xf32>
    %c23_i32 = arith.constant 23 : i32
    %1216 = tpu.concatenate %1214, %1188 in 1 : vector<1x32xf32>, vector<1x32xf32> -> vector<1x64xf32>
    %cst_312 = arith.constant dense<0.000000e+00> : vector<1x128xf32>
    %1217 = tpu.matmul %1216, %11, %cst_312 {dimension_numbers = #tpu.dot_dimension_numbers<[1], [0], [0], [1], [0, 0, 1, 1], [], []>} : vector<1x64xf32>, vector<64x128xf32>, vector<1x128xf32> -> vector<1x128xf32>
    %1218 = arith.addf %1217, %12 : vector<1x128xf32>
    %cst_313 = arith.constant 5.000000e-01 : f32
    %1219 = vector.broadcast %cst_313 : f32 to vector<1x128xf32>
    %1220 = arith.mulf %1219, %1218 : vector<1x128xf32>
    %1221 = arith.select %18, %1218, %1220 : vector<1x128xi1>, vector<1x128xf32>
    %1222 = math.tanh %1221 : vector<1x128xf32>
    %cst_314 = arith.constant 5.000000e-01 : f32
    %1223 = vector.broadcast %cst_314 : f32 to vector<1x128xf32>
    %1224 = arith.mulf %1223, %1222 : vector<1x128xf32>
    %cst_315 = arith.constant 5.000000e-01 : f32
    %1225 = vector.broadcast %cst_315 : f32 to vector<1x128xf32>
    %1226 = arith.addf %1224, %1225 : vector<1x128xf32>
    %1227 = arith.select %18, %1222, %1226 : vector<1x128xi1>, vector<1x128xf32>
    %1228 = vector.extract_strided_slice %1227 {offsets = [0, 0], sizes = [1, 32], strides = [1, 1]} : vector<1x128xf32> to vector<1x32xf32>
    %1229 = vector.extract_strided_slice %1227 {offsets = [0, 32], sizes = [1, 32], strides = [1, 1]} : vector<1x128xf32> to vector<1x32xf32>
    %1230 = vector.extract_strided_slice %1227 {offsets = [0, 64], sizes = [1, 32], strides = [1, 1]} : vector<1x128xf32> to vector<1x32xf32>
    %1231 = vector.extract_strided_slice %1227 {offsets = [0, 96], sizes = [1, 32], strides = [1, 1]} : vector<1x128xf32> to vector<1x32xf32>
    %1232 = arith.mulf %1229, %1189 : vector<1x32xf32>
    %1233 = arith.mulf %1228, %1230 : vector<1x32xf32>
    %1234 = arith.addf %1232, %1233 : vector<1x32xf32>
    %1235 = math.tanh %1234 : vector<1x32xf32>
    %1236 = arith.mulf %1231, %1235 : vector<1x32xf32>
    %c1_i32_316 = arith.constant 1 : i32
    %1237 = arith.cmpi sge, %c23_i32, %c1_i32_316 : i32
    %c46_i32_317 = arith.constant 46 : i32
    %1238 = arith.cmpi slt, %c23_i32, %c46_i32_317 : i32
    %1239 = arith.andi %1237, %1238 : i1
    %1240 = arith.select %1239, %1236, %1188 : vector<1x32xf32>
    %1241 = arith.select %1239, %1234, %1189 : vector<1x32xf32>
    %c44_i32_318 = arith.constant 44 : i32
    %1242 = arith.minsi %c23_i32, %c44_i32_318 : i32
    %1243 = arith.index_cast %1242 : i32 to index
    %c0_319 = arith.constant 0 : index
    %1244 = vector.load %arg10[%1243, %c0_319] : memref<45x128xf32, #tpu.memory_space<vmem>>, vector<1x128xf32>
    %cst_320 = arith.constant dense<0.000000e+00> : vector<1x128xf32>
    %1245 = tpu.matmul %1214, %10, %cst_320 {dimension_numbers = #tpu.dot_dimension_numbers<[1], [0], [0], [1], [0, 0, 1, 1], [], []>} : vector<1x32xf32>, vector<32x128xf32>, vector<1x128xf32> -> vector<1x128xf32>
    %1246 = arith.addf %1244, %1245 : vector<1x128xf32>
    %cst_321 = arith.constant 5.000000e-01 : f32
    %1247 = vector.broadcast %cst_321 : f32 to vector<1x128xf32>
    %1248 = arith.mulf %1247, %1246 : vector<1x128xf32>
    %1249 = arith.select %18, %1246, %1248 : vector<1x128xi1>, vector<1x128xf32>
    %1250 = math.tanh %1249 : vector<1x128xf32>
    %cst_322 = arith.constant 5.000000e-01 : f32
    %1251 = vector.broadcast %cst_322 : f32 to vector<1x128xf32>
    %1252 = arith.mulf %1251, %1250 : vector<1x128xf32>
    %cst_323 = arith.constant 5.000000e-01 : f32
    %1253 = vector.broadcast %cst_323 : f32 to vector<1x128xf32>
    %1254 = arith.addf %1252, %1253 : vector<1x128xf32>
    %1255 = arith.select %18, %1250, %1254 : vector<1x128xi1>, vector<1x128xf32>
    %1256 = vector.extract_strided_slice %1255 {offsets = [0, 0], sizes = [1, 32], strides = [1, 1]} : vector<1x128xf32> to vector<1x32xf32>
    %1257 = vector.extract_strided_slice %1255 {offsets = [0, 32], sizes = [1, 32], strides = [1, 1]} : vector<1x128xf32> to vector<1x32xf32>
    %1258 = vector.extract_strided_slice %1255 {offsets = [0, 64], sizes = [1, 32], strides = [1, 1]} : vector<1x128xf32> to vector<1x32xf32>
    %1259 = vector.extract_strided_slice %1255 {offsets = [0, 96], sizes = [1, 32], strides = [1, 1]} : vector<1x128xf32> to vector<1x32xf32>
    %1260 = arith.mulf %1257, %1215 : vector<1x32xf32>
    %1261 = arith.mulf %1256, %1258 : vector<1x32xf32>
    %1262 = arith.addf %1260, %1261 : vector<1x32xf32>
    %1263 = math.tanh %1262 : vector<1x32xf32>
    %1264 = arith.mulf %1259, %1263 : vector<1x32xf32>
    %c45_i32_324 = arith.constant 45 : i32
    %1265 = arith.cmpi slt, %c23_i32, %c45_i32_324 : i32
    %1266 = arith.select %1265, %1264, %1214 : vector<1x32xf32>
    %1267 = arith.select %1265, %1262, %1215 : vector<1x32xf32>
    %c24_i32 = arith.constant 24 : i32
    %1268 = tpu.concatenate %1266, %1240 in 1 : vector<1x32xf32>, vector<1x32xf32> -> vector<1x64xf32>
    %cst_325 = arith.constant dense<0.000000e+00> : vector<1x128xf32>
    %1269 = tpu.matmul %1268, %11, %cst_325 {dimension_numbers = #tpu.dot_dimension_numbers<[1], [0], [0], [1], [0, 0, 1, 1], [], []>} : vector<1x64xf32>, vector<64x128xf32>, vector<1x128xf32> -> vector<1x128xf32>
    %1270 = arith.addf %1269, %12 : vector<1x128xf32>
    %cst_326 = arith.constant 5.000000e-01 : f32
    %1271 = vector.broadcast %cst_326 : f32 to vector<1x128xf32>
    %1272 = arith.mulf %1271, %1270 : vector<1x128xf32>
    %1273 = arith.select %18, %1270, %1272 : vector<1x128xi1>, vector<1x128xf32>
    %1274 = math.tanh %1273 : vector<1x128xf32>
    %cst_327 = arith.constant 5.000000e-01 : f32
    %1275 = vector.broadcast %cst_327 : f32 to vector<1x128xf32>
    %1276 = arith.mulf %1275, %1274 : vector<1x128xf32>
    %cst_328 = arith.constant 5.000000e-01 : f32
    %1277 = vector.broadcast %cst_328 : f32 to vector<1x128xf32>
    %1278 = arith.addf %1276, %1277 : vector<1x128xf32>
    %1279 = arith.select %18, %1274, %1278 : vector<1x128xi1>, vector<1x128xf32>
    %1280 = vector.extract_strided_slice %1279 {offsets = [0, 0], sizes = [1, 32], strides = [1, 1]} : vector<1x128xf32> to vector<1x32xf32>
    %1281 = vector.extract_strided_slice %1279 {offsets = [0, 32], sizes = [1, 32], strides = [1, 1]} : vector<1x128xf32> to vector<1x32xf32>
    %1282 = vector.extract_strided_slice %1279 {offsets = [0, 64], sizes = [1, 32], strides = [1, 1]} : vector<1x128xf32> to vector<1x32xf32>
    %1283 = vector.extract_strided_slice %1279 {offsets = [0, 96], sizes = [1, 32], strides = [1, 1]} : vector<1x128xf32> to vector<1x32xf32>
    %1284 = arith.mulf %1281, %1241 : vector<1x32xf32>
    %1285 = arith.mulf %1280, %1282 : vector<1x32xf32>
    %1286 = arith.addf %1284, %1285 : vector<1x32xf32>
    %1287 = math.tanh %1286 : vector<1x32xf32>
    %1288 = arith.mulf %1283, %1287 : vector<1x32xf32>
    %c1_i32_329 = arith.constant 1 : i32
    %1289 = arith.cmpi sge, %c24_i32, %c1_i32_329 : i32
    %c46_i32_330 = arith.constant 46 : i32
    %1290 = arith.cmpi slt, %c24_i32, %c46_i32_330 : i32
    %1291 = arith.andi %1289, %1290 : i1
    %1292 = arith.select %1291, %1288, %1240 : vector<1x32xf32>
    %1293 = arith.select %1291, %1286, %1241 : vector<1x32xf32>
    %c44_i32_331 = arith.constant 44 : i32
    %1294 = arith.minsi %c24_i32, %c44_i32_331 : i32
    %1295 = arith.index_cast %1294 : i32 to index
    %c0_332 = arith.constant 0 : index
    %1296 = vector.load %arg10[%1295, %c0_332] : memref<45x128xf32, #tpu.memory_space<vmem>>, vector<1x128xf32>
    %cst_333 = arith.constant dense<0.000000e+00> : vector<1x128xf32>
    %1297 = tpu.matmul %1266, %10, %cst_333 {dimension_numbers = #tpu.dot_dimension_numbers<[1], [0], [0], [1], [0, 0, 1, 1], [], []>} : vector<1x32xf32>, vector<32x128xf32>, vector<1x128xf32> -> vector<1x128xf32>
    %1298 = arith.addf %1296, %1297 : vector<1x128xf32>
    %cst_334 = arith.constant 5.000000e-01 : f32
    %1299 = vector.broadcast %cst_334 : f32 to vector<1x128xf32>
    %1300 = arith.mulf %1299, %1298 : vector<1x128xf32>
    %1301 = arith.select %18, %1298, %1300 : vector<1x128xi1>, vector<1x128xf32>
    %1302 = math.tanh %1301 : vector<1x128xf32>
    %cst_335 = arith.constant 5.000000e-01 : f32
    %1303 = vector.broadcast %cst_335 : f32 to vector<1x128xf32>
    %1304 = arith.mulf %1303, %1302 : vector<1x128xf32>
    %cst_336 = arith.constant 5.000000e-01 : f32
    %1305 = vector.broadcast %cst_336 : f32 to vector<1x128xf32>
    %1306 = arith.addf %1304, %1305 : vector<1x128xf32>
    %1307 = arith.select %18, %1302, %1306 : vector<1x128xi1>, vector<1x128xf32>
    %1308 = vector.extract_strided_slice %1307 {offsets = [0, 0], sizes = [1, 32], strides = [1, 1]} : vector<1x128xf32> to vector<1x32xf32>
    %1309 = vector.extract_strided_slice %1307 {offsets = [0, 32], sizes = [1, 32], strides = [1, 1]} : vector<1x128xf32> to vector<1x32xf32>
    %1310 = vector.extract_strided_slice %1307 {offsets = [0, 64], sizes = [1, 32], strides = [1, 1]} : vector<1x128xf32> to vector<1x32xf32>
    %1311 = vector.extract_strided_slice %1307 {offsets = [0, 96], sizes = [1, 32], strides = [1, 1]} : vector<1x128xf32> to vector<1x32xf32>
    %1312 = arith.mulf %1309, %1267 : vector<1x32xf32>
    %1313 = arith.mulf %1308, %1310 : vector<1x32xf32>
    %1314 = arith.addf %1312, %1313 : vector<1x32xf32>
    %1315 = math.tanh %1314 : vector<1x32xf32>
    %1316 = arith.mulf %1311, %1315 : vector<1x32xf32>
    %c45_i32_337 = arith.constant 45 : i32
    %1317 = arith.cmpi slt, %c24_i32, %c45_i32_337 : i32
    %1318 = arith.select %1317, %1316, %1266 : vector<1x32xf32>
    %1319 = arith.select %1317, %1314, %1267 : vector<1x32xf32>
    %c25_i32 = arith.constant 25 : i32
    %1320 = tpu.concatenate %1318, %1292 in 1 : vector<1x32xf32>, vector<1x32xf32> -> vector<1x64xf32>
    %cst_338 = arith.constant dense<0.000000e+00> : vector<1x128xf32>
    %1321 = tpu.matmul %1320, %11, %cst_338 {dimension_numbers = #tpu.dot_dimension_numbers<[1], [0], [0], [1], [0, 0, 1, 1], [], []>} : vector<1x64xf32>, vector<64x128xf32>, vector<1x128xf32> -> vector<1x128xf32>
    %1322 = arith.addf %1321, %12 : vector<1x128xf32>
    %cst_339 = arith.constant 5.000000e-01 : f32
    %1323 = vector.broadcast %cst_339 : f32 to vector<1x128xf32>
    %1324 = arith.mulf %1323, %1322 : vector<1x128xf32>
    %1325 = arith.select %18, %1322, %1324 : vector<1x128xi1>, vector<1x128xf32>
    %1326 = math.tanh %1325 : vector<1x128xf32>
    %cst_340 = arith.constant 5.000000e-01 : f32
    %1327 = vector.broadcast %cst_340 : f32 to vector<1x128xf32>
    %1328 = arith.mulf %1327, %1326 : vector<1x128xf32>
    %cst_341 = arith.constant 5.000000e-01 : f32
    %1329 = vector.broadcast %cst_341 : f32 to vector<1x128xf32>
    %1330 = arith.addf %1328, %1329 : vector<1x128xf32>
    %1331 = arith.select %18, %1326, %1330 : vector<1x128xi1>, vector<1x128xf32>
    %1332 = vector.extract_strided_slice %1331 {offsets = [0, 0], sizes = [1, 32], strides = [1, 1]} : vector<1x128xf32> to vector<1x32xf32>
    %1333 = vector.extract_strided_slice %1331 {offsets = [0, 32], sizes = [1, 32], strides = [1, 1]} : vector<1x128xf32> to vector<1x32xf32>
    %1334 = vector.extract_strided_slice %1331 {offsets = [0, 64], sizes = [1, 32], strides = [1, 1]} : vector<1x128xf32> to vector<1x32xf32>
    %1335 = vector.extract_strided_slice %1331 {offsets = [0, 96], sizes = [1, 32], strides = [1, 1]} : vector<1x128xf32> to vector<1x32xf32>
    %1336 = arith.mulf %1333, %1293 : vector<1x32xf32>
    %1337 = arith.mulf %1332, %1334 : vector<1x32xf32>
    %1338 = arith.addf %1336, %1337 : vector<1x32xf32>
    %1339 = math.tanh %1338 : vector<1x32xf32>
    %1340 = arith.mulf %1335, %1339 : vector<1x32xf32>
    %c1_i32_342 = arith.constant 1 : i32
    %1341 = arith.cmpi sge, %c25_i32, %c1_i32_342 : i32
    %c46_i32_343 = arith.constant 46 : i32
    %1342 = arith.cmpi slt, %c25_i32, %c46_i32_343 : i32
    %1343 = arith.andi %1341, %1342 : i1
    %1344 = arith.select %1343, %1340, %1292 : vector<1x32xf32>
    %1345 = arith.select %1343, %1338, %1293 : vector<1x32xf32>
    %c44_i32_344 = arith.constant 44 : i32
    %1346 = arith.minsi %c25_i32, %c44_i32_344 : i32
    %1347 = arith.index_cast %1346 : i32 to index
    %c0_345 = arith.constant 0 : index
    %1348 = vector.load %arg10[%1347, %c0_345] : memref<45x128xf32, #tpu.memory_space<vmem>>, vector<1x128xf32>
    %cst_346 = arith.constant dense<0.000000e+00> : vector<1x128xf32>
    %1349 = tpu.matmul %1318, %10, %cst_346 {dimension_numbers = #tpu.dot_dimension_numbers<[1], [0], [0], [1], [0, 0, 1, 1], [], []>} : vector<1x32xf32>, vector<32x128xf32>, vector<1x128xf32> -> vector<1x128xf32>
    %1350 = arith.addf %1348, %1349 : vector<1x128xf32>
    %cst_347 = arith.constant 5.000000e-01 : f32
    %1351 = vector.broadcast %cst_347 : f32 to vector<1x128xf32>
    %1352 = arith.mulf %1351, %1350 : vector<1x128xf32>
    %1353 = arith.select %18, %1350, %1352 : vector<1x128xi1>, vector<1x128xf32>
    %1354 = math.tanh %1353 : vector<1x128xf32>
    %cst_348 = arith.constant 5.000000e-01 : f32
    %1355 = vector.broadcast %cst_348 : f32 to vector<1x128xf32>
    %1356 = arith.mulf %1355, %1354 : vector<1x128xf32>
    %cst_349 = arith.constant 5.000000e-01 : f32
    %1357 = vector.broadcast %cst_349 : f32 to vector<1x128xf32>
    %1358 = arith.addf %1356, %1357 : vector<1x128xf32>
    %1359 = arith.select %18, %1354, %1358 : vector<1x128xi1>, vector<1x128xf32>
    %1360 = vector.extract_strided_slice %1359 {offsets = [0, 0], sizes = [1, 32], strides = [1, 1]} : vector<1x128xf32> to vector<1x32xf32>
    %1361 = vector.extract_strided_slice %1359 {offsets = [0, 32], sizes = [1, 32], strides = [1, 1]} : vector<1x128xf32> to vector<1x32xf32>
    %1362 = vector.extract_strided_slice %1359 {offsets = [0, 64], sizes = [1, 32], strides = [1, 1]} : vector<1x128xf32> to vector<1x32xf32>
    %1363 = vector.extract_strided_slice %1359 {offsets = [0, 96], sizes = [1, 32], strides = [1, 1]} : vector<1x128xf32> to vector<1x32xf32>
    %1364 = arith.mulf %1361, %1319 : vector<1x32xf32>
    %1365 = arith.mulf %1360, %1362 : vector<1x32xf32>
    %1366 = arith.addf %1364, %1365 : vector<1x32xf32>
    %1367 = math.tanh %1366 : vector<1x32xf32>
    %1368 = arith.mulf %1363, %1367 : vector<1x32xf32>
    %c45_i32_350 = arith.constant 45 : i32
    %1369 = arith.cmpi slt, %c25_i32, %c45_i32_350 : i32
    %1370 = arith.select %1369, %1368, %1318 : vector<1x32xf32>
    %1371 = arith.select %1369, %1366, %1319 : vector<1x32xf32>
    %c26_i32 = arith.constant 26 : i32
    %1372 = tpu.concatenate %1370, %1344 in 1 : vector<1x32xf32>, vector<1x32xf32> -> vector<1x64xf32>
    %cst_351 = arith.constant dense<0.000000e+00> : vector<1x128xf32>
    %1373 = tpu.matmul %1372, %11, %cst_351 {dimension_numbers = #tpu.dot_dimension_numbers<[1], [0], [0], [1], [0, 0, 1, 1], [], []>} : vector<1x64xf32>, vector<64x128xf32>, vector<1x128xf32> -> vector<1x128xf32>
    %1374 = arith.addf %1373, %12 : vector<1x128xf32>
    %cst_352 = arith.constant 5.000000e-01 : f32
    %1375 = vector.broadcast %cst_352 : f32 to vector<1x128xf32>
    %1376 = arith.mulf %1375, %1374 : vector<1x128xf32>
    %1377 = arith.select %18, %1374, %1376 : vector<1x128xi1>, vector<1x128xf32>
    %1378 = math.tanh %1377 : vector<1x128xf32>
    %cst_353 = arith.constant 5.000000e-01 : f32
    %1379 = vector.broadcast %cst_353 : f32 to vector<1x128xf32>
    %1380 = arith.mulf %1379, %1378 : vector<1x128xf32>
    %cst_354 = arith.constant 5.000000e-01 : f32
    %1381 = vector.broadcast %cst_354 : f32 to vector<1x128xf32>
    %1382 = arith.addf %1380, %1381 : vector<1x128xf32>
    %1383 = arith.select %18, %1378, %1382 : vector<1x128xi1>, vector<1x128xf32>
    %1384 = vector.extract_strided_slice %1383 {offsets = [0, 0], sizes = [1, 32], strides = [1, 1]} : vector<1x128xf32> to vector<1x32xf32>
    %1385 = vector.extract_strided_slice %1383 {offsets = [0, 32], sizes = [1, 32], strides = [1, 1]} : vector<1x128xf32> to vector<1x32xf32>
    %1386 = vector.extract_strided_slice %1383 {offsets = [0, 64], sizes = [1, 32], strides = [1, 1]} : vector<1x128xf32> to vector<1x32xf32>
    %1387 = vector.extract_strided_slice %1383 {offsets = [0, 96], sizes = [1, 32], strides = [1, 1]} : vector<1x128xf32> to vector<1x32xf32>
    %1388 = arith.mulf %1385, %1345 : vector<1x32xf32>
    %1389 = arith.mulf %1384, %1386 : vector<1x32xf32>
    %1390 = arith.addf %1388, %1389 : vector<1x32xf32>
    %1391 = math.tanh %1390 : vector<1x32xf32>
    %1392 = arith.mulf %1387, %1391 : vector<1x32xf32>
    %c1_i32_355 = arith.constant 1 : i32
    %1393 = arith.cmpi sge, %c26_i32, %c1_i32_355 : i32
    %c46_i32_356 = arith.constant 46 : i32
    %1394 = arith.cmpi slt, %c26_i32, %c46_i32_356 : i32
    %1395 = arith.andi %1393, %1394 : i1
    %1396 = arith.select %1395, %1392, %1344 : vector<1x32xf32>
    %1397 = arith.select %1395, %1390, %1345 : vector<1x32xf32>
    %c44_i32_357 = arith.constant 44 : i32
    %1398 = arith.minsi %c26_i32, %c44_i32_357 : i32
    %1399 = arith.index_cast %1398 : i32 to index
    %c0_358 = arith.constant 0 : index
    %1400 = vector.load %arg10[%1399, %c0_358] : memref<45x128xf32, #tpu.memory_space<vmem>>, vector<1x128xf32>
    %cst_359 = arith.constant dense<0.000000e+00> : vector<1x128xf32>
    %1401 = tpu.matmul %1370, %10, %cst_359 {dimension_numbers = #tpu.dot_dimension_numbers<[1], [0], [0], [1], [0, 0, 1, 1], [], []>} : vector<1x32xf32>, vector<32x128xf32>, vector<1x128xf32> -> vector<1x128xf32>
    %1402 = arith.addf %1400, %1401 : vector<1x128xf32>
    %cst_360 = arith.constant 5.000000e-01 : f32
    %1403 = vector.broadcast %cst_360 : f32 to vector<1x128xf32>
    %1404 = arith.mulf %1403, %1402 : vector<1x128xf32>
    %1405 = arith.select %18, %1402, %1404 : vector<1x128xi1>, vector<1x128xf32>
    %1406 = math.tanh %1405 : vector<1x128xf32>
    %cst_361 = arith.constant 5.000000e-01 : f32
    %1407 = vector.broadcast %cst_361 : f32 to vector<1x128xf32>
    %1408 = arith.mulf %1407, %1406 : vector<1x128xf32>
    %cst_362 = arith.constant 5.000000e-01 : f32
    %1409 = vector.broadcast %cst_362 : f32 to vector<1x128xf32>
    %1410 = arith.addf %1408, %1409 : vector<1x128xf32>
    %1411 = arith.select %18, %1406, %1410 : vector<1x128xi1>, vector<1x128xf32>
    %1412 = vector.extract_strided_slice %1411 {offsets = [0, 0], sizes = [1, 32], strides = [1, 1]} : vector<1x128xf32> to vector<1x32xf32>
    %1413 = vector.extract_strided_slice %1411 {offsets = [0, 32], sizes = [1, 32], strides = [1, 1]} : vector<1x128xf32> to vector<1x32xf32>
    %1414 = vector.extract_strided_slice %1411 {offsets = [0, 64], sizes = [1, 32], strides = [1, 1]} : vector<1x128xf32> to vector<1x32xf32>
    %1415 = vector.extract_strided_slice %1411 {offsets = [0, 96], sizes = [1, 32], strides = [1, 1]} : vector<1x128xf32> to vector<1x32xf32>
    %1416 = arith.mulf %1413, %1371 : vector<1x32xf32>
    %1417 = arith.mulf %1412, %1414 : vector<1x32xf32>
    %1418 = arith.addf %1416, %1417 : vector<1x32xf32>
    %1419 = math.tanh %1418 : vector<1x32xf32>
    %1420 = arith.mulf %1415, %1419 : vector<1x32xf32>
    %c45_i32_363 = arith.constant 45 : i32
    %1421 = arith.cmpi slt, %c26_i32, %c45_i32_363 : i32
    %1422 = arith.select %1421, %1420, %1370 : vector<1x32xf32>
    %1423 = arith.select %1421, %1418, %1371 : vector<1x32xf32>
    %c27_i32 = arith.constant 27 : i32
    %1424 = tpu.concatenate %1422, %1396 in 1 : vector<1x32xf32>, vector<1x32xf32> -> vector<1x64xf32>
    %cst_364 = arith.constant dense<0.000000e+00> : vector<1x128xf32>
    %1425 = tpu.matmul %1424, %11, %cst_364 {dimension_numbers = #tpu.dot_dimension_numbers<[1], [0], [0], [1], [0, 0, 1, 1], [], []>} : vector<1x64xf32>, vector<64x128xf32>, vector<1x128xf32> -> vector<1x128xf32>
    %1426 = arith.addf %1425, %12 : vector<1x128xf32>
    %cst_365 = arith.constant 5.000000e-01 : f32
    %1427 = vector.broadcast %cst_365 : f32 to vector<1x128xf32>
    %1428 = arith.mulf %1427, %1426 : vector<1x128xf32>
    %1429 = arith.select %18, %1426, %1428 : vector<1x128xi1>, vector<1x128xf32>
    %1430 = math.tanh %1429 : vector<1x128xf32>
    %cst_366 = arith.constant 5.000000e-01 : f32
    %1431 = vector.broadcast %cst_366 : f32 to vector<1x128xf32>
    %1432 = arith.mulf %1431, %1430 : vector<1x128xf32>
    %cst_367 = arith.constant 5.000000e-01 : f32
    %1433 = vector.broadcast %cst_367 : f32 to vector<1x128xf32>
    %1434 = arith.addf %1432, %1433 : vector<1x128xf32>
    %1435 = arith.select %18, %1430, %1434 : vector<1x128xi1>, vector<1x128xf32>
    %1436 = vector.extract_strided_slice %1435 {offsets = [0, 0], sizes = [1, 32], strides = [1, 1]} : vector<1x128xf32> to vector<1x32xf32>
    %1437 = vector.extract_strided_slice %1435 {offsets = [0, 32], sizes = [1, 32], strides = [1, 1]} : vector<1x128xf32> to vector<1x32xf32>
    %1438 = vector.extract_strided_slice %1435 {offsets = [0, 64], sizes = [1, 32], strides = [1, 1]} : vector<1x128xf32> to vector<1x32xf32>
    %1439 = vector.extract_strided_slice %1435 {offsets = [0, 96], sizes = [1, 32], strides = [1, 1]} : vector<1x128xf32> to vector<1x32xf32>
    %1440 = arith.mulf %1437, %1397 : vector<1x32xf32>
    %1441 = arith.mulf %1436, %1438 : vector<1x32xf32>
    %1442 = arith.addf %1440, %1441 : vector<1x32xf32>
    %1443 = math.tanh %1442 : vector<1x32xf32>
    %1444 = arith.mulf %1439, %1443 : vector<1x32xf32>
    %c1_i32_368 = arith.constant 1 : i32
    %1445 = arith.cmpi sge, %c27_i32, %c1_i32_368 : i32
    %c46_i32_369 = arith.constant 46 : i32
    %1446 = arith.cmpi slt, %c27_i32, %c46_i32_369 : i32
    %1447 = arith.andi %1445, %1446 : i1
    %1448 = arith.select %1447, %1444, %1396 : vector<1x32xf32>
    %1449 = arith.select %1447, %1442, %1397 : vector<1x32xf32>
    %c44_i32_370 = arith.constant 44 : i32
    %1450 = arith.minsi %c27_i32, %c44_i32_370 : i32
    %1451 = arith.index_cast %1450 : i32 to index
    %c0_371 = arith.constant 0 : index
    %1452 = vector.load %arg10[%1451, %c0_371] : memref<45x128xf32, #tpu.memory_space<vmem>>, vector<1x128xf32>
    %cst_372 = arith.constant dense<0.000000e+00> : vector<1x128xf32>
    %1453 = tpu.matmul %1422, %10, %cst_372 {dimension_numbers = #tpu.dot_dimension_numbers<[1], [0], [0], [1], [0, 0, 1, 1], [], []>} : vector<1x32xf32>, vector<32x128xf32>, vector<1x128xf32> -> vector<1x128xf32>
    %1454 = arith.addf %1452, %1453 : vector<1x128xf32>
    %cst_373 = arith.constant 5.000000e-01 : f32
    %1455 = vector.broadcast %cst_373 : f32 to vector<1x128xf32>
    %1456 = arith.mulf %1455, %1454 : vector<1x128xf32>
    %1457 = arith.select %18, %1454, %1456 : vector<1x128xi1>, vector<1x128xf32>
    %1458 = math.tanh %1457 : vector<1x128xf32>
    %cst_374 = arith.constant 5.000000e-01 : f32
    %1459 = vector.broadcast %cst_374 : f32 to vector<1x128xf32>
    %1460 = arith.mulf %1459, %1458 : vector<1x128xf32>
    %cst_375 = arith.constant 5.000000e-01 : f32
    %1461 = vector.broadcast %cst_375 : f32 to vector<1x128xf32>
    %1462 = arith.addf %1460, %1461 : vector<1x128xf32>
    %1463 = arith.select %18, %1458, %1462 : vector<1x128xi1>, vector<1x128xf32>
    %1464 = vector.extract_strided_slice %1463 {offsets = [0, 0], sizes = [1, 32], strides = [1, 1]} : vector<1x128xf32> to vector<1x32xf32>
    %1465 = vector.extract_strided_slice %1463 {offsets = [0, 32], sizes = [1, 32], strides = [1, 1]} : vector<1x128xf32> to vector<1x32xf32>
    %1466 = vector.extract_strided_slice %1463 {offsets = [0, 64], sizes = [1, 32], strides = [1, 1]} : vector<1x128xf32> to vector<1x32xf32>
    %1467 = vector.extract_strided_slice %1463 {offsets = [0, 96], sizes = [1, 32], strides = [1, 1]} : vector<1x128xf32> to vector<1x32xf32>
    %1468 = arith.mulf %1465, %1423 : vector<1x32xf32>
    %1469 = arith.mulf %1464, %1466 : vector<1x32xf32>
    %1470 = arith.addf %1468, %1469 : vector<1x32xf32>
    %1471 = math.tanh %1470 : vector<1x32xf32>
    %1472 = arith.mulf %1467, %1471 : vector<1x32xf32>
    %c45_i32_376 = arith.constant 45 : i32
    %1473 = arith.cmpi slt, %c27_i32, %c45_i32_376 : i32
    %1474 = arith.select %1473, %1472, %1422 : vector<1x32xf32>
    %1475 = arith.select %1473, %1470, %1423 : vector<1x32xf32>
    %c28_i32 = arith.constant 28 : i32
    %1476 = tpu.concatenate %1474, %1448 in 1 : vector<1x32xf32>, vector<1x32xf32> -> vector<1x64xf32>
    %cst_377 = arith.constant dense<0.000000e+00> : vector<1x128xf32>
    %1477 = tpu.matmul %1476, %11, %cst_377 {dimension_numbers = #tpu.dot_dimension_numbers<[1], [0], [0], [1], [0, 0, 1, 1], [], []>} : vector<1x64xf32>, vector<64x128xf32>, vector<1x128xf32> -> vector<1x128xf32>
    %1478 = arith.addf %1477, %12 : vector<1x128xf32>
    %cst_378 = arith.constant 5.000000e-01 : f32
    %1479 = vector.broadcast %cst_378 : f32 to vector<1x128xf32>
    %1480 = arith.mulf %1479, %1478 : vector<1x128xf32>
    %1481 = arith.select %18, %1478, %1480 : vector<1x128xi1>, vector<1x128xf32>
    %1482 = math.tanh %1481 : vector<1x128xf32>
    %cst_379 = arith.constant 5.000000e-01 : f32
    %1483 = vector.broadcast %cst_379 : f32 to vector<1x128xf32>
    %1484 = arith.mulf %1483, %1482 : vector<1x128xf32>
    %cst_380 = arith.constant 5.000000e-01 : f32
    %1485 = vector.broadcast %cst_380 : f32 to vector<1x128xf32>
    %1486 = arith.addf %1484, %1485 : vector<1x128xf32>
    %1487 = arith.select %18, %1482, %1486 : vector<1x128xi1>, vector<1x128xf32>
    %1488 = vector.extract_strided_slice %1487 {offsets = [0, 0], sizes = [1, 32], strides = [1, 1]} : vector<1x128xf32> to vector<1x32xf32>
    %1489 = vector.extract_strided_slice %1487 {offsets = [0, 32], sizes = [1, 32], strides = [1, 1]} : vector<1x128xf32> to vector<1x32xf32>
    %1490 = vector.extract_strided_slice %1487 {offsets = [0, 64], sizes = [1, 32], strides = [1, 1]} : vector<1x128xf32> to vector<1x32xf32>
    %1491 = vector.extract_strided_slice %1487 {offsets = [0, 96], sizes = [1, 32], strides = [1, 1]} : vector<1x128xf32> to vector<1x32xf32>
    %1492 = arith.mulf %1489, %1449 : vector<1x32xf32>
    %1493 = arith.mulf %1488, %1490 : vector<1x32xf32>
    %1494 = arith.addf %1492, %1493 : vector<1x32xf32>
    %1495 = math.tanh %1494 : vector<1x32xf32>
    %1496 = arith.mulf %1491, %1495 : vector<1x32xf32>
    %c1_i32_381 = arith.constant 1 : i32
    %1497 = arith.cmpi sge, %c28_i32, %c1_i32_381 : i32
    %c46_i32_382 = arith.constant 46 : i32
    %1498 = arith.cmpi slt, %c28_i32, %c46_i32_382 : i32
    %1499 = arith.andi %1497, %1498 : i1
    %1500 = arith.select %1499, %1496, %1448 : vector<1x32xf32>
    %1501 = arith.select %1499, %1494, %1449 : vector<1x32xf32>
    %c44_i32_383 = arith.constant 44 : i32
    %1502 = arith.minsi %c28_i32, %c44_i32_383 : i32
    %1503 = arith.index_cast %1502 : i32 to index
    %c0_384 = arith.constant 0 : index
    %1504 = vector.load %arg10[%1503, %c0_384] : memref<45x128xf32, #tpu.memory_space<vmem>>, vector<1x128xf32>
    %cst_385 = arith.constant dense<0.000000e+00> : vector<1x128xf32>
    %1505 = tpu.matmul %1474, %10, %cst_385 {dimension_numbers = #tpu.dot_dimension_numbers<[1], [0], [0], [1], [0, 0, 1, 1], [], []>} : vector<1x32xf32>, vector<32x128xf32>, vector<1x128xf32> -> vector<1x128xf32>
    %1506 = arith.addf %1504, %1505 : vector<1x128xf32>
    %cst_386 = arith.constant 5.000000e-01 : f32
    %1507 = vector.broadcast %cst_386 : f32 to vector<1x128xf32>
    %1508 = arith.mulf %1507, %1506 : vector<1x128xf32>
    %1509 = arith.select %18, %1506, %1508 : vector<1x128xi1>, vector<1x128xf32>
    %1510 = math.tanh %1509 : vector<1x128xf32>
    %cst_387 = arith.constant 5.000000e-01 : f32
    %1511 = vector.broadcast %cst_387 : f32 to vector<1x128xf32>
    %1512 = arith.mulf %1511, %1510 : vector<1x128xf32>
    %cst_388 = arith.constant 5.000000e-01 : f32
    %1513 = vector.broadcast %cst_388 : f32 to vector<1x128xf32>
    %1514 = arith.addf %1512, %1513 : vector<1x128xf32>
    %1515 = arith.select %18, %1510, %1514 : vector<1x128xi1>, vector<1x128xf32>
    %1516 = vector.extract_strided_slice %1515 {offsets = [0, 0], sizes = [1, 32], strides = [1, 1]} : vector<1x128xf32> to vector<1x32xf32>
    %1517 = vector.extract_strided_slice %1515 {offsets = [0, 32], sizes = [1, 32], strides = [1, 1]} : vector<1x128xf32> to vector<1x32xf32>
    %1518 = vector.extract_strided_slice %1515 {offsets = [0, 64], sizes = [1, 32], strides = [1, 1]} : vector<1x128xf32> to vector<1x32xf32>
    %1519 = vector.extract_strided_slice %1515 {offsets = [0, 96], sizes = [1, 32], strides = [1, 1]} : vector<1x128xf32> to vector<1x32xf32>
    %1520 = arith.mulf %1517, %1475 : vector<1x32xf32>
    %1521 = arith.mulf %1516, %1518 : vector<1x32xf32>
    %1522 = arith.addf %1520, %1521 : vector<1x32xf32>
    %1523 = math.tanh %1522 : vector<1x32xf32>
    %1524 = arith.mulf %1519, %1523 : vector<1x32xf32>
    %c45_i32_389 = arith.constant 45 : i32
    %1525 = arith.cmpi slt, %c28_i32, %c45_i32_389 : i32
    %1526 = arith.select %1525, %1524, %1474 : vector<1x32xf32>
    %1527 = arith.select %1525, %1522, %1475 : vector<1x32xf32>
    %c29_i32 = arith.constant 29 : i32
    %1528 = tpu.concatenate %1526, %1500 in 1 : vector<1x32xf32>, vector<1x32xf32> -> vector<1x64xf32>
    %cst_390 = arith.constant dense<0.000000e+00> : vector<1x128xf32>
    %1529 = tpu.matmul %1528, %11, %cst_390 {dimension_numbers = #tpu.dot_dimension_numbers<[1], [0], [0], [1], [0, 0, 1, 1], [], []>} : vector<1x64xf32>, vector<64x128xf32>, vector<1x128xf32> -> vector<1x128xf32>
    %1530 = arith.addf %1529, %12 : vector<1x128xf32>
    %cst_391 = arith.constant 5.000000e-01 : f32
    %1531 = vector.broadcast %cst_391 : f32 to vector<1x128xf32>
    %1532 = arith.mulf %1531, %1530 : vector<1x128xf32>
    %1533 = arith.select %18, %1530, %1532 : vector<1x128xi1>, vector<1x128xf32>
    %1534 = math.tanh %1533 : vector<1x128xf32>
    %cst_392 = arith.constant 5.000000e-01 : f32
    %1535 = vector.broadcast %cst_392 : f32 to vector<1x128xf32>
    %1536 = arith.mulf %1535, %1534 : vector<1x128xf32>
    %cst_393 = arith.constant 5.000000e-01 : f32
    %1537 = vector.broadcast %cst_393 : f32 to vector<1x128xf32>
    %1538 = arith.addf %1536, %1537 : vector<1x128xf32>
    %1539 = arith.select %18, %1534, %1538 : vector<1x128xi1>, vector<1x128xf32>
    %1540 = vector.extract_strided_slice %1539 {offsets = [0, 0], sizes = [1, 32], strides = [1, 1]} : vector<1x128xf32> to vector<1x32xf32>
    %1541 = vector.extract_strided_slice %1539 {offsets = [0, 32], sizes = [1, 32], strides = [1, 1]} : vector<1x128xf32> to vector<1x32xf32>
    %1542 = vector.extract_strided_slice %1539 {offsets = [0, 64], sizes = [1, 32], strides = [1, 1]} : vector<1x128xf32> to vector<1x32xf32>
    %1543 = vector.extract_strided_slice %1539 {offsets = [0, 96], sizes = [1, 32], strides = [1, 1]} : vector<1x128xf32> to vector<1x32xf32>
    %1544 = arith.mulf %1541, %1501 : vector<1x32xf32>
    %1545 = arith.mulf %1540, %1542 : vector<1x32xf32>
    %1546 = arith.addf %1544, %1545 : vector<1x32xf32>
    %1547 = math.tanh %1546 : vector<1x32xf32>
    %1548 = arith.mulf %1543, %1547 : vector<1x32xf32>
    %c1_i32_394 = arith.constant 1 : i32
    %1549 = arith.cmpi sge, %c29_i32, %c1_i32_394 : i32
    %c46_i32_395 = arith.constant 46 : i32
    %1550 = arith.cmpi slt, %c29_i32, %c46_i32_395 : i32
    %1551 = arith.andi %1549, %1550 : i1
    %1552 = arith.select %1551, %1548, %1500 : vector<1x32xf32>
    %1553 = arith.select %1551, %1546, %1501 : vector<1x32xf32>
    %c44_i32_396 = arith.constant 44 : i32
    %1554 = arith.minsi %c29_i32, %c44_i32_396 : i32
    %1555 = arith.index_cast %1554 : i32 to index
    %c0_397 = arith.constant 0 : index
    %1556 = vector.load %arg10[%1555, %c0_397] : memref<45x128xf32, #tpu.memory_space<vmem>>, vector<1x128xf32>
    %cst_398 = arith.constant dense<0.000000e+00> : vector<1x128xf32>
    %1557 = tpu.matmul %1526, %10, %cst_398 {dimension_numbers = #tpu.dot_dimension_numbers<[1], [0], [0], [1], [0, 0, 1, 1], [], []>} : vector<1x32xf32>, vector<32x128xf32>, vector<1x128xf32> -> vector<1x128xf32>
    %1558 = arith.addf %1556, %1557 : vector<1x128xf32>
    %cst_399 = arith.constant 5.000000e-01 : f32
    %1559 = vector.broadcast %cst_399 : f32 to vector<1x128xf32>
    %1560 = arith.mulf %1559, %1558 : vector<1x128xf32>
    %1561 = arith.select %18, %1558, %1560 : vector<1x128xi1>, vector<1x128xf32>
    %1562 = math.tanh %1561 : vector<1x128xf32>
    %cst_400 = arith.constant 5.000000e-01 : f32
    %1563 = vector.broadcast %cst_400 : f32 to vector<1x128xf32>
    %1564 = arith.mulf %1563, %1562 : vector<1x128xf32>
    %cst_401 = arith.constant 5.000000e-01 : f32
    %1565 = vector.broadcast %cst_401 : f32 to vector<1x128xf32>
    %1566 = arith.addf %1564, %1565 : vector<1x128xf32>
    %1567 = arith.select %18, %1562, %1566 : vector<1x128xi1>, vector<1x128xf32>
    %1568 = vector.extract_strided_slice %1567 {offsets = [0, 0], sizes = [1, 32], strides = [1, 1]} : vector<1x128xf32> to vector<1x32xf32>
    %1569 = vector.extract_strided_slice %1567 {offsets = [0, 32], sizes = [1, 32], strides = [1, 1]} : vector<1x128xf32> to vector<1x32xf32>
    %1570 = vector.extract_strided_slice %1567 {offsets = [0, 64], sizes = [1, 32], strides = [1, 1]} : vector<1x128xf32> to vector<1x32xf32>
    %1571 = vector.extract_strided_slice %1567 {offsets = [0, 96], sizes = [1, 32], strides = [1, 1]} : vector<1x128xf32> to vector<1x32xf32>
    %1572 = arith.mulf %1569, %1527 : vector<1x32xf32>
    %1573 = arith.mulf %1568, %1570 : vector<1x32xf32>
    %1574 = arith.addf %1572, %1573 : vector<1x32xf32>
    %1575 = math.tanh %1574 : vector<1x32xf32>
    %1576 = arith.mulf %1571, %1575 : vector<1x32xf32>
    %c45_i32_402 = arith.constant 45 : i32
    %1577 = arith.cmpi slt, %c29_i32, %c45_i32_402 : i32
    %1578 = arith.select %1577, %1576, %1526 : vector<1x32xf32>
    %1579 = arith.select %1577, %1574, %1527 : vector<1x32xf32>
    %c30_i32 = arith.constant 30 : i32
    %1580 = tpu.concatenate %1578, %1552 in 1 : vector<1x32xf32>, vector<1x32xf32> -> vector<1x64xf32>
    %cst_403 = arith.constant dense<0.000000e+00> : vector<1x128xf32>
    %1581 = tpu.matmul %1580, %11, %cst_403 {dimension_numbers = #tpu.dot_dimension_numbers<[1], [0], [0], [1], [0, 0, 1, 1], [], []>} : vector<1x64xf32>, vector<64x128xf32>, vector<1x128xf32> -> vector<1x128xf32>
    %1582 = arith.addf %1581, %12 : vector<1x128xf32>
    %cst_404 = arith.constant 5.000000e-01 : f32
    %1583 = vector.broadcast %cst_404 : f32 to vector<1x128xf32>
    %1584 = arith.mulf %1583, %1582 : vector<1x128xf32>
    %1585 = arith.select %18, %1582, %1584 : vector<1x128xi1>, vector<1x128xf32>
    %1586 = math.tanh %1585 : vector<1x128xf32>
    %cst_405 = arith.constant 5.000000e-01 : f32
    %1587 = vector.broadcast %cst_405 : f32 to vector<1x128xf32>
    %1588 = arith.mulf %1587, %1586 : vector<1x128xf32>
    %cst_406 = arith.constant 5.000000e-01 : f32
    %1589 = vector.broadcast %cst_406 : f32 to vector<1x128xf32>
    %1590 = arith.addf %1588, %1589 : vector<1x128xf32>
    %1591 = arith.select %18, %1586, %1590 : vector<1x128xi1>, vector<1x128xf32>
    %1592 = vector.extract_strided_slice %1591 {offsets = [0, 0], sizes = [1, 32], strides = [1, 1]} : vector<1x128xf32> to vector<1x32xf32>
    %1593 = vector.extract_strided_slice %1591 {offsets = [0, 32], sizes = [1, 32], strides = [1, 1]} : vector<1x128xf32> to vector<1x32xf32>
    %1594 = vector.extract_strided_slice %1591 {offsets = [0, 64], sizes = [1, 32], strides = [1, 1]} : vector<1x128xf32> to vector<1x32xf32>
    %1595 = vector.extract_strided_slice %1591 {offsets = [0, 96], sizes = [1, 32], strides = [1, 1]} : vector<1x128xf32> to vector<1x32xf32>
    %1596 = arith.mulf %1593, %1553 : vector<1x32xf32>
    %1597 = arith.mulf %1592, %1594 : vector<1x32xf32>
    %1598 = arith.addf %1596, %1597 : vector<1x32xf32>
    %1599 = math.tanh %1598 : vector<1x32xf32>
    %1600 = arith.mulf %1595, %1599 : vector<1x32xf32>
    %c1_i32_407 = arith.constant 1 : i32
    %1601 = arith.cmpi sge, %c30_i32, %c1_i32_407 : i32
    %c46_i32_408 = arith.constant 46 : i32
    %1602 = arith.cmpi slt, %c30_i32, %c46_i32_408 : i32
    %1603 = arith.andi %1601, %1602 : i1
    %1604 = arith.select %1603, %1600, %1552 : vector<1x32xf32>
    %1605 = arith.select %1603, %1598, %1553 : vector<1x32xf32>
    %c44_i32_409 = arith.constant 44 : i32
    %1606 = arith.minsi %c30_i32, %c44_i32_409 : i32
    %1607 = arith.index_cast %1606 : i32 to index
    %c0_410 = arith.constant 0 : index
    %1608 = vector.load %arg10[%1607, %c0_410] : memref<45x128xf32, #tpu.memory_space<vmem>>, vector<1x128xf32>
    %cst_411 = arith.constant dense<0.000000e+00> : vector<1x128xf32>
    %1609 = tpu.matmul %1578, %10, %cst_411 {dimension_numbers = #tpu.dot_dimension_numbers<[1], [0], [0], [1], [0, 0, 1, 1], [], []>} : vector<1x32xf32>, vector<32x128xf32>, vector<1x128xf32> -> vector<1x128xf32>
    %1610 = arith.addf %1608, %1609 : vector<1x128xf32>
    %cst_412 = arith.constant 5.000000e-01 : f32
    %1611 = vector.broadcast %cst_412 : f32 to vector<1x128xf32>
    %1612 = arith.mulf %1611, %1610 : vector<1x128xf32>
    %1613 = arith.select %18, %1610, %1612 : vector<1x128xi1>, vector<1x128xf32>
    %1614 = math.tanh %1613 : vector<1x128xf32>
    %cst_413 = arith.constant 5.000000e-01 : f32
    %1615 = vector.broadcast %cst_413 : f32 to vector<1x128xf32>
    %1616 = arith.mulf %1615, %1614 : vector<1x128xf32>
    %cst_414 = arith.constant 5.000000e-01 : f32
    %1617 = vector.broadcast %cst_414 : f32 to vector<1x128xf32>
    %1618 = arith.addf %1616, %1617 : vector<1x128xf32>
    %1619 = arith.select %18, %1614, %1618 : vector<1x128xi1>, vector<1x128xf32>
    %1620 = vector.extract_strided_slice %1619 {offsets = [0, 0], sizes = [1, 32], strides = [1, 1]} : vector<1x128xf32> to vector<1x32xf32>
    %1621 = vector.extract_strided_slice %1619 {offsets = [0, 32], sizes = [1, 32], strides = [1, 1]} : vector<1x128xf32> to vector<1x32xf32>
    %1622 = vector.extract_strided_slice %1619 {offsets = [0, 64], sizes = [1, 32], strides = [1, 1]} : vector<1x128xf32> to vector<1x32xf32>
    %1623 = vector.extract_strided_slice %1619 {offsets = [0, 96], sizes = [1, 32], strides = [1, 1]} : vector<1x128xf32> to vector<1x32xf32>
    %1624 = arith.mulf %1621, %1579 : vector<1x32xf32>
    %1625 = arith.mulf %1620, %1622 : vector<1x32xf32>
    %1626 = arith.addf %1624, %1625 : vector<1x32xf32>
    %1627 = math.tanh %1626 : vector<1x32xf32>
    %1628 = arith.mulf %1623, %1627 : vector<1x32xf32>
    %c45_i32_415 = arith.constant 45 : i32
    %1629 = arith.cmpi slt, %c30_i32, %c45_i32_415 : i32
    %1630 = arith.select %1629, %1628, %1578 : vector<1x32xf32>
    %1631 = arith.select %1629, %1626, %1579 : vector<1x32xf32>
    %c31_i32 = arith.constant 31 : i32
    %1632 = tpu.concatenate %1630, %1604 in 1 : vector<1x32xf32>, vector<1x32xf32> -> vector<1x64xf32>
    %cst_416 = arith.constant dense<0.000000e+00> : vector<1x128xf32>
    %1633 = tpu.matmul %1632, %11, %cst_416 {dimension_numbers = #tpu.dot_dimension_numbers<[1], [0], [0], [1], [0, 0, 1, 1], [], []>} : vector<1x64xf32>, vector<64x128xf32>, vector<1x128xf32> -> vector<1x128xf32>
    %1634 = arith.addf %1633, %12 : vector<1x128xf32>
    %cst_417 = arith.constant 5.000000e-01 : f32
    %1635 = vector.broadcast %cst_417 : f32 to vector<1x128xf32>
    %1636 = arith.mulf %1635, %1634 : vector<1x128xf32>
    %1637 = arith.select %18, %1634, %1636 : vector<1x128xi1>, vector<1x128xf32>
    %1638 = math.tanh %1637 : vector<1x128xf32>
    %cst_418 = arith.constant 5.000000e-01 : f32
    %1639 = vector.broadcast %cst_418 : f32 to vector<1x128xf32>
    %1640 = arith.mulf %1639, %1638 : vector<1x128xf32>
    %cst_419 = arith.constant 5.000000e-01 : f32
    %1641 = vector.broadcast %cst_419 : f32 to vector<1x128xf32>
    %1642 = arith.addf %1640, %1641 : vector<1x128xf32>
    %1643 = arith.select %18, %1638, %1642 : vector<1x128xi1>, vector<1x128xf32>
    %1644 = vector.extract_strided_slice %1643 {offsets = [0, 0], sizes = [1, 32], strides = [1, 1]} : vector<1x128xf32> to vector<1x32xf32>
    %1645 = vector.extract_strided_slice %1643 {offsets = [0, 32], sizes = [1, 32], strides = [1, 1]} : vector<1x128xf32> to vector<1x32xf32>
    %1646 = vector.extract_strided_slice %1643 {offsets = [0, 64], sizes = [1, 32], strides = [1, 1]} : vector<1x128xf32> to vector<1x32xf32>
    %1647 = vector.extract_strided_slice %1643 {offsets = [0, 96], sizes = [1, 32], strides = [1, 1]} : vector<1x128xf32> to vector<1x32xf32>
    %1648 = arith.mulf %1645, %1605 : vector<1x32xf32>
    %1649 = arith.mulf %1644, %1646 : vector<1x32xf32>
    %1650 = arith.addf %1648, %1649 : vector<1x32xf32>
    %1651 = math.tanh %1650 : vector<1x32xf32>
    %1652 = arith.mulf %1647, %1651 : vector<1x32xf32>
    %c1_i32_420 = arith.constant 1 : i32
    %1653 = arith.cmpi sge, %c31_i32, %c1_i32_420 : i32
    %c46_i32_421 = arith.constant 46 : i32
    %1654 = arith.cmpi slt, %c31_i32, %c46_i32_421 : i32
    %1655 = arith.andi %1653, %1654 : i1
    %1656 = arith.select %1655, %1652, %1604 : vector<1x32xf32>
    %1657 = arith.select %1655, %1650, %1605 : vector<1x32xf32>
    %c44_i32_422 = arith.constant 44 : i32
    %1658 = arith.minsi %c31_i32, %c44_i32_422 : i32
    %1659 = arith.index_cast %1658 : i32 to index
    %c0_423 = arith.constant 0 : index
    %1660 = vector.load %arg10[%1659, %c0_423] : memref<45x128xf32, #tpu.memory_space<vmem>>, vector<1x128xf32>
    %cst_424 = arith.constant dense<0.000000e+00> : vector<1x128xf32>
    %1661 = tpu.matmul %1630, %10, %cst_424 {dimension_numbers = #tpu.dot_dimension_numbers<[1], [0], [0], [1], [0, 0, 1, 1], [], []>} : vector<1x32xf32>, vector<32x128xf32>, vector<1x128xf32> -> vector<1x128xf32>
    %1662 = arith.addf %1660, %1661 : vector<1x128xf32>
    %cst_425 = arith.constant 5.000000e-01 : f32
    %1663 = vector.broadcast %cst_425 : f32 to vector<1x128xf32>
    %1664 = arith.mulf %1663, %1662 : vector<1x128xf32>
    %1665 = arith.select %18, %1662, %1664 : vector<1x128xi1>, vector<1x128xf32>
    %1666 = math.tanh %1665 : vector<1x128xf32>
    %cst_426 = arith.constant 5.000000e-01 : f32
    %1667 = vector.broadcast %cst_426 : f32 to vector<1x128xf32>
    %1668 = arith.mulf %1667, %1666 : vector<1x128xf32>
    %cst_427 = arith.constant 5.000000e-01 : f32
    %1669 = vector.broadcast %cst_427 : f32 to vector<1x128xf32>
    %1670 = arith.addf %1668, %1669 : vector<1x128xf32>
    %1671 = arith.select %18, %1666, %1670 : vector<1x128xi1>, vector<1x128xf32>
    %1672 = vector.extract_strided_slice %1671 {offsets = [0, 0], sizes = [1, 32], strides = [1, 1]} : vector<1x128xf32> to vector<1x32xf32>
    %1673 = vector.extract_strided_slice %1671 {offsets = [0, 32], sizes = [1, 32], strides = [1, 1]} : vector<1x128xf32> to vector<1x32xf32>
    %1674 = vector.extract_strided_slice %1671 {offsets = [0, 64], sizes = [1, 32], strides = [1, 1]} : vector<1x128xf32> to vector<1x32xf32>
    %1675 = vector.extract_strided_slice %1671 {offsets = [0, 96], sizes = [1, 32], strides = [1, 1]} : vector<1x128xf32> to vector<1x32xf32>
    %1676 = arith.mulf %1673, %1631 : vector<1x32xf32>
    %1677 = arith.mulf %1672, %1674 : vector<1x32xf32>
    %1678 = arith.addf %1676, %1677 : vector<1x32xf32>
    %1679 = math.tanh %1678 : vector<1x32xf32>
    %1680 = arith.mulf %1675, %1679 : vector<1x32xf32>
    %c45_i32_428 = arith.constant 45 : i32
    %1681 = arith.cmpi slt, %c31_i32, %c45_i32_428 : i32
    %1682 = arith.select %1681, %1680, %1630 : vector<1x32xf32>
    %1683 = arith.select %1681, %1678, %1631 : vector<1x32xf32>
    %c32_i32 = arith.constant 32 : i32
    %1684 = tpu.concatenate %1682, %1656 in 1 : vector<1x32xf32>, vector<1x32xf32> -> vector<1x64xf32>
    %cst_429 = arith.constant dense<0.000000e+00> : vector<1x128xf32>
    %1685 = tpu.matmul %1684, %11, %cst_429 {dimension_numbers = #tpu.dot_dimension_numbers<[1], [0], [0], [1], [0, 0, 1, 1], [], []>} : vector<1x64xf32>, vector<64x128xf32>, vector<1x128xf32> -> vector<1x128xf32>
    %1686 = arith.addf %1685, %12 : vector<1x128xf32>
    %cst_430 = arith.constant 5.000000e-01 : f32
    %1687 = vector.broadcast %cst_430 : f32 to vector<1x128xf32>
    %1688 = arith.mulf %1687, %1686 : vector<1x128xf32>
    %1689 = arith.select %18, %1686, %1688 : vector<1x128xi1>, vector<1x128xf32>
    %1690 = math.tanh %1689 : vector<1x128xf32>
    %cst_431 = arith.constant 5.000000e-01 : f32
    %1691 = vector.broadcast %cst_431 : f32 to vector<1x128xf32>
    %1692 = arith.mulf %1691, %1690 : vector<1x128xf32>
    %cst_432 = arith.constant 5.000000e-01 : f32
    %1693 = vector.broadcast %cst_432 : f32 to vector<1x128xf32>
    %1694 = arith.addf %1692, %1693 : vector<1x128xf32>
    %1695 = arith.select %18, %1690, %1694 : vector<1x128xi1>, vector<1x128xf32>
    %1696 = vector.extract_strided_slice %1695 {offsets = [0, 0], sizes = [1, 32], strides = [1, 1]} : vector<1x128xf32> to vector<1x32xf32>
    %1697 = vector.extract_strided_slice %1695 {offsets = [0, 32], sizes = [1, 32], strides = [1, 1]} : vector<1x128xf32> to vector<1x32xf32>
    %1698 = vector.extract_strided_slice %1695 {offsets = [0, 64], sizes = [1, 32], strides = [1, 1]} : vector<1x128xf32> to vector<1x32xf32>
    %1699 = vector.extract_strided_slice %1695 {offsets = [0, 96], sizes = [1, 32], strides = [1, 1]} : vector<1x128xf32> to vector<1x32xf32>
    %1700 = arith.mulf %1697, %1657 : vector<1x32xf32>
    %1701 = arith.mulf %1696, %1698 : vector<1x32xf32>
    %1702 = arith.addf %1700, %1701 : vector<1x32xf32>
    %1703 = math.tanh %1702 : vector<1x32xf32>
    %1704 = arith.mulf %1699, %1703 : vector<1x32xf32>
    %c1_i32_433 = arith.constant 1 : i32
    %1705 = arith.cmpi sge, %c32_i32, %c1_i32_433 : i32
    %c46_i32_434 = arith.constant 46 : i32
    %1706 = arith.cmpi slt, %c32_i32, %c46_i32_434 : i32
    %1707 = arith.andi %1705, %1706 : i1
    %1708 = arith.select %1707, %1704, %1656 : vector<1x32xf32>
    %1709 = arith.select %1707, %1702, %1657 : vector<1x32xf32>
    %c44_i32_435 = arith.constant 44 : i32
    %1710 = arith.minsi %c32_i32, %c44_i32_435 : i32
    %1711 = arith.index_cast %1710 : i32 to index
    %c0_436 = arith.constant 0 : index
    %1712 = vector.load %arg10[%1711, %c0_436] : memref<45x128xf32, #tpu.memory_space<vmem>>, vector<1x128xf32>
    %cst_437 = arith.constant dense<0.000000e+00> : vector<1x128xf32>
    %1713 = tpu.matmul %1682, %10, %cst_437 {dimension_numbers = #tpu.dot_dimension_numbers<[1], [0], [0], [1], [0, 0, 1, 1], [], []>} : vector<1x32xf32>, vector<32x128xf32>, vector<1x128xf32> -> vector<1x128xf32>
    %1714 = arith.addf %1712, %1713 : vector<1x128xf32>
    %cst_438 = arith.constant 5.000000e-01 : f32
    %1715 = vector.broadcast %cst_438 : f32 to vector<1x128xf32>
    %1716 = arith.mulf %1715, %1714 : vector<1x128xf32>
    %1717 = arith.select %18, %1714, %1716 : vector<1x128xi1>, vector<1x128xf32>
    %1718 = math.tanh %1717 : vector<1x128xf32>
    %cst_439 = arith.constant 5.000000e-01 : f32
    %1719 = vector.broadcast %cst_439 : f32 to vector<1x128xf32>
    %1720 = arith.mulf %1719, %1718 : vector<1x128xf32>
    %cst_440 = arith.constant 5.000000e-01 : f32
    %1721 = vector.broadcast %cst_440 : f32 to vector<1x128xf32>
    %1722 = arith.addf %1720, %1721 : vector<1x128xf32>
    %1723 = arith.select %18, %1718, %1722 : vector<1x128xi1>, vector<1x128xf32>
    %1724 = vector.extract_strided_slice %1723 {offsets = [0, 0], sizes = [1, 32], strides = [1, 1]} : vector<1x128xf32> to vector<1x32xf32>
    %1725 = vector.extract_strided_slice %1723 {offsets = [0, 32], sizes = [1, 32], strides = [1, 1]} : vector<1x128xf32> to vector<1x32xf32>
    %1726 = vector.extract_strided_slice %1723 {offsets = [0, 64], sizes = [1, 32], strides = [1, 1]} : vector<1x128xf32> to vector<1x32xf32>
    %1727 = vector.extract_strided_slice %1723 {offsets = [0, 96], sizes = [1, 32], strides = [1, 1]} : vector<1x128xf32> to vector<1x32xf32>
    %1728 = arith.mulf %1725, %1683 : vector<1x32xf32>
    %1729 = arith.mulf %1724, %1726 : vector<1x32xf32>
    %1730 = arith.addf %1728, %1729 : vector<1x32xf32>
    %1731 = math.tanh %1730 : vector<1x32xf32>
    %1732 = arith.mulf %1727, %1731 : vector<1x32xf32>
    %c45_i32_441 = arith.constant 45 : i32
    %1733 = arith.cmpi slt, %c32_i32, %c45_i32_441 : i32
    %1734 = arith.select %1733, %1732, %1682 : vector<1x32xf32>
    %1735 = arith.select %1733, %1730, %1683 : vector<1x32xf32>
    %c33_i32 = arith.constant 33 : i32
    %1736 = tpu.concatenate %1734, %1708 in 1 : vector<1x32xf32>, vector<1x32xf32> -> vector<1x64xf32>
    %cst_442 = arith.constant dense<0.000000e+00> : vector<1x128xf32>
    %1737 = tpu.matmul %1736, %11, %cst_442 {dimension_numbers = #tpu.dot_dimension_numbers<[1], [0], [0], [1], [0, 0, 1, 1], [], []>} : vector<1x64xf32>, vector<64x128xf32>, vector<1x128xf32> -> vector<1x128xf32>
    %1738 = arith.addf %1737, %12 : vector<1x128xf32>
    %cst_443 = arith.constant 5.000000e-01 : f32
    %1739 = vector.broadcast %cst_443 : f32 to vector<1x128xf32>
    %1740 = arith.mulf %1739, %1738 : vector<1x128xf32>
    %1741 = arith.select %18, %1738, %1740 : vector<1x128xi1>, vector<1x128xf32>
    %1742 = math.tanh %1741 : vector<1x128xf32>
    %cst_444 = arith.constant 5.000000e-01 : f32
    %1743 = vector.broadcast %cst_444 : f32 to vector<1x128xf32>
    %1744 = arith.mulf %1743, %1742 : vector<1x128xf32>
    %cst_445 = arith.constant 5.000000e-01 : f32
    %1745 = vector.broadcast %cst_445 : f32 to vector<1x128xf32>
    %1746 = arith.addf %1744, %1745 : vector<1x128xf32>
    %1747 = arith.select %18, %1742, %1746 : vector<1x128xi1>, vector<1x128xf32>
    %1748 = vector.extract_strided_slice %1747 {offsets = [0, 0], sizes = [1, 32], strides = [1, 1]} : vector<1x128xf32> to vector<1x32xf32>
    %1749 = vector.extract_strided_slice %1747 {offsets = [0, 32], sizes = [1, 32], strides = [1, 1]} : vector<1x128xf32> to vector<1x32xf32>
    %1750 = vector.extract_strided_slice %1747 {offsets = [0, 64], sizes = [1, 32], strides = [1, 1]} : vector<1x128xf32> to vector<1x32xf32>
    %1751 = vector.extract_strided_slice %1747 {offsets = [0, 96], sizes = [1, 32], strides = [1, 1]} : vector<1x128xf32> to vector<1x32xf32>
    %1752 = arith.mulf %1749, %1709 : vector<1x32xf32>
    %1753 = arith.mulf %1748, %1750 : vector<1x32xf32>
    %1754 = arith.addf %1752, %1753 : vector<1x32xf32>
    %1755 = math.tanh %1754 : vector<1x32xf32>
    %1756 = arith.mulf %1751, %1755 : vector<1x32xf32>
    %c1_i32_446 = arith.constant 1 : i32
    %1757 = arith.cmpi sge, %c33_i32, %c1_i32_446 : i32
    %c46_i32_447 = arith.constant 46 : i32
    %1758 = arith.cmpi slt, %c33_i32, %c46_i32_447 : i32
    %1759 = arith.andi %1757, %1758 : i1
    %1760 = arith.select %1759, %1756, %1708 : vector<1x32xf32>
    %1761 = arith.select %1759, %1754, %1709 : vector<1x32xf32>
    %c44_i32_448 = arith.constant 44 : i32
    %1762 = arith.minsi %c33_i32, %c44_i32_448 : i32
    %1763 = arith.index_cast %1762 : i32 to index
    %c0_449 = arith.constant 0 : index
    %1764 = vector.load %arg10[%1763, %c0_449] : memref<45x128xf32, #tpu.memory_space<vmem>>, vector<1x128xf32>
    %cst_450 = arith.constant dense<0.000000e+00> : vector<1x128xf32>
    %1765 = tpu.matmul %1734, %10, %cst_450 {dimension_numbers = #tpu.dot_dimension_numbers<[1], [0], [0], [1], [0, 0, 1, 1], [], []>} : vector<1x32xf32>, vector<32x128xf32>, vector<1x128xf32> -> vector<1x128xf32>
    %1766 = arith.addf %1764, %1765 : vector<1x128xf32>
    %cst_451 = arith.constant 5.000000e-01 : f32
    %1767 = vector.broadcast %cst_451 : f32 to vector<1x128xf32>
    %1768 = arith.mulf %1767, %1766 : vector<1x128xf32>
    %1769 = arith.select %18, %1766, %1768 : vector<1x128xi1>, vector<1x128xf32>
    %1770 = math.tanh %1769 : vector<1x128xf32>
    %cst_452 = arith.constant 5.000000e-01 : f32
    %1771 = vector.broadcast %cst_452 : f32 to vector<1x128xf32>
    %1772 = arith.mulf %1771, %1770 : vector<1x128xf32>
    %cst_453 = arith.constant 5.000000e-01 : f32
    %1773 = vector.broadcast %cst_453 : f32 to vector<1x128xf32>
    %1774 = arith.addf %1772, %1773 : vector<1x128xf32>
    %1775 = arith.select %18, %1770, %1774 : vector<1x128xi1>, vector<1x128xf32>
    %1776 = vector.extract_strided_slice %1775 {offsets = [0, 0], sizes = [1, 32], strides = [1, 1]} : vector<1x128xf32> to vector<1x32xf32>
    %1777 = vector.extract_strided_slice %1775 {offsets = [0, 32], sizes = [1, 32], strides = [1, 1]} : vector<1x128xf32> to vector<1x32xf32>
    %1778 = vector.extract_strided_slice %1775 {offsets = [0, 64], sizes = [1, 32], strides = [1, 1]} : vector<1x128xf32> to vector<1x32xf32>
    %1779 = vector.extract_strided_slice %1775 {offsets = [0, 96], sizes = [1, 32], strides = [1, 1]} : vector<1x128xf32> to vector<1x32xf32>
    %1780 = arith.mulf %1777, %1735 : vector<1x32xf32>
    %1781 = arith.mulf %1776, %1778 : vector<1x32xf32>
    %1782 = arith.addf %1780, %1781 : vector<1x32xf32>
    %1783 = math.tanh %1782 : vector<1x32xf32>
    %1784 = arith.mulf %1779, %1783 : vector<1x32xf32>
    %c45_i32_454 = arith.constant 45 : i32
    %1785 = arith.cmpi slt, %c33_i32, %c45_i32_454 : i32
    %1786 = arith.select %1785, %1784, %1734 : vector<1x32xf32>
    %1787 = arith.select %1785, %1782, %1735 : vector<1x32xf32>
    %c34_i32 = arith.constant 34 : i32
    %1788 = tpu.concatenate %1786, %1760 in 1 : vector<1x32xf32>, vector<1x32xf32> -> vector<1x64xf32>
    %cst_455 = arith.constant dense<0.000000e+00> : vector<1x128xf32>
    %1789 = tpu.matmul %1788, %11, %cst_455 {dimension_numbers = #tpu.dot_dimension_numbers<[1], [0], [0], [1], [0, 0, 1, 1], [], []>} : vector<1x64xf32>, vector<64x128xf32>, vector<1x128xf32> -> vector<1x128xf32>
    %1790 = arith.addf %1789, %12 : vector<1x128xf32>
    %cst_456 = arith.constant 5.000000e-01 : f32
    %1791 = vector.broadcast %cst_456 : f32 to vector<1x128xf32>
    %1792 = arith.mulf %1791, %1790 : vector<1x128xf32>
    %1793 = arith.select %18, %1790, %1792 : vector<1x128xi1>, vector<1x128xf32>
    %1794 = math.tanh %1793 : vector<1x128xf32>
    %cst_457 = arith.constant 5.000000e-01 : f32
    %1795 = vector.broadcast %cst_457 : f32 to vector<1x128xf32>
    %1796 = arith.mulf %1795, %1794 : vector<1x128xf32>
    %cst_458 = arith.constant 5.000000e-01 : f32
    %1797 = vector.broadcast %cst_458 : f32 to vector<1x128xf32>
    %1798 = arith.addf %1796, %1797 : vector<1x128xf32>
    %1799 = arith.select %18, %1794, %1798 : vector<1x128xi1>, vector<1x128xf32>
    %1800 = vector.extract_strided_slice %1799 {offsets = [0, 0], sizes = [1, 32], strides = [1, 1]} : vector<1x128xf32> to vector<1x32xf32>
    %1801 = vector.extract_strided_slice %1799 {offsets = [0, 32], sizes = [1, 32], strides = [1, 1]} : vector<1x128xf32> to vector<1x32xf32>
    %1802 = vector.extract_strided_slice %1799 {offsets = [0, 64], sizes = [1, 32], strides = [1, 1]} : vector<1x128xf32> to vector<1x32xf32>
    %1803 = vector.extract_strided_slice %1799 {offsets = [0, 96], sizes = [1, 32], strides = [1, 1]} : vector<1x128xf32> to vector<1x32xf32>
    %1804 = arith.mulf %1801, %1761 : vector<1x32xf32>
    %1805 = arith.mulf %1800, %1802 : vector<1x32xf32>
    %1806 = arith.addf %1804, %1805 : vector<1x32xf32>
    %1807 = math.tanh %1806 : vector<1x32xf32>
    %1808 = arith.mulf %1803, %1807 : vector<1x32xf32>
    %c1_i32_459 = arith.constant 1 : i32
    %1809 = arith.cmpi sge, %c34_i32, %c1_i32_459 : i32
    %c46_i32_460 = arith.constant 46 : i32
    %1810 = arith.cmpi slt, %c34_i32, %c46_i32_460 : i32
    %1811 = arith.andi %1809, %1810 : i1
    %1812 = arith.select %1811, %1808, %1760 : vector<1x32xf32>
    %1813 = arith.select %1811, %1806, %1761 : vector<1x32xf32>
    %c44_i32_461 = arith.constant 44 : i32
    %1814 = arith.minsi %c34_i32, %c44_i32_461 : i32
    %1815 = arith.index_cast %1814 : i32 to index
    %c0_462 = arith.constant 0 : index
    %1816 = vector.load %arg10[%1815, %c0_462] : memref<45x128xf32, #tpu.memory_space<vmem>>, vector<1x128xf32>
    %cst_463 = arith.constant dense<0.000000e+00> : vector<1x128xf32>
    %1817 = tpu.matmul %1786, %10, %cst_463 {dimension_numbers = #tpu.dot_dimension_numbers<[1], [0], [0], [1], [0, 0, 1, 1], [], []>} : vector<1x32xf32>, vector<32x128xf32>, vector<1x128xf32> -> vector<1x128xf32>
    %1818 = arith.addf %1816, %1817 : vector<1x128xf32>
    %cst_464 = arith.constant 5.000000e-01 : f32
    %1819 = vector.broadcast %cst_464 : f32 to vector<1x128xf32>
    %1820 = arith.mulf %1819, %1818 : vector<1x128xf32>
    %1821 = arith.select %18, %1818, %1820 : vector<1x128xi1>, vector<1x128xf32>
    %1822 = math.tanh %1821 : vector<1x128xf32>
    %cst_465 = arith.constant 5.000000e-01 : f32
    %1823 = vector.broadcast %cst_465 : f32 to vector<1x128xf32>
    %1824 = arith.mulf %1823, %1822 : vector<1x128xf32>
    %cst_466 = arith.constant 5.000000e-01 : f32
    %1825 = vector.broadcast %cst_466 : f32 to vector<1x128xf32>
    %1826 = arith.addf %1824, %1825 : vector<1x128xf32>
    %1827 = arith.select %18, %1822, %1826 : vector<1x128xi1>, vector<1x128xf32>
    %1828 = vector.extract_strided_slice %1827 {offsets = [0, 0], sizes = [1, 32], strides = [1, 1]} : vector<1x128xf32> to vector<1x32xf32>
    %1829 = vector.extract_strided_slice %1827 {offsets = [0, 32], sizes = [1, 32], strides = [1, 1]} : vector<1x128xf32> to vector<1x32xf32>
    %1830 = vector.extract_strided_slice %1827 {offsets = [0, 64], sizes = [1, 32], strides = [1, 1]} : vector<1x128xf32> to vector<1x32xf32>
    %1831 = vector.extract_strided_slice %1827 {offsets = [0, 96], sizes = [1, 32], strides = [1, 1]} : vector<1x128xf32> to vector<1x32xf32>
    %1832 = arith.mulf %1829, %1787 : vector<1x32xf32>
    %1833 = arith.mulf %1828, %1830 : vector<1x32xf32>
    %1834 = arith.addf %1832, %1833 : vector<1x32xf32>
    %1835 = math.tanh %1834 : vector<1x32xf32>
    %1836 = arith.mulf %1831, %1835 : vector<1x32xf32>
    %c45_i32_467 = arith.constant 45 : i32
    %1837 = arith.cmpi slt, %c34_i32, %c45_i32_467 : i32
    %1838 = arith.select %1837, %1836, %1786 : vector<1x32xf32>
    %1839 = arith.select %1837, %1834, %1787 : vector<1x32xf32>
    %c35_i32 = arith.constant 35 : i32
    %1840 = tpu.concatenate %1838, %1812 in 1 : vector<1x32xf32>, vector<1x32xf32> -> vector<1x64xf32>
    %cst_468 = arith.constant dense<0.000000e+00> : vector<1x128xf32>
    %1841 = tpu.matmul %1840, %11, %cst_468 {dimension_numbers = #tpu.dot_dimension_numbers<[1], [0], [0], [1], [0, 0, 1, 1], [], []>} : vector<1x64xf32>, vector<64x128xf32>, vector<1x128xf32> -> vector<1x128xf32>
    %1842 = arith.addf %1841, %12 : vector<1x128xf32>
    %cst_469 = arith.constant 5.000000e-01 : f32
    %1843 = vector.broadcast %cst_469 : f32 to vector<1x128xf32>
    %1844 = arith.mulf %1843, %1842 : vector<1x128xf32>
    %1845 = arith.select %18, %1842, %1844 : vector<1x128xi1>, vector<1x128xf32>
    %1846 = math.tanh %1845 : vector<1x128xf32>
    %cst_470 = arith.constant 5.000000e-01 : f32
    %1847 = vector.broadcast %cst_470 : f32 to vector<1x128xf32>
    %1848 = arith.mulf %1847, %1846 : vector<1x128xf32>
    %cst_471 = arith.constant 5.000000e-01 : f32
    %1849 = vector.broadcast %cst_471 : f32 to vector<1x128xf32>
    %1850 = arith.addf %1848, %1849 : vector<1x128xf32>
    %1851 = arith.select %18, %1846, %1850 : vector<1x128xi1>, vector<1x128xf32>
    %1852 = vector.extract_strided_slice %1851 {offsets = [0, 0], sizes = [1, 32], strides = [1, 1]} : vector<1x128xf32> to vector<1x32xf32>
    %1853 = vector.extract_strided_slice %1851 {offsets = [0, 32], sizes = [1, 32], strides = [1, 1]} : vector<1x128xf32> to vector<1x32xf32>
    %1854 = vector.extract_strided_slice %1851 {offsets = [0, 64], sizes = [1, 32], strides = [1, 1]} : vector<1x128xf32> to vector<1x32xf32>
    %1855 = vector.extract_strided_slice %1851 {offsets = [0, 96], sizes = [1, 32], strides = [1, 1]} : vector<1x128xf32> to vector<1x32xf32>
    %1856 = arith.mulf %1853, %1813 : vector<1x32xf32>
    %1857 = arith.mulf %1852, %1854 : vector<1x32xf32>
    %1858 = arith.addf %1856, %1857 : vector<1x32xf32>
    %1859 = math.tanh %1858 : vector<1x32xf32>
    %1860 = arith.mulf %1855, %1859 : vector<1x32xf32>
    %c1_i32_472 = arith.constant 1 : i32
    %1861 = arith.cmpi sge, %c35_i32, %c1_i32_472 : i32
    %c46_i32_473 = arith.constant 46 : i32
    %1862 = arith.cmpi slt, %c35_i32, %c46_i32_473 : i32
    %1863 = arith.andi %1861, %1862 : i1
    %1864 = arith.select %1863, %1860, %1812 : vector<1x32xf32>
    %1865 = arith.select %1863, %1858, %1813 : vector<1x32xf32>
    %c44_i32_474 = arith.constant 44 : i32
    %1866 = arith.minsi %c35_i32, %c44_i32_474 : i32
    %1867 = arith.index_cast %1866 : i32 to index
    %c0_475 = arith.constant 0 : index
    %1868 = vector.load %arg10[%1867, %c0_475] : memref<45x128xf32, #tpu.memory_space<vmem>>, vector<1x128xf32>
    %cst_476 = arith.constant dense<0.000000e+00> : vector<1x128xf32>
    %1869 = tpu.matmul %1838, %10, %cst_476 {dimension_numbers = #tpu.dot_dimension_numbers<[1], [0], [0], [1], [0, 0, 1, 1], [], []>} : vector<1x32xf32>, vector<32x128xf32>, vector<1x128xf32> -> vector<1x128xf32>
    %1870 = arith.addf %1868, %1869 : vector<1x128xf32>
    %cst_477 = arith.constant 5.000000e-01 : f32
    %1871 = vector.broadcast %cst_477 : f32 to vector<1x128xf32>
    %1872 = arith.mulf %1871, %1870 : vector<1x128xf32>
    %1873 = arith.select %18, %1870, %1872 : vector<1x128xi1>, vector<1x128xf32>
    %1874 = math.tanh %1873 : vector<1x128xf32>
    %cst_478 = arith.constant 5.000000e-01 : f32
    %1875 = vector.broadcast %cst_478 : f32 to vector<1x128xf32>
    %1876 = arith.mulf %1875, %1874 : vector<1x128xf32>
    %cst_479 = arith.constant 5.000000e-01 : f32
    %1877 = vector.broadcast %cst_479 : f32 to vector<1x128xf32>
    %1878 = arith.addf %1876, %1877 : vector<1x128xf32>
    %1879 = arith.select %18, %1874, %1878 : vector<1x128xi1>, vector<1x128xf32>
    %1880 = vector.extract_strided_slice %1879 {offsets = [0, 0], sizes = [1, 32], strides = [1, 1]} : vector<1x128xf32> to vector<1x32xf32>
    %1881 = vector.extract_strided_slice %1879 {offsets = [0, 32], sizes = [1, 32], strides = [1, 1]} : vector<1x128xf32> to vector<1x32xf32>
    %1882 = vector.extract_strided_slice %1879 {offsets = [0, 64], sizes = [1, 32], strides = [1, 1]} : vector<1x128xf32> to vector<1x32xf32>
    %1883 = vector.extract_strided_slice %1879 {offsets = [0, 96], sizes = [1, 32], strides = [1, 1]} : vector<1x128xf32> to vector<1x32xf32>
    %1884 = arith.mulf %1881, %1839 : vector<1x32xf32>
    %1885 = arith.mulf %1880, %1882 : vector<1x32xf32>
    %1886 = arith.addf %1884, %1885 : vector<1x32xf32>
    %1887 = math.tanh %1886 : vector<1x32xf32>
    %1888 = arith.mulf %1883, %1887 : vector<1x32xf32>
    %c45_i32_480 = arith.constant 45 : i32
    %1889 = arith.cmpi slt, %c35_i32, %c45_i32_480 : i32
    %1890 = arith.select %1889, %1888, %1838 : vector<1x32xf32>
    %1891 = arith.select %1889, %1886, %1839 : vector<1x32xf32>
    %c36_i32 = arith.constant 36 : i32
    %1892 = tpu.concatenate %1890, %1864 in 1 : vector<1x32xf32>, vector<1x32xf32> -> vector<1x64xf32>
    %cst_481 = arith.constant dense<0.000000e+00> : vector<1x128xf32>
    %1893 = tpu.matmul %1892, %11, %cst_481 {dimension_numbers = #tpu.dot_dimension_numbers<[1], [0], [0], [1], [0, 0, 1, 1], [], []>} : vector<1x64xf32>, vector<64x128xf32>, vector<1x128xf32> -> vector<1x128xf32>
    %1894 = arith.addf %1893, %12 : vector<1x128xf32>
    %cst_482 = arith.constant 5.000000e-01 : f32
    %1895 = vector.broadcast %cst_482 : f32 to vector<1x128xf32>
    %1896 = arith.mulf %1895, %1894 : vector<1x128xf32>
    %1897 = arith.select %18, %1894, %1896 : vector<1x128xi1>, vector<1x128xf32>
    %1898 = math.tanh %1897 : vector<1x128xf32>
    %cst_483 = arith.constant 5.000000e-01 : f32
    %1899 = vector.broadcast %cst_483 : f32 to vector<1x128xf32>
    %1900 = arith.mulf %1899, %1898 : vector<1x128xf32>
    %cst_484 = arith.constant 5.000000e-01 : f32
    %1901 = vector.broadcast %cst_484 : f32 to vector<1x128xf32>
    %1902 = arith.addf %1900, %1901 : vector<1x128xf32>
    %1903 = arith.select %18, %1898, %1902 : vector<1x128xi1>, vector<1x128xf32>
    %1904 = vector.extract_strided_slice %1903 {offsets = [0, 0], sizes = [1, 32], strides = [1, 1]} : vector<1x128xf32> to vector<1x32xf32>
    %1905 = vector.extract_strided_slice %1903 {offsets = [0, 32], sizes = [1, 32], strides = [1, 1]} : vector<1x128xf32> to vector<1x32xf32>
    %1906 = vector.extract_strided_slice %1903 {offsets = [0, 64], sizes = [1, 32], strides = [1, 1]} : vector<1x128xf32> to vector<1x32xf32>
    %1907 = vector.extract_strided_slice %1903 {offsets = [0, 96], sizes = [1, 32], strides = [1, 1]} : vector<1x128xf32> to vector<1x32xf32>
    %1908 = arith.mulf %1905, %1865 : vector<1x32xf32>
    %1909 = arith.mulf %1904, %1906 : vector<1x32xf32>
    %1910 = arith.addf %1908, %1909 : vector<1x32xf32>
    %1911 = math.tanh %1910 : vector<1x32xf32>
    %1912 = arith.mulf %1907, %1911 : vector<1x32xf32>
    %c1_i32_485 = arith.constant 1 : i32
    %1913 = arith.cmpi sge, %c36_i32, %c1_i32_485 : i32
    %c46_i32_486 = arith.constant 46 : i32
    %1914 = arith.cmpi slt, %c36_i32, %c46_i32_486 : i32
    %1915 = arith.andi %1913, %1914 : i1
    %1916 = arith.select %1915, %1912, %1864 : vector<1x32xf32>
    %1917 = arith.select %1915, %1910, %1865 : vector<1x32xf32>
    %c44_i32_487 = arith.constant 44 : i32
    %1918 = arith.minsi %c36_i32, %c44_i32_487 : i32
    %1919 = arith.index_cast %1918 : i32 to index
    %c0_488 = arith.constant 0 : index
    %1920 = vector.load %arg10[%1919, %c0_488] : memref<45x128xf32, #tpu.memory_space<vmem>>, vector<1x128xf32>
    %cst_489 = arith.constant dense<0.000000e+00> : vector<1x128xf32>
    %1921 = tpu.matmul %1890, %10, %cst_489 {dimension_numbers = #tpu.dot_dimension_numbers<[1], [0], [0], [1], [0, 0, 1, 1], [], []>} : vector<1x32xf32>, vector<32x128xf32>, vector<1x128xf32> -> vector<1x128xf32>
    %1922 = arith.addf %1920, %1921 : vector<1x128xf32>
    %cst_490 = arith.constant 5.000000e-01 : f32
    %1923 = vector.broadcast %cst_490 : f32 to vector<1x128xf32>
    %1924 = arith.mulf %1923, %1922 : vector<1x128xf32>
    %1925 = arith.select %18, %1922, %1924 : vector<1x128xi1>, vector<1x128xf32>
    %1926 = math.tanh %1925 : vector<1x128xf32>
    %cst_491 = arith.constant 5.000000e-01 : f32
    %1927 = vector.broadcast %cst_491 : f32 to vector<1x128xf32>
    %1928 = arith.mulf %1927, %1926 : vector<1x128xf32>
    %cst_492 = arith.constant 5.000000e-01 : f32
    %1929 = vector.broadcast %cst_492 : f32 to vector<1x128xf32>
    %1930 = arith.addf %1928, %1929 : vector<1x128xf32>
    %1931 = arith.select %18, %1926, %1930 : vector<1x128xi1>, vector<1x128xf32>
    %1932 = vector.extract_strided_slice %1931 {offsets = [0, 0], sizes = [1, 32], strides = [1, 1]} : vector<1x128xf32> to vector<1x32xf32>
    %1933 = vector.extract_strided_slice %1931 {offsets = [0, 32], sizes = [1, 32], strides = [1, 1]} : vector<1x128xf32> to vector<1x32xf32>
    %1934 = vector.extract_strided_slice %1931 {offsets = [0, 64], sizes = [1, 32], strides = [1, 1]} : vector<1x128xf32> to vector<1x32xf32>
    %1935 = vector.extract_strided_slice %1931 {offsets = [0, 96], sizes = [1, 32], strides = [1, 1]} : vector<1x128xf32> to vector<1x32xf32>
    %1936 = arith.mulf %1933, %1891 : vector<1x32xf32>
    %1937 = arith.mulf %1932, %1934 : vector<1x32xf32>
    %1938 = arith.addf %1936, %1937 : vector<1x32xf32>
    %1939 = math.tanh %1938 : vector<1x32xf32>
    %1940 = arith.mulf %1935, %1939 : vector<1x32xf32>
    %c45_i32_493 = arith.constant 45 : i32
    %1941 = arith.cmpi slt, %c36_i32, %c45_i32_493 : i32
    %1942 = arith.select %1941, %1940, %1890 : vector<1x32xf32>
    %1943 = arith.select %1941, %1938, %1891 : vector<1x32xf32>
    %c37_i32 = arith.constant 37 : i32
    %1944 = tpu.concatenate %1942, %1916 in 1 : vector<1x32xf32>, vector<1x32xf32> -> vector<1x64xf32>
    %cst_494 = arith.constant dense<0.000000e+00> : vector<1x128xf32>
    %1945 = tpu.matmul %1944, %11, %cst_494 {dimension_numbers = #tpu.dot_dimension_numbers<[1], [0], [0], [1], [0, 0, 1, 1], [], []>} : vector<1x64xf32>, vector<64x128xf32>, vector<1x128xf32> -> vector<1x128xf32>
    %1946 = arith.addf %1945, %12 : vector<1x128xf32>
    %cst_495 = arith.constant 5.000000e-01 : f32
    %1947 = vector.broadcast %cst_495 : f32 to vector<1x128xf32>
    %1948 = arith.mulf %1947, %1946 : vector<1x128xf32>
    %1949 = arith.select %18, %1946, %1948 : vector<1x128xi1>, vector<1x128xf32>
    %1950 = math.tanh %1949 : vector<1x128xf32>
    %cst_496 = arith.constant 5.000000e-01 : f32
    %1951 = vector.broadcast %cst_496 : f32 to vector<1x128xf32>
    %1952 = arith.mulf %1951, %1950 : vector<1x128xf32>
    %cst_497 = arith.constant 5.000000e-01 : f32
    %1953 = vector.broadcast %cst_497 : f32 to vector<1x128xf32>
    %1954 = arith.addf %1952, %1953 : vector<1x128xf32>
    %1955 = arith.select %18, %1950, %1954 : vector<1x128xi1>, vector<1x128xf32>
    %1956 = vector.extract_strided_slice %1955 {offsets = [0, 0], sizes = [1, 32], strides = [1, 1]} : vector<1x128xf32> to vector<1x32xf32>
    %1957 = vector.extract_strided_slice %1955 {offsets = [0, 32], sizes = [1, 32], strides = [1, 1]} : vector<1x128xf32> to vector<1x32xf32>
    %1958 = vector.extract_strided_slice %1955 {offsets = [0, 64], sizes = [1, 32], strides = [1, 1]} : vector<1x128xf32> to vector<1x32xf32>
    %1959 = vector.extract_strided_slice %1955 {offsets = [0, 96], sizes = [1, 32], strides = [1, 1]} : vector<1x128xf32> to vector<1x32xf32>
    %1960 = arith.mulf %1957, %1917 : vector<1x32xf32>
    %1961 = arith.mulf %1956, %1958 : vector<1x32xf32>
    %1962 = arith.addf %1960, %1961 : vector<1x32xf32>
    %1963 = math.tanh %1962 : vector<1x32xf32>
    %1964 = arith.mulf %1959, %1963 : vector<1x32xf32>
    %c1_i32_498 = arith.constant 1 : i32
    %1965 = arith.cmpi sge, %c37_i32, %c1_i32_498 : i32
    %c46_i32_499 = arith.constant 46 : i32
    %1966 = arith.cmpi slt, %c37_i32, %c46_i32_499 : i32
    %1967 = arith.andi %1965, %1966 : i1
    %1968 = arith.select %1967, %1964, %1916 : vector<1x32xf32>
    %1969 = arith.select %1967, %1962, %1917 : vector<1x32xf32>
    %c44_i32_500 = arith.constant 44 : i32
    %1970 = arith.minsi %c37_i32, %c44_i32_500 : i32
    %1971 = arith.index_cast %1970 : i32 to index
    %c0_501 = arith.constant 0 : index
    %1972 = vector.load %arg10[%1971, %c0_501] : memref<45x128xf32, #tpu.memory_space<vmem>>, vector<1x128xf32>
    %cst_502 = arith.constant dense<0.000000e+00> : vector<1x128xf32>
    %1973 = tpu.matmul %1942, %10, %cst_502 {dimension_numbers = #tpu.dot_dimension_numbers<[1], [0], [0], [1], [0, 0, 1, 1], [], []>} : vector<1x32xf32>, vector<32x128xf32>, vector<1x128xf32> -> vector<1x128xf32>
    %1974 = arith.addf %1972, %1973 : vector<1x128xf32>
    %cst_503 = arith.constant 5.000000e-01 : f32
    %1975 = vector.broadcast %cst_503 : f32 to vector<1x128xf32>
    %1976 = arith.mulf %1975, %1974 : vector<1x128xf32>
    %1977 = arith.select %18, %1974, %1976 : vector<1x128xi1>, vector<1x128xf32>
    %1978 = math.tanh %1977 : vector<1x128xf32>
    %cst_504 = arith.constant 5.000000e-01 : f32
    %1979 = vector.broadcast %cst_504 : f32 to vector<1x128xf32>
    %1980 = arith.mulf %1979, %1978 : vector<1x128xf32>
    %cst_505 = arith.constant 5.000000e-01 : f32
    %1981 = vector.broadcast %cst_505 : f32 to vector<1x128xf32>
    %1982 = arith.addf %1980, %1981 : vector<1x128xf32>
    %1983 = arith.select %18, %1978, %1982 : vector<1x128xi1>, vector<1x128xf32>
    %1984 = vector.extract_strided_slice %1983 {offsets = [0, 0], sizes = [1, 32], strides = [1, 1]} : vector<1x128xf32> to vector<1x32xf32>
    %1985 = vector.extract_strided_slice %1983 {offsets = [0, 32], sizes = [1, 32], strides = [1, 1]} : vector<1x128xf32> to vector<1x32xf32>
    %1986 = vector.extract_strided_slice %1983 {offsets = [0, 64], sizes = [1, 32], strides = [1, 1]} : vector<1x128xf32> to vector<1x32xf32>
    %1987 = vector.extract_strided_slice %1983 {offsets = [0, 96], sizes = [1, 32], strides = [1, 1]} : vector<1x128xf32> to vector<1x32xf32>
    %1988 = arith.mulf %1985, %1943 : vector<1x32xf32>
    %1989 = arith.mulf %1984, %1986 : vector<1x32xf32>
    %1990 = arith.addf %1988, %1989 : vector<1x32xf32>
    %1991 = math.tanh %1990 : vector<1x32xf32>
    %1992 = arith.mulf %1987, %1991 : vector<1x32xf32>
    %c45_i32_506 = arith.constant 45 : i32
    %1993 = arith.cmpi slt, %c37_i32, %c45_i32_506 : i32
    %1994 = arith.select %1993, %1992, %1942 : vector<1x32xf32>
    %1995 = arith.select %1993, %1990, %1943 : vector<1x32xf32>
    %c38_i32 = arith.constant 38 : i32
    %1996 = tpu.concatenate %1994, %1968 in 1 : vector<1x32xf32>, vector<1x32xf32> -> vector<1x64xf32>
    %cst_507 = arith.constant dense<0.000000e+00> : vector<1x128xf32>
    %1997 = tpu.matmul %1996, %11, %cst_507 {dimension_numbers = #tpu.dot_dimension_numbers<[1], [0], [0], [1], [0, 0, 1, 1], [], []>} : vector<1x64xf32>, vector<64x128xf32>, vector<1x128xf32> -> vector<1x128xf32>
    %1998 = arith.addf %1997, %12 : vector<1x128xf32>
    %cst_508 = arith.constant 5.000000e-01 : f32
    %1999 = vector.broadcast %cst_508 : f32 to vector<1x128xf32>
    %2000 = arith.mulf %1999, %1998 : vector<1x128xf32>
    %2001 = arith.select %18, %1998, %2000 : vector<1x128xi1>, vector<1x128xf32>
    %2002 = math.tanh %2001 : vector<1x128xf32>
    %cst_509 = arith.constant 5.000000e-01 : f32
    %2003 = vector.broadcast %cst_509 : f32 to vector<1x128xf32>
    %2004 = arith.mulf %2003, %2002 : vector<1x128xf32>
    %cst_510 = arith.constant 5.000000e-01 : f32
    %2005 = vector.broadcast %cst_510 : f32 to vector<1x128xf32>
    %2006 = arith.addf %2004, %2005 : vector<1x128xf32>
    %2007 = arith.select %18, %2002, %2006 : vector<1x128xi1>, vector<1x128xf32>
    %2008 = vector.extract_strided_slice %2007 {offsets = [0, 0], sizes = [1, 32], strides = [1, 1]} : vector<1x128xf32> to vector<1x32xf32>
    %2009 = vector.extract_strided_slice %2007 {offsets = [0, 32], sizes = [1, 32], strides = [1, 1]} : vector<1x128xf32> to vector<1x32xf32>
    %2010 = vector.extract_strided_slice %2007 {offsets = [0, 64], sizes = [1, 32], strides = [1, 1]} : vector<1x128xf32> to vector<1x32xf32>
    %2011 = vector.extract_strided_slice %2007 {offsets = [0, 96], sizes = [1, 32], strides = [1, 1]} : vector<1x128xf32> to vector<1x32xf32>
    %2012 = arith.mulf %2009, %1969 : vector<1x32xf32>
    %2013 = arith.mulf %2008, %2010 : vector<1x32xf32>
    %2014 = arith.addf %2012, %2013 : vector<1x32xf32>
    %2015 = math.tanh %2014 : vector<1x32xf32>
    %2016 = arith.mulf %2011, %2015 : vector<1x32xf32>
    %c1_i32_511 = arith.constant 1 : i32
    %2017 = arith.cmpi sge, %c38_i32, %c1_i32_511 : i32
    %c46_i32_512 = arith.constant 46 : i32
    %2018 = arith.cmpi slt, %c38_i32, %c46_i32_512 : i32
    %2019 = arith.andi %2017, %2018 : i1
    %2020 = arith.select %2019, %2016, %1968 : vector<1x32xf32>
    %2021 = arith.select %2019, %2014, %1969 : vector<1x32xf32>
    %c44_i32_513 = arith.constant 44 : i32
    %2022 = arith.minsi %c38_i32, %c44_i32_513 : i32
    %2023 = arith.index_cast %2022 : i32 to index
    %c0_514 = arith.constant 0 : index
    %2024 = vector.load %arg10[%2023, %c0_514] : memref<45x128xf32, #tpu.memory_space<vmem>>, vector<1x128xf32>
    %cst_515 = arith.constant dense<0.000000e+00> : vector<1x128xf32>
    %2025 = tpu.matmul %1994, %10, %cst_515 {dimension_numbers = #tpu.dot_dimension_numbers<[1], [0], [0], [1], [0, 0, 1, 1], [], []>} : vector<1x32xf32>, vector<32x128xf32>, vector<1x128xf32> -> vector<1x128xf32>
    %2026 = arith.addf %2024, %2025 : vector<1x128xf32>
    %cst_516 = arith.constant 5.000000e-01 : f32
    %2027 = vector.broadcast %cst_516 : f32 to vector<1x128xf32>
    %2028 = arith.mulf %2027, %2026 : vector<1x128xf32>
    %2029 = arith.select %18, %2026, %2028 : vector<1x128xi1>, vector<1x128xf32>
    %2030 = math.tanh %2029 : vector<1x128xf32>
    %cst_517 = arith.constant 5.000000e-01 : f32
    %2031 = vector.broadcast %cst_517 : f32 to vector<1x128xf32>
    %2032 = arith.mulf %2031, %2030 : vector<1x128xf32>
    %cst_518 = arith.constant 5.000000e-01 : f32
    %2033 = vector.broadcast %cst_518 : f32 to vector<1x128xf32>
    %2034 = arith.addf %2032, %2033 : vector<1x128xf32>
    %2035 = arith.select %18, %2030, %2034 : vector<1x128xi1>, vector<1x128xf32>
    %2036 = vector.extract_strided_slice %2035 {offsets = [0, 0], sizes = [1, 32], strides = [1, 1]} : vector<1x128xf32> to vector<1x32xf32>
    %2037 = vector.extract_strided_slice %2035 {offsets = [0, 32], sizes = [1, 32], strides = [1, 1]} : vector<1x128xf32> to vector<1x32xf32>
    %2038 = vector.extract_strided_slice %2035 {offsets = [0, 64], sizes = [1, 32], strides = [1, 1]} : vector<1x128xf32> to vector<1x32xf32>
    %2039 = vector.extract_strided_slice %2035 {offsets = [0, 96], sizes = [1, 32], strides = [1, 1]} : vector<1x128xf32> to vector<1x32xf32>
    %2040 = arith.mulf %2037, %1995 : vector<1x32xf32>
    %2041 = arith.mulf %2036, %2038 : vector<1x32xf32>
    %2042 = arith.addf %2040, %2041 : vector<1x32xf32>
    %2043 = math.tanh %2042 : vector<1x32xf32>
    %2044 = arith.mulf %2039, %2043 : vector<1x32xf32>
    %c45_i32_519 = arith.constant 45 : i32
    %2045 = arith.cmpi slt, %c38_i32, %c45_i32_519 : i32
    %2046 = arith.select %2045, %2044, %1994 : vector<1x32xf32>
    %2047 = arith.select %2045, %2042, %1995 : vector<1x32xf32>
    %c39_i32 = arith.constant 39 : i32
    %2048 = tpu.concatenate %2046, %2020 in 1 : vector<1x32xf32>, vector<1x32xf32> -> vector<1x64xf32>
    %cst_520 = arith.constant dense<0.000000e+00> : vector<1x128xf32>
    %2049 = tpu.matmul %2048, %11, %cst_520 {dimension_numbers = #tpu.dot_dimension_numbers<[1], [0], [0], [1], [0, 0, 1, 1], [], []>} : vector<1x64xf32>, vector<64x128xf32>, vector<1x128xf32> -> vector<1x128xf32>
    %2050 = arith.addf %2049, %12 : vector<1x128xf32>
    %cst_521 = arith.constant 5.000000e-01 : f32
    %2051 = vector.broadcast %cst_521 : f32 to vector<1x128xf32>
    %2052 = arith.mulf %2051, %2050 : vector<1x128xf32>
    %2053 = arith.select %18, %2050, %2052 : vector<1x128xi1>, vector<1x128xf32>
    %2054 = math.tanh %2053 : vector<1x128xf32>
    %cst_522 = arith.constant 5.000000e-01 : f32
    %2055 = vector.broadcast %cst_522 : f32 to vector<1x128xf32>
    %2056 = arith.mulf %2055, %2054 : vector<1x128xf32>
    %cst_523 = arith.constant 5.000000e-01 : f32
    %2057 = vector.broadcast %cst_523 : f32 to vector<1x128xf32>
    %2058 = arith.addf %2056, %2057 : vector<1x128xf32>
    %2059 = arith.select %18, %2054, %2058 : vector<1x128xi1>, vector<1x128xf32>
    %2060 = vector.extract_strided_slice %2059 {offsets = [0, 0], sizes = [1, 32], strides = [1, 1]} : vector<1x128xf32> to vector<1x32xf32>
    %2061 = vector.extract_strided_slice %2059 {offsets = [0, 32], sizes = [1, 32], strides = [1, 1]} : vector<1x128xf32> to vector<1x32xf32>
    %2062 = vector.extract_strided_slice %2059 {offsets = [0, 64], sizes = [1, 32], strides = [1, 1]} : vector<1x128xf32> to vector<1x32xf32>
    %2063 = vector.extract_strided_slice %2059 {offsets = [0, 96], sizes = [1, 32], strides = [1, 1]} : vector<1x128xf32> to vector<1x32xf32>
    %2064 = arith.mulf %2061, %2021 : vector<1x32xf32>
    %2065 = arith.mulf %2060, %2062 : vector<1x32xf32>
    %2066 = arith.addf %2064, %2065 : vector<1x32xf32>
    %2067 = math.tanh %2066 : vector<1x32xf32>
    %2068 = arith.mulf %2063, %2067 : vector<1x32xf32>
    %c1_i32_524 = arith.constant 1 : i32
    %2069 = arith.cmpi sge, %c39_i32, %c1_i32_524 : i32
    %c46_i32_525 = arith.constant 46 : i32
    %2070 = arith.cmpi slt, %c39_i32, %c46_i32_525 : i32
    %2071 = arith.andi %2069, %2070 : i1
    %2072 = arith.select %2071, %2068, %2020 : vector<1x32xf32>
    %2073 = arith.select %2071, %2066, %2021 : vector<1x32xf32>
    %c44_i32_526 = arith.constant 44 : i32
    %2074 = arith.minsi %c39_i32, %c44_i32_526 : i32
    %2075 = arith.index_cast %2074 : i32 to index
    %c0_527 = arith.constant 0 : index
    %2076 = vector.load %arg10[%2075, %c0_527] : memref<45x128xf32, #tpu.memory_space<vmem>>, vector<1x128xf32>
    %cst_528 = arith.constant dense<0.000000e+00> : vector<1x128xf32>
    %2077 = tpu.matmul %2046, %10, %cst_528 {dimension_numbers = #tpu.dot_dimension_numbers<[1], [0], [0], [1], [0, 0, 1, 1], [], []>} : vector<1x32xf32>, vector<32x128xf32>, vector<1x128xf32> -> vector<1x128xf32>
    %2078 = arith.addf %2076, %2077 : vector<1x128xf32>
    %cst_529 = arith.constant 5.000000e-01 : f32
    %2079 = vector.broadcast %cst_529 : f32 to vector<1x128xf32>
    %2080 = arith.mulf %2079, %2078 : vector<1x128xf32>
    %2081 = arith.select %18, %2078, %2080 : vector<1x128xi1>, vector<1x128xf32>
    %2082 = math.tanh %2081 : vector<1x128xf32>
    %cst_530 = arith.constant 5.000000e-01 : f32
    %2083 = vector.broadcast %cst_530 : f32 to vector<1x128xf32>
    %2084 = arith.mulf %2083, %2082 : vector<1x128xf32>
    %cst_531 = arith.constant 5.000000e-01 : f32
    %2085 = vector.broadcast %cst_531 : f32 to vector<1x128xf32>
    %2086 = arith.addf %2084, %2085 : vector<1x128xf32>
    %2087 = arith.select %18, %2082, %2086 : vector<1x128xi1>, vector<1x128xf32>
    %2088 = vector.extract_strided_slice %2087 {offsets = [0, 0], sizes = [1, 32], strides = [1, 1]} : vector<1x128xf32> to vector<1x32xf32>
    %2089 = vector.extract_strided_slice %2087 {offsets = [0, 32], sizes = [1, 32], strides = [1, 1]} : vector<1x128xf32> to vector<1x32xf32>
    %2090 = vector.extract_strided_slice %2087 {offsets = [0, 64], sizes = [1, 32], strides = [1, 1]} : vector<1x128xf32> to vector<1x32xf32>
    %2091 = vector.extract_strided_slice %2087 {offsets = [0, 96], sizes = [1, 32], strides = [1, 1]} : vector<1x128xf32> to vector<1x32xf32>
    %2092 = arith.mulf %2089, %2047 : vector<1x32xf32>
    %2093 = arith.mulf %2088, %2090 : vector<1x32xf32>
    %2094 = arith.addf %2092, %2093 : vector<1x32xf32>
    %2095 = math.tanh %2094 : vector<1x32xf32>
    %2096 = arith.mulf %2091, %2095 : vector<1x32xf32>
    %c45_i32_532 = arith.constant 45 : i32
    %2097 = arith.cmpi slt, %c39_i32, %c45_i32_532 : i32
    %2098 = arith.select %2097, %2096, %2046 : vector<1x32xf32>
    %2099 = arith.select %2097, %2094, %2047 : vector<1x32xf32>
    %c40_i32 = arith.constant 40 : i32
    %2100 = tpu.concatenate %2098, %2072 in 1 : vector<1x32xf32>, vector<1x32xf32> -> vector<1x64xf32>
    %cst_533 = arith.constant dense<0.000000e+00> : vector<1x128xf32>
    %2101 = tpu.matmul %2100, %11, %cst_533 {dimension_numbers = #tpu.dot_dimension_numbers<[1], [0], [0], [1], [0, 0, 1, 1], [], []>} : vector<1x64xf32>, vector<64x128xf32>, vector<1x128xf32> -> vector<1x128xf32>
    %2102 = arith.addf %2101, %12 : vector<1x128xf32>
    %cst_534 = arith.constant 5.000000e-01 : f32
    %2103 = vector.broadcast %cst_534 : f32 to vector<1x128xf32>
    %2104 = arith.mulf %2103, %2102 : vector<1x128xf32>
    %2105 = arith.select %18, %2102, %2104 : vector<1x128xi1>, vector<1x128xf32>
    %2106 = math.tanh %2105 : vector<1x128xf32>
    %cst_535 = arith.constant 5.000000e-01 : f32
    %2107 = vector.broadcast %cst_535 : f32 to vector<1x128xf32>
    %2108 = arith.mulf %2107, %2106 : vector<1x128xf32>
    %cst_536 = arith.constant 5.000000e-01 : f32
    %2109 = vector.broadcast %cst_536 : f32 to vector<1x128xf32>
    %2110 = arith.addf %2108, %2109 : vector<1x128xf32>
    %2111 = arith.select %18, %2106, %2110 : vector<1x128xi1>, vector<1x128xf32>
    %2112 = vector.extract_strided_slice %2111 {offsets = [0, 0], sizes = [1, 32], strides = [1, 1]} : vector<1x128xf32> to vector<1x32xf32>
    %2113 = vector.extract_strided_slice %2111 {offsets = [0, 32], sizes = [1, 32], strides = [1, 1]} : vector<1x128xf32> to vector<1x32xf32>
    %2114 = vector.extract_strided_slice %2111 {offsets = [0, 64], sizes = [1, 32], strides = [1, 1]} : vector<1x128xf32> to vector<1x32xf32>
    %2115 = vector.extract_strided_slice %2111 {offsets = [0, 96], sizes = [1, 32], strides = [1, 1]} : vector<1x128xf32> to vector<1x32xf32>
    %2116 = arith.mulf %2113, %2073 : vector<1x32xf32>
    %2117 = arith.mulf %2112, %2114 : vector<1x32xf32>
    %2118 = arith.addf %2116, %2117 : vector<1x32xf32>
    %2119 = math.tanh %2118 : vector<1x32xf32>
    %2120 = arith.mulf %2115, %2119 : vector<1x32xf32>
    %c1_i32_537 = arith.constant 1 : i32
    %2121 = arith.cmpi sge, %c40_i32, %c1_i32_537 : i32
    %c46_i32_538 = arith.constant 46 : i32
    %2122 = arith.cmpi slt, %c40_i32, %c46_i32_538 : i32
    %2123 = arith.andi %2121, %2122 : i1
    %2124 = arith.select %2123, %2120, %2072 : vector<1x32xf32>
    %2125 = arith.select %2123, %2118, %2073 : vector<1x32xf32>
    %c44_i32_539 = arith.constant 44 : i32
    %2126 = arith.minsi %c40_i32, %c44_i32_539 : i32
    %2127 = arith.index_cast %2126 : i32 to index
    %c0_540 = arith.constant 0 : index
    %2128 = vector.load %arg10[%2127, %c0_540] : memref<45x128xf32, #tpu.memory_space<vmem>>, vector<1x128xf32>
    %cst_541 = arith.constant dense<0.000000e+00> : vector<1x128xf32>
    %2129 = tpu.matmul %2098, %10, %cst_541 {dimension_numbers = #tpu.dot_dimension_numbers<[1], [0], [0], [1], [0, 0, 1, 1], [], []>} : vector<1x32xf32>, vector<32x128xf32>, vector<1x128xf32> -> vector<1x128xf32>
    %2130 = arith.addf %2128, %2129 : vector<1x128xf32>
    %cst_542 = arith.constant 5.000000e-01 : f32
    %2131 = vector.broadcast %cst_542 : f32 to vector<1x128xf32>
    %2132 = arith.mulf %2131, %2130 : vector<1x128xf32>
    %2133 = arith.select %18, %2130, %2132 : vector<1x128xi1>, vector<1x128xf32>
    %2134 = math.tanh %2133 : vector<1x128xf32>
    %cst_543 = arith.constant 5.000000e-01 : f32
    %2135 = vector.broadcast %cst_543 : f32 to vector<1x128xf32>
    %2136 = arith.mulf %2135, %2134 : vector<1x128xf32>
    %cst_544 = arith.constant 5.000000e-01 : f32
    %2137 = vector.broadcast %cst_544 : f32 to vector<1x128xf32>
    %2138 = arith.addf %2136, %2137 : vector<1x128xf32>
    %2139 = arith.select %18, %2134, %2138 : vector<1x128xi1>, vector<1x128xf32>
    %2140 = vector.extract_strided_slice %2139 {offsets = [0, 0], sizes = [1, 32], strides = [1, 1]} : vector<1x128xf32> to vector<1x32xf32>
    %2141 = vector.extract_strided_slice %2139 {offsets = [0, 32], sizes = [1, 32], strides = [1, 1]} : vector<1x128xf32> to vector<1x32xf32>
    %2142 = vector.extract_strided_slice %2139 {offsets = [0, 64], sizes = [1, 32], strides = [1, 1]} : vector<1x128xf32> to vector<1x32xf32>
    %2143 = vector.extract_strided_slice %2139 {offsets = [0, 96], sizes = [1, 32], strides = [1, 1]} : vector<1x128xf32> to vector<1x32xf32>
    %2144 = arith.mulf %2141, %2099 : vector<1x32xf32>
    %2145 = arith.mulf %2140, %2142 : vector<1x32xf32>
    %2146 = arith.addf %2144, %2145 : vector<1x32xf32>
    %2147 = math.tanh %2146 : vector<1x32xf32>
    %2148 = arith.mulf %2143, %2147 : vector<1x32xf32>
    %c45_i32_545 = arith.constant 45 : i32
    %2149 = arith.cmpi slt, %c40_i32, %c45_i32_545 : i32
    %2150 = arith.select %2149, %2148, %2098 : vector<1x32xf32>
    %2151 = arith.select %2149, %2146, %2099 : vector<1x32xf32>
    %c41_i32 = arith.constant 41 : i32
    %2152 = tpu.concatenate %2150, %2124 in 1 : vector<1x32xf32>, vector<1x32xf32> -> vector<1x64xf32>
    %cst_546 = arith.constant dense<0.000000e+00> : vector<1x128xf32>
    %2153 = tpu.matmul %2152, %11, %cst_546 {dimension_numbers = #tpu.dot_dimension_numbers<[1], [0], [0], [1], [0, 0, 1, 1], [], []>} : vector<1x64xf32>, vector<64x128xf32>, vector<1x128xf32> -> vector<1x128xf32>
    %2154 = arith.addf %2153, %12 : vector<1x128xf32>
    %cst_547 = arith.constant 5.000000e-01 : f32
    %2155 = vector.broadcast %cst_547 : f32 to vector<1x128xf32>
    %2156 = arith.mulf %2155, %2154 : vector<1x128xf32>
    %2157 = arith.select %18, %2154, %2156 : vector<1x128xi1>, vector<1x128xf32>
    %2158 = math.tanh %2157 : vector<1x128xf32>
    %cst_548 = arith.constant 5.000000e-01 : f32
    %2159 = vector.broadcast %cst_548 : f32 to vector<1x128xf32>
    %2160 = arith.mulf %2159, %2158 : vector<1x128xf32>
    %cst_549 = arith.constant 5.000000e-01 : f32
    %2161 = vector.broadcast %cst_549 : f32 to vector<1x128xf32>
    %2162 = arith.addf %2160, %2161 : vector<1x128xf32>
    %2163 = arith.select %18, %2158, %2162 : vector<1x128xi1>, vector<1x128xf32>
    %2164 = vector.extract_strided_slice %2163 {offsets = [0, 0], sizes = [1, 32], strides = [1, 1]} : vector<1x128xf32> to vector<1x32xf32>
    %2165 = vector.extract_strided_slice %2163 {offsets = [0, 32], sizes = [1, 32], strides = [1, 1]} : vector<1x128xf32> to vector<1x32xf32>
    %2166 = vector.extract_strided_slice %2163 {offsets = [0, 64], sizes = [1, 32], strides = [1, 1]} : vector<1x128xf32> to vector<1x32xf32>
    %2167 = vector.extract_strided_slice %2163 {offsets = [0, 96], sizes = [1, 32], strides = [1, 1]} : vector<1x128xf32> to vector<1x32xf32>
    %2168 = arith.mulf %2165, %2125 : vector<1x32xf32>
    %2169 = arith.mulf %2164, %2166 : vector<1x32xf32>
    %2170 = arith.addf %2168, %2169 : vector<1x32xf32>
    %2171 = math.tanh %2170 : vector<1x32xf32>
    %2172 = arith.mulf %2167, %2171 : vector<1x32xf32>
    %c1_i32_550 = arith.constant 1 : i32
    %2173 = arith.cmpi sge, %c41_i32, %c1_i32_550 : i32
    %c46_i32_551 = arith.constant 46 : i32
    %2174 = arith.cmpi slt, %c41_i32, %c46_i32_551 : i32
    %2175 = arith.andi %2173, %2174 : i1
    %2176 = arith.select %2175, %2172, %2124 : vector<1x32xf32>
    %2177 = arith.select %2175, %2170, %2125 : vector<1x32xf32>
    %c44_i32_552 = arith.constant 44 : i32
    %2178 = arith.minsi %c41_i32, %c44_i32_552 : i32
    %2179 = arith.index_cast %2178 : i32 to index
    %c0_553 = arith.constant 0 : index
    %2180 = vector.load %arg10[%2179, %c0_553] : memref<45x128xf32, #tpu.memory_space<vmem>>, vector<1x128xf32>
    %cst_554 = arith.constant dense<0.000000e+00> : vector<1x128xf32>
    %2181 = tpu.matmul %2150, %10, %cst_554 {dimension_numbers = #tpu.dot_dimension_numbers<[1], [0], [0], [1], [0, 0, 1, 1], [], []>} : vector<1x32xf32>, vector<32x128xf32>, vector<1x128xf32> -> vector<1x128xf32>
    %2182 = arith.addf %2180, %2181 : vector<1x128xf32>
    %cst_555 = arith.constant 5.000000e-01 : f32
    %2183 = vector.broadcast %cst_555 : f32 to vector<1x128xf32>
    %2184 = arith.mulf %2183, %2182 : vector<1x128xf32>
    %2185 = arith.select %18, %2182, %2184 : vector<1x128xi1>, vector<1x128xf32>
    %2186 = math.tanh %2185 : vector<1x128xf32>
    %cst_556 = arith.constant 5.000000e-01 : f32
    %2187 = vector.broadcast %cst_556 : f32 to vector<1x128xf32>
    %2188 = arith.mulf %2187, %2186 : vector<1x128xf32>
    %cst_557 = arith.constant 5.000000e-01 : f32
    %2189 = vector.broadcast %cst_557 : f32 to vector<1x128xf32>
    %2190 = arith.addf %2188, %2189 : vector<1x128xf32>
    %2191 = arith.select %18, %2186, %2190 : vector<1x128xi1>, vector<1x128xf32>
    %2192 = vector.extract_strided_slice %2191 {offsets = [0, 0], sizes = [1, 32], strides = [1, 1]} : vector<1x128xf32> to vector<1x32xf32>
    %2193 = vector.extract_strided_slice %2191 {offsets = [0, 32], sizes = [1, 32], strides = [1, 1]} : vector<1x128xf32> to vector<1x32xf32>
    %2194 = vector.extract_strided_slice %2191 {offsets = [0, 64], sizes = [1, 32], strides = [1, 1]} : vector<1x128xf32> to vector<1x32xf32>
    %2195 = vector.extract_strided_slice %2191 {offsets = [0, 96], sizes = [1, 32], strides = [1, 1]} : vector<1x128xf32> to vector<1x32xf32>
    %2196 = arith.mulf %2193, %2151 : vector<1x32xf32>
    %2197 = arith.mulf %2192, %2194 : vector<1x32xf32>
    %2198 = arith.addf %2196, %2197 : vector<1x32xf32>
    %2199 = math.tanh %2198 : vector<1x32xf32>
    %2200 = arith.mulf %2195, %2199 : vector<1x32xf32>
    %c45_i32_558 = arith.constant 45 : i32
    %2201 = arith.cmpi slt, %c41_i32, %c45_i32_558 : i32
    %2202 = arith.select %2201, %2200, %2150 : vector<1x32xf32>
    %2203 = arith.select %2201, %2198, %2151 : vector<1x32xf32>
    %c42_i32 = arith.constant 42 : i32
    %2204 = tpu.concatenate %2202, %2176 in 1 : vector<1x32xf32>, vector<1x32xf32> -> vector<1x64xf32>
    %cst_559 = arith.constant dense<0.000000e+00> : vector<1x128xf32>
    %2205 = tpu.matmul %2204, %11, %cst_559 {dimension_numbers = #tpu.dot_dimension_numbers<[1], [0], [0], [1], [0, 0, 1, 1], [], []>} : vector<1x64xf32>, vector<64x128xf32>, vector<1x128xf32> -> vector<1x128xf32>
    %2206 = arith.addf %2205, %12 : vector<1x128xf32>
    %cst_560 = arith.constant 5.000000e-01 : f32
    %2207 = vector.broadcast %cst_560 : f32 to vector<1x128xf32>
    %2208 = arith.mulf %2207, %2206 : vector<1x128xf32>
    %2209 = arith.select %18, %2206, %2208 : vector<1x128xi1>, vector<1x128xf32>
    %2210 = math.tanh %2209 : vector<1x128xf32>
    %cst_561 = arith.constant 5.000000e-01 : f32
    %2211 = vector.broadcast %cst_561 : f32 to vector<1x128xf32>
    %2212 = arith.mulf %2211, %2210 : vector<1x128xf32>
    %cst_562 = arith.constant 5.000000e-01 : f32
    %2213 = vector.broadcast %cst_562 : f32 to vector<1x128xf32>
    %2214 = arith.addf %2212, %2213 : vector<1x128xf32>
    %2215 = arith.select %18, %2210, %2214 : vector<1x128xi1>, vector<1x128xf32>
    %2216 = vector.extract_strided_slice %2215 {offsets = [0, 0], sizes = [1, 32], strides = [1, 1]} : vector<1x128xf32> to vector<1x32xf32>
    %2217 = vector.extract_strided_slice %2215 {offsets = [0, 32], sizes = [1, 32], strides = [1, 1]} : vector<1x128xf32> to vector<1x32xf32>
    %2218 = vector.extract_strided_slice %2215 {offsets = [0, 64], sizes = [1, 32], strides = [1, 1]} : vector<1x128xf32> to vector<1x32xf32>
    %2219 = vector.extract_strided_slice %2215 {offsets = [0, 96], sizes = [1, 32], strides = [1, 1]} : vector<1x128xf32> to vector<1x32xf32>
    %2220 = arith.mulf %2217, %2177 : vector<1x32xf32>
    %2221 = arith.mulf %2216, %2218 : vector<1x32xf32>
    %2222 = arith.addf %2220, %2221 : vector<1x32xf32>
    %2223 = math.tanh %2222 : vector<1x32xf32>
    %2224 = arith.mulf %2219, %2223 : vector<1x32xf32>
    %c1_i32_563 = arith.constant 1 : i32
    %2225 = arith.cmpi sge, %c42_i32, %c1_i32_563 : i32
    %c46_i32_564 = arith.constant 46 : i32
    %2226 = arith.cmpi slt, %c42_i32, %c46_i32_564 : i32
    %2227 = arith.andi %2225, %2226 : i1
    %2228 = arith.select %2227, %2224, %2176 : vector<1x32xf32>
    %2229 = arith.select %2227, %2222, %2177 : vector<1x32xf32>
    %c44_i32_565 = arith.constant 44 : i32
    %2230 = arith.minsi %c42_i32, %c44_i32_565 : i32
    %2231 = arith.index_cast %2230 : i32 to index
    %c0_566 = arith.constant 0 : index
    %2232 = vector.load %arg10[%2231, %c0_566] : memref<45x128xf32, #tpu.memory_space<vmem>>, vector<1x128xf32>
    %cst_567 = arith.constant dense<0.000000e+00> : vector<1x128xf32>
    %2233 = tpu.matmul %2202, %10, %cst_567 {dimension_numbers = #tpu.dot_dimension_numbers<[1], [0], [0], [1], [0, 0, 1, 1], [], []>} : vector<1x32xf32>, vector<32x128xf32>, vector<1x128xf32> -> vector<1x128xf32>
    %2234 = arith.addf %2232, %2233 : vector<1x128xf32>
    %cst_568 = arith.constant 5.000000e-01 : f32
    %2235 = vector.broadcast %cst_568 : f32 to vector<1x128xf32>
    %2236 = arith.mulf %2235, %2234 : vector<1x128xf32>
    %2237 = arith.select %18, %2234, %2236 : vector<1x128xi1>, vector<1x128xf32>
    %2238 = math.tanh %2237 : vector<1x128xf32>
    %cst_569 = arith.constant 5.000000e-01 : f32
    %2239 = vector.broadcast %cst_569 : f32 to vector<1x128xf32>
    %2240 = arith.mulf %2239, %2238 : vector<1x128xf32>
    %cst_570 = arith.constant 5.000000e-01 : f32
    %2241 = vector.broadcast %cst_570 : f32 to vector<1x128xf32>
    %2242 = arith.addf %2240, %2241 : vector<1x128xf32>
    %2243 = arith.select %18, %2238, %2242 : vector<1x128xi1>, vector<1x128xf32>
    %2244 = vector.extract_strided_slice %2243 {offsets = [0, 0], sizes = [1, 32], strides = [1, 1]} : vector<1x128xf32> to vector<1x32xf32>
    %2245 = vector.extract_strided_slice %2243 {offsets = [0, 32], sizes = [1, 32], strides = [1, 1]} : vector<1x128xf32> to vector<1x32xf32>
    %2246 = vector.extract_strided_slice %2243 {offsets = [0, 64], sizes = [1, 32], strides = [1, 1]} : vector<1x128xf32> to vector<1x32xf32>
    %2247 = vector.extract_strided_slice %2243 {offsets = [0, 96], sizes = [1, 32], strides = [1, 1]} : vector<1x128xf32> to vector<1x32xf32>
    %2248 = arith.mulf %2245, %2203 : vector<1x32xf32>
    %2249 = arith.mulf %2244, %2246 : vector<1x32xf32>
    %2250 = arith.addf %2248, %2249 : vector<1x32xf32>
    %2251 = math.tanh %2250 : vector<1x32xf32>
    %2252 = arith.mulf %2247, %2251 : vector<1x32xf32>
    %c45_i32_571 = arith.constant 45 : i32
    %2253 = arith.cmpi slt, %c42_i32, %c45_i32_571 : i32
    %2254 = arith.select %2253, %2252, %2202 : vector<1x32xf32>
    %2255 = arith.select %2253, %2250, %2203 : vector<1x32xf32>
    %c43_i32 = arith.constant 43 : i32
    %2256 = tpu.concatenate %2254, %2228 in 1 : vector<1x32xf32>, vector<1x32xf32> -> vector<1x64xf32>
    %cst_572 = arith.constant dense<0.000000e+00> : vector<1x128xf32>
    %2257 = tpu.matmul %2256, %11, %cst_572 {dimension_numbers = #tpu.dot_dimension_numbers<[1], [0], [0], [1], [0, 0, 1, 1], [], []>} : vector<1x64xf32>, vector<64x128xf32>, vector<1x128xf32> -> vector<1x128xf32>
    %2258 = arith.addf %2257, %12 : vector<1x128xf32>
    %cst_573 = arith.constant 5.000000e-01 : f32
    %2259 = vector.broadcast %cst_573 : f32 to vector<1x128xf32>
    %2260 = arith.mulf %2259, %2258 : vector<1x128xf32>
    %2261 = arith.select %18, %2258, %2260 : vector<1x128xi1>, vector<1x128xf32>
    %2262 = math.tanh %2261 : vector<1x128xf32>
    %cst_574 = arith.constant 5.000000e-01 : f32
    %2263 = vector.broadcast %cst_574 : f32 to vector<1x128xf32>
    %2264 = arith.mulf %2263, %2262 : vector<1x128xf32>
    %cst_575 = arith.constant 5.000000e-01 : f32
    %2265 = vector.broadcast %cst_575 : f32 to vector<1x128xf32>
    %2266 = arith.addf %2264, %2265 : vector<1x128xf32>
    %2267 = arith.select %18, %2262, %2266 : vector<1x128xi1>, vector<1x128xf32>
    %2268 = vector.extract_strided_slice %2267 {offsets = [0, 0], sizes = [1, 32], strides = [1, 1]} : vector<1x128xf32> to vector<1x32xf32>
    %2269 = vector.extract_strided_slice %2267 {offsets = [0, 32], sizes = [1, 32], strides = [1, 1]} : vector<1x128xf32> to vector<1x32xf32>
    %2270 = vector.extract_strided_slice %2267 {offsets = [0, 64], sizes = [1, 32], strides = [1, 1]} : vector<1x128xf32> to vector<1x32xf32>
    %2271 = vector.extract_strided_slice %2267 {offsets = [0, 96], sizes = [1, 32], strides = [1, 1]} : vector<1x128xf32> to vector<1x32xf32>
    %2272 = arith.mulf %2269, %2229 : vector<1x32xf32>
    %2273 = arith.mulf %2268, %2270 : vector<1x32xf32>
    %2274 = arith.addf %2272, %2273 : vector<1x32xf32>
    %2275 = math.tanh %2274 : vector<1x32xf32>
    %2276 = arith.mulf %2271, %2275 : vector<1x32xf32>
    %c1_i32_576 = arith.constant 1 : i32
    %2277 = arith.cmpi sge, %c43_i32, %c1_i32_576 : i32
    %c46_i32_577 = arith.constant 46 : i32
    %2278 = arith.cmpi slt, %c43_i32, %c46_i32_577 : i32
    %2279 = arith.andi %2277, %2278 : i1
    %2280 = arith.select %2279, %2276, %2228 : vector<1x32xf32>
    %2281 = arith.select %2279, %2274, %2229 : vector<1x32xf32>
    %c44_i32_578 = arith.constant 44 : i32
    %2282 = arith.minsi %c43_i32, %c44_i32_578 : i32
    %2283 = arith.index_cast %2282 : i32 to index
    %c0_579 = arith.constant 0 : index
    %2284 = vector.load %arg10[%2283, %c0_579] : memref<45x128xf32, #tpu.memory_space<vmem>>, vector<1x128xf32>
    %cst_580 = arith.constant dense<0.000000e+00> : vector<1x128xf32>
    %2285 = tpu.matmul %2254, %10, %cst_580 {dimension_numbers = #tpu.dot_dimension_numbers<[1], [0], [0], [1], [0, 0, 1, 1], [], []>} : vector<1x32xf32>, vector<32x128xf32>, vector<1x128xf32> -> vector<1x128xf32>
    %2286 = arith.addf %2284, %2285 : vector<1x128xf32>
    %cst_581 = arith.constant 5.000000e-01 : f32
    %2287 = vector.broadcast %cst_581 : f32 to vector<1x128xf32>
    %2288 = arith.mulf %2287, %2286 : vector<1x128xf32>
    %2289 = arith.select %18, %2286, %2288 : vector<1x128xi1>, vector<1x128xf32>
    %2290 = math.tanh %2289 : vector<1x128xf32>
    %cst_582 = arith.constant 5.000000e-01 : f32
    %2291 = vector.broadcast %cst_582 : f32 to vector<1x128xf32>
    %2292 = arith.mulf %2291, %2290 : vector<1x128xf32>
    %cst_583 = arith.constant 5.000000e-01 : f32
    %2293 = vector.broadcast %cst_583 : f32 to vector<1x128xf32>
    %2294 = arith.addf %2292, %2293 : vector<1x128xf32>
    %2295 = arith.select %18, %2290, %2294 : vector<1x128xi1>, vector<1x128xf32>
    %2296 = vector.extract_strided_slice %2295 {offsets = [0, 0], sizes = [1, 32], strides = [1, 1]} : vector<1x128xf32> to vector<1x32xf32>
    %2297 = vector.extract_strided_slice %2295 {offsets = [0, 32], sizes = [1, 32], strides = [1, 1]} : vector<1x128xf32> to vector<1x32xf32>
    %2298 = vector.extract_strided_slice %2295 {offsets = [0, 64], sizes = [1, 32], strides = [1, 1]} : vector<1x128xf32> to vector<1x32xf32>
    %2299 = vector.extract_strided_slice %2295 {offsets = [0, 96], sizes = [1, 32], strides = [1, 1]} : vector<1x128xf32> to vector<1x32xf32>
    %2300 = arith.mulf %2297, %2255 : vector<1x32xf32>
    %2301 = arith.mulf %2296, %2298 : vector<1x32xf32>
    %2302 = arith.addf %2300, %2301 : vector<1x32xf32>
    %2303 = math.tanh %2302 : vector<1x32xf32>
    %2304 = arith.mulf %2299, %2303 : vector<1x32xf32>
    %c45_i32_584 = arith.constant 45 : i32
    %2305 = arith.cmpi slt, %c43_i32, %c45_i32_584 : i32
    %2306 = arith.select %2305, %2304, %2254 : vector<1x32xf32>
    %2307 = arith.select %2305, %2302, %2255 : vector<1x32xf32>
    %c44_i32_585 = arith.constant 44 : i32
    %2308 = tpu.concatenate %2306, %2280 in 1 : vector<1x32xf32>, vector<1x32xf32> -> vector<1x64xf32>
    %cst_586 = arith.constant dense<0.000000e+00> : vector<1x128xf32>
    %2309 = tpu.matmul %2308, %11, %cst_586 {dimension_numbers = #tpu.dot_dimension_numbers<[1], [0], [0], [1], [0, 0, 1, 1], [], []>} : vector<1x64xf32>, vector<64x128xf32>, vector<1x128xf32> -> vector<1x128xf32>
    %2310 = arith.addf %2309, %12 : vector<1x128xf32>
    %cst_587 = arith.constant 5.000000e-01 : f32
    %2311 = vector.broadcast %cst_587 : f32 to vector<1x128xf32>
    %2312 = arith.mulf %2311, %2310 : vector<1x128xf32>
    %2313 = arith.select %18, %2310, %2312 : vector<1x128xi1>, vector<1x128xf32>
    %2314 = math.tanh %2313 : vector<1x128xf32>
    %cst_588 = arith.constant 5.000000e-01 : f32
    %2315 = vector.broadcast %cst_588 : f32 to vector<1x128xf32>
    %2316 = arith.mulf %2315, %2314 : vector<1x128xf32>
    %cst_589 = arith.constant 5.000000e-01 : f32
    %2317 = vector.broadcast %cst_589 : f32 to vector<1x128xf32>
    %2318 = arith.addf %2316, %2317 : vector<1x128xf32>
    %2319 = arith.select %18, %2314, %2318 : vector<1x128xi1>, vector<1x128xf32>
    %2320 = vector.extract_strided_slice %2319 {offsets = [0, 0], sizes = [1, 32], strides = [1, 1]} : vector<1x128xf32> to vector<1x32xf32>
    %2321 = vector.extract_strided_slice %2319 {offsets = [0, 32], sizes = [1, 32], strides = [1, 1]} : vector<1x128xf32> to vector<1x32xf32>
    %2322 = vector.extract_strided_slice %2319 {offsets = [0, 64], sizes = [1, 32], strides = [1, 1]} : vector<1x128xf32> to vector<1x32xf32>
    %2323 = vector.extract_strided_slice %2319 {offsets = [0, 96], sizes = [1, 32], strides = [1, 1]} : vector<1x128xf32> to vector<1x32xf32>
    %2324 = arith.mulf %2321, %2281 : vector<1x32xf32>
    %2325 = arith.mulf %2320, %2322 : vector<1x32xf32>
    %2326 = arith.addf %2324, %2325 : vector<1x32xf32>
    %2327 = math.tanh %2326 : vector<1x32xf32>
    %2328 = arith.mulf %2323, %2327 : vector<1x32xf32>
    %c1_i32_590 = arith.constant 1 : i32
    %2329 = arith.cmpi sge, %c44_i32_585, %c1_i32_590 : i32
    %c46_i32_591 = arith.constant 46 : i32
    %2330 = arith.cmpi slt, %c44_i32_585, %c46_i32_591 : i32
    %2331 = arith.andi %2329, %2330 : i1
    %2332 = arith.select %2331, %2328, %2280 : vector<1x32xf32>
    %2333 = arith.select %2331, %2326, %2281 : vector<1x32xf32>
    %c44_i32_592 = arith.constant 44 : i32
    %2334 = arith.minsi %c44_i32_585, %c44_i32_592 : i32
    %2335 = arith.index_cast %2334 : i32 to index
    %c0_593 = arith.constant 0 : index
    %2336 = vector.load %arg10[%2335, %c0_593] : memref<45x128xf32, #tpu.memory_space<vmem>>, vector<1x128xf32>
    %cst_594 = arith.constant dense<0.000000e+00> : vector<1x128xf32>
    %2337 = tpu.matmul %2306, %10, %cst_594 {dimension_numbers = #tpu.dot_dimension_numbers<[1], [0], [0], [1], [0, 0, 1, 1], [], []>} : vector<1x32xf32>, vector<32x128xf32>, vector<1x128xf32> -> vector<1x128xf32>
    %2338 = arith.addf %2336, %2337 : vector<1x128xf32>
    %cst_595 = arith.constant 5.000000e-01 : f32
    %2339 = vector.broadcast %cst_595 : f32 to vector<1x128xf32>
    %2340 = arith.mulf %2339, %2338 : vector<1x128xf32>
    %2341 = arith.select %18, %2338, %2340 : vector<1x128xi1>, vector<1x128xf32>
    %2342 = math.tanh %2341 : vector<1x128xf32>
    %cst_596 = arith.constant 5.000000e-01 : f32
    %2343 = vector.broadcast %cst_596 : f32 to vector<1x128xf32>
    %2344 = arith.mulf %2343, %2342 : vector<1x128xf32>
    %cst_597 = arith.constant 5.000000e-01 : f32
    %2345 = vector.broadcast %cst_597 : f32 to vector<1x128xf32>
    %2346 = arith.addf %2344, %2345 : vector<1x128xf32>
    %2347 = arith.select %18, %2342, %2346 : vector<1x128xi1>, vector<1x128xf32>
    %2348 = vector.extract_strided_slice %2347 {offsets = [0, 0], sizes = [1, 32], strides = [1, 1]} : vector<1x128xf32> to vector<1x32xf32>
    %2349 = vector.extract_strided_slice %2347 {offsets = [0, 32], sizes = [1, 32], strides = [1, 1]} : vector<1x128xf32> to vector<1x32xf32>
    %2350 = vector.extract_strided_slice %2347 {offsets = [0, 64], sizes = [1, 32], strides = [1, 1]} : vector<1x128xf32> to vector<1x32xf32>
    %2351 = vector.extract_strided_slice %2347 {offsets = [0, 96], sizes = [1, 32], strides = [1, 1]} : vector<1x128xf32> to vector<1x32xf32>
    %2352 = arith.mulf %2349, %2307 : vector<1x32xf32>
    %2353 = arith.mulf %2348, %2350 : vector<1x32xf32>
    %2354 = arith.addf %2352, %2353 : vector<1x32xf32>
    %2355 = math.tanh %2354 : vector<1x32xf32>
    %2356 = arith.mulf %2351, %2355 : vector<1x32xf32>
    %c45_i32_598 = arith.constant 45 : i32
    %2357 = arith.cmpi slt, %c44_i32_585, %c45_i32_598 : i32
    %2358 = arith.select %2357, %2356, %2306 : vector<1x32xf32>
    %2359 = arith.select %2357, %2354, %2307 : vector<1x32xf32>
    %c45_i32_599 = arith.constant 45 : i32
    %2360 = tpu.concatenate %2358, %2332 in 1 : vector<1x32xf32>, vector<1x32xf32> -> vector<1x64xf32>
    %cst_600 = arith.constant dense<0.000000e+00> : vector<1x128xf32>
    %2361 = tpu.matmul %2360, %11, %cst_600 {dimension_numbers = #tpu.dot_dimension_numbers<[1], [0], [0], [1], [0, 0, 1, 1], [], []>} : vector<1x64xf32>, vector<64x128xf32>, vector<1x128xf32> -> vector<1x128xf32>
    %2362 = arith.addf %2361, %12 : vector<1x128xf32>
    %cst_601 = arith.constant 5.000000e-01 : f32
    %2363 = vector.broadcast %cst_601 : f32 to vector<1x128xf32>
    %2364 = arith.mulf %2363, %2362 : vector<1x128xf32>
    %2365 = arith.select %18, %2362, %2364 : vector<1x128xi1>, vector<1x128xf32>
    %2366 = math.tanh %2365 : vector<1x128xf32>
    %cst_602 = arith.constant 5.000000e-01 : f32
    %2367 = vector.broadcast %cst_602 : f32 to vector<1x128xf32>
    %2368 = arith.mulf %2367, %2366 : vector<1x128xf32>
    %cst_603 = arith.constant 5.000000e-01 : f32
    %2369 = vector.broadcast %cst_603 : f32 to vector<1x128xf32>
    %2370 = arith.addf %2368, %2369 : vector<1x128xf32>
    %2371 = arith.select %18, %2366, %2370 : vector<1x128xi1>, vector<1x128xf32>
    %2372 = vector.extract_strided_slice %2371 {offsets = [0, 0], sizes = [1, 32], strides = [1, 1]} : vector<1x128xf32> to vector<1x32xf32>
    %2373 = vector.extract_strided_slice %2371 {offsets = [0, 32], sizes = [1, 32], strides = [1, 1]} : vector<1x128xf32> to vector<1x32xf32>
    %2374 = vector.extract_strided_slice %2371 {offsets = [0, 64], sizes = [1, 32], strides = [1, 1]} : vector<1x128xf32> to vector<1x32xf32>
    %2375 = vector.extract_strided_slice %2371 {offsets = [0, 96], sizes = [1, 32], strides = [1, 1]} : vector<1x128xf32> to vector<1x32xf32>
    %2376 = arith.mulf %2373, %2333 : vector<1x32xf32>
    %2377 = arith.mulf %2372, %2374 : vector<1x32xf32>
    %2378 = arith.addf %2376, %2377 : vector<1x32xf32>
    %2379 = math.tanh %2378 : vector<1x32xf32>
    %2380 = arith.mulf %2375, %2379 : vector<1x32xf32>
    %c1_i32_604 = arith.constant 1 : i32
    %2381 = arith.cmpi sge, %c45_i32_599, %c1_i32_604 : i32
    %c46_i32_605 = arith.constant 46 : i32
    %2382 = arith.cmpi slt, %c45_i32_599, %c46_i32_605 : i32
    %2383 = arith.andi %2381, %2382 : i1
    %2384 = arith.select %2383, %2380, %2332 : vector<1x32xf32>
    %2385 = arith.select %2383, %2378, %2333 : vector<1x32xf32>
    %c44_i32_606 = arith.constant 44 : i32
    %2386 = arith.minsi %c45_i32_599, %c44_i32_606 : i32
    %2387 = arith.index_cast %2386 : i32 to index
    %c0_607 = arith.constant 0 : index
    %2388 = vector.load %arg10[%2387, %c0_607] : memref<45x128xf32, #tpu.memory_space<vmem>>, vector<1x128xf32>
    %cst_608 = arith.constant dense<0.000000e+00> : vector<1x128xf32>
    %2389 = tpu.matmul %2358, %10, %cst_608 {dimension_numbers = #tpu.dot_dimension_numbers<[1], [0], [0], [1], [0, 0, 1, 1], [], []>} : vector<1x32xf32>, vector<32x128xf32>, vector<1x128xf32> -> vector<1x128xf32>
    %2390 = arith.addf %2388, %2389 : vector<1x128xf32>
    %cst_609 = arith.constant 5.000000e-01 : f32
    %2391 = vector.broadcast %cst_609 : f32 to vector<1x128xf32>
    %2392 = arith.mulf %2391, %2390 : vector<1x128xf32>
    %2393 = arith.select %18, %2390, %2392 : vector<1x128xi1>, vector<1x128xf32>
    %2394 = math.tanh %2393 : vector<1x128xf32>
    %cst_610 = arith.constant 5.000000e-01 : f32
    %2395 = vector.broadcast %cst_610 : f32 to vector<1x128xf32>
    %2396 = arith.mulf %2395, %2394 : vector<1x128xf32>
    %cst_611 = arith.constant 5.000000e-01 : f32
    %2397 = vector.broadcast %cst_611 : f32 to vector<1x128xf32>
    %2398 = arith.addf %2396, %2397 : vector<1x128xf32>
    %2399 = arith.select %18, %2394, %2398 : vector<1x128xi1>, vector<1x128xf32>
    %2400 = vector.extract_strided_slice %2399 {offsets = [0, 0], sizes = [1, 32], strides = [1, 1]} : vector<1x128xf32> to vector<1x32xf32>
    %2401 = vector.extract_strided_slice %2399 {offsets = [0, 32], sizes = [1, 32], strides = [1, 1]} : vector<1x128xf32> to vector<1x32xf32>
    %2402 = vector.extract_strided_slice %2399 {offsets = [0, 64], sizes = [1, 32], strides = [1, 1]} : vector<1x128xf32> to vector<1x32xf32>
    %2403 = vector.extract_strided_slice %2399 {offsets = [0, 96], sizes = [1, 32], strides = [1, 1]} : vector<1x128xf32> to vector<1x32xf32>
    %2404 = arith.mulf %2401, %2359 : vector<1x32xf32>
    %2405 = arith.mulf %2400, %2402 : vector<1x32xf32>
    %2406 = arith.addf %2404, %2405 : vector<1x32xf32>
    %2407 = math.tanh %2406 : vector<1x32xf32>
    %2408 = arith.mulf %2403, %2407 : vector<1x32xf32>
    %c45_i32_612 = arith.constant 45 : i32
    %2409 = arith.cmpi slt, %c45_i32_599, %c45_i32_612 : i32
    %2410 = arith.select %2409, %2408, %2358 : vector<1x32xf32>
    %2411 = arith.select %2409, %2406, %2359 : vector<1x32xf32>
    %c46_i32_613 = arith.constant 46 : i32
    %c0_614 = arith.constant 0 : index
    %c0_615 = arith.constant 0 : index
    %2412 = vector.load %arg7[%c0_614, %c0_615] : memref<32x6xf32, #tpu.memory_space<vmem>>, vector<32x6xf32>
    %cst_616 = arith.constant dense<0.000000e+00> : vector<1x6xf32>
    %2413 = tpu.matmul %2384, %2412, %cst_616 {dimension_numbers = #tpu.dot_dimension_numbers<[1], [0], [0], [1], [0, 0, 1, 1], [], []>} : vector<1x32xf32>, vector<32x6xf32>, vector<1x6xf32> -> vector<1x6xf32>
    %c0_617 = arith.constant 0 : index
    %c0_618 = arith.constant 0 : index
    %2414 = vector.load %arg8[%c0_617, %c0_618] : memref<1x6xf32, #tpu.memory_space<vmem>>, vector<1x6xf32>
    %2415 = arith.addf %2413, %2414 : vector<1x6xf32>
    %c0_619 = arith.constant 0 : index
    %c0_620 = arith.constant 0 : index
    %2416 = vector.load %arg9[%c0_619, %c0_620] : memref<1x6xf32, #tpu.memory_space<vmem>>, vector<1x6xf32>
    tpu.vector_store %arg9[%c0_619, %c0_620], %2415 {strides = array<i32>} : memref<1x6xf32, #tpu.memory_space<vmem>>, vector<1x6xf32>,
    return
  }
}

</mosaic_0001>

<llo_original>
// kernel: gated_attention_forward.1
$region0: #{gated_attention_forward.1}
  #allocation0 [shape = 'u32[]', space=smem, size = 0x4, offset = 0x4, fixed_abs, tag = 'smem constant byte address 0x4 - core index']
  #allocation1 [shape = 'u32[72,128]{1,0:T(1,128)}', space=vmem, size = 0x9000, scoped, tag = 'internal scratch']
  #allocation2 [shape = 'f32[45,128]{1,0:T(8,128)}', space=vmem, size = 0x6000, scoped, tag = 'scratch operand']
  %s0 = inlined_call_operand.vmem [shape: f32[1,32], index: 0, kind: input, shape index: {}]
  %s1 = inlined_call_operand.vmem [shape: f32[45,32], index: 1, kind: input, shape index: {}]
  %s2 = inlined_call_operand.vmem [shape: f32[32,128], index: 2, kind: input, shape index: {}]
  %s3 = inlined_call_operand.vmem [shape: f32[32,128], index: 3, kind: input, shape index: {}]
  %s4 = inlined_call_operand.vmem [shape: f32[1,128], index: 4, kind: input, shape index: {}]
  %s5 = inlined_call_operand.vmem [shape: f32[64,128], index: 5, kind: input, shape index: {}]
  %s6 = inlined_call_operand.vmem [shape: f32[1,128], index: 6, kind: input, shape index: {}]
  %s7 = inlined_call_operand.vmem [shape: f32[32,6], index: 7, kind: input, shape index: {}]
  %s8 = inlined_call_operand.vmem [shape: f32[1,6], index: 8, kind: input, shape index: {}]
  %s9 = inlined_call_operand.hbm [shape: f32[1,6], index: 9, kind: output, shape index: {}]
  %s10 = sld [smem:[#allocation0]]
  $region46: #{gated_attention_forward.1} parent=0
    _
  %s12 = ssub.s32 1, %s10
  %s13 = scalar_select 0, %s12, %s10
  $region1: #{gated_attention_forward.1} parent=0
    #allocation3 [shape = 'u8[512]{0}', space=vmem, size = 0x400, scoped, tag = 'output window, operand 0, single buffered']
    #allocation4 [shape = 's32[1]{0}', space=sflag, size = 0x4, scoped, tag = 'scoped memory for gated_attention_forward.1']
    %14 = vsyncpa [#allocation4], 0
    // Predicated region
    $region2: #{gated_attention_forward.1} parent=1 // pred_check
      _
    $region3: #{gated_attention_forward.1} parent=1 // pred_check_branch
      %16 = sbr.rel (0) target = $region5
    $region4: #{gated_attention_forward.1} parent=1 // pred_region
      _
    $region5: #{gated_attention_forward.1} parent=1 // pred_fallthru
      _
    // Predicated region
    $region6: #{gated_attention_forward.1} parent=1 // pred_check
      _
    $region7: #{gated_attention_forward.1} parent=1 // pred_check_branch
      %18 = sbr.rel (0) target = $region9
    $region8: #{gated_attention_forward.1} parent=1 // pred_region
      _
    $region9: #{gated_attention_forward.1} parent=1 // pred_fallthru
      _
    // Predicated region
    $region10: #{gated_attention_forward.1} parent=1 // pred_check
      _
    $region11: #{gated_attention_forward.1} parent=1 // pred_check_branch
      %20 = sbr.rel (0) target = $region13
    $region12: #{gated_attention_forward.1} parent=1 // pred_region
      _
    $region13: #{gated_attention_forward.1} parent=1 // pred_fallthru
      _
    // Predicated region
    $region14: #{gated_attention_forward.1} parent=1 // pred_check
      _
    $region15: #{gated_attention_forward.1} parent=1 // pred_check_branch
      %22 = sbr.rel (0) target = $region17
    $region16: #{gated_attention_forward.1} parent=1 // pred_region
      _
    $region17: #{gated_attention_forward.1} parent=1 // pred_fallthru
      _
    // Predicated region
    $region18: #{gated_attention_forward.1} parent=1 // pred_check
      _
    $region19: #{gated_attention_forward.1} parent=1 // pred_check_branch
      %24 = sbr.rel (0) target = $region21
    $region20: #{gated_attention_forward.1} parent=1 // pred_region
      _
    $region21: #{gated_attention_forward.1} parent=1 // pred_fallthru
      _
    // Predicated region
    $region22: #{gated_attention_forward.1} parent=1 // pred_check
      _
    $region23: #{gated_attention_forward.1} parent=1 // pred_check_branch
      %26 = sbr.rel (0) target = $region25
    $region24: #{gated_attention_forward.1} parent=1 // pred_region
      _
    $region25: #{gated_attention_forward.1} parent=1 // pred_fallthru
      _
    // Predicated region
    $region26: #{gated_attention_forward.1} parent=1 // pred_check
      _
    $region27: #{gated_attention_forward.1} parent=1 // pred_check_branch
      %28 = sbr.rel (0) target = $region29
    $region28: #{gated_attention_forward.1} parent=1 // pred_region
      _
    $region29: #{gated_attention_forward.1} parent=1 // pred_fallthru
      _
    // Predicated region
    $region30: #{gated_attention_forward.1} parent=1 // pred_check
      _
    $region31: #{gated_attention_forward.1} parent=1 // pred_check_branch
      %30 = sbr.rel (0) target = $region33
    $region32: #{gated_attention_forward.1} parent=1 // pred_region
      _
    $region33: #{gated_attention_forward.1} parent=1 // pred_fallthru
      _
    // Predicated region
    $region34: #{gated_attention_forward.1} parent=1 // pred_check
      _
    $region35: #{gated_attention_forward.1} parent=1 // pred_check_branch
      %32 = sbr.rel (0) target = $region37
    $region36: #{gated_attention_forward.1} parent=1 // pred_region
      _
    $region37: #{gated_attention_forward.1} parent=1 // pred_fallthru
      _
    %v33 = vld [vmem:[%s0] sm:$0x1]
    %v34 = vld [vmem:[%s1] sm:$0xff]
    %v35 = vld [vmem:[%s1 + $0x8] sm:$0xff]
    %v36 = vld [vmem:[%s1 + $0x10] sm:$0xff]
    %v37 = vld [vmem:[%s1 + $0x18] sm:$0xff]
    %v38 = vld [vmem:[%s1 + $0x20] sm:$0xff]
    %v39 = vld [vmem:[%s1 + $0x28] sm:$0x1f]
    %v41 = vperm.slane %v33, 0
    %v43 = vmul.f32 %v41, %v34
    %v44 = vmul.f32 %v41, %v35
    %v45 = vmul.f32 %v41, %v36
    %v46 = vmul.f32 %v41, %v37
    %v47 = vmul.f32 %v41, %v38
    %v48 = vmul.f32 %v41, %v39
    %v49 = vld [vmem:[%s2] sm:$0xff]
    %v50 = vld [vmem:[%s2 + $0x8] sm:$0xff]
    %v51 = vld [vmem:[%s2 + $0x10] sm:$0xff]
    %v52 = vld [vmem:[%s2 + $0x18] sm:$0xff]
    %v53 = vld [vmem:[%s4] sm:$0x1]
    %v55 = vperm.slane %v53, 0
    %vm57 = vcmask 261120
    %v59 = vsel %vm57, %v43, 0
    %v62 = vsel %vm57, %v44, 0
    %v65 = vsel %vm57, %v45, 0
    %v68 = vsel %vm57, %v46, 0
    %v71 = vsel %vm57, %v47, 0
    %v74 = vsel %vm57, %v48, 0
    %76 = vmatpush.msra.mxu0 0.0
    %77 = vmatpush.msra.mxu0 0.0
    %78 = vmatpush.msra.mxu0 0.0
    %79 = vmatpush.msra.mxu0 0.0
    %80 = vmatpush.msra.mxu0 0.0
    %81 = vmatpush.msra.mxu0 0.0
    %82 = vmatpush.msra.mxu0 0.0
    %83 = vmatpush.msra.mxu0 0.0
    %84 = vmatpush.msra.mxu0 0.0
    %85 = vmatpush.msra.mxu0 0.0
    %86 = vmatpush.msra.mxu0 0.0
    %87 = vmatpush.msra.mxu0 0.0
    %88 = vmatpush.msra.mxu0 %v52
    %89 = vmatpush.msra.mxu0 %v51
    %90 = vmatpush.msra.mxu0 %v50
    %91 = vmatpush.msra.mxu0 %v49
    %92 = vmatmul.f32.gmra.mxu0 %v59
    %v93 = vpop.f32.mrf.mxu0
    %v94 = vadd.f32 %v55, %v93
    %95 = vmatmul.f32.gmra.mxu0 %v62
    %v96 = vpop.f32.mrf.mxu0
    %v97 = vadd.f32 %v55, %v96
    %98 = vmatmul.f32.gmra.mxu0 %v65
    %v99 = vpop.f32.mrf.mxu0
    %v100 = vadd.f32 %v55, %v99
    %101 = vmatmul.f32.gmra.mxu0 %v68
    %v102 = vpop.f32.mrf.mxu0
    %v103 = vadd.f32 %v55, %v102
    %104 = vmatmul.f32.gmra.mxu0 %v71
    %v105 = vpop.f32.mrf.mxu0
    %v106 = vadd.f32 %v55, %v105
    %107 = vmatmul.f32.gmra.mxu0 %v74
    %v108 = vpop.f32.mrf.mxu0
    %v109 = vadd.f32 %v55, %v108
    %110 = vdwg.mxu0
    %111 = vst [vmem:[#allocation2] sm:$0xff] %v94
    %112 = vst [vmem:[#allocation2 + $0x8] sm:$0xff] %v97
    %113 = vst [vmem:[#allocation2 + $0x10] sm:$0xff] %v100
    %114 = vst [vmem:[#allocation2 + $0x18] sm:$0xff] %v103
    %115 = vst [vmem:[#allocation2 + $0x20] sm:$0xff] %v106
    %116 = vst [vmem:[#allocation2 + $0x28] sm:$0x1f] %v109
    %v117 = vld [vmem:[%s3] sm:$0xff]
    %v118 = vld [vmem:[%s3 + $0x8] sm:$0xff]
    %v119 = vld [vmem:[%s3 + $0x10] sm:$0xff]
    %v120 = vld [vmem:[%s3 + $0x18] sm:$0xff]
    %v121 = vld [vmem:[%s5] sm:$0xff]
    %v122 = vld [vmem:[%s5 + $0x8] sm:$0xff]
    %v123 = vld [vmem:[%s5 + $0x10] sm:$0xff]
    %v124 = vld [vmem:[%s5 + $0x18] sm:$0xff]
    %v125 = vld [vmem:[%s5 + $0x20] sm:$0xff]
    %v126 = vld [vmem:[%s5 + $0x28] sm:$0xff]
    %v127 = vld [vmem:[%s5 + $0x30] sm:$0xff]
    %v128 = vld [vmem:[%s5 + $0x38] sm:$0xff]
    %v129 = vld [vmem:[%s6] sm:$0x1]
    %v130 = vlaneseq
    %v131 = vand.u32 %v130, 127
    %vm132 = vcmp.ge.s32.totalorder %v131, 64
    %vm133 = vcmp.lt.s32.totalorder %v131, 96
    %vm134 = vmand %vm132, %vm133
    %v135 = vld [vmem:[#allocation2] sm:$0x1]
    %v137 = vsel %vm57, 0.0, 0
    %139 = vmatpush.msra.mxu0 0.0
    %140 = vmatpush.msra.mxu0 0.0
    %141 = vmatpush.msra.mxu0 0.0
    %142 = vmatpush.msra.mxu0 0.0
    %143 = vmatpush.msra.mxu0 0.0
    %144 = vmatpush.msra.mxu0 0.0
    %145 = vmatpush.msra.mxu0 0.0
    %146 = vmatpush.msra.mxu0 0.0
    %147 = vmatpush.msra.mxu0 0.0
    %148 = vmatpush.msra.mxu0 0.0
    %149 = vmatpush.msra.mxu0 0.0
    %150 = vmatpush.msra.mxu0 0.0
    %151 = vmatpush.msra.mxu0 %v120
    %152 = vmatpush.msra.mxu0 %v119
    %153 = vmatpush.msra.mxu0 %v118
    %154 = vmatpush.msra.mxu0 %v117
    %155 = vmatmul.f32.gmra.mxu0 %v137
    %v156 = vpop.f32.mrf.mxu0
    %v157 = vadd.f32 0.0, %v156
    %158 = vdwg.mxu0
    %v159 = vadd.f32 %v135, %v157
    %v160 = vmul.f32 %v159, 0.5
    %v161 = vsel %vm134, %v159, %v160
    %v162 = vtanh.pop %v161
    %v163 = vmul.f32 %v162, 0.5
    %v164 = vadd.f32 %v163, 0.5
    %v165 = vsel %vm134, %v162, %v164
    %v166 = vmul.f32 %v165, 0.0
    %168 = vrot.lane.b32.xlu0 %v165, 64
    %v169 = vpop.permute.xlu0 %168
    %v171 = vmul.f32 %v165, %v169
    %173 = vrot.lane.b32.xlu0 %v171, 32
    %v174 = vpop.permute.xlu0 %173
    %v176 = vadd.f32 %v166, %v174
    %v177 = vtanh.pop %v176
    %179 = vrot.lane.b32.xlu0 %v177, 64
    %v180 = vpop.permute.xlu0 %179
    %v182 = vmul.f32 %v165, %v180
    %184 = vrot.lane.b32.xlu0 %v182, 32
    %v185 = vpop.permute.xlu0 %184
    %v187 = vsel %vm57, %v185, 0.0
    %vm188 = vcmask 523264
    %v190 = vsel %vm188, %v187, 0
    %192 = vmatpush.msra.mxu0 0.0
    %193 = vmatpush.msra.mxu0 0.0
    %194 = vmatpush.msra.mxu0 0.0
    %195 = vmatpush.msra.mxu0 0.0
    %196 = vmatpush.msra.mxu0 0.0
    %197 = vmatpush.msra.mxu0 0.0
    %198 = vmatpush.msra.mxu0 0.0
    %199 = vmatpush.msra.mxu0 0.0
    %200 = vmatpush.msra.mxu0 %v128
    %201 = vmatpush.msra.mxu0 %v127
    %202 = vmatpush.msra.mxu0 %v126
    %203 = vmatpush.msra.mxu0 %v125
    %204 = vmatpush.msra.mxu0 %v124
    %205 = vmatpush.msra.mxu0 %v123
    %206 = vmatpush.msra.mxu0 %v122
    %207 = vmatpush.msra.mxu0 %v121
    %208 = vmatmul.f32.gmra.mxu0 %v190
    %v209 = vpop.f32.mrf.mxu0
    %v210 = vadd.f32 %v129, %v209
    %211 = vdwg.mxu0
    %v212 = vmul.f32 %v210, 0.5
    %v213 = vsel %vm134, %v210, %v212
    %v214 = vtanh.pop %v213
    %v215 = vmul.f32 %v214, 0.5
    %v216 = vadd.f32 %v215, 0.5
    %v217 = vsel %vm134, %v214, %v216
    %v218 = vmul.f32 %v217, 0.0
    %220 = vrot.lane.b32.xlu0 %v217, 64
    %v221 = vpop.permute.xlu0 %220
    %v223 = vmul.f32 %v217, %v221
    %225 = vrot.lane.b32.xlu0 %v223, 32
    %v226 = vpop.permute.xlu0 %225
    %v228 = vadd.f32 %v218, %v226
    %v229 = vtanh.pop %v228
    %231 = vrot.lane.b32.xlu0 %v229, 64
    %v232 = vpop.permute.xlu0 %231
    %v234 = vmul.f32 %v217, %v232
    %v235 = vld [vmem:[#allocation2 + $0x1] sm:$0x1]
    %v236 = vsel %vm57, %v185, 0
    %238 = vmatpush.msra.mxu0 0.0
    %239 = vmatpush.msra.mxu0 0.0
    %240 = vmatpush.msra.mxu0 0.0
    %241 = vmatpush.msra.mxu0 0.0
    %242 = vmatpush.msra.mxu0 0.0
    %243 = vmatpush.msra.mxu0 0.0
    %244 = vmatpush.msra.mxu0 0.0
    %245 = vmatpush.msra.mxu0 0.0
    %246 = vmatpush.msra.mxu0 0.0
    %247 = vmatpush.msra.mxu0 0.0
    %248 = vmatpush.msra.mxu0 0.0
    %249 = vmatpush.msra.mxu0 0.0
    %250 = vmatpush.msra.mxu0 %v120
    %251 = vmatpush.msra.mxu0 %v119
    %252 = vmatpush.msra.mxu0 %v118
    %253 = vmatpush.msra.mxu0 %v117
    %254 = vmatmul.f32.gmra.mxu0 %v236
    %v255 = vpop.f32.mrf.mxu0
    %v256 = vadd.f32 0.0, %v255
    %257 = vdwg.mxu0
    %v258 = vadd.f32 %v235, %v256
    %v259 = vmul.f32 %v258, 0.5
    %v260 = vsel %vm134, %v258, %v259
    %v261 = vtanh.pop %v260
    %v262 = vmul.f32 %v261, 0.5
    %v263 = vadd.f32 %v262, 0.5
    %v264 = vsel %vm134, %v261, %v263
    %v265 = vmul.f32 %v264, %v176
    %267 = vrot.lane.b32.xlu0 %v264, 64
    %v268 = vpop.permute.xlu0 %267
    %v270 = vmul.f32 %v264, %v268
    %272 = vrot.lane.b32.xlu0 %v270, 32
    %v273 = vpop.permute.xlu0 %272
    %v275 = vadd.f32 %v265, %v273
    %v276 = vtanh.pop %v275
    %278 = vrot.lane.b32.xlu0 %v276, 64
    %v279 = vpop.permute.xlu0 %278
    %v281 = vmul.f32 %v264, %v279
    %283 = vrot.lane.b32.xlu0 %v281, 32
    %v284 = vpop.permute.xlu0 %283
    %287 = vrot.lane.b32.xlu0 %v234, 64
    %v288 = vpop.permute.xlu0 %287
    %v290 = vsel %vm57, %v284, %v288
    %v292 = vsel %vm188, %v290, 0
    %294 = vmatpush.msra.mxu0 0.0
    %295 = vmatpush.msra.mxu0 0.0
    %296 = vmatpush.msra.mxu0 0.0
    %297 = vmatpush.msra.mxu0 0.0
    %298 = vmatpush.msra.mxu0 0.0
    %299 = vmatpush.msra.mxu0 0.0
    %300 = vmatpush.msra.mxu0 0.0
    %301 = vmatpush.msra.mxu0 0.0
    %302 = vmatpush.msra.mxu0 %v128
    %303 = vmatpush.msra.mxu0 %v127
    %304 = vmatpush.msra.mxu0 %v126
    %305 = vmatpush.msra.mxu0 %v125
    %306 = vmatpush.msra.mxu0 %v124
    %307 = vmatpush.msra.mxu0 %v123
    %308 = vmatpush.msra.mxu0 %v122
    %309 = vmatpush.msra.mxu0 %v121
    %310 = vmatmul.f32.gmra.mxu0 %v292
    %v311 = vpop.f32.mrf.mxu0
    %v312 = vadd.f32 %v129, %v311
    %313 = vdwg.mxu0
    %v314 = vmul.f32 %v312, 0.5
    %v315 = vsel %vm134, %v312, %v314
    %v316 = vtanh.pop %v315
    %v317 = vmul.f32 %v316, 0.5
    %v318 = vadd.f32 %v317, 0.5
    %v319 = vsel %vm134, %v316, %v318
    %v320 = vmul.f32 %v319, %v228
    %322 = vrot.lane.b32.xlu0 %v319, 64
    %v323 = vpop.permute.xlu0 %322
    %v325 = vmul.f32 %v319, %v323
    %327 = vrot.lane.b32.xlu0 %v325, 32
    %v328 = vpop.permute.xlu0 %327
    %v330 = vadd.f32 %v320, %v328
    %v331 = vtanh.pop %v330
    %333 = vrot.lane.b32.xlu0 %v331, 64
    %v334 = vpop.permute.xlu0 %333
    %v336 = vmul.f32 %v319, %v334
    %v337 = vld [vmem:[#allocation2 + $0x2] sm:$0x1]
    %v338 = vsel %vm57, %v284, 0
    %340 = vmatpush.msra.mxu0 0.0
    %341 = vmatpush.msra.mxu0 0.0
    %342 = vmatpush.msra.mxu0 0.0
    %343 = vmatpush.msra.mxu0 0.0
    %344 = vmatpush.msra.mxu0 0.0
    %345 = vmatpush.msra.mxu0 0.0
    %346 = vmatpush.msra.mxu0 0.0
    %347 = vmatpush.msra.mxu0 0.0
    %348 = vmatpush.msra.mxu0 0.0
    %349 = vmatpush.msra.mxu0 0.0
    %350 = vmatpush.msra.mxu0 0.0
    %351 = vmatpush.msra.mxu0 0.0
    %352 = vmatpush.msra.mxu0 %v120
    %353 = vmatpush.msra.mxu0 %v119
    %354 = vmatpush.msra.mxu0 %v118
    %355 = vmatpush.msra.mxu0 %v117
    %356 = vmatmul.f32.gmra.mxu0 %v338
    %v357 = vpop.f32.mrf.mxu0
    %v358 = vadd.f32 0.0, %v357
    %359 = vdwg.mxu0
    %v360 = vadd.f32 %v337, %v358
    %v361 = vmul.f32 %v360, 0.5
    %v362 = vsel %vm134, %v360, %v361
    %v363 = vtanh.pop %v362
    %v364 = vmul.f32 %v363, 0.5
    %v365 = vadd.f32 %v364, 0.5
    %v366 = vsel %vm134, %v363, %v365
    %v367 = vmul.f32 %v366, %v275
    %369 = vrot.lane.b32.xlu0 %v366, 64
    %v370 = vpop.permute.xlu0 %369
    %v372 = vmul.f32 %v366, %v370
    %374 = vrot.lane.b32.xlu0 %v372, 32
    %v375 = vpop.permute.xlu0 %374
    %v377 = vadd.f32 %v367, %v375
    %v378 = vtanh.pop %v377
    %380 = vrot.lane.b32.xlu0 %v378, 64
    %v381 = vpop.permute.xlu0 %380
    %v383 = vmul.f32 %v366, %v381
    %385 = vrot.lane.b32.xlu0 %v383, 32
    %v386 = vpop.permute.xlu0 %385
    %389 = vrot.lane.b32.xlu0 %v336, 64
    %v390 = vpop.permute.xlu0 %389
    %v392 = vsel %vm57, %v386, %v390
    %v394 = vsel %vm188, %v392, 0
    %396 = vmatpush.msra.mxu0 0.0
    %397 = vmatpush.msra.mxu0 0.0
    %398 = vmatpush.msra.mxu0 0.0
    %399 = vmatpush.msra.mxu0 0.0
    %400 = vmatpush.msra.mxu0 0.0
    %401 = vmatpush.msra.mxu0 0.0
    %402 = vmatpush.msra.mxu0 0.0
    %403 = vmatpush.msra.mxu0 0.0
    %404 = vmatpush.msra.mxu0 %v128
    %405 = vmatpush.msra.mxu0 %v127
    %406 = vmatpush.msra.mxu0 %v126
    %407 = vmatpush.msra.mxu0 %v125
    %408 = vmatpush.msra.mxu0 %v124
    %409 = vmatpush.msra.mxu0 %v123
    %410 = vmatpush.msra.mxu0 %v122
    %411 = vmatpush.msra.mxu0 %v121
    %412 = vmatmul.f32.gmra.mxu0 %v394
    %v413 = vpop.f32.mrf.mxu0
    %v414 = vadd.f32 %v129, %v413
    %415 = vdwg.mxu0
    %v416 = vmul.f32 %v414, 0.5
    %v417 = vsel %vm134, %v414, %v416
    %v418 = vtanh.pop %v417
    %v419 = vmul.f32 %v418, 0.5
    %v420 = vadd.f32 %v419, 0.5
    %v421 = vsel %vm134, %v418, %v420
    %v422 = vmul.f32 %v421, %v330
    %424 = vrot.lane.b32.xlu0 %v421, 64
    %v425 = vpop.permute.xlu0 %424
    %v427 = vmul.f32 %v421, %v425
    %429 = vrot.lane.b32.xlu0 %v427, 32
    %v430 = vpop.permute.xlu0 %429
    %v432 = vadd.f32 %v422, %v430
    %v433 = vtanh.pop %v432
    %435 = vrot.lane.b32.xlu0 %v433, 64
    %v436 = vpop.permute.xlu0 %435
    %v438 = vmul.f32 %v421, %v436
    %v439 = vld [vmem:[#allocation2 + $0x3] sm:$0x1]
    %v440 = vsel %vm57, %v386, 0
    %442 = vmatpush.msra.mxu0 0.0
    %443 = vmatpush.msra.mxu0 0.0
    %444 = vmatpush.msra.mxu0 0.0
    %445 = vmatpush.msra.mxu0 0.0
    %446 = vmatpush.msra.mxu0 0.0
    %447 = vmatpush.msra.mxu0 0.0
    %448 = vmatpush.msra.mxu0 0.0
    %449 = vmatpush.msra.mxu0 0.0
    %450 = vmatpush.msra.mxu0 0.0
    %451 = vmatpush.msra.mxu0 0.0
    %452 = vmatpush.msra.mxu0 0.0
    %453 = vmatpush.msra.mxu0 0.0
    %454 = vmatpush.msra.mxu0 %v120
    %455 = vmatpush.msra.mxu0 %v119
    %456 = vmatpush.msra.mxu0 %v118
    %457 = vmatpush.msra.mxu0 %v117
    %458 = vmatmul.f32.gmra.mxu0 %v440
    %v459 = vpop.f32.mrf.mxu0
    %v460 = vadd.f32 0.0, %v459
    %461 = vdwg.mxu0
    %v462 = vadd.f32 %v439, %v460
    %v463 = vmul.f32 %v462, 0.5
    %v464 = vsel %vm134, %v462, %v463
    %v465 = vtanh.pop %v464
    %v466 = vmul.f32 %v465, 0.5
    %v467 = vadd.f32 %v466, 0.5
    %v468 = vsel %vm134, %v465, %v467
    %v469 = vmul.f32 %v468, %v377
    %471 = vrot.lane.b32.xlu0 %v468, 64
    %v472 = vpop.permute.xlu0 %471
    %v474 = vmul.f32 %v468, %v472
    %476 = vrot.lane.b32.xlu0 %v474, 32
    %v477 = vpop.permute.xlu0 %476
    %v479 = vadd.f32 %v469, %v477
    %v480 = vtanh.pop %v479
    %482 = vrot.lane.b32.xlu0 %v480, 64
    %v483 = vpop.permute.xlu0 %482
    %v485 = vmul.f32 %v468, %v483
    %487 = vrot.lane.b32.xlu0 %v485, 32
    %v488 = vpop.permute.xlu0 %487
    %491 = vrot.lane.b32.xlu0 %v438, 64
    %v492 = vpop.permute.xlu0 %491
    %v494 = vsel %vm57, %v488, %v492
    %v496 = vsel %vm188, %v494, 0
    %498 = vmatpush.msra.mxu0 0.0
    %499 = vmatpush.msra.mxu0 0.0
    %500 = vmatpush.msra.mxu0 0.0
    %501 = vmatpush.msra.mxu0 0.0
    %502 = vmatpush.msra.mxu0 0.0
    %503 = vmatpush.msra.mxu0 0.0
    %504 = vmatpush.msra.mxu0 0.0
    %505 = vmatpush.msra.mxu0 0.0
    %506 = vmatpush.msra.mxu0 %v128
    %507 = vmatpush.msra.mxu0 %v127
    %508 = vmatpush.msra.mxu0 %v126
    %509 = vmatpush.msra.mxu0 %v125
    %510 = vmatpush.msra.mxu0 %v124
    %511 = vmatpush.msra.mxu0 %v123
    %512 = vmatpush.msra.mxu0 %v122
    %513 = vmatpush.msra.mxu0 %v121
    %514 = vmatmul.f32.gmra.mxu0 %v496
    %v515 = vpop.f32.mrf.mxu0
    %v516 = vadd.f32 %v129, %v515
    %517 = vdwg.mxu0
    %v518 = vmul.f32 %v516, 0.5
    %v519 = vsel %vm134, %v516, %v518
    %v520 = vtanh.pop %v519
    %v521 = vmul.f32 %v520, 0.5
    %v522 = vadd.f32 %v521, 0.5
    %v523 = vsel %vm134, %v520, %v522
    %v524 = vmul.f32 %v523, %v432
    %526 = vrot.lane.b32.xlu0 %v523, 64
    %v527 = vpop.permute.xlu0 %526
    %v529 = vmul.f32 %v523, %v527
    %531 = vrot.lane.b32.xlu0 %v529, 32
    %v532 = vpop.permute.xlu0 %531
    %v534 = vadd.f32 %v524, %v532
    %v535 = vtanh.pop %v534
    %537 = vrot.lane.b32.xlu0 %v535, 64
    %v538 = vpop.permute.xlu0 %537
    %v540 = vmul.f32 %v523, %v538
    %v541 = vld [vmem:[#allocation2 + $0x4] sm:$0x1]
    %v542 = vsel %vm57, %v488, 0
    %544 = vmatpush.msra.mxu0 0.0
    %545 = vmatpush.msra.mxu0 0.0
    %546 = vmatpush.msra.mxu0 0.0
    %547 = vmatpush.msra.mxu0 0.0
    %548 = vmatpush.msra.mxu0 0.0
    %549 = vmatpush.msra.mxu0 0.0
    %550 = vmatpush.msra.mxu0 0.0
    %551 = vmatpush.msra.mxu0 0.0
    %552 = vmatpush.msra.mxu0 0.0
    %553 = vmatpush.msra.mxu0 0.0
    %554 = vmatpush.msra.mxu0 0.0
    %555 = vmatpush.msra.mxu0 0.0
    %556 = vmatpush.msra.mxu0 %v120
    %557 = vmatpush.msra.mxu0 %v119
    %558 = vmatpush.msra.mxu0 %v118
    %559 = vmatpush.msra.mxu0 %v117
    %560 = vmatmul.f32.gmra.mxu0 %v542
    %v561 = vpop.f32.mrf.mxu0
    %v562 = vadd.f32 0.0, %v561
    %563 = vdwg.mxu0
    %v564 = vadd.f32 %v541, %v562
    %v565 = vmul.f32 %v564, 0.5
    %v566 = vsel %vm134, %v564, %v565
    %v567 = vtanh.pop %v566
    %v568 = vmul.f32 %v567, 0.5
    %v569 = vadd.f32 %v568, 0.5
    %v570 = vsel %vm134, %v567, %v569
    %v571 = vmul.f32 %v570, %v479
    %573 = vrot.lane.b32.xlu0 %v570, 64
    %v574 = vpop.permute.xlu0 %573
    %v576 = vmul.f32 %v570, %v574
    %578 = vrot.lane.b32.xlu0 %v576, 32
    %v579 = vpop.permute.xlu0 %578
    %v581 = vadd.f32 %v571, %v579
    %v582 = vtanh.pop %v581
    %584 = vrot.lane.b32.xlu0 %v582, 64
    %v585 = vpop.permute.xlu0 %584
    %v587 = vmul.f32 %v570, %v585
    %589 = vrot.lane.b32.xlu0 %v587, 32
    %v590 = vpop.permute.xlu0 %589
    %593 = vrot.lane.b32.xlu0 %v540, 64
    %v594 = vpop.permute.xlu0 %593
    %v596 = vsel %vm57, %v590, %v594
    %v598 = vsel %vm188, %v596, 0
    %600 = vmatpush.msra.mxu0 0.0
    %601 = vmatpush.msra.mxu0 0.0
    %602 = vmatpush.msra.mxu0 0.0
    %603 = vmatpush.msra.mxu0 0.0
    %604 = vmatpush.msra.mxu0 0.0
    %605 = vmatpush.msra.mxu0 0.0
    %606 = vmatpush.msra.mxu0 0.0
    %607 = vmatpush.msra.mxu0 0.0
    %608 = vmatpush.msra.mxu0 %v128
    %609 = vmatpush.msra.mxu0 %v127
    %610 = vmatpush.msra.mxu0 %v126
    %611 = vmatpush.msra.mxu0 %v125
    %612 = vmatpush.msra.mxu0 %v124
    %613 = vmatpush.msra.mxu0 %v123
    %614 = vmatpush.msra.mxu0 %v122
    %615 = vmatpush.msra.mxu0 %v121
    %616 = vmatmul.f32.gmra.mxu0 %v598
    %v617 = vpop.f32.mrf.mxu0
    %v618 = vadd.f32 %v129, %v617
    %619 = vdwg.mxu0
    %v620 = vmul.f32 %v618, 0.5
    %v621 = vsel %vm134, %v618, %v620
    %v622 = vtanh.pop %v621
    %v623 = vmul.f32 %v622, 0.5
    %v624 = vadd.f32 %v623, 0.5
    %v625 = vsel %vm134, %v622, %v624
    %v626 = vmul.f32 %v625, %v534
    %628 = vrot.lane.b32.xlu0 %v625, 64
    %v629 = vpop.permute.xlu0 %628
    %v631 = vmul.f32 %v625, %v629
    %633 = vrot.lane.b32.xlu0 %v631, 32
    %v634 = vpop.permute.xlu0 %633
    %v636 = vadd.f32 %v626, %v634
    %v637 = vtanh.pop %v636
    %639 = vrot.lane.b32.xlu0 %v637, 64
    %v640 = vpop.permute.xlu0 %639
    %v642 = vmul.f32 %v625, %v640
    %v643 = vld [vmem:[#allocation2 + $0x5] sm:$0x1]
    %v644 = vsel %vm57, %v590, 0
    %646 = vmatpush.msra.mxu0 0.0
    %647 = vmatpush.msra.mxu0 0.0
    %648 = vmatpush.msra.mxu0 0.0
    %649 = vmatpush.msra.mxu0 0.0
    %650 = vmatpush.msra.mxu0 0.0
    %651 = vmatpush.msra.mxu0 0.0
    %652 = vmatpush.msra.mxu0 0.0
    %653 = vmatpush.msra.mxu0 0.0
    %654 = vmatpush.msra.mxu0 0.0
    %655 = vmatpush.msra.mxu0 0.0
    %656 = vmatpush.msra.mxu0 0.0
    %657 = vmatpush.msra.mxu0 0.0
    %658 = vmatpush.msra.mxu0 %v120
    %659 = vmatpush.msra.mxu0 %v119
    %660 = vmatpush.msra.mxu0 %v118
    %661 = vmatpush.msra.mxu0 %v117
    %662 = vmatmul.f32.gmra.mxu0 %v644
    %v663 = vpop.f32.mrf.mxu0
    %v664 = vadd.f32 0.0, %v663
    %665 = vdwg.mxu0
    %v666 = vadd.f32 %v643, %v664
    %v667 = vmul.f32 %v666, 0.5
    %v668 = vsel %vm134, %v666, %v667
    %v669 = vtanh.pop %v668
    %v670 = vmul.f32 %v669, 0.5
    %v671 = vadd.f32 %v670, 0.5
    %v672 = vsel %vm134, %v669, %v671
    %v673 = vmul.f32 %v672, %v581
    %675 = vrot.lane.b32.xlu0 %v672, 64
    %v676 = vpop.permute.xlu0 %675
    %v678 = vmul.f32 %v672, %v676
    %680 = vrot.lane.b32.xlu0 %v678, 32
    %v681 = vpop.permute.xlu0 %680
    %v683 = vadd.f32 %v673, %v681
    %v684 = vtanh.pop %v683
    %686 = vrot.lane.b32.xlu0 %v684, 64
    %v687 = vpop.permute.xlu0 %686
    %v689 = vmul.f32 %v672, %v687
    %691 = vrot.lane.b32.xlu0 %v689, 32
    %v692 = vpop.permute.xlu0 %691
    %695 = vrot.lane.b32.xlu0 %v642, 64
    %v696 = vpop.permute.xlu0 %695
    %v698 = vsel %vm57, %v692, %v696
    %v700 = vsel %vm188, %v698, 0
    %702 = vmatpush.msra.mxu0 0.0
    %703 = vmatpush.msra.mxu0 0.0
    %704 = vmatpush.msra.mxu0 0.0
    %705 = vmatpush.msra.mxu0 0.0
    %706 = vmatpush.msra.mxu0 0.0
    %707 = vmatpush.msra.mxu0 0.0
    %708 = vmatpush.msra.mxu0 0.0
    %709 = vmatpush.msra.mxu0 0.0
    %710 = vmatpush.msra.mxu0 %v128
    %711 = vmatpush.msra.mxu0 %v127
    %712 = vmatpush.msra.mxu0 %v126
    %713 = vmatpush.msra.mxu0 %v125
    %714 = vmatpush.msra.mxu0 %v124
    %715 = vmatpush.msra.mxu0 %v123
    %716 = vmatpush.msra.mxu0 %v122
    %717 = vmatpush.msra.mxu0 %v121
    %718 = vmatmul.f32.gmra.mxu0 %v700
    %v719 = vpop.f32.mrf.mxu0
    %v720 = vadd.f32 %v129, %v719
    %721 = vdwg.mxu0
    %v722 = vmul.f32 %v720, 0.5
    %v723 = vsel %vm134, %v720, %v722
    %v724 = vtanh.pop %v723
    %v725 = vmul.f32 %v724, 0.5
    %v726 = vadd.f32 %v725, 0.5
    %v727 = vsel %vm134, %v724, %v726
    %v728 = vmul.f32 %v727, %v636
    %730 = vrot.lane.b32.xlu0 %v727, 64
    %v731 = vpop.permute.xlu0 %730
    %v733 = vmul.f32 %v727, %v731
    %735 = vrot.lane.b32.xlu0 %v733, 32
    %v736 = vpop.permute.xlu0 %735
    %v738 = vadd.f32 %v728, %v736
    %v739 = vtanh.pop %v738
    %741 = vrot.lane.b32.xlu0 %v739, 64
    %v742 = vpop.permute.xlu0 %741
    %v744 = vmul.f32 %v727, %v742
    %v745 = vld [vmem:[#allocation2 + $0x6] sm:$0x1]
    %v746 = vsel %vm57, %v692, 0
    %748 = vmatpush.msra.mxu0 0.0
    %749 = vmatpush.msra.mxu0 0.0
    %750 = vmatpush.msra.mxu0 0.0
    %751 = vmatpush.msra.mxu0 0.0
    %752 = vmatpush.msra.mxu0 0.0
    %753 = vmatpush.msra.mxu0 0.0
    %754 = vmatpush.msra.mxu0 0.0
    %755 = vmatpush.msra.mxu0 0.0
    %756 = vmatpush.msra.mxu0 0.0
    %757 = vmatpush.msra.mxu0 0.0
    %758 = vmatpush.msra.mxu0 0.0
    %759 = vmatpush.msra.mxu0 0.0
    %760 = vmatpush.msra.mxu0 %v120
    %761 = vmatpush.msra.mxu0 %v119
    %762 = vmatpush.msra.mxu0 %v118
    %763 = vmatpush.msra.mxu0 %v117
    %764 = vmatmul.f32.gmra.mxu0 %v746
    %v765 = vpop.f32.mrf.mxu0
    %v766 = vadd.f32 0.0, %v765
    %767 = vdwg.mxu0
    %v768 = vadd.f32 %v745, %v766
    %v769 = vmul.f32 %v768, 0.5
    %v770 = vsel %vm134, %v768, %v769
    %v771 = vtanh.pop %v770
    %v772 = vmul.f32 %v771, 0.5
    %v773 = vadd.f32 %v772, 0.5
    %v774 = vsel %vm134, %v771, %v773
    %v775 = vmul.f32 %v774, %v683
    %777 = vrot.lane.b32.xlu0 %v774, 64
    %v778 = vpop.permute.xlu0 %777
    %v780 = vmul.f32 %v774, %v778
    %782 = vrot.lane.b32.xlu0 %v780, 32
    %v783 = vpop.permute.xlu0 %782
    %v785 = vadd.f32 %v775, %v783
    %v786 = vtanh.pop %v785
    %788 = vrot.lane.b32.xlu0 %v786, 64
    %v789 = vpop.permute.xlu0 %788
    %v791 = vmul.f32 %v774, %v789
    %793 = vrot.lane.b32.xlu0 %v791, 32
    %v794 = vpop.permute.xlu0 %793
    %797 = vrot.lane.b32.xlu0 %v744, 64
    %v798 = vpop.permute.xlu0 %797
    %v800 = vsel %vm57, %v794, %v798
    %v802 = vsel %vm188, %v800, 0
    %804 = vmatpush.msra.mxu0 0.0
    %805 = vmatpush.msra.mxu0 0.0
    %806 = vmatpush.msra.mxu0 0.0
    %807 = vmatpush.msra.mxu0 0.0
    %808 = vmatpush.msra.mxu0 0.0
    %809 = vmatpush.msra.mxu0 0.0
    %810 = vmatpush.msra.mxu0 0.0
    %811 = vmatpush.msra.mxu0 0.0
    %812 = vmatpush.msra.mxu0 %v128
    %813 = vmatpush.msra.mxu0 %v127
    %814 = vmatpush.msra.mxu0 %v126
    %815 = vmatpush.msra.mxu0 %v125
    %816 = vmatpush.msra.mxu0 %v124
    %817 = vmatpush.msra.mxu0 %v123
    %818 = vmatpush.msra.mxu0 %v122
    %819 = vmatpush.msra.mxu0 %v121
    %820 = vmatmul.f32.gmra.mxu0 %v802
    %v821 = vpop.f32.mrf.mxu0
    %v822 = vadd.f32 %v129, %v821
    %823 = vdwg.mxu0
    %v824 = vmul.f32 %v822, 0.5
    %v825 = vsel %vm134, %v822, %v824
    %v826 = vtanh.pop %v825
    %v827 = vmul.f32 %v826, 0.5
    %v828 = vadd.f32 %v827, 0.5
    %v829 = vsel %vm134, %v826, %v828
    %v830 = vmul.f32 %v829, %v738
    %832 = vrot.lane.b32.xlu0 %v829, 64
    %v833 = vpop.permute.xlu0 %832
    %v835 = vmul.f32 %v829, %v833
    %837 = vrot.lane.b32.xlu0 %v835, 32
    %v838 = vpop.permute.xlu0 %837
    %v840 = vadd.f32 %v830, %v838
    %v841 = vtanh.pop %v840
    %843 = vrot.lane.b32.xlu0 %v841, 64
    %v844 = vpop.permute.xlu0 %843
    %v846 = vmul.f32 %v829, %v844
    %v847 = vld [vmem:[#allocation2 + $0x7] sm:$0x1]
    %v848 = vsel %vm57, %v794, 0
    %850 = vmatpush.msra.mxu0 0.0
    %851 = vmatpush.msra.mxu0 0.0
    %852 = vmatpush.msra.mxu0 0.0
    %853 = vmatpush.msra.mxu0 0.0
    %854 = vmatpush.msra.mxu0 0.0
    %855 = vmatpush.msra.mxu0 0.0
    %856 = vmatpush.msra.mxu0 0.0
    %857 = vmatpush.msra.mxu0 0.0
    %858 = vmatpush.msra.mxu0 0.0
    %859 = vmatpush.msra.mxu0 0.0
    %860 = vmatpush.msra.mxu0 0.0
    %861 = vmatpush.msra.mxu0 0.0
    %862 = vmatpush.msra.mxu0 %v120
    %863 = vmatpush.msra.mxu0 %v119
    %864 = vmatpush.msra.mxu0 %v118
    %865 = vmatpush.msra.mxu0 %v117
    %866 = vmatmul.f32.gmra.mxu0 %v848
    %v867 = vpop.f32.mrf.mxu0
    %v868 = vadd.f32 0.0, %v867
    %869 = vdwg.mxu0
    %v870 = vadd.f32 %v847, %v868
    %v871 = vmul.f32 %v870, 0.5
    %v872 = vsel %vm134, %v870, %v871
    %v873 = vtanh.pop %v872
    %v874 = vmul.f32 %v873, 0.5
    %v875 = vadd.f32 %v874, 0.5
    %v876 = vsel %vm134, %v873, %v875
    %v877 = vmul.f32 %v876, %v785
    %879 = vrot.lane.b32.xlu0 %v876, 64
    %v880 = vpop.permute.xlu0 %879
    %v882 = vmul.f32 %v876, %v880
    %884 = vrot.lane.b32.xlu0 %v882, 32
    %v885 = vpop.permute.xlu0 %884
    %v887 = vadd.f32 %v877, %v885
    %v888 = vtanh.pop %v887
    %890 = vrot.lane.b32.xlu0 %v888, 64
    %v891 = vpop.permute.xlu0 %890
    %v893 = vmul.f32 %v876, %v891
    %895 = vrot.lane.b32.xlu0 %v893, 32
    %v896 = vpop.permute.xlu0 %895
    %899 = vrot.lane.b32.xlu0 %v846, 64
    %v900 = vpop.permute.xlu0 %899
    %v902 = vsel %vm57, %v896, %v900
    %v904 = vsel %vm188, %v902, 0
    %906 = vmatpush.msra.mxu0 0.0
    %907 = vmatpush.msra.mxu0 0.0
    %908 = vmatpush.msra.mxu0 0.0
    %909 = vmatpush.msra.mxu0 0.0
    %910 = vmatpush.msra.mxu0 0.0
    %911 = vmatpush.msra.mxu0 0.0
    %912 = vmatpush.msra.mxu0 0.0
    %913 = vmatpush.msra.mxu0 0.0
    %914 = vmatpush.msra.mxu0 %v128
    %915 = vmatpush.msra.mxu0 %v127
    %916 = vmatpush.msra.mxu0 %v126
    %917 = vmatpush.msra.mxu0 %v125
    %918 = vmatpush.msra.mxu0 %v124
    %919 = vmatpush.msra.mxu0 %v123
    %920 = vmatpush.msra.mxu0 %v122
    %921 = vmatpush.msra.mxu0 %v121
    %922 = vmatmul.f32.gmra.mxu0 %v904
    %v923 = vpop.f32.mrf.mxu0
    %v924 = vadd.f32 %v129, %v923
    %925 = vdwg.mxu0
    %v926 = vmul.f32 %v924, 0.5
    %v927 = vsel %vm134, %v924, %v926
    %v928 = vtanh.pop %v927
    %v929 = vmul.f32 %v928, 0.5
    %v930 = vadd.f32 %v929, 0.5
    %v931 = vsel %vm134, %v928, %v930
    %v932 = vmul.f32 %v931, %v840
    %934 = vrot.lane.b32.xlu0 %v931, 64
    %v935 = vpop.permute.xlu0 %934
    %v937 = vmul.f32 %v931, %v935
    %939 = vrot.lane.b32.xlu0 %v937, 32
    %v940 = vpop.permute.xlu0 %939
    %v942 = vadd.f32 %v932, %v940
    %v943 = vtanh.pop %v942
    %945 = vrot.lane.b32.xlu0 %v943, 64
    %v946 = vpop.permute.xlu0 %945
    %v948 = vmul.f32 %v931, %v946
    %v949 = vld [vmem:[#allocation2 + $0x8] sm:$0x1]
    %v950 = vsel %vm57, %v896, 0
    %952 = vmatpush.msra.mxu0 0.0
    %953 = vmatpush.msra.mxu0 0.0
    %954 = vmatpush.msra.mxu0 0.0
    %955 = vmatpush.msra.mxu0 0.0
    %956 = vmatpush.msra.mxu0 0.0
    %957 = vmatpush.msra.mxu0 0.0
    %958 = vmatpush.msra.mxu0 0.0
    %959 = vmatpush.msra.mxu0 0.0
    %960 = vmatpush.msra.mxu0 0.0
    %961 = vmatpush.msra.mxu0 0.0
    %962 = vmatpush.msra.mxu0 0.0
    %963 = vmatpush.msra.mxu0 0.0
    %964 = vmatpush.msra.mxu0 %v120
    %965 = vmatpush.msra.mxu0 %v119
    %966 = vmatpush.msra.mxu0 %v118
    %967 = vmatpush.msra.mxu0 %v117
    %968 = vmatmul.f32.gmra.mxu0 %v950
    %v969 = vpop.f32.mrf.mxu0
    %v970 = vadd.f32 0.0, %v969
    %971 = vdwg.mxu0
    %v972 = vadd.f32 %v949, %v970
    %v973 = vmul.f32 %v972, 0.5
    %v974 = vsel %vm134, %v972, %v973
    %v975 = vtanh.pop %v974
    %v976 = vmul.f32 %v975, 0.5
    %v977 = vadd.f32 %v976, 0.5
    %v978 = vsel %vm134, %v975, %v977
    %v979 = vmul.f32 %v978, %v887
    %981 = vrot.lane.b32.xlu0 %v978, 64
    %v982 = vpop.permute.xlu0 %981
    %v984 = vmul.f32 %v978, %v982
    %986 = vrot.lane.b32.xlu0 %v984, 32
    %v987 = vpop.permute.xlu0 %986
    %v989 = vadd.f32 %v979, %v987
    %v990 = vtanh.pop %v989
    %992 = vrot.lane.b32.xlu0 %v990, 64
    %v993 = vpop.permute.xlu0 %992
    %v995 = vmul.f32 %v978, %v993
    %997 = vrot.lane.b32.xlu0 %v995, 32
    %v998 = vpop.permute.xlu0 %997
    %1001 = vrot.lane.b32.xlu0 %v948, 64
    %v1002 = vpop.permute.xlu0 %1001
    %v1004 = vsel %vm57, %v998, %v1002
    %v1006 = vsel %vm188, %v1004, 0
    %1008 = vmatpush.msra.mxu0 0.0
    %1009 = vmatpush.msra.mxu0 0.0
    %1010 = vmatpush.msra.mxu0 0.0
    %1011 = vmatpush.msra.mxu0 0.0
    %1012 = vmatpush.msra.mxu0 0.0
    %1013 = vmatpush.msra.mxu0 0.0
    %1014 = vmatpush.msra.mxu0 0.0
    %1015 = vmatpush.msra.mxu0 0.0
    %1016 = vmatpush.msra.mxu0 %v128
    %1017 = vmatpush.msra.mxu0 %v127
    %1018 = vmatpush.msra.mxu0 %v126
    %1019 = vmatpush.msra.mxu0 %v125
    %1020 = vmatpush.msra.mxu0 %v124
    %1021 = vmatpush.msra.mxu0 %v123
    %1022 = vmatpush.msra.mxu0 %v122
    %1023 = vmatpush.msra.mxu0 %v121
    %1024 = vmatmul.f32.gmra.mxu0 %v1006
    %v1025 = vpop.f32.mrf.mxu0
    %v1026 = vadd.f32 %v129, %v1025
    %1027 = vdwg.mxu0
    %v1028 = vmul.f32 %v1026, 0.5
    %v1029 = vsel %vm134, %v1026, %v1028
    %v1030 = vtanh.pop %v1029
    %v1031 = vmul.f32 %v1030, 0.5
    %v1032 = vadd.f32 %v1031, 0.5
    %v1033 = vsel %vm134, %v1030, %v1032
    %v1034 = vmul.f32 %v1033, %v942
    %1036 = vrot.lane.b32.xlu0 %v1033, 64
    %v1037 = vpop.permute.xlu0 %1036
    %v1039 = vmul.f32 %v1033, %v1037
    %1041 = vrot.lane.b32.xlu0 %v1039, 32
    %v1042 = vpop.permute.xlu0 %1041
    %v1044 = vadd.f32 %v1034, %v1042
    %v1045 = vtanh.pop %v1044
    %1047 = vrot.lane.b32.xlu0 %v1045, 64
    %v1048 = vpop.permute.xlu0 %1047
    %v1050 = vmul.f32 %v1033, %v1048
    %v1051 = vld [vmem:[#allocation2 + $0x9] sm:$0x1]
    %v1052 = vsel %vm57, %v998, 0
    %1054 = vmatpush.msra.mxu0 0.0
    %1055 = vmatpush.msra.mxu0 0.0
    %1056 = vmatpush.msra.mxu0 0.0
    %1057 = vmatpush.msra.mxu0 0.0
    %1058 = vmatpush.msra.mxu0 0.0
    %1059 = vmatpush.msra.mxu0 0.0
    %1060 = vmatpush.msra.mxu0 0.0
    %1061 = vmatpush.msra.mxu0 0.0
    %1062 = vmatpush.msra.mxu0 0.0
    %1063 = vmatpush.msra.mxu0 0.0
    %1064 = vmatpush.msra.mxu0 0.0
    %1065 = vmatpush.msra.mxu0 0.0
    %1066 = vmatpush.msra.mxu0 %v120
    %1067 = vmatpush.msra.mxu0 %v119
    %1068 = vmatpush.msra.mxu0 %v118
    %1069 = vmatpush.msra.mxu0 %v117
    %1070 = vmatmul.f32.gmra.mxu0 %v1052
    %v1071 = vpop.f32.mrf.mxu0
    %v1072 = vadd.f32 0.0, %v1071
    %1073 = vdwg.mxu0
    %v1074 = vadd.f32 %v1051, %v1072
    %v1075 = vmul.f32 %v1074, 0.5
    %v1076 = vsel %vm134, %v1074, %v1075
    %v1077 = vtanh.pop %v1076
    %v1078 = vmul.f32 %v1077, 0.5
    %v1079 = vadd.f32 %v1078, 0.5
    %v1080 = vsel %vm134, %v1077, %v1079
    %v1081 = vmul.f32 %v1080, %v989
    %1083 = vrot.lane.b32.xlu0 %v1080, 64
    %v1084 = vpop.permute.xlu0 %1083
    %v1086 = vmul.f32 %v1080, %v1084
    %1088 = vrot.lane.b32.xlu0 %v1086, 32
    %v1089 = vpop.permute.xlu0 %1088
    %v1091 = vadd.f32 %v1081, %v1089
    %v1092 = vtanh.pop %v1091
    %1094 = vrot.lane.b32.xlu0 %v1092, 64
    %v1095 = vpop.permute.xlu0 %1094
    %v1097 = vmul.f32 %v1080, %v1095
    %1099 = vrot.lane.b32.xlu0 %v1097, 32
    %v1100 = vpop.permute.xlu0 %1099
    %1103 = vrot.lane.b32.xlu0 %v1050, 64
    %v1104 = vpop.permute.xlu0 %1103
    %v1106 = vsel %vm57, %v1100, %v1104
    %v1108 = vsel %vm188, %v1106, 0
    %1110 = vmatpush.msra.mxu0 0.0
    %1111 = vmatpush.msra.mxu0 0.0
    %1112 = vmatpush.msra.mxu0 0.0
    %1113 = vmatpush.msra.mxu0 0.0
    %1114 = vmatpush.msra.mxu0 0.0
    %1115 = vmatpush.msra.mxu0 0.0
    %1116 = vmatpush.msra.mxu0 0.0
    %1117 = vmatpush.msra.mxu0 0.0
    %1118 = vmatpush.msra.mxu0 %v128
    %1119 = vmatpush.msra.mxu0 %v127
    %1120 = vmatpush.msra.mxu0 %v126
    %1121 = vmatpush.msra.mxu0 %v125
    %1122 = vmatpush.msra.mxu0 %v124
    %1123 = vmatpush.msra.mxu0 %v123
    %1124 = vmatpush.msra.mxu0 %v122
    %1125 = vmatpush.msra.mxu0 %v121
    %1126 = vmatmul.f32.gmra.mxu0 %v1108
    %v1127 = vpop.f32.mrf.mxu0
    %v1128 = vadd.f32 %v129, %v1127
    %1129 = vdwg.mxu0
    %v1130 = vmul.f32 %v1128, 0.5
    %v1131 = vsel %vm134, %v1128, %v1130
    %v1132 = vtanh.pop %v1131
    %v1133 = vmul.f32 %v1132, 0.5
    %v1134 = vadd.f32 %v1133, 0.5
    %v1135 = vsel %vm134, %v1132, %v1134
    %v1136 = vmul.f32 %v1135, %v1044
    %1138 = vrot.lane.b32.xlu0 %v1135, 64
    %v1139 = vpop.permute.xlu0 %1138
    %v1141 = vmul.f32 %v1135, %v1139
    %1143 = vrot.lane.b32.xlu0 %v1141, 32
    %v1144 = vpop.permute.xlu0 %1143
    %v1146 = vadd.f32 %v1136, %v1144
    %v1147 = vtanh.pop %v1146
    %1149 = vrot.lane.b32.xlu0 %v1147, 64
    %v1150 = vpop.permute.xlu0 %1149
    %v1152 = vmul.f32 %v1135, %v1150
    %v1153 = vld [vmem:[#allocation2 + $0xa] sm:$0x1]
    %v1154 = vsel %vm57, %v1100, 0
    %1156 = vmatpush.msra.mxu0 0.0
    %1157 = vmatpush.msra.mxu0 0.0
    %1158 = vmatpush.msra.mxu0 0.0
    %1159 = vmatpush.msra.mxu0 0.0
    %1160 = vmatpush.msra.mxu0 0.0
    %1161 = vmatpush.msra.mxu0 0.0
    %1162 = vmatpush.msra.mxu0 0.0
    %1163 = vmatpush.msra.mxu0 0.0
    %1164 = vmatpush.msra.mxu0 0.0
    %1165 = vmatpush.msra.mxu0 0.0
    %1166 = vmatpush.msra.mxu0 0.0
    %1167 = vmatpush.msra.mxu0 0.0
    %1168 = vmatpush.msra.mxu0 %v120
    %1169 = vmatpush.msra.mxu0 %v119
    %1170 = vmatpush.msra.mxu0 %v118
    %1171 = vmatpush.msra.mxu0 %v117
    %1172 = vmatmul.f32.gmra.mxu0 %v1154
    %v1173 = vpop.f32.mrf.mxu0
    %v1174 = vadd.f32 0.0, %v1173
    %1175 = vdwg.mxu0
    %v1176 = vadd.f32 %v1153, %v1174
    %v1177 = vmul.f32 %v1176, 0.5
    %v1178 = vsel %vm134, %v1176, %v1177
    %v1179 = vtanh.pop %v1178
    %v1180 = vmul.f32 %v1179, 0.5
    %v1181 = vadd.f32 %v1180, 0.5
    %v1182 = vsel %vm134, %v1179, %v1181
    %v1183 = vmul.f32 %v1182, %v1091
    %1185 = vrot.lane.b32.xlu0 %v1182, 64
    %v1186 = vpop.permute.xlu0 %1185
    %v1188 = vmul.f32 %v1182, %v1186
    %1190 = vrot.lane.b32.xlu0 %v1188, 32
    %v1191 = vpop.permute.xlu0 %1190
    %v1193 = vadd.f32 %v1183, %v1191
    %v1194 = vtanh.pop %v1193
    %1196 = vrot.lane.b32.xlu0 %v1194, 64
    %v1197 = vpop.permute.xlu0 %1196
    %v1199 = vmul.f32 %v1182, %v1197
    %1201 = vrot.lane.b32.xlu0 %v1199, 32
    %v1202 = vpop.permute.xlu0 %1201
    %1205 = vrot.lane.b32.xlu0 %v1152, 64
    %v1206 = vpop.permute.xlu0 %1205
    %v1208 = vsel %vm57, %v1202, %v1206
    %v1210 = vsel %vm188, %v1208, 0
    %1212 = vmatpush.msra.mxu0 0.0
    %1213 = vmatpush.msra.mxu0 0.0
    %1214 = vmatpush.msra.mxu0 0.0
    %1215 = vmatpush.msra.mxu0 0.0
    %1216 = vmatpush.msra.mxu0 0.0
    %1217 = vmatpush.msra.mxu0 0.0
    %1218 = vmatpush.msra.mxu0 0.0
    %1219 = vmatpush.msra.mxu0 0.0
    %1220 = vmatpush.msra.mxu0 %v128
    %1221 = vmatpush.msra.mxu0 %v127
    %1222 = vmatpush.msra.mxu0 %v126
    %1223 = vmatpush.msra.mxu0 %v125
    %1224 = vmatpush.msra.mxu0 %v124
    %1225 = vmatpush.msra.mxu0 %v123
    %1226 = vmatpush.msra.mxu0 %v122
    %1227 = vmatpush.msra.mxu0 %v121
    %1228 = vmatmul.f32.gmra.mxu0 %v1210
    %v1229 = vpop.f32.mrf.mxu0
    %v1230 = vadd.f32 %v129, %v1229
    %1231 = vdwg.mxu0
    %v1232 = vmul.f32 %v1230, 0.5
    %v1233 = vsel %vm134, %v1230, %v1232
    %v1234 = vtanh.pop %v1233
    %v1235 = vmul.f32 %v1234, 0.5
    %v1236 = vadd.f32 %v1235, 0.5
    %v1237 = vsel %vm134, %v1234, %v1236
    %v1238 = vmul.f32 %v1237, %v1146
    %1240 = vrot.lane.b32.xlu0 %v1237, 64
    %v1241 = vpop.permute.xlu0 %1240
    %v1243 = vmul.f32 %v1237, %v1241
    %1245 = vrot.lane.b32.xlu0 %v1243, 32
    %v1246 = vpop.permute.xlu0 %1245
    %v1248 = vadd.f32 %v1238, %v1246
    %v1249 = vtanh.pop %v1248
    %1251 = vrot.lane.b32.xlu0 %v1249, 64
    %v1252 = vpop.permute.xlu0 %1251
    %v1254 = vmul.f32 %v1237, %v1252
    %v1255 = vld [vmem:[#allocation2 + $0xb] sm:$0x1]
    %v1256 = vsel %vm57, %v1202, 0
    %1258 = vmatpush.msra.mxu0 0.0
    %1259 = vmatpush.msra.mxu0 0.0
    %1260 = vmatpush.msra.mxu0 0.0
    %1261 = vmatpush.msra.mxu0 0.0
    %1262 = vmatpush.msra.mxu0 0.0
    %1263 = vmatpush.msra.mxu0 0.0
    %1264 = vmatpush.msra.mxu0 0.0
    %1265 = vmatpush.msra.mxu0 0.0
    %1266 = vmatpush.msra.mxu0 0.0
    %1267 = vmatpush.msra.mxu0 0.0
    %1268 = vmatpush.msra.mxu0 0.0
    %1269 = vmatpush.msra.mxu0 0.0
    %1270 = vmatpush.msra.mxu0 %v120
    %1271 = vmatpush.msra.mxu0 %v119
    %1272 = vmatpush.msra.mxu0 %v118
    %1273 = vmatpush.msra.mxu0 %v117
    %1274 = vmatmul.f32.gmra.mxu0 %v1256
    %v1275 = vpop.f32.mrf.mxu0
    %v1276 = vadd.f32 0.0, %v1275
    %1277 = vdwg.mxu0
    %v1278 = vadd.f32 %v1255, %v1276
    %v1279 = vmul.f32 %v1278, 0.5
    %v1280 = vsel %vm134, %v1278, %v1279
    %v1281 = vtanh.pop %v1280
    %v1282 = vmul.f32 %v1281, 0.5
    %v1283 = vadd.f32 %v1282, 0.5
    %v1284 = vsel %vm134, %v1281, %v1283
    %v1285 = vmul.f32 %v1284, %v1193
    %1287 = vrot.lane.b32.xlu0 %v1284, 64
    %v1288 = vpop.permute.xlu0 %1287
    %v1290 = vmul.f32 %v1284, %v1288
    %1292 = vrot.lane.b32.xlu0 %v1290, 32
    %v1293 = vpop.permute.xlu0 %1292
    %v1295 = vadd.f32 %v1285, %v1293
    %v1296 = vtanh.pop %v1295
    %1298 = vrot.lane.b32.xlu0 %v1296, 64
    %v1299 = vpop.permute.xlu0 %1298
    %v1301 = vmul.f32 %v1284, %v1299
    %1303 = vrot.lane.b32.xlu0 %v1301, 32
    %v1304 = vpop.permute.xlu0 %1303
    %1307 = vrot.lane.b32.xlu0 %v1254, 64
    %v1308 = vpop.permute.xlu0 %1307
    %v1310 = vsel %vm57, %v1304, %v1308
    %v1312 = vsel %vm188, %v1310, 0
    %1314 = vmatpush.msra.mxu0 0.0
    %1315 = vmatpush.msra.mxu0 0.0
    %1316 = vmatpush.msra.mxu0 0.0
    %1317 = vmatpush.msra.mxu0 0.0
    %1318 = vmatpush.msra.mxu0 0.0
    %1319 = vmatpush.msra.mxu0 0.0
    %1320 = vmatpush.msra.mxu0 0.0
    %1321 = vmatpush.msra.mxu0 0.0
    %1322 = vmatpush.msra.mxu0 %v128
    %1323 = vmatpush.msra.mxu0 %v127
    %1324 = vmatpush.msra.mxu0 %v126
    %1325 = vmatpush.msra.mxu0 %v125
    %1326 = vmatpush.msra.mxu0 %v124
    %1327 = vmatpush.msra.mxu0 %v123
    %1328 = vmatpush.msra.mxu0 %v122
    %1329 = vmatpush.msra.mxu0 %v121
    %1330 = vmatmul.f32.gmra.mxu0 %v1312
    %v1331 = vpop.f32.mrf.mxu0
    %v1332 = vadd.f32 %v129, %v1331
    %1333 = vdwg.mxu0
    %v1334 = vmul.f32 %v1332, 0.5
    %v1335 = vsel %vm134, %v1332, %v1334
    %v1336 = vtanh.pop %v1335
    %v1337 = vmul.f32 %v1336, 0.5
    %v1338 = vadd.f32 %v1337, 0.5
    %v1339 = vsel %vm134, %v1336, %v1338
    %v1340 = vmul.f32 %v1339, %v1248
    %1342 = vrot.lane.b32.xlu0 %v1339, 64
    %v1343 = vpop.permute.xlu0 %1342
    %v1345 = vmul.f32 %v1339, %v1343
    %1347 = vrot.lane.b32.xlu0 %v1345, 32
    %v1348 = vpop.permute.xlu0 %1347
    %v1350 = vadd.f32 %v1340, %v1348
    %v1351 = vtanh.pop %v1350
    %1353 = vrot.lane.b32.xlu0 %v1351, 64
    %v1354 = vpop.permute.xlu0 %1353
    %v1356 = vmul.f32 %v1339, %v1354
    %v1357 = vld [vmem:[#allocation2 + $0xc] sm:$0x1]
    %v1358 = vsel %vm57, %v1304, 0
    %1360 = vmatpush.msra.mxu0 0.0
    %1361 = vmatpush.msra.mxu0 0.0
    %1362 = vmatpush.msra.mxu0 0.0
    %1363 = vmatpush.msra.mxu0 0.0
    %1364 = vmatpush.msra.mxu0 0.0
    %1365 = vmatpush.msra.mxu0 0.0
    %1366 = vmatpush.msra.mxu0 0.0
    %1367 = vmatpush.msra.mxu0 0.0
    %1368 = vmatpush.msra.mxu0 0.0
    %1369 = vmatpush.msra.mxu0 0.0
    %1370 = vmatpush.msra.mxu0 0.0
    %1371 = vmatpush.msra.mxu0 0.0
    %1372 = vmatpush.msra.mxu0 %v120
    %1373 = vmatpush.msra.mxu0 %v119
    %1374 = vmatpush.msra.mxu0 %v118
    %1375 = vmatpush.msra.mxu0 %v117
    %1376 = vmatmul.f32.gmra.mxu0 %v1358
    %v1377 = vpop.f32.mrf.mxu0
    %v1378 = vadd.f32 0.0, %v1377
    %1379 = vdwg.mxu0
    %v1380 = vadd.f32 %v1357, %v1378
    %v1381 = vmul.f32 %v1380, 0.5
    %v1382 = vsel %vm134, %v1380, %v1381
    %v1383 = vtanh.pop %v1382
    %v1384 = vmul.f32 %v1383, 0.5
    %v1385 = vadd.f32 %v1384, 0.5
    %v1386 = vsel %vm134, %v1383, %v1385
    %v1387 = vmul.f32 %v1386, %v1295
    %1389 = vrot.lane.b32.xlu0 %v1386, 64
    %v1390 = vpop.permute.xlu0 %1389
    %v1392 = vmul.f32 %v1386, %v1390
    %1394 = vrot.lane.b32.xlu0 %v1392, 32
    %v1395 = vpop.permute.xlu0 %1394
    %v1397 = vadd.f32 %v1387, %v1395
    %v1398 = vtanh.pop %v1397
    %1400 = vrot.lane.b32.xlu0 %v1398, 64
    %v1401 = vpop.permute.xlu0 %1400
    %v1403 = vmul.f32 %v1386, %v1401
    %1405 = vrot.lane.b32.xlu0 %v1403, 32
    %v1406 = vpop.permute.xlu0 %1405
    %1409 = vrot.lane.b32.xlu0 %v1356, 64
    %v1410 = vpop.permute.xlu0 %1409
    %v1412 = vsel %vm57, %v1406, %v1410
    %v1414 = vsel %vm188, %v1412, 0
    %1416 = vmatpush.msra.mxu0 0.0
    %1417 = vmatpush.msra.mxu0 0.0
    %1418 = vmatpush.msra.mxu0 0.0
    %1419 = vmatpush.msra.mxu0 0.0
    %1420 = vmatpush.msra.mxu0 0.0
    %1421 = vmatpush.msra.mxu0 0.0
    %1422 = vmatpush.msra.mxu0 0.0
    %1423 = vmatpush.msra.mxu0 0.0
    %1424 = vmatpush.msra.mxu0 %v128
    %1425 = vmatpush.msra.mxu0 %v127
    %1426 = vmatpush.msra.mxu0 %v126
    %1427 = vmatpush.msra.mxu0 %v125
    %1428 = vmatpush.msra.mxu0 %v124
    %1429 = vmatpush.msra.mxu0 %v123
    %1430 = vmatpush.msra.mxu0 %v122
    %1431 = vmatpush.msra.mxu0 %v121
    %1432 = vmatmul.f32.gmra.mxu0 %v1414
    %v1433 = vpop.f32.mrf.mxu0
    %v1434 = vadd.f32 %v129, %v1433
    %1435 = vdwg.mxu0
    %v1436 = vmul.f32 %v1434, 0.5
    %v1437 = vsel %vm134, %v1434, %v1436
    %v1438 = vtanh.pop %v1437
    %v1439 = vmul.f32 %v1438, 0.5
    %v1440 = vadd.f32 %v1439, 0.5
    %v1441 = vsel %vm134, %v1438, %v1440
    %v1442 = vmul.f32 %v1441, %v1350
    %1444 = vrot.lane.b32.xlu0 %v1441, 64
    %v1445 = vpop.permute.xlu0 %1444
    %v1447 = vmul.f32 %v1441, %v1445
    %1449 = vrot.lane.b32.xlu0 %v1447, 32
    %v1450 = vpop.permute.xlu0 %1449
    %v1452 = vadd.f32 %v1442, %v1450
    %v1453 = vtanh.pop %v1452
    %1455 = vrot.lane.b32.xlu0 %v1453, 64
    %v1456 = vpop.permute.xlu0 %1455
    %v1458 = vmul.f32 %v1441, %v1456
    %v1459 = vld [vmem:[#allocation2 + $0xd] sm:$0x1]
    %v1460 = vsel %vm57, %v1406, 0
    %1462 = vmatpush.msra.mxu0 0.0
    %1463 = vmatpush.msra.mxu0 0.0
    %1464 = vmatpush.msra.mxu0 0.0
    %1465 = vmatpush.msra.mxu0 0.0
    %1466 = vmatpush.msra.mxu0 0.0
    %1467 = vmatpush.msra.mxu0 0.0
    %1468 = vmatpush.msra.mxu0 0.0
    %1469 = vmatpush.msra.mxu0 0.0
    %1470 = vmatpush.msra.mxu0 0.0
    %1471 = vmatpush.msra.mxu0 0.0
    %1472 = vmatpush.msra.mxu0 0.0
    %1473 = vmatpush.msra.mxu0 0.0
    %1474 = vmatpush.msra.mxu0 %v120
    %1475 = vmatpush.msra.mxu0 %v119
    %1476 = vmatpush.msra.mxu0 %v118
    %1477 = vmatpush.msra.mxu0 %v117
    %1478 = vmatmul.f32.gmra.mxu0 %v1460
    %v1479 = vpop.f32.mrf.mxu0
    %v1480 = vadd.f32 0.0, %v1479
    %1481 = vdwg.mxu0
    %v1482 = vadd.f32 %v1459, %v1480
    %v1483 = vmul.f32 %v1482, 0.5
    %v1484 = vsel %vm134, %v1482, %v1483
    %v1485 = vtanh.pop %v1484
    %v1486 = vmul.f32 %v1485, 0.5
    %v1487 = vadd.f32 %v1486, 0.5
    %v1488 = vsel %vm134, %v1485, %v1487
    %v1489 = vmul.f32 %v1488, %v1397
    %1491 = vrot.lane.b32.xlu0 %v1488, 64
    %v1492 = vpop.permute.xlu0 %1491
    %v1494 = vmul.f32 %v1488, %v1492
    %1496 = vrot.lane.b32.xlu0 %v1494, 32
    %v1497 = vpop.permute.xlu0 %1496
    %v1499 = vadd.f32 %v1489, %v1497
    %v1500 = vtanh.pop %v1499
    %1502 = vrot.lane.b32.xlu0 %v1500, 64
    %v1503 = vpop.permute.xlu0 %1502
    %v1505 = vmul.f32 %v1488, %v1503
    %1507 = vrot.lane.b32.xlu0 %v1505, 32
    %v1508 = vpop.permute.xlu0 %1507
    %1511 = vrot.lane.b32.xlu0 %v1458, 64
    %v1512 = vpop.permute.xlu0 %1511
    %v1514 = vsel %vm57, %v1508, %v1512
    %v1516 = vsel %vm188, %v1514, 0
    %1518 = vmatpush.msra.mxu0 0.0
    %1519 = vmatpush.msra.mxu0 0.0
    %1520 = vmatpush.msra.mxu0 0.0
    %1521 = vmatpush.msra.mxu0 0.0
    %1522 = vmatpush.msra.mxu0 0.0
    %1523 = vmatpush.msra.mxu0 0.0
    %1524 = vmatpush.msra.mxu0 0.0
    %1525 = vmatpush.msra.mxu0 0.0
    %1526 = vmatpush.msra.mxu0 %v128
    %1527 = vmatpush.msra.mxu0 %v127
    %1528 = vmatpush.msra.mxu0 %v126
    %1529 = vmatpush.msra.mxu0 %v125
    %1530 = vmatpush.msra.mxu0 %v124
    %1531 = vmatpush.msra.mxu0 %v123
    %1532 = vmatpush.msra.mxu0 %v122
    %1533 = vmatpush.msra.mxu0 %v121
    %1534 = vmatmul.f32.gmra.mxu0 %v1516
    %v1535 = vpop.f32.mrf.mxu0
    %v1536 = vadd.f32 %v129, %v1535
    %1537 = vdwg.mxu0
    %v1538 = vmul.f32 %v1536, 0.5
    %v1539 = vsel %vm134, %v1536, %v1538
    %v1540 = vtanh.pop %v1539
    %v1541 = vmul.f32 %v1540, 0.5
    %v1542 = vadd.f32 %v1541, 0.5
    %v1543 = vsel %vm134, %v1540, %v1542
    %v1544 = vmul.f32 %v1543, %v1452
    %1546 = vrot.lane.b32.xlu0 %v1543, 64
    %v1547 = vpop.permute.xlu0 %1546
    %v1549 = vmul.f32 %v1543, %v1547
    %1551 = vrot.lane.b32.xlu0 %v1549, 32
    %v1552 = vpop.permute.xlu0 %1551
    %v1554 = vadd.f32 %v1544, %v1552
    %v1555 = vtanh.pop %v1554
    %1557 = vrot.lane.b32.xlu0 %v1555, 64
    %v1558 = vpop.permute.xlu0 %1557
    %v1560 = vmul.f32 %v1543, %v1558
    %v1561 = vld [vmem:[#allocation2 + $0xe] sm:$0x1]
    %v1562 = vsel %vm57, %v1508, 0
    %1564 = vmatpush.msra.mxu0 0.0
    %1565 = vmatpush.msra.mxu0 0.0
    %1566 = vmatpush.msra.mxu0 0.0
    %1567 = vmatpush.msra.mxu0 0.0
    %1568 = vmatpush.msra.mxu0 0.0
    %1569 = vmatpush.msra.mxu0 0.0
    %1570 = vmatpush.msra.mxu0 0.0
    %1571 = vmatpush.msra.mxu0 0.0
    %1572 = vmatpush.msra.mxu0 0.0
    %1573 = vmatpush.msra.mxu0 0.0
    %1574 = vmatpush.msra.mxu0 0.0
    %1575 = vmatpush.msra.mxu0 0.0
    %1576 = vmatpush.msra.mxu0 %v120
    %1577 = vmatpush.msra.mxu0 %v119
    %1578 = vmatpush.msra.mxu0 %v118
    %1579 = vmatpush.msra.mxu0 %v117
    %1580 = vmatmul.f32.gmra.mxu0 %v1562
    %v1581 = vpop.f32.mrf.mxu0
    %v1582 = vadd.f32 0.0, %v1581
    %1583 = vdwg.mxu0
    %v1584 = vadd.f32 %v1561, %v1582
    %v1585 = vmul.f32 %v1584, 0.5
    %v1586 = vsel %vm134, %v1584, %v1585
    %v1587 = vtanh.pop %v1586
    %v1588 = vmul.f32 %v1587, 0.5
    %v1589 = vadd.f32 %v1588, 0.5
    %v1590 = vsel %vm134, %v1587, %v1589
    %v1591 = vmul.f32 %v1590, %v1499
    %1593 = vrot.lane.b32.xlu0 %v1590, 64
    %v1594 = vpop.permute.xlu0 %1593
    %v1596 = vmul.f32 %v1590, %v1594
    %1598 = vrot.lane.b32.xlu0 %v1596, 32
    %v1599 = vpop.permute.xlu0 %1598
    %v1601 = vadd.f32 %v1591, %v1599
    %v1602 = vtanh.pop %v1601
    %1604 = vrot.lane.b32.xlu0 %v1602, 64
    %v1605 = vpop.permute.xlu0 %1604
    %v1607 = vmul.f32 %v1590, %v1605
    %1609 = vrot.lane.b32.xlu0 %v1607, 32
    %v1610 = vpop.permute.xlu0 %1609
    %1613 = vrot.lane.b32.xlu0 %v1560, 64
    %v1614 = vpop.permute.xlu0 %1613
    %v1616 = vsel %vm57, %v1610, %v1614
    %v1618 = vsel %vm188, %v1616, 0
    %1620 = vmatpush.msra.mxu0 0.0
    %1621 = vmatpush.msra.mxu0 0.0
    %1622 = vmatpush.msra.mxu0 0.0
    %1623 = vmatpush.msra.mxu0 0.0
    %1624 = vmatpush.msra.mxu0 0.0
    %1625 = vmatpush.msra.mxu0 0.0
    %1626 = vmatpush.msra.mxu0 0.0
    %1627 = vmatpush.msra.mxu0 0.0
    %1628 = vmatpush.msra.mxu0 %v128
    %1629 = vmatpush.msra.mxu0 %v127
    %1630 = vmatpush.msra.mxu0 %v126
    %1631 = vmatpush.msra.mxu0 %v125
    %1632 = vmatpush.msra.mxu0 %v124
    %1633 = vmatpush.msra.mxu0 %v123
    %1634 = vmatpush.msra.mxu0 %v122
    %1635 = vmatpush.msra.mxu0 %v121
    %1636 = vmatmul.f32.gmra.mxu0 %v1618
    %v1637 = vpop.f32.mrf.mxu0
    %v1638 = vadd.f32 %v129, %v1637
    %1639 = vdwg.mxu0
    %v1640 = vmul.f32 %v1638, 0.5
    %v1641 = vsel %vm134, %v1638, %v1640
    %v1642 = vtanh.pop %v1641
    %v1643 = vmul.f32 %v1642, 0.5
    %v1644 = vadd.f32 %v1643, 0.5
    %v1645 = vsel %vm134, %v1642, %v1644
    %v1646 = vmul.f32 %v1645, %v1554
    %1648 = vrot.lane.b32.xlu0 %v1645, 64
    %v1649 = vpop.permute.xlu0 %1648
    %v1651 = vmul.f32 %v1645, %v1649
    %1653 = vrot.lane.b32.xlu0 %v1651, 32
    %v1654 = vpop.permute.xlu0 %1653
    %v1656 = vadd.f32 %v1646, %v1654
    %v1657 = vtanh.pop %v1656
    %1659 = vrot.lane.b32.xlu0 %v1657, 64
    %v1660 = vpop.permute.xlu0 %1659
    %v1662 = vmul.f32 %v1645, %v1660
    %v1663 = vld [vmem:[#allocation2 + $0xf] sm:$0x1]
    %v1664 = vsel %vm57, %v1610, 0
    %1666 = vmatpush.msra.mxu0 0.0
    %1667 = vmatpush.msra.mxu0 0.0
    %1668 = vmatpush.msra.mxu0 0.0
    %1669 = vmatpush.msra.mxu0 0.0
    %1670 = vmatpush.msra.mxu0 0.0
    %1671 = vmatpush.msra.mxu0 0.0
    %1672 = vmatpush.msra.mxu0 0.0
    %1673 = vmatpush.msra.mxu0 0.0
    %1674 = vmatpush.msra.mxu0 0.0
    %1675 = vmatpush.msra.mxu0 0.0
    %1676 = vmatpush.msra.mxu0 0.0
    %1677 = vmatpush.msra.mxu0 0.0
    %1678 = vmatpush.msra.mxu0 %v120
    %1679 = vmatpush.msra.mxu0 %v119
    %1680 = vmatpush.msra.mxu0 %v118
    %1681 = vmatpush.msra.mxu0 %v117
    %1682 = vmatmul.f32.gmra.mxu0 %v1664
    %v1683 = vpop.f32.mrf.mxu0
    %v1684 = vadd.f32 0.0, %v1683
    %1685 = vdwg.mxu0
    %v1686 = vadd.f32 %v1663, %v1684
    %v1687 = vmul.f32 %v1686, 0.5
    %v1688 = vsel %vm134, %v1686, %v1687
    %v1689 = vtanh.pop %v1688
    %v1690 = vmul.f32 %v1689, 0.5
    %v1691 = vadd.f32 %v1690, 0.5
    %v1692 = vsel %vm134, %v1689, %v1691
    %v1693 = vmul.f32 %v1692, %v1601
    %1695 = vrot.lane.b32.xlu0 %v1692, 64
    %v1696 = vpop.permute.xlu0 %1695
    %v1698 = vmul.f32 %v1692, %v1696
    %1700 = vrot.lane.b32.xlu0 %v1698, 32
    %v1701 = vpop.permute.xlu0 %1700
    %v1703 = vadd.f32 %v1693, %v1701
    %v1704 = vtanh.pop %v1703
    %1706 = vrot.lane.b32.xlu0 %v1704, 64
    %v1707 = vpop.permute.xlu0 %1706
    %v1709 = vmul.f32 %v1692, %v1707
    %1711 = vrot.lane.b32.xlu0 %v1709, 32
    %v1712 = vpop.permute.xlu0 %1711
    %1715 = vrot.lane.b32.xlu0 %v1662, 64
    %v1716 = vpop.permute.xlu0 %1715
    %v1718 = vsel %vm57, %v1712, %v1716
    %v1720 = vsel %vm188, %v1718, 0
    %1722 = vmatpush.msra.mxu0 0.0
    %1723 = vmatpush.msra.mxu0 0.0
    %1724 = vmatpush.msra.mxu0 0.0
    %1725 = vmatpush.msra.mxu0 0.0
    %1726 = vmatpush.msra.mxu0 0.0
    %1727 = vmatpush.msra.mxu0 0.0
    %1728 = vmatpush.msra.mxu0 0.0
    %1729 = vmatpush.msra.mxu0 0.0
    %1730 = vmatpush.msra.mxu0 %v128
    %1731 = vmatpush.msra.mxu0 %v127
    %1732 = vmatpush.msra.mxu0 %v126
    %1733 = vmatpush.msra.mxu0 %v125
    %1734 = vmatpush.msra.mxu0 %v124
    %1735 = vmatpush.msra.mxu0 %v123
    %1736 = vmatpush.msra.mxu0 %v122
    %1737 = vmatpush.msra.mxu0 %v121
    %1738 = vmatmul.f32.gmra.mxu0 %v1720
    %v1739 = vpop.f32.mrf.mxu0
    %v1740 = vadd.f32 %v129, %v1739
    %1741 = vdwg.mxu0
    %v1742 = vmul.f32 %v1740, 0.5
    %v1743 = vsel %vm134, %v1740, %v1742
    %v1744 = vtanh.pop %v1743
    %v1745 = vmul.f32 %v1744, 0.5
    %v1746 = vadd.f32 %v1745, 0.5
    %v1747 = vsel %vm134, %v1744, %v1746
    %v1748 = vmul.f32 %v1747, %v1656
    %1750 = vrot.lane.b32.xlu0 %v1747, 64
    %v1751 = vpop.permute.xlu0 %1750
    %v1753 = vmul.f32 %v1747, %v1751
    %1755 = vrot.lane.b32.xlu0 %v1753, 32
    %v1756 = vpop.permute.xlu0 %1755
    %v1758 = vadd.f32 %v1748, %v1756
    %v1759 = vtanh.pop %v1758
    %1761 = vrot.lane.b32.xlu0 %v1759, 64
    %v1762 = vpop.permute.xlu0 %1761
    %v1764 = vmul.f32 %v1747, %v1762
    %v1765 = vld [vmem:[#allocation2 + $0x10] sm:$0x1]
    %v1766 = vsel %vm57, %v1712, 0
    %1768 = vmatpush.msra.mxu0 0.0
    %1769 = vmatpush.msra.mxu0 0.0
    %1770 = vmatpush.msra.mxu0 0.0
    %1771 = vmatpush.msra.mxu0 0.0
    %1772 = vmatpush.msra.mxu0 0.0
    %1773 = vmatpush.msra.mxu0 0.0
    %1774 = vmatpush.msra.mxu0 0.0
    %1775 = vmatpush.msra.mxu0 0.0
    %1776 = vmatpush.msra.mxu0 0.0
    %1777 = vmatpush.msra.mxu0 0.0
    %1778 = vmatpush.msra.mxu0 0.0
    %1779 = vmatpush.msra.mxu0 0.0
    %1780 = vmatpush.msra.mxu0 %v120
    %1781 = vmatpush.msra.mxu0 %v119
    %1782 = vmatpush.msra.mxu0 %v118
    %1783 = vmatpush.msra.mxu0 %v117
    %1784 = vmatmul.f32.gmra.mxu0 %v1766
    %v1785 = vpop.f32.mrf.mxu0
    %v1786 = vadd.f32 0.0, %v1785
    %1787 = vdwg.mxu0
    %v1788 = vadd.f32 %v1765, %v1786
    %v1789 = vmul.f32 %v1788, 0.5
    %v1790 = vsel %vm134, %v1788, %v1789
    %v1791 = vtanh.pop %v1790
    %v1792 = vmul.f32 %v1791, 0.5
    %v1793 = vadd.f32 %v1792, 0.5
    %v1794 = vsel %vm134, %v1791, %v1793
    %v1795 = vmul.f32 %v1794, %v1703
    %1797 = vrot.lane.b32.xlu0 %v1794, 64
    %v1798 = vpop.permute.xlu0 %1797
    %v1800 = vmul.f32 %v1794, %v1798
    %1802 = vrot.lane.b32.xlu0 %v1800, 32
    %v1803 = vpop.permute.xlu0 %1802
    %v1805 = vadd.f32 %v1795, %v1803
    %v1806 = vtanh.pop %v1805
    %1808 = vrot.lane.b32.xlu0 %v1806, 64
    %v1809 = vpop.permute.xlu0 %1808
    %v1811 = vmul.f32 %v1794, %v1809
    %1813 = vrot.lane.b32.xlu0 %v1811, 32
    %v1814 = vpop.permute.xlu0 %1813
    %1817 = vrot.lane.b32.xlu0 %v1764, 64
    %v1818 = vpop.permute.xlu0 %1817
    %v1820 = vsel %vm57, %v1814, %v1818
    %v1822 = vsel %vm188, %v1820, 0
    %1824 = vmatpush.msra.mxu0 0.0
    %1825 = vmatpush.msra.mxu0 0.0
    %1826 = vmatpush.msra.mxu0 0.0
    %1827 = vmatpush.msra.mxu0 0.0
    %1828 = vmatpush.msra.mxu0 0.0
    %1829 = vmatpush.msra.mxu0 0.0
    %1830 = vmatpush.msra.mxu0 0.0
    %1831 = vmatpush.msra.mxu0 0.0
    %1832 = vmatpush.msra.mxu0 %v128
    %1833 = vmatpush.msra.mxu0 %v127
    %1834 = vmatpush.msra.mxu0 %v126
    %1835 = vmatpush.msra.mxu0 %v125
    %1836 = vmatpush.msra.mxu0 %v124
    %1837 = vmatpush.msra.mxu0 %v123
    %1838 = vmatpush.msra.mxu0 %v122
    %1839 = vmatpush.msra.mxu0 %v121
    %1840 = vmatmul.f32.gmra.mxu0 %v1822
    %v1841 = vpop.f32.mrf.mxu0
    %v1842 = vadd.f32 %v129, %v1841
    %1843 = vdwg.mxu0
    %v1844 = vmul.f32 %v1842, 0.5
    %v1845 = vsel %vm134, %v1842, %v1844
    %v1846 = vtanh.pop %v1845
    %v1847 = vmul.f32 %v1846, 0.5
    %v1848 = vadd.f32 %v1847, 0.5
    %v1849 = vsel %vm134, %v1846, %v1848
    %v1850 = vmul.f32 %v1849, %v1758
    %1852 = vrot.lane.b32.xlu0 %v1849, 64
    %v1853 = vpop.permute.xlu0 %1852
    %v1855 = vmul.f32 %v1849, %v1853
    %1857 = vrot.lane.b32.xlu0 %v1855, 32
    %v1858 = vpop.permute.xlu0 %1857
    %v1860 = vadd.f32 %v1850, %v1858
    %v1861 = vtanh.pop %v1860
    %1863 = vrot.lane.b32.xlu0 %v1861, 64
    %v1864 = vpop.permute.xlu0 %1863
    %v1866 = vmul.f32 %v1849, %v1864
    %v1867 = vld [vmem:[#allocation2 + $0x11] sm:$0x1]
    %v1868 = vsel %vm57, %v1814, 0
    %1870 = vmatpush.msra.mxu0 0.0
    %1871 = vmatpush.msra.mxu0 0.0
    %1872 = vmatpush.msra.mxu0 0.0
    %1873 = vmatpush.msra.mxu0 0.0
    %1874 = vmatpush.msra.mxu0 0.0
    %1875 = vmatpush.msra.mxu0 0.0
    %1876 = vmatpush.msra.mxu0 0.0
    %1877 = vmatpush.msra.mxu0 0.0
    %1878 = vmatpush.msra.mxu0 0.0
    %1879 = vmatpush.msra.mxu0 0.0
    %1880 = vmatpush.msra.mxu0 0.0
    %1881 = vmatpush.msra.mxu0 0.0
    %1882 = vmatpush.msra.mxu0 %v120
    %1883 = vmatpush.msra.mxu0 %v119
    %1884 = vmatpush.msra.mxu0 %v118
    %1885 = vmatpush.msra.mxu0 %v117
    %1886 = vmatmul.f32.gmra.mxu0 %v1868
    %v1887 = vpop.f32.mrf.mxu0
    %v1888 = vadd.f32 0.0, %v1887
    %1889 = vdwg.mxu0
    %v1890 = vadd.f32 %v1867, %v1888
    %v1891 = vmul.f32 %v1890, 0.5
    %v1892 = vsel %vm134, %v1890, %v1891
    %v1893 = vtanh.pop %v1892
    %v1894 = vmul.f32 %v1893, 0.5
    %v1895 = vadd.f32 %v1894, 0.5
    %v1896 = vsel %vm134, %v1893, %v1895
    %v1897 = vmul.f32 %v1896, %v1805
    %1899 = vrot.lane.b32.xlu0 %v1896, 64
    %v1900 = vpop.permute.xlu0 %1899
    %v1902 = vmul.f32 %v1896, %v1900
    %1904 = vrot.lane.b32.xlu0 %v1902, 32
    %v1905 = vpop.permute.xlu0 %1904
    %v1907 = vadd.f32 %v1897, %v1905
    %v1908 = vtanh.pop %v1907
    %1910 = vrot.lane.b32.xlu0 %v1908, 64
    %v1911 = vpop.permute.xlu0 %1910
    %v1913 = vmul.f32 %v1896, %v1911
    %1915 = vrot.lane.b32.xlu0 %v1913, 32
    %v1916 = vpop.permute.xlu0 %1915
    %1919 = vrot.lane.b32.xlu0 %v1866, 64
    %v1920 = vpop.permute.xlu0 %1919
    %v1922 = vsel %vm57, %v1916, %v1920
    %v1924 = vsel %vm188, %v1922, 0
    %1926 = vmatpush.msra.mxu0 0.0
    %1927 = vmatpush.msra.mxu0 0.0
    %1928 = vmatpush.msra.mxu0 0.0
    %1929 = vmatpush.msra.mxu0 0.0
    %1930 = vmatpush.msra.mxu0 0.0
    %1931 = vmatpush.msra.mxu0 0.0
    %1932 = vmatpush.msra.mxu0 0.0
    %1933 = vmatpush.msra.mxu0 0.0
    %1934 = vmatpush.msra.mxu0 %v128
    %1935 = vmatpush.msra.mxu0 %v127
    %1936 = vmatpush.msra.mxu0 %v126
    %1937 = vmatpush.msra.mxu0 %v125
    %1938 = vmatpush.msra.mxu0 %v124
    %1939 = vmatpush.msra.mxu0 %v123
    %1940 = vmatpush.msra.mxu0 %v122
    %1941 = vmatpush.msra.mxu0 %v121
    %1942 = vmatmul.f32.gmra.mxu0 %v1924
    %v1943 = vpop.f32.mrf.mxu0
    %v1944 = vadd.f32 %v129, %v1943
    %1945 = vdwg.mxu0
    %v1946 = vmul.f32 %v1944, 0.5
    %v1947 = vsel %vm134, %v1944, %v1946
    %v1948 = vtanh.pop %v1947
    %v1949 = vmul.f32 %v1948, 0.5
    %v1950 = vadd.f32 %v1949, 0.5
    %v1951 = vsel %vm134, %v1948, %v1950
    %v1952 = vmul.f32 %v1951, %v1860
    %1954 = vrot.lane.b32.xlu0 %v1951, 64
    %v1955 = vpop.permute.xlu0 %1954
    %v1957 = vmul.f32 %v1951, %v1955
    %1959 = vrot.lane.b32.xlu0 %v1957, 32
    %v1960 = vpop.permute.xlu0 %1959
    %v1962 = vadd.f32 %v1952, %v1960
    %v1963 = vtanh.pop %v1962
    %1965 = vrot.lane.b32.xlu0 %v1963, 64
    %v1966 = vpop.permute.xlu0 %1965
    %v1968 = vmul.f32 %v1951, %v1966
    %v1969 = vld [vmem:[#allocation2 + $0x12] sm:$0x1]
    %v1970 = vsel %vm57, %v1916, 0
    %1972 = vmatpush.msra.mxu0 0.0
    %1973 = vmatpush.msra.mxu0 0.0
    %1974 = vmatpush.msra.mxu0 0.0
    %1975 = vmatpush.msra.mxu0 0.0
    %1976 = vmatpush.msra.mxu0 0.0
    %1977 = vmatpush.msra.mxu0 0.0
    %1978 = vmatpush.msra.mxu0 0.0
    %1979 = vmatpush.msra.mxu0 0.0
    %1980 = vmatpush.msra.mxu0 0.0
    %1981 = vmatpush.msra.mxu0 0.0
    %1982 = vmatpush.msra.mxu0 0.0
    %1983 = vmatpush.msra.mxu0 0.0
    %1984 = vmatpush.msra.mxu0 %v120
    %1985 = vmatpush.msra.mxu0 %v119
    %1986 = vmatpush.msra.mxu0 %v118
    %1987 = vmatpush.msra.mxu0 %v117
    %1988 = vmatmul.f32.gmra.mxu0 %v1970
    %v1989 = vpop.f32.mrf.mxu0
    %v1990 = vadd.f32 0.0, %v1989
    %1991 = vdwg.mxu0
    %v1992 = vadd.f32 %v1969, %v1990
    %v1993 = vmul.f32 %v1992, 0.5
    %v1994 = vsel %vm134, %v1992, %v1993
    %v1995 = vtanh.pop %v1994
    %v1996 = vmul.f32 %v1995, 0.5
    %v1997 = vadd.f32 %v1996, 0.5
    %v1998 = vsel %vm134, %v1995, %v1997
    %v1999 = vmul.f32 %v1998, %v1907
    %2001 = vrot.lane.b32.xlu0 %v1998, 64
    %v2002 = vpop.permute.xlu0 %2001
    %v2004 = vmul.f32 %v1998, %v2002
    %2006 = vrot.lane.b32.xlu0 %v2004, 32
    %v2007 = vpop.permute.xlu0 %2006
    %v2009 = vadd.f32 %v1999, %v2007
    %v2010 = vtanh.pop %v2009
    %2012 = vrot.lane.b32.xlu0 %v2010, 64
    %v2013 = vpop.permute.xlu0 %2012
    %v2015 = vmul.f32 %v1998, %v2013
    %2017 = vrot.lane.b32.xlu0 %v2015, 32
    %v2018 = vpop.permute.xlu0 %2017
    %2021 = vrot.lane.b32.xlu0 %v1968, 64
    %v2022 = vpop.permute.xlu0 %2021
    %v2024 = vsel %vm57, %v2018, %v2022
    %v2026 = vsel %vm188, %v2024, 0
    %2028 = vmatpush.msra.mxu0 0.0
    %2029 = vmatpush.msra.mxu0 0.0
    %2030 = vmatpush.msra.mxu0 0.0
    %2031 = vmatpush.msra.mxu0 0.0
    %2032 = vmatpush.msra.mxu0 0.0
    %2033 = vmatpush.msra.mxu0 0.0
    %2034 = vmatpush.msra.mxu0 0.0
    %2035 = vmatpush.msra.mxu0 0.0
    %2036 = vmatpush.msra.mxu0 %v128
    %2037 = vmatpush.msra.mxu0 %v127
    %2038 = vmatpush.msra.mxu0 %v126
    %2039 = vmatpush.msra.mxu0 %v125
    %2040 = vmatpush.msra.mxu0 %v124
    %2041 = vmatpush.msra.mxu0 %v123
    %2042 = vmatpush.msra.mxu0 %v122
    %2043 = vmatpush.msra.mxu0 %v121
    %2044 = vmatmul.f32.gmra.mxu0 %v2026
    %v2045 = vpop.f32.mrf.mxu0
    %v2046 = vadd.f32 %v129, %v2045
    %2047 = vdwg.mxu0
    %v2048 = vmul.f32 %v2046, 0.5
    %v2049 = vsel %vm134, %v2046, %v2048
    %v2050 = vtanh.pop %v2049
    %v2051 = vmul.f32 %v2050, 0.5
    %v2052 = vadd.f32 %v2051, 0.5
    %v2053 = vsel %vm134, %v2050, %v2052
    %v2054 = vmul.f32 %v2053, %v1962
    %2056 = vrot.lane.b32.xlu0 %v2053, 64
    %v2057 = vpop.permute.xlu0 %2056
    %v2059 = vmul.f32 %v2053, %v2057
    %2061 = vrot.lane.b32.xlu0 %v2059, 32
    %v2062 = vpop.permute.xlu0 %2061
    %v2064 = vadd.f32 %v2054, %v2062
    %v2065 = vtanh.pop %v2064
    %2067 = vrot.lane.b32.xlu0 %v2065, 64
    %v2068 = vpop.permute.xlu0 %2067
    %v2070 = vmul.f32 %v2053, %v2068
    %v2071 = vld [vmem:[#allocation2 + $0x13] sm:$0x1]
    %v2072 = vsel %vm57, %v2018, 0
    %2074 = vmatpush.msra.mxu0 0.0
    %2075 = vmatpush.msra.mxu0 0.0
    %2076 = vmatpush.msra.mxu0 0.0
    %2077 = vmatpush.msra.mxu0 0.0
    %2078 = vmatpush.msra.mxu0 0.0
    %2079 = vmatpush.msra.mxu0 0.0
    %2080 = vmatpush.msra.mxu0 0.0
    %2081 = vmatpush.msra.mxu0 0.0
    %2082 = vmatpush.msra.mxu0 0.0
    %2083 = vmatpush.msra.mxu0 0.0
    %2084 = vmatpush.msra.mxu0 0.0
    %2085 = vmatpush.msra.mxu0 0.0
    %2086 = vmatpush.msra.mxu0 %v120
    %2087 = vmatpush.msra.mxu0 %v119
    %2088 = vmatpush.msra.mxu0 %v118
    %2089 = vmatpush.msra.mxu0 %v117
    %2090 = vmatmul.f32.gmra.mxu0 %v2072
    %v2091 = vpop.f32.mrf.mxu0
    %v2092 = vadd.f32 0.0, %v2091
    %2093 = vdwg.mxu0
    %v2094 = vadd.f32 %v2071, %v2092
    %v2095 = vmul.f32 %v2094, 0.5
    %v2096 = vsel %vm134, %v2094, %v2095
    %v2097 = vtanh.pop %v2096
    %v2098 = vmul.f32 %v2097, 0.5
    %v2099 = vadd.f32 %v2098, 0.5
    %v2100 = vsel %vm134, %v2097, %v2099
    %v2101 = vmul.f32 %v2100, %v2009
    %2103 = vrot.lane.b32.xlu0 %v2100, 64
    %v2104 = vpop.permute.xlu0 %2103
    %v2106 = vmul.f32 %v2100, %v2104
    %2108 = vrot.lane.b32.xlu0 %v2106, 32
    %v2109 = vpop.permute.xlu0 %2108
    %v2111 = vadd.f32 %v2101, %v2109
    %v2112 = vtanh.pop %v2111
    %2114 = vrot.lane.b32.xlu0 %v2112, 64
    %v2115 = vpop.permute.xlu0 %2114
    %v2117 = vmul.f32 %v2100, %v2115
    %2119 = vrot.lane.b32.xlu0 %v2117, 32
    %v2120 = vpop.permute.xlu0 %2119
    %2123 = vrot.lane.b32.xlu0 %v2070, 64
    %v2124 = vpop.permute.xlu0 %2123
    %v2126 = vsel %vm57, %v2120, %v2124
    %v2128 = vsel %vm188, %v2126, 0
    %2130 = vmatpush.msra.mxu0 0.0
    %2131 = vmatpush.msra.mxu0 0.0
    %2132 = vmatpush.msra.mxu0 0.0
    %2133 = vmatpush.msra.mxu0 0.0
    %2134 = vmatpush.msra.mxu0 0.0
    %2135 = vmatpush.msra.mxu0 0.0
    %2136 = vmatpush.msra.mxu0 0.0
    %2137 = vmatpush.msra.mxu0 0.0
    %2138 = vmatpush.msra.mxu0 %v128
    %2139 = vmatpush.msra.mxu0 %v127
    %2140 = vmatpush.msra.mxu0 %v126
    %2141 = vmatpush.msra.mxu0 %v125
    %2142 = vmatpush.msra.mxu0 %v124
    %2143 = vmatpush.msra.mxu0 %v123
    %2144 = vmatpush.msra.mxu0 %v122
    %2145 = vmatpush.msra.mxu0 %v121
    %2146 = vmatmul.f32.gmra.mxu0 %v2128
    %v2147 = vpop.f32.mrf.mxu0
    %v2148 = vadd.f32 %v129, %v2147
    %2149 = vdwg.mxu0
    %v2150 = vmul.f32 %v2148, 0.5
    %v2151 = vsel %vm134, %v2148, %v2150
    %v2152 = vtanh.pop %v2151
    %v2153 = vmul.f32 %v2152, 0.5
    %v2154 = vadd.f32 %v2153, 0.5
    %v2155 = vsel %vm134, %v2152, %v2154
    %v2156 = vmul.f32 %v2155, %v2064
    %2158 = vrot.lane.b32.xlu0 %v2155, 64
    %v2159 = vpop.permute.xlu0 %2158
    %v2161 = vmul.f32 %v2155, %v2159
    %2163 = vrot.lane.b32.xlu0 %v2161, 32
    %v2164 = vpop.permute.xlu0 %2163
    %v2166 = vadd.f32 %v2156, %v2164
    %v2167 = vtanh.pop %v2166
    %2169 = vrot.lane.b32.xlu0 %v2167, 64
    %v2170 = vpop.permute.xlu0 %2169
    %v2172 = vmul.f32 %v2155, %v2170
    %v2173 = vld [vmem:[#allocation2 + $0x14] sm:$0x1]
    %v2174 = vsel %vm57, %v2120, 0
    %2176 = vmatpush.msra.mxu0 0.0
    %2177 = vmatpush.msra.mxu0 0.0
    %2178 = vmatpush.msra.mxu0 0.0
    %2179 = vmatpush.msra.mxu0 0.0
    %2180 = vmatpush.msra.mxu0 0.0
    %2181 = vmatpush.msra.mxu0 0.0
    %2182 = vmatpush.msra.mxu0 0.0
    %2183 = vmatpush.msra.mxu0 0.0
    %2184 = vmatpush.msra.mxu0 0.0
    %2185 = vmatpush.msra.mxu0 0.0
    %2186 = vmatpush.msra.mxu0 0.0
    %2187 = vmatpush.msra.mxu0 0.0
    %2188 = vmatpush.msra.mxu0 %v120
    %2189 = vmatpush.msra.mxu0 %v119
    %2190 = vmatpush.msra.mxu0 %v118
    %2191 = vmatpush.msra.mxu0 %v117
    %2192 = vmatmul.f32.gmra.mxu0 %v2174
    %v2193 = vpop.f32.mrf.mxu0
    %v2194 = vadd.f32 0.0, %v2193
    %2195 = vdwg.mxu0
    %v2196 = vadd.f32 %v2173, %v2194
    %v2197 = vmul.f32 %v2196, 0.5
    %v2198 = vsel %vm134, %v2196, %v2197
    %v2199 = vtanh.pop %v2198
    %v2200 = vmul.f32 %v2199, 0.5
    %v2201 = vadd.f32 %v2200, 0.5
    %v2202 = vsel %vm134, %v2199, %v2201
    %v2203 = vmul.f32 %v2202, %v2111
    %2205 = vrot.lane.b32.xlu0 %v2202, 64
    %v2206 = vpop.permute.xlu0 %2205
    %v2208 = vmul.f32 %v2202, %v2206
    %2210 = vrot.lane.b32.xlu0 %v2208, 32
    %v2211 = vpop.permute.xlu0 %2210
    %v2213 = vadd.f32 %v2203, %v2211
    %v2214 = vtanh.pop %v2213
    %2216 = vrot.lane.b32.xlu0 %v2214, 64
    %v2217 = vpop.permute.xlu0 %2216
    %v2219 = vmul.f32 %v2202, %v2217
    %2221 = vrot.lane.b32.xlu0 %v2219, 32
    %v2222 = vpop.permute.xlu0 %2221
    %2225 = vrot.lane.b32.xlu0 %v2172, 64
    %v2226 = vpop.permute.xlu0 %2225
    %v2228 = vsel %vm57, %v2222, %v2226
    %v2230 = vsel %vm188, %v2228, 0
    %2232 = vmatpush.msra.mxu0 0.0
    %2233 = vmatpush.msra.mxu0 0.0
    %2234 = vmatpush.msra.mxu0 0.0
    %2235 = vmatpush.msra.mxu0 0.0
    %2236 = vmatpush.msra.mxu0 0.0
    %2237 = vmatpush.msra.mxu0 0.0
    %2238 = vmatpush.msra.mxu0 0.0
    %2239 = vmatpush.msra.mxu0 0.0
    %2240 = vmatpush.msra.mxu0 %v128
    %2241 = vmatpush.msra.mxu0 %v127
    %2242 = vmatpush.msra.mxu0 %v126
    %2243 = vmatpush.msra.mxu0 %v125
    %2244 = vmatpush.msra.mxu0 %v124
    %2245 = vmatpush.msra.mxu0 %v123
    %2246 = vmatpush.msra.mxu0 %v122
    %2247 = vmatpush.msra.mxu0 %v121
    %2248 = vmatmul.f32.gmra.mxu0 %v2230
    %v2249 = vpop.f32.mrf.mxu0
    %v2250 = vadd.f32 %v129, %v2249
    %2251 = vdwg.mxu0
    %v2252 = vmul.f32 %v2250, 0.5
    %v2253 = vsel %vm134, %v2250, %v2252
    %v2254 = vtanh.pop %v2253
    %v2255 = vmul.f32 %v2254, 0.5
    %v2256 = vadd.f32 %v2255, 0.5
    %v2257 = vsel %vm134, %v2254, %v2256
    %v2258 = vmul.f32 %v2257, %v2166
    %2260 = vrot.lane.b32.xlu0 %v2257, 64
    %v2261 = vpop.permute.xlu0 %2260
    %v2263 = vmul.f32 %v2257, %v2261
    %2265 = vrot.lane.b32.xlu0 %v2263, 32
    %v2266 = vpop.permute.xlu0 %2265
    %v2268 = vadd.f32 %v2258, %v2266
    %v2269 = vtanh.pop %v2268
    %2271 = vrot.lane.b32.xlu0 %v2269, 64
    %v2272 = vpop.permute.xlu0 %2271
    %v2274 = vmul.f32 %v2257, %v2272
    %v2275 = vld [vmem:[#allocation2 + $0x15] sm:$0x1]
    %v2276 = vsel %vm57, %v2222, 0
    %2278 = vmatpush.msra.mxu0 0.0
    %2279 = vmatpush.msra.mxu0 0.0
    %2280 = vmatpush.msra.mxu0 0.0
    %2281 = vmatpush.msra.mxu0 0.0
    %2282 = vmatpush.msra.mxu0 0.0
    %2283 = vmatpush.msra.mxu0 0.0
    %2284 = vmatpush.msra.mxu0 0.0
    %2285 = vmatpush.msra.mxu0 0.0
    %2286 = vmatpush.msra.mxu0 0.0
    %2287 = vmatpush.msra.mxu0 0.0
    %2288 = vmatpush.msra.mxu0 0.0
    %2289 = vmatpush.msra.mxu0 0.0
    %2290 = vmatpush.msra.mxu0 %v120
    %2291 = vmatpush.msra.mxu0 %v119
    %2292 = vmatpush.msra.mxu0 %v118
    %2293 = vmatpush.msra.mxu0 %v117
    %2294 = vmatmul.f32.gmra.mxu0 %v2276
    %v2295 = vpop.f32.mrf.mxu0
    %v2296 = vadd.f32 0.0, %v2295
    %2297 = vdwg.mxu0
    %v2298 = vadd.f32 %v2275, %v2296
    %v2299 = vmul.f32 %v2298, 0.5
    %v2300 = vsel %vm134, %v2298, %v2299
    %v2301 = vtanh.pop %v2300
    %v2302 = vmul.f32 %v2301, 0.5
    %v2303 = vadd.f32 %v2302, 0.5
    %v2304 = vsel %vm134, %v2301, %v2303
    %v2305 = vmul.f32 %v2304, %v2213
    %2307 = vrot.lane.b32.xlu0 %v2304, 64
    %v2308 = vpop.permute.xlu0 %2307
    %v2310 = vmul.f32 %v2304, %v2308
    %2312 = vrot.lane.b32.xlu0 %v2310, 32
    %v2313 = vpop.permute.xlu0 %2312
    %v2315 = vadd.f32 %v2305, %v2313
    %v2316 = vtanh.pop %v2315
    %2318 = vrot.lane.b32.xlu0 %v2316, 64
    %v2319 = vpop.permute.xlu0 %2318
    %v2321 = vmul.f32 %v2304, %v2319
    %2323 = vrot.lane.b32.xlu0 %v2321, 32
    %v2324 = vpop.permute.xlu0 %2323
    %2327 = vrot.lane.b32.xlu0 %v2274, 64
    %v2328 = vpop.permute.xlu0 %2327
    %v2330 = vsel %vm57, %v2324, %v2328
    %v2332 = vsel %vm188, %v2330, 0
    %2334 = vmatpush.msra.mxu0 0.0
    %2335 = vmatpush.msra.mxu0 0.0
    %2336 = vmatpush.msra.mxu0 0.0
    %2337 = vmatpush.msra.mxu0 0.0
    %2338 = vmatpush.msra.mxu0 0.0
    %2339 = vmatpush.msra.mxu0 0.0
    %2340 = vmatpush.msra.mxu0 0.0
    %2341 = vmatpush.msra.mxu0 0.0
    %2342 = vmatpush.msra.mxu0 %v128
    %2343 = vmatpush.msra.mxu0 %v127
    %2344 = vmatpush.msra.mxu0 %v126
    %2345 = vmatpush.msra.mxu0 %v125
    %2346 = vmatpush.msra.mxu0 %v124
    %2347 = vmatpush.msra.mxu0 %v123
    %2348 = vmatpush.msra.mxu0 %v122
    %2349 = vmatpush.msra.mxu0 %v121
    %2350 = vmatmul.f32.gmra.mxu0 %v2332
    %v2351 = vpop.f32.mrf.mxu0
    %v2352 = vadd.f32 %v129, %v2351
    %2353 = vdwg.mxu0
    %v2354 = vmul.f32 %v2352, 0.5
    %v2355 = vsel %vm134, %v2352, %v2354
    %v2356 = vtanh.pop %v2355
    %v2357 = vmul.f32 %v2356, 0.5
    %v2358 = vadd.f32 %v2357, 0.5
    %v2359 = vsel %vm134, %v2356, %v2358
    %v2360 = vmul.f32 %v2359, %v2268
    %2362 = vrot.lane.b32.xlu0 %v2359, 64
    %v2363 = vpop.permute.xlu0 %2362
    %v2365 = vmul.f32 %v2359, %v2363
    %2367 = vrot.lane.b32.xlu0 %v2365, 32
    %v2368 = vpop.permute.xlu0 %2367
    %v2370 = vadd.f32 %v2360, %v2368
    %v2371 = vtanh.pop %v2370
    %2373 = vrot.lane.b32.xlu0 %v2371, 64
    %v2374 = vpop.permute.xlu0 %2373
    %v2376 = vmul.f32 %v2359, %v2374
    %v2377 = vld [vmem:[#allocation2 + $0x16] sm:$0x1]
    %v2378 = vsel %vm57, %v2324, 0
    %2380 = vmatpush.msra.mxu0 0.0
    %2381 = vmatpush.msra.mxu0 0.0
    %2382 = vmatpush.msra.mxu0 0.0
    %2383 = vmatpush.msra.mxu0 0.0
    %2384 = vmatpush.msra.mxu0 0.0
    %2385 = vmatpush.msra.mxu0 0.0
    %2386 = vmatpush.msra.mxu0 0.0
    %2387 = vmatpush.msra.mxu0 0.0
    %2388 = vmatpush.msra.mxu0 0.0
    %2389 = vmatpush.msra.mxu0 0.0
    %2390 = vmatpush.msra.mxu0 0.0
    %2391 = vmatpush.msra.mxu0 0.0
    %2392 = vmatpush.msra.mxu0 %v120
    %2393 = vmatpush.msra.mxu0 %v119
    %2394 = vmatpush.msra.mxu0 %v118
    %2395 = vmatpush.msra.mxu0 %v117
    %2396 = vmatmul.f32.gmra.mxu0 %v2378
    %v2397 = vpop.f32.mrf.mxu0
    %v2398 = vadd.f32 0.0, %v2397
    %2399 = vdwg.mxu0
    %v2400 = vadd.f32 %v2377, %v2398
    %v2401 = vmul.f32 %v2400, 0.5
    %v2402 = vsel %vm134, %v2400, %v2401
    %v2403 = vtanh.pop %v2402
    %v2404 = vmul.f32 %v2403, 0.5
    %v2405 = vadd.f32 %v2404, 0.5
    %v2406 = vsel %vm134, %v2403, %v2405
    %v2407 = vmul.f32 %v2406, %v2315
    %2409 = vrot.lane.b32.xlu0 %v2406, 64
    %v2410 = vpop.permute.xlu0 %2409
    %v2412 = vmul.f32 %v2406, %v2410
    %2414 = vrot.lane.b32.xlu0 %v2412, 32
    %v2415 = vpop.permute.xlu0 %2414
    %v2417 = vadd.f32 %v2407, %v2415
    %v2418 = vtanh.pop %v2417
    %2420 = vrot.lane.b32.xlu0 %v2418, 64
    %v2421 = vpop.permute.xlu0 %2420
    %v2423 = vmul.f32 %v2406, %v2421
    %2425 = vrot.lane.b32.xlu0 %v2423, 32
    %v2426 = vpop.permute.xlu0 %2425
    %2429 = vrot.lane.b32.xlu0 %v2376, 64
    %v2430 = vpop.permute.xlu0 %2429
    %v2432 = vsel %vm57, %v2426, %v2430
    %v2434 = vsel %vm188, %v2432, 0
    %2436 = vmatpush.msra.mxu0 0.0
    %2437 = vmatpush.msra.mxu0 0.0
    %2438 = vmatpush.msra.mxu0 0.0
    %2439 = vmatpush.msra.mxu0 0.0
    %2440 = vmatpush.msra.mxu0 0.0
    %2441 = vmatpush.msra.mxu0 0.0
    %2442 = vmatpush.msra.mxu0 0.0
    %2443 = vmatpush.msra.mxu0 0.0
    %2444 = vmatpush.msra.mxu0 %v128
    %2445 = vmatpush.msra.mxu0 %v127
    %2446 = vmatpush.msra.mxu0 %v126
    %2447 = vmatpush.msra.mxu0 %v125
    %2448 = vmatpush.msra.mxu0 %v124
    %2449 = vmatpush.msra.mxu0 %v123
    %2450 = vmatpush.msra.mxu0 %v122
    %2451 = vmatpush.msra.mxu0 %v121
    %2452 = vmatmul.f32.gmra.mxu0 %v2434
    %v2453 = vpop.f32.mrf.mxu0
    %v2454 = vadd.f32 %v129, %v2453
    %2455 = vdwg.mxu0
    %v2456 = vmul.f32 %v2454, 0.5
    %v2457 = vsel %vm134, %v2454, %v2456
    %v2458 = vtanh.pop %v2457
    %v2459 = vmul.f32 %v2458, 0.5
    %v2460 = vadd.f32 %v2459, 0.5
    %v2461 = vsel %vm134, %v2458, %v2460
    %v2462 = vmul.f32 %v2461, %v2370
    %2464 = vrot.lane.b32.xlu0 %v2461, 64
    %v2465 = vpop.permute.xlu0 %2464
    %v2467 = vmul.f32 %v2461, %v2465
    %2469 = vrot.lane.b32.xlu0 %v2467, 32
    %v2470 = vpop.permute.xlu0 %2469
    %v2472 = vadd.f32 %v2462, %v2470
    %v2473 = vtanh.pop %v2472
    %2475 = vrot.lane.b32.xlu0 %v2473, 64
    %v2476 = vpop.permute.xlu0 %2475
    %v2478 = vmul.f32 %v2461, %v2476
    %v2479 = vld [vmem:[#allocation2 + $0x17] sm:$0x1]
    %v2480 = vsel %vm57, %v2426, 0
    %2482 = vmatpush.msra.mxu0 0.0
    %2483 = vmatpush.msra.mxu0 0.0
    %2484 = vmatpush.msra.mxu0 0.0
    %2485 = vmatpush.msra.mxu0 0.0
    %2486 = vmatpush.msra.mxu0 0.0
    %2487 = vmatpush.msra.mxu0 0.0
    %2488 = vmatpush.msra.mxu0 0.0
    %2489 = vmatpush.msra.mxu0 0.0
    %2490 = vmatpush.msra.mxu0 0.0
    %2491 = vmatpush.msra.mxu0 0.0
    %2492 = vmatpush.msra.mxu0 0.0
    %2493 = vmatpush.msra.mxu0 0.0
    %2494 = vmatpush.msra.mxu0 %v120
    %2495 = vmatpush.msra.mxu0 %v119
    %2496 = vmatpush.msra.mxu0 %v118
    %2497 = vmatpush.msra.mxu0 %v117
    %2498 = vmatmul.f32.gmra.mxu0 %v2480
    %v2499 = vpop.f32.mrf.mxu0
    %v2500 = vadd.f32 0.0, %v2499
    %2501 = vdwg.mxu0
    %v2502 = vadd.f32 %v2479, %v2500
    %v2503 = vmul.f32 %v2502, 0.5
    %v2504 = vsel %vm134, %v2502, %v2503
    %v2505 = vtanh.pop %v2504
    %v2506 = vmul.f32 %v2505, 0.5
    %v2507 = vadd.f32 %v2506, 0.5
    %v2508 = vsel %vm134, %v2505, %v2507
    %v2509 = vmul.f32 %v2508, %v2417
    %2511 = vrot.lane.b32.xlu0 %v2508, 64
    %v2512 = vpop.permute.xlu0 %2511
    %v2514 = vmul.f32 %v2508, %v2512
    %2516 = vrot.lane.b32.xlu0 %v2514, 32
    %v2517 = vpop.permute.xlu0 %2516
    %v2519 = vadd.f32 %v2509, %v2517
    %v2520 = vtanh.pop %v2519
    %2522 = vrot.lane.b32.xlu0 %v2520, 64
    %v2523 = vpop.permute.xlu0 %2522
    %v2525 = vmul.f32 %v2508, %v2523
    %2527 = vrot.lane.b32.xlu0 %v2525, 32
    %v2528 = vpop.permute.xlu0 %2527
    %2531 = vrot.lane.b32.xlu0 %v2478, 64
    %v2532 = vpop.permute.xlu0 %2531
    %v2534 = vsel %vm57, %v2528, %v2532
    %v2536 = vsel %vm188, %v2534, 0
    %2538 = vmatpush.msra.mxu0 0.0
    %2539 = vmatpush.msra.mxu0 0.0
    %2540 = vmatpush.msra.mxu0 0.0
    %2541 = vmatpush.msra.mxu0 0.0
    %2542 = vmatpush.msra.mxu0 0.0
    %2543 = vmatpush.msra.mxu0 0.0
    %2544 = vmatpush.msra.mxu0 0.0
    %2545 = vmatpush.msra.mxu0 0.0
    %2546 = vmatpush.msra.mxu0 %v128
    %2547 = vmatpush.msra.mxu0 %v127
    %2548 = vmatpush.msra.mxu0 %v126
    %2549 = vmatpush.msra.mxu0 %v125
    %2550 = vmatpush.msra.mxu0 %v124
    %2551 = vmatpush.msra.mxu0 %v123
    %2552 = vmatpush.msra.mxu0 %v122
    %2553 = vmatpush.msra.mxu0 %v121
    %2554 = vmatmul.f32.gmra.mxu0 %v2536
    %v2555 = vpop.f32.mrf.mxu0
    %v2556 = vadd.f32 %v129, %v2555
    %2557 = vdwg.mxu0
    %v2558 = vmul.f32 %v2556, 0.5
    %v2559 = vsel %vm134, %v2556, %v2558
    %v2560 = vtanh.pop %v2559
    %v2561 = vmul.f32 %v2560, 0.5
    %v2562 = vadd.f32 %v2561, 0.5
    %v2563 = vsel %vm134, %v2560, %v2562
    %v2564 = vmul.f32 %v2563, %v2472
    %2566 = vrot.lane.b32.xlu0 %v2563, 64
    %v2567 = vpop.permute.xlu0 %2566
    %v2569 = vmul.f32 %v2563, %v2567
    %2571 = vrot.lane.b32.xlu0 %v2569, 32
    %v2572 = vpop.permute.xlu0 %2571
    %v2574 = vadd.f32 %v2564, %v2572
    %v2575 = vtanh.pop %v2574
    %2577 = vrot.lane.b32.xlu0 %v2575, 64
    %v2578 = vpop.permute.xlu0 %2577
    %v2580 = vmul.f32 %v2563, %v2578
    %v2581 = vld [vmem:[#allocation2 + $0x18] sm:$0x1]
    %v2582 = vsel %vm57, %v2528, 0
    %2584 = vmatpush.msra.mxu0 0.0
    %2585 = vmatpush.msra.mxu0 0.0
    %2586 = vmatpush.msra.mxu0 0.0
    %2587 = vmatpush.msra.mxu0 0.0
    %2588 = vmatpush.msra.mxu0 0.0
    %2589 = vmatpush.msra.mxu0 0.0
    %2590 = vmatpush.msra.mxu0 0.0
    %2591 = vmatpush.msra.mxu0 0.0
    %2592 = vmatpush.msra.mxu0 0.0
    %2593 = vmatpush.msra.mxu0 0.0
    %2594 = vmatpush.msra.mxu0 0.0
    %2595 = vmatpush.msra.mxu0 0.0
    %2596 = vmatpush.msra.mxu0 %v120
    %2597 = vmatpush.msra.mxu0 %v119
    %2598 = vmatpush.msra.mxu0 %v118
    %2599 = vmatpush.msra.mxu0 %v117
    %2600 = vmatmul.f32.gmra.mxu0 %v2582
    %v2601 = vpop.f32.mrf.mxu0
    %v2602 = vadd.f32 0.0, %v2601
    %2603 = vdwg.mxu0
    %v2604 = vadd.f32 %v2581, %v2602
    %v2605 = vmul.f32 %v2604, 0.5
    %v2606 = vsel %vm134, %v2604, %v2605
    %v2607 = vtanh.pop %v2606
    %v2608 = vmul.f32 %v2607, 0.5
    %v2609 = vadd.f32 %v2608, 0.5
    %v2610 = vsel %vm134, %v2607, %v2609
    %v2611 = vmul.f32 %v2610, %v2519
    %2613 = vrot.lane.b32.xlu0 %v2610, 64
    %v2614 = vpop.permute.xlu0 %2613
    %v2616 = vmul.f32 %v2610, %v2614
    %2618 = vrot.lane.b32.xlu0 %v2616, 32
    %v2619 = vpop.permute.xlu0 %2618
    %v2621 = vadd.f32 %v2611, %v2619
    %v2622 = vtanh.pop %v2621
    %2624 = vrot.lane.b32.xlu0 %v2622, 64
    %v2625 = vpop.permute.xlu0 %2624
    %v2627 = vmul.f32 %v2610, %v2625
    %2629 = vrot.lane.b32.xlu0 %v2627, 32
    %v2630 = vpop.permute.xlu0 %2629
    %2633 = vrot.lane.b32.xlu0 %v2580, 64
    %v2634 = vpop.permute.xlu0 %2633
    %v2636 = vsel %vm57, %v2630, %v2634
    %v2638 = vsel %vm188, %v2636, 0
    %2640 = vmatpush.msra.mxu0 0.0
    %2641 = vmatpush.msra.mxu0 0.0
    %2642 = vmatpush.msra.mxu0 0.0
    %2643 = vmatpush.msra.mxu0 0.0
    %2644 = vmatpush.msra.mxu0 0.0
    %2645 = vmatpush.msra.mxu0 0.0
    %2646 = vmatpush.msra.mxu0 0.0
    %2647 = vmatpush.msra.mxu0 0.0
    %2648 = vmatpush.msra.mxu0 %v128
    %2649 = vmatpush.msra.mxu0 %v127
    %2650 = vmatpush.msra.mxu0 %v126
    %2651 = vmatpush.msra.mxu0 %v125
    %2652 = vmatpush.msra.mxu0 %v124
    %2653 = vmatpush.msra.mxu0 %v123
    %2654 = vmatpush.msra.mxu0 %v122
    %2655 = vmatpush.msra.mxu0 %v121
    %2656 = vmatmul.f32.gmra.mxu0 %v2638
    %v2657 = vpop.f32.mrf.mxu0
    %v2658 = vadd.f32 %v129, %v2657
    %2659 = vdwg.mxu0
    %v2660 = vmul.f32 %v2658, 0.5
    %v2661 = vsel %vm134, %v2658, %v2660
    %v2662 = vtanh.pop %v2661
    %v2663 = vmul.f32 %v2662, 0.5
    %v2664 = vadd.f32 %v2663, 0.5
    %v2665 = vsel %vm134, %v2662, %v2664
    %v2666 = vmul.f32 %v2665, %v2574
    %2668 = vrot.lane.b32.xlu0 %v2665, 64
    %v2669 = vpop.permute.xlu0 %2668
    %v2671 = vmul.f32 %v2665, %v2669
    %2673 = vrot.lane.b32.xlu0 %v2671, 32
    %v2674 = vpop.permute.xlu0 %2673
    %v2676 = vadd.f32 %v2666, %v2674
    %v2677 = vtanh.pop %v2676
    %2679 = vrot.lane.b32.xlu0 %v2677, 64
    %v2680 = vpop.permute.xlu0 %2679
    %v2682 = vmul.f32 %v2665, %v2680
    %v2683 = vld [vmem:[#allocation2 + $0x19] sm:$0x1]
    %v2684 = vsel %vm57, %v2630, 0
    %2686 = vmatpush.msra.mxu0 0.0
    %2687 = vmatpush.msra.mxu0 0.0
    %2688 = vmatpush.msra.mxu0 0.0
    %2689 = vmatpush.msra.mxu0 0.0
    %2690 = vmatpush.msra.mxu0 0.0
    %2691 = vmatpush.msra.mxu0 0.0
    %2692 = vmatpush.msra.mxu0 0.0
    %2693 = vmatpush.msra.mxu0 0.0
    %2694 = vmatpush.msra.mxu0 0.0
    %2695 = vmatpush.msra.mxu0 0.0
    %2696 = vmatpush.msra.mxu0 0.0
    %2697 = vmatpush.msra.mxu0 0.0
    %2698 = vmatpush.msra.mxu0 %v120
    %2699 = vmatpush.msra.mxu0 %v119
    %2700 = vmatpush.msra.mxu0 %v118
    %2701 = vmatpush.msra.mxu0 %v117
    %2702 = vmatmul.f32.gmra.mxu0 %v2684
    %v2703 = vpop.f32.mrf.mxu0
    %v2704 = vadd.f32 0.0, %v2703
    %2705 = vdwg.mxu0
    %v2706 = vadd.f32 %v2683, %v2704
    %v2707 = vmul.f32 %v2706, 0.5
    %v2708 = vsel %vm134, %v2706, %v2707
    %v2709 = vtanh.pop %v2708
    %v2710 = vmul.f32 %v2709, 0.5
    %v2711 = vadd.f32 %v2710, 0.5
    %v2712 = vsel %vm134, %v2709, %v2711
    %v2713 = vmul.f32 %v2712, %v2621
    %2715 = vrot.lane.b32.xlu0 %v2712, 64
    %v2716 = vpop.permute.xlu0 %2715
    %v2718 = vmul.f32 %v2712, %v2716
    %2720 = vrot.lane.b32.xlu0 %v2718, 32
    %v2721 = vpop.permute.xlu0 %2720
    %v2723 = vadd.f32 %v2713, %v2721
    %v2724 = vtanh.pop %v2723
    %2726 = vrot.lane.b32.xlu0 %v2724, 64
    %v2727 = vpop.permute.xlu0 %2726
    %v2729 = vmul.f32 %v2712, %v2727
    %2731 = vrot.lane.b32.xlu0 %v2729, 32
    %v2732 = vpop.permute.xlu0 %2731
    %2735 = vrot.lane.b32.xlu0 %v2682, 64
    %v2736 = vpop.permute.xlu0 %2735
    %v2738 = vsel %vm57, %v2732, %v2736
    %v2740 = vsel %vm188, %v2738, 0
    %2742 = vmatpush.msra.mxu0 0.0
    %2743 = vmatpush.msra.mxu0 0.0
    %2744 = vmatpush.msra.mxu0 0.0
    %2745 = vmatpush.msra.mxu0 0.0
    %2746 = vmatpush.msra.mxu0 0.0
    %2747 = vmatpush.msra.mxu0 0.0
    %2748 = vmatpush.msra.mxu0 0.0
    %2749 = vmatpush.msra.mxu0 0.0
    %2750 = vmatpush.msra.mxu0 %v128
    %2751 = vmatpush.msra.mxu0 %v127
    %2752 = vmatpush.msra.mxu0 %v126
    %2753 = vmatpush.msra.mxu0 %v125
    %2754 = vmatpush.msra.mxu0 %v124
    %2755 = vmatpush.msra.mxu0 %v123
    %2756 = vmatpush.msra.mxu0 %v122
    %2757 = vmatpush.msra.mxu0 %v121
    %2758 = vmatmul.f32.gmra.mxu0 %v2740
    %v2759 = vpop.f32.mrf.mxu0
    %v2760 = vadd.f32 %v129, %v2759
    %2761 = vdwg.mxu0
    %v2762 = vmul.f32 %v2760, 0.5
    %v2763 = vsel %vm134, %v2760, %v2762
    %v2764 = vtanh.pop %v2763
    %v2765 = vmul.f32 %v2764, 0.5
    %v2766 = vadd.f32 %v2765, 0.5
    %v2767 = vsel %vm134, %v2764, %v2766
    %v2768 = vmul.f32 %v2767, %v2676
    %2770 = vrot.lane.b32.xlu0 %v2767, 64
    %v2771 = vpop.permute.xlu0 %2770
    %v2773 = vmul.f32 %v2767, %v2771
    %2775 = vrot.lane.b32.xlu0 %v2773, 32
    %v2776 = vpop.permute.xlu0 %2775
    %v2778 = vadd.f32 %v2768, %v2776
    %v2779 = vtanh.pop %v2778
    %2781 = vrot.lane.b32.xlu0 %v2779, 64
    %v2782 = vpop.permute.xlu0 %2781
    %v2784 = vmul.f32 %v2767, %v2782
    %v2785 = vld [vmem:[#allocation2 + $0x1a] sm:$0x1]
    %v2786 = vsel %vm57, %v2732, 0
    %2788 = vmatpush.msra.mxu0 0.0
    %2789 = vmatpush.msra.mxu0 0.0
    %2790 = vmatpush.msra.mxu0 0.0
    %2791 = vmatpush.msra.mxu0 0.0
    %2792 = vmatpush.msra.mxu0 0.0
    %2793 = vmatpush.msra.mxu0 0.0
    %2794 = vmatpush.msra.mxu0 0.0
    %2795 = vmatpush.msra.mxu0 0.0
    %2796 = vmatpush.msra.mxu0 0.0
    %2797 = vmatpush.msra.mxu0 0.0
    %2798 = vmatpush.msra.mxu0 0.0
    %2799 = vmatpush.msra.mxu0 0.0
    %2800 = vmatpush.msra.mxu0 %v120
    %2801 = vmatpush.msra.mxu0 %v119
    %2802 = vmatpush.msra.mxu0 %v118
    %2803 = vmatpush.msra.mxu0 %v117
    %2804 = vmatmul.f32.gmra.mxu0 %v2786
    %v2805 = vpop.f32.mrf.mxu0
    %v2806 = vadd.f32 0.0, %v2805
    %2807 = vdwg.mxu0
    %v2808 = vadd.f32 %v2785, %v2806
    %v2809 = vmul.f32 %v2808, 0.5
    %v2810 = vsel %vm134, %v2808, %v2809
    %v2811 = vtanh.pop %v2810
    %v2812 = vmul.f32 %v2811, 0.5
    %v2813 = vadd.f32 %v2812, 0.5
    %v2814 = vsel %vm134, %v2811, %v2813
    %v2815 = vmul.f32 %v2814, %v2723
    %2817 = vrot.lane.b32.xlu0 %v2814, 64
    %v2818 = vpop.permute.xlu0 %2817
    %v2820 = vmul.f32 %v2814, %v2818
    %2822 = vrot.lane.b32.xlu0 %v2820, 32
    %v2823 = vpop.permute.xlu0 %2822
    %v2825 = vadd.f32 %v2815, %v2823
    %v2826 = vtanh.pop %v2825
    %2828 = vrot.lane.b32.xlu0 %v2826, 64
    %v2829 = vpop.permute.xlu0 %2828
    %v2831 = vmul.f32 %v2814, %v2829
    %2833 = vrot.lane.b32.xlu0 %v2831, 32
    %v2834 = vpop.permute.xlu0 %2833
    %2837 = vrot.lane.b32.xlu0 %v2784, 64
    %v2838 = vpop.permute.xlu0 %2837
    %v2840 = vsel %vm57, %v2834, %v2838
    %v2842 = vsel %vm188, %v2840, 0
    %2844 = vmatpush.msra.mxu0 0.0
    %2845 = vmatpush.msra.mxu0 0.0
    %2846 = vmatpush.msra.mxu0 0.0
    %2847 = vmatpush.msra.mxu0 0.0
    %2848 = vmatpush.msra.mxu0 0.0
    %2849 = vmatpush.msra.mxu0 0.0
    %2850 = vmatpush.msra.mxu0 0.0
    %2851 = vmatpush.msra.mxu0 0.0
    %2852 = vmatpush.msra.mxu0 %v128
    %2853 = vmatpush.msra.mxu0 %v127
    %2854 = vmatpush.msra.mxu0 %v126
    %2855 = vmatpush.msra.mxu0 %v125
    %2856 = vmatpush.msra.mxu0 %v124
    %2857 = vmatpush.msra.mxu0 %v123
    %2858 = vmatpush.msra.mxu0 %v122
    %2859 = vmatpush.msra.mxu0 %v121
    %2860 = vmatmul.f32.gmra.mxu0 %v2842
    %v2861 = vpop.f32.mrf.mxu0
    %v2862 = vadd.f32 %v129, %v2861
    %2863 = vdwg.mxu0
    %v2864 = vmul.f32 %v2862, 0.5
    %v2865 = vsel %vm134, %v2862, %v2864
    %v2866 = vtanh.pop %v2865
    %v2867 = vmul.f32 %v2866, 0.5
    %v2868 = vadd.f32 %v2867, 0.5
    %v2869 = vsel %vm134, %v2866, %v2868
    %v2870 = vmul.f32 %v2869, %v2778
    %2872 = vrot.lane.b32.xlu0 %v2869, 64
    %v2873 = vpop.permute.xlu0 %2872
    %v2875 = vmul.f32 %v2869, %v2873
    %2877 = vrot.lane.b32.xlu0 %v2875, 32
    %v2878 = vpop.permute.xlu0 %2877
    %v2880 = vadd.f32 %v2870, %v2878
    %v2881 = vtanh.pop %v2880
    %2883 = vrot.lane.b32.xlu0 %v2881, 64
    %v2884 = vpop.permute.xlu0 %2883
    %v2886 = vmul.f32 %v2869, %v2884
    %v2887 = vld [vmem:[#allocation2 + $0x1b] sm:$0x1]
    %v2888 = vsel %vm57, %v2834, 0
    %2890 = vmatpush.msra.mxu0 0.0
    %2891 = vmatpush.msra.mxu0 0.0
    %2892 = vmatpush.msra.mxu0 0.0
    %2893 = vmatpush.msra.mxu0 0.0
    %2894 = vmatpush.msra.mxu0 0.0
    %2895 = vmatpush.msra.mxu0 0.0
    %2896 = vmatpush.msra.mxu0 0.0
    %2897 = vmatpush.msra.mxu0 0.0
    %2898 = vmatpush.msra.mxu0 0.0
    %2899 = vmatpush.msra.mxu0 0.0
    %2900 = vmatpush.msra.mxu0 0.0
    %2901 = vmatpush.msra.mxu0 0.0
    %2902 = vmatpush.msra.mxu0 %v120
    %2903 = vmatpush.msra.mxu0 %v119
    %2904 = vmatpush.msra.mxu0 %v118
    %2905 = vmatpush.msra.mxu0 %v117
    %2906 = vmatmul.f32.gmra.mxu0 %v2888
    %v2907 = vpop.f32.mrf.mxu0
    %v2908 = vadd.f32 0.0, %v2907
    %2909 = vdwg.mxu0
    %v2910 = vadd.f32 %v2887, %v2908
    %v2911 = vmul.f32 %v2910, 0.5
    %v2912 = vsel %vm134, %v2910, %v2911
    %v2913 = vtanh.pop %v2912
    %v2914 = vmul.f32 %v2913, 0.5
    %v2915 = vadd.f32 %v2914, 0.5
    %v2916 = vsel %vm134, %v2913, %v2915
    %v2917 = vmul.f32 %v2916, %v2825
    %2919 = vrot.lane.b32.xlu0 %v2916, 64
    %v2920 = vpop.permute.xlu0 %2919
    %v2922 = vmul.f32 %v2916, %v2920
    %2924 = vrot.lane.b32.xlu0 %v2922, 32
    %v2925 = vpop.permute.xlu0 %2924
    %v2927 = vadd.f32 %v2917, %v2925
    %v2928 = vtanh.pop %v2927
    %2930 = vrot.lane.b32.xlu0 %v2928, 64
    %v2931 = vpop.permute.xlu0 %2930
    %v2933 = vmul.f32 %v2916, %v2931
    %2935 = vrot.lane.b32.xlu0 %v2933, 32
    %v2936 = vpop.permute.xlu0 %2935
    %2939 = vrot.lane.b32.xlu0 %v2886, 64
    %v2940 = vpop.permute.xlu0 %2939
    %v2942 = vsel %vm57, %v2936, %v2940
    %v2944 = vsel %vm188, %v2942, 0
    %2946 = vmatpush.msra.mxu0 0.0
    %2947 = vmatpush.msra.mxu0 0.0
    %2948 = vmatpush.msra.mxu0 0.0
    %2949 = vmatpush.msra.mxu0 0.0
    %2950 = vmatpush.msra.mxu0 0.0
    %2951 = vmatpush.msra.mxu0 0.0
    %2952 = vmatpush.msra.mxu0 0.0
    %2953 = vmatpush.msra.mxu0 0.0
    %2954 = vmatpush.msra.mxu0 %v128
    %2955 = vmatpush.msra.mxu0 %v127
    %2956 = vmatpush.msra.mxu0 %v126
    %2957 = vmatpush.msra.mxu0 %v125
    %2958 = vmatpush.msra.mxu0 %v124
    %2959 = vmatpush.msra.mxu0 %v123
    %2960 = vmatpush.msra.mxu0 %v122
    %2961 = vmatpush.msra.mxu0 %v121
    %2962 = vmatmul.f32.gmra.mxu0 %v2944
    %v2963 = vpop.f32.mrf.mxu0
    %v2964 = vadd.f32 %v129, %v2963
    %2965 = vdwg.mxu0
    %v2966 = vmul.f32 %v2964, 0.5
    %v2967 = vsel %vm134, %v2964, %v2966
    %v2968 = vtanh.pop %v2967
    %v2969 = vmul.f32 %v2968, 0.5
    %v2970 = vadd.f32 %v2969, 0.5
    %v2971 = vsel %vm134, %v2968, %v2970
    %v2972 = vmul.f32 %v2971, %v2880
    %2974 = vrot.lane.b32.xlu0 %v2971, 64
    %v2975 = vpop.permute.xlu0 %2974
    %v2977 = vmul.f32 %v2971, %v2975
    %2979 = vrot.lane.b32.xlu0 %v2977, 32
    %v2980 = vpop.permute.xlu0 %2979
    %v2982 = vadd.f32 %v2972, %v2980
    %v2983 = vtanh.pop %v2982
    %2985 = vrot.lane.b32.xlu0 %v2983, 64
    %v2986 = vpop.permute.xlu0 %2985
    %v2988 = vmul.f32 %v2971, %v2986
    %v2989 = vld [vmem:[#allocation2 + $0x1c] sm:$0x1]
    %v2990 = vsel %vm57, %v2936, 0
    %2992 = vmatpush.msra.mxu0 0.0
    %2993 = vmatpush.msra.mxu0 0.0
    %2994 = vmatpush.msra.mxu0 0.0
    %2995 = vmatpush.msra.mxu0 0.0
    %2996 = vmatpush.msra.mxu0 0.0
    %2997 = vmatpush.msra.mxu0 0.0
    %2998 = vmatpush.msra.mxu0 0.0
    %2999 = vmatpush.msra.mxu0 0.0
    %3000 = vmatpush.msra.mxu0 0.0
    %3001 = vmatpush.msra.mxu0 0.0
    %3002 = vmatpush.msra.mxu0 0.0
    %3003 = vmatpush.msra.mxu0 0.0
    %3004 = vmatpush.msra.mxu0 %v120
    %3005 = vmatpush.msra.mxu0 %v119
    %3006 = vmatpush.msra.mxu0 %v118
    %3007 = vmatpush.msra.mxu0 %v117
    %3008 = vmatmul.f32.gmra.mxu0 %v2990
    %v3009 = vpop.f32.mrf.mxu0
    %v3010 = vadd.f32 0.0, %v3009
    %3011 = vdwg.mxu0
    %v3012 = vadd.f32 %v2989, %v3010
    %v3013 = vmul.f32 %v3012, 0.5
    %v3014 = vsel %vm134, %v3012, %v3013
    %v3015 = vtanh.pop %v3014
    %v3016 = vmul.f32 %v3015, 0.5
    %v3017 = vadd.f32 %v3016, 0.5
    %v3018 = vsel %vm134, %v3015, %v3017
    %v3019 = vmul.f32 %v3018, %v2927
    %3021 = vrot.lane.b32.xlu0 %v3018, 64
    %v3022 = vpop.permute.xlu0 %3021
    %v3024 = vmul.f32 %v3018, %v3022
    %3026 = vrot.lane.b32.xlu0 %v3024, 32
    %v3027 = vpop.permute.xlu0 %3026
    %v3029 = vadd.f32 %v3019, %v3027
    %v3030 = vtanh.pop %v3029
    %3032 = vrot.lane.b32.xlu0 %v3030, 64
    %v3033 = vpop.permute.xlu0 %3032
    %v3035 = vmul.f32 %v3018, %v3033
    %3037 = vrot.lane.b32.xlu0 %v3035, 32
    %v3038 = vpop.permute.xlu0 %3037
    %3041 = vrot.lane.b32.xlu0 %v2988, 64
    %v3042 = vpop.permute.xlu0 %3041
    %v3044 = vsel %vm57, %v3038, %v3042
    %v3046 = vsel %vm188, %v3044, 0
    %3048 = vmatpush.msra.mxu0 0.0
    %3049 = vmatpush.msra.mxu0 0.0
    %3050 = vmatpush.msra.mxu0 0.0
    %3051 = vmatpush.msra.mxu0 0.0
    %3052 = vmatpush.msra.mxu0 0.0
    %3053 = vmatpush.msra.mxu0 0.0
    %3054 = vmatpush.msra.mxu0 0.0
    %3055 = vmatpush.msra.mxu0 0.0
    %3056 = vmatpush.msra.mxu0 %v128
    %3057 = vmatpush.msra.mxu0 %v127
    %3058 = vmatpush.msra.mxu0 %v126
    %3059 = vmatpush.msra.mxu0 %v125
    %3060 = vmatpush.msra.mxu0 %v124
    %3061 = vmatpush.msra.mxu0 %v123
    %3062 = vmatpush.msra.mxu0 %v122
    %3063 = vmatpush.msra.mxu0 %v121
    %3064 = vmatmul.f32.gmra.mxu0 %v3046
    %v3065 = vpop.f32.mrf.mxu0
    %v3066 = vadd.f32 %v129, %v3065
    %3067 = vdwg.mxu0
    %v3068 = vmul.f32 %v3066, 0.5
    %v3069 = vsel %vm134, %v3066, %v3068
    %v3070 = vtanh.pop %v3069
    %v3071 = vmul.f32 %v3070, 0.5
    %v3072 = vadd.f32 %v3071, 0.5
    %v3073 = vsel %vm134, %v3070, %v3072
    %v3074 = vmul.f32 %v3073, %v2982
    %3076 = vrot.lane.b32.xlu0 %v3073, 64
    %v3077 = vpop.permute.xlu0 %3076
    %v3079 = vmul.f32 %v3073, %v3077
    %3081 = vrot.lane.b32.xlu0 %v3079, 32
    %v3082 = vpop.permute.xlu0 %3081
    %v3084 = vadd.f32 %v3074, %v3082
    %v3085 = vtanh.pop %v3084
    %3087 = vrot.lane.b32.xlu0 %v3085, 64
    %v3088 = vpop.permute.xlu0 %3087
    %v3090 = vmul.f32 %v3073, %v3088
    %v3091 = vld [vmem:[#allocation2 + $0x1d] sm:$0x1]
    %v3092 = vsel %vm57, %v3038, 0
    %3094 = vmatpush.msra.mxu0 0.0
    %3095 = vmatpush.msra.mxu0 0.0
    %3096 = vmatpush.msra.mxu0 0.0
    %3097 = vmatpush.msra.mxu0 0.0
    %3098 = vmatpush.msra.mxu0 0.0
    %3099 = vmatpush.msra.mxu0 0.0
    %3100 = vmatpush.msra.mxu0 0.0
    %3101 = vmatpush.msra.mxu0 0.0
    %3102 = vmatpush.msra.mxu0 0.0
    %3103 = vmatpush.msra.mxu0 0.0
    %3104 = vmatpush.msra.mxu0 0.0
    %3105 = vmatpush.msra.mxu0 0.0
    %3106 = vmatpush.msra.mxu0 %v120
    %3107 = vmatpush.msra.mxu0 %v119
    %3108 = vmatpush.msra.mxu0 %v118
    %3109 = vmatpush.msra.mxu0 %v117
    %3110 = vmatmul.f32.gmra.mxu0 %v3092
    %v3111 = vpop.f32.mrf.mxu0
    %v3112 = vadd.f32 0.0, %v3111
    %3113 = vdwg.mxu0
    %v3114 = vadd.f32 %v3091, %v3112
    %v3115 = vmul.f32 %v3114, 0.5
    %v3116 = vsel %vm134, %v3114, %v3115
    %v3117 = vtanh.pop %v3116
    %v3118 = vmul.f32 %v3117, 0.5
    %v3119 = vadd.f32 %v3118, 0.5
    %v3120 = vsel %vm134, %v3117, %v3119
    %v3121 = vmul.f32 %v3120, %v3029
    %3123 = vrot.lane.b32.xlu0 %v3120, 64
    %v3124 = vpop.permute.xlu0 %3123
    %v3126 = vmul.f32 %v3120, %v3124
    %3128 = vrot.lane.b32.xlu0 %v3126, 32
    %v3129 = vpop.permute.xlu0 %3128
    %v3131 = vadd.f32 %v3121, %v3129
    %v3132 = vtanh.pop %v3131
    %3134 = vrot.lane.b32.xlu0 %v3132, 64
    %v3135 = vpop.permute.xlu0 %3134
    %v3137 = vmul.f32 %v3120, %v3135
    %3139 = vrot.lane.b32.xlu0 %v3137, 32
    %v3140 = vpop.permute.xlu0 %3139
    %3143 = vrot.lane.b32.xlu0 %v3090, 64
    %v3144 = vpop.permute.xlu0 %3143
    %v3146 = vsel %vm57, %v3140, %v3144
    %v3148 = vsel %vm188, %v3146, 0
    %3150 = vmatpush.msra.mxu0 0.0
    %3151 = vmatpush.msra.mxu0 0.0
    %3152 = vmatpush.msra.mxu0 0.0
    %3153 = vmatpush.msra.mxu0 0.0
    %3154 = vmatpush.msra.mxu0 0.0
    %3155 = vmatpush.msra.mxu0 0.0
    %3156 = vmatpush.msra.mxu0 0.0
    %3157 = vmatpush.msra.mxu0 0.0
    %3158 = vmatpush.msra.mxu0 %v128
    %3159 = vmatpush.msra.mxu0 %v127
    %3160 = vmatpush.msra.mxu0 %v126
    %3161 = vmatpush.msra.mxu0 %v125
    %3162 = vmatpush.msra.mxu0 %v124
    %3163 = vmatpush.msra.mxu0 %v123
    %3164 = vmatpush.msra.mxu0 %v122
    %3165 = vmatpush.msra.mxu0 %v121
    %3166 = vmatmul.f32.gmra.mxu0 %v3148
    %v3167 = vpop.f32.mrf.mxu0
    %v3168 = vadd.f32 %v129, %v3167
    %3169 = vdwg.mxu0
    %v3170 = vmul.f32 %v3168, 0.5
    %v3171 = vsel %vm134, %v3168, %v3170
    %v3172 = vtanh.pop %v3171
    %v3173 = vmul.f32 %v3172, 0.5
    %v3174 = vadd.f32 %v3173, 0.5
    %v3175 = vsel %vm134, %v3172, %v3174
    %v3176 = vmul.f32 %v3175, %v3084
    %3178 = vrot.lane.b32.xlu0 %v3175, 64
    %v3179 = vpop.permute.xlu0 %3178
    %v3181 = vmul.f32 %v3175, %v3179
    %3183 = vrot.lane.b32.xlu0 %v3181, 32
    %v3184 = vpop.permute.xlu0 %3183
    %v3186 = vadd.f32 %v3176, %v3184
    %v3187 = vtanh.pop %v3186
    %3189 = vrot.lane.b32.xlu0 %v3187, 64
    %v3190 = vpop.permute.xlu0 %3189
    %v3192 = vmul.f32 %v3175, %v3190
    %v3193 = vld [vmem:[#allocation2 + $0x1e] sm:$0x1]
    %v3194 = vsel %vm57, %v3140, 0
    %3196 = vmatpush.msra.mxu0 0.0
    %3197 = vmatpush.msra.mxu0 0.0
    %3198 = vmatpush.msra.mxu0 0.0
    %3199 = vmatpush.msra.mxu0 0.0
    %3200 = vmatpush.msra.mxu0 0.0
    %3201 = vmatpush.msra.mxu0 0.0
    %3202 = vmatpush.msra.mxu0 0.0
    %3203 = vmatpush.msra.mxu0 0.0
    %3204 = vmatpush.msra.mxu0 0.0
    %3205 = vmatpush.msra.mxu0 0.0
    %3206 = vmatpush.msra.mxu0 0.0
    %3207 = vmatpush.msra.mxu0 0.0
    %3208 = vmatpush.msra.mxu0 %v120
    %3209 = vmatpush.msra.mxu0 %v119
    %3210 = vmatpush.msra.mxu0 %v118
    %3211 = vmatpush.msra.mxu0 %v117
    %3212 = vmatmul.f32.gmra.mxu0 %v3194
    %v3213 = vpop.f32.mrf.mxu0
    %v3214 = vadd.f32 0.0, %v3213
    %3215 = vdwg.mxu0
    %v3216 = vadd.f32 %v3193, %v3214
    %v3217 = vmul.f32 %v3216, 0.5
    %v3218 = vsel %vm134, %v3216, %v3217
    %v3219 = vtanh.pop %v3218
    %v3220 = vmul.f32 %v3219, 0.5
    %v3221 = vadd.f32 %v3220, 0.5
    %v3222 = vsel %vm134, %v3219, %v3221
    %v3223 = vmul.f32 %v3222, %v3131
    %3225 = vrot.lane.b32.xlu0 %v3222, 64
    %v3226 = vpop.permute.xlu0 %3225
    %v3228 = vmul.f32 %v3222, %v3226
    %3230 = vrot.lane.b32.xlu0 %v3228, 32
    %v3231 = vpop.permute.xlu0 %3230
    %v3233 = vadd.f32 %v3223, %v3231
    %v3234 = vtanh.pop %v3233
    %3236 = vrot.lane.b32.xlu0 %v3234, 64
    %v3237 = vpop.permute.xlu0 %3236
    %v3239 = vmul.f32 %v3222, %v3237
    %3241 = vrot.lane.b32.xlu0 %v3239, 32
    %v3242 = vpop.permute.xlu0 %3241
    %3245 = vrot.lane.b32.xlu0 %v3192, 64
    %v3246 = vpop.permute.xlu0 %3245
    %v3248 = vsel %vm57, %v3242, %v3246
    %v3250 = vsel %vm188, %v3248, 0
    %3252 = vmatpush.msra.mxu0 0.0
    %3253 = vmatpush.msra.mxu0 0.0
    %3254 = vmatpush.msra.mxu0 0.0
    %3255 = vmatpush.msra.mxu0 0.0
    %3256 = vmatpush.msra.mxu0 0.0
    %3257 = vmatpush.msra.mxu0 0.0
    %3258 = vmatpush.msra.mxu0 0.0
    %3259 = vmatpush.msra.mxu0 0.0
    %3260 = vmatpush.msra.mxu0 %v128
    %3261 = vmatpush.msra.mxu0 %v127
    %3262 = vmatpush.msra.mxu0 %v126
    %3263 = vmatpush.msra.mxu0 %v125
    %3264 = vmatpush.msra.mxu0 %v124
    %3265 = vmatpush.msra.mxu0 %v123
    %3266 = vmatpush.msra.mxu0 %v122
    %3267 = vmatpush.msra.mxu0 %v121
    %3268 = vmatmul.f32.gmra.mxu0 %v3250
    %v3269 = vpop.f32.mrf.mxu0
    %v3270 = vadd.f32 %v129, %v3269
    %3271 = vdwg.mxu0
    %v3272 = vmul.f32 %v3270, 0.5
    %v3273 = vsel %vm134, %v3270, %v3272
    %v3274 = vtanh.pop %v3273
    %v3275 = vmul.f32 %v3274, 0.5
    %v3276 = vadd.f32 %v3275, 0.5
    %v3277 = vsel %vm134, %v3274, %v3276
    %v3278 = vmul.f32 %v3277, %v3186
    %3280 = vrot.lane.b32.xlu0 %v3277, 64
    %v3281 = vpop.permute.xlu0 %3280
    %v3283 = vmul.f32 %v3277, %v3281
    %3285 = vrot.lane.b32.xlu0 %v3283, 32
    %v3286 = vpop.permute.xlu0 %3285
    %v3288 = vadd.f32 %v3278, %v3286
    %v3289 = vtanh.pop %v3288
    %3291 = vrot.lane.b32.xlu0 %v3289, 64
    %v3292 = vpop.permute.xlu0 %3291
    %v3294 = vmul.f32 %v3277, %v3292
    %v3295 = vld [vmem:[#allocation2 + $0x1f] sm:$0x1]
    %v3296 = vsel %vm57, %v3242, 0
    %3298 = vmatpush.msra.mxu0 0.0
    %3299 = vmatpush.msra.mxu0 0.0
    %3300 = vmatpush.msra.mxu0 0.0
    %3301 = vmatpush.msra.mxu0 0.0
    %3302 = vmatpush.msra.mxu0 0.0
    %3303 = vmatpush.msra.mxu0 0.0
    %3304 = vmatpush.msra.mxu0 0.0
    %3305 = vmatpush.msra.mxu0 0.0
    %3306 = vmatpush.msra.mxu0 0.0
    %3307 = vmatpush.msra.mxu0 0.0
    %3308 = vmatpush.msra.mxu0 0.0
    %3309 = vmatpush.msra.mxu0 0.0
    %3310 = vmatpush.msra.mxu0 %v120
    %3311 = vmatpush.msra.mxu0 %v119
    %3312 = vmatpush.msra.mxu0 %v118
    %3313 = vmatpush.msra.mxu0 %v117
    %3314 = vmatmul.f32.gmra.mxu0 %v3296
    %v3315 = vpop.f32.mrf.mxu0
    %v3316 = vadd.f32 0.0, %v3315
    %3317 = vdwg.mxu0
    %v3318 = vadd.f32 %v3295, %v3316
    %v3319 = vmul.f32 %v3318, 0.5
    %v3320 = vsel %vm134, %v3318, %v3319
    %v3321 = vtanh.pop %v3320
    %v3322 = vmul.f32 %v3321, 0.5
    %v3323 = vadd.f32 %v3322, 0.5
    %v3324 = vsel %vm134, %v3321, %v3323
    %v3325 = vmul.f32 %v3324, %v3233
    %3327 = vrot.lane.b32.xlu0 %v3324, 64
    %v3328 = vpop.permute.xlu0 %3327
    %v3330 = vmul.f32 %v3324, %v3328
    %3332 = vrot.lane.b32.xlu0 %v3330, 32
    %v3333 = vpop.permute.xlu0 %3332
    %v3335 = vadd.f32 %v3325, %v3333
    %v3336 = vtanh.pop %v3335
    %3338 = vrot.lane.b32.xlu0 %v3336, 64
    %v3339 = vpop.permute.xlu0 %3338
    %v3341 = vmul.f32 %v3324, %v3339
    %3343 = vrot.lane.b32.xlu0 %v3341, 32
    %v3344 = vpop.permute.xlu0 %3343
    %3347 = vrot.lane.b32.xlu0 %v3294, 64
    %v3348 = vpop.permute.xlu0 %3347
    %v3350 = vsel %vm57, %v3344, %v3348
    %v3352 = vsel %vm188, %v3350, 0
    %3354 = vmatpush.msra.mxu0 0.0
    %3355 = vmatpush.msra.mxu0 0.0
    %3356 = vmatpush.msra.mxu0 0.0
    %3357 = vmatpush.msra.mxu0 0.0
    %3358 = vmatpush.msra.mxu0 0.0
    %3359 = vmatpush.msra.mxu0 0.0
    %3360 = vmatpush.msra.mxu0 0.0
    %3361 = vmatpush.msra.mxu0 0.0
    %3362 = vmatpush.msra.mxu0 %v128
    %3363 = vmatpush.msra.mxu0 %v127
    %3364 = vmatpush.msra.mxu0 %v126
    %3365 = vmatpush.msra.mxu0 %v125
    %3366 = vmatpush.msra.mxu0 %v124
    %3367 = vmatpush.msra.mxu0 %v123
    %3368 = vmatpush.msra.mxu0 %v122
    %3369 = vmatpush.msra.mxu0 %v121
    %3370 = vmatmul.f32.gmra.mxu0 %v3352
    %v3371 = vpop.f32.mrf.mxu0
    %v3372 = vadd.f32 %v129, %v3371
    %3373 = vdwg.mxu0
    %v3374 = vmul.f32 %v3372, 0.5
    %v3375 = vsel %vm134, %v3372, %v3374
    %v3376 = vtanh.pop %v3375
    %v3377 = vmul.f32 %v3376, 0.5
    %v3378 = vadd.f32 %v3377, 0.5
    %v3379 = vsel %vm134, %v3376, %v3378
    %v3380 = vmul.f32 %v3379, %v3288
    %3382 = vrot.lane.b32.xlu0 %v3379, 64
    %v3383 = vpop.permute.xlu0 %3382
    %v3385 = vmul.f32 %v3379, %v3383
    %3387 = vrot.lane.b32.xlu0 %v3385, 32
    %v3388 = vpop.permute.xlu0 %3387
    %v3390 = vadd.f32 %v3380, %v3388
    %v3391 = vtanh.pop %v3390
    %3393 = vrot.lane.b32.xlu0 %v3391, 64
    %v3394 = vpop.permute.xlu0 %3393
    %v3396 = vmul.f32 %v3379, %v3394
    %v3397 = vld [vmem:[#allocation2 + $0x20] sm:$0x1]
    %v3398 = vsel %vm57, %v3344, 0
    %3400 = vmatpush.msra.mxu0 0.0
    %3401 = vmatpush.msra.mxu0 0.0
    %3402 = vmatpush.msra.mxu0 0.0
    %3403 = vmatpush.msra.mxu0 0.0
    %3404 = vmatpush.msra.mxu0 0.0
    %3405 = vmatpush.msra.mxu0 0.0
    %3406 = vmatpush.msra.mxu0 0.0
    %3407 = vmatpush.msra.mxu0 0.0
    %3408 = vmatpush.msra.mxu0 0.0
    %3409 = vmatpush.msra.mxu0 0.0
    %3410 = vmatpush.msra.mxu0 0.0
    %3411 = vmatpush.msra.mxu0 0.0
    %3412 = vmatpush.msra.mxu0 %v120
    %3413 = vmatpush.msra.mxu0 %v119
    %3414 = vmatpush.msra.mxu0 %v118
    %3415 = vmatpush.msra.mxu0 %v117
    %3416 = vmatmul.f32.gmra.mxu0 %v3398
    %v3417 = vpop.f32.mrf.mxu0
    %v3418 = vadd.f32 0.0, %v3417
    %3419 = vdwg.mxu0
    %v3420 = vadd.f32 %v3397, %v3418
    %v3421 = vmul.f32 %v3420, 0.5
    %v3422 = vsel %vm134, %v3420, %v3421
    %v3423 = vtanh.pop %v3422
    %v3424 = vmul.f32 %v3423, 0.5
    %v3425 = vadd.f32 %v3424, 0.5
    %v3426 = vsel %vm134, %v3423, %v3425
    %v3427 = vmul.f32 %v3426, %v3335
    %3429 = vrot.lane.b32.xlu0 %v3426, 64
    %v3430 = vpop.permute.xlu0 %3429
    %v3432 = vmul.f32 %v3426, %v3430
    %3434 = vrot.lane.b32.xlu0 %v3432, 32
    %v3435 = vpop.permute.xlu0 %3434
    %v3437 = vadd.f32 %v3427, %v3435
    %v3438 = vtanh.pop %v3437
    %3440 = vrot.lane.b32.xlu0 %v3438, 64
    %v3441 = vpop.permute.xlu0 %3440
    %v3443 = vmul.f32 %v3426, %v3441
    %3445 = vrot.lane.b32.xlu0 %v3443, 32
    %v3446 = vpop.permute.xlu0 %3445
    %3449 = vrot.lane.b32.xlu0 %v3396, 64
    %v3450 = vpop.permute.xlu0 %3449
    %v3452 = vsel %vm57, %v3446, %v3450
    %v3454 = vsel %vm188, %v3452, 0
    %3456 = vmatpush.msra.mxu0 0.0
    %3457 = vmatpush.msra.mxu0 0.0
    %3458 = vmatpush.msra.mxu0 0.0
    %3459 = vmatpush.msra.mxu0 0.0
    %3460 = vmatpush.msra.mxu0 0.0
    %3461 = vmatpush.msra.mxu0 0.0
    %3462 = vmatpush.msra.mxu0 0.0
    %3463 = vmatpush.msra.mxu0 0.0
    %3464 = vmatpush.msra.mxu0 %v128
    %3465 = vmatpush.msra.mxu0 %v127
    %3466 = vmatpush.msra.mxu0 %v126
    %3467 = vmatpush.msra.mxu0 %v125
    %3468 = vmatpush.msra.mxu0 %v124
    %3469 = vmatpush.msra.mxu0 %v123
    %3470 = vmatpush.msra.mxu0 %v122
    %3471 = vmatpush.msra.mxu0 %v121
    %3472 = vmatmul.f32.gmra.mxu0 %v3454
    %v3473 = vpop.f32.mrf.mxu0
    %v3474 = vadd.f32 %v129, %v3473
    %3475 = vdwg.mxu0
    %v3476 = vmul.f32 %v3474, 0.5
    %v3477 = vsel %vm134, %v3474, %v3476
    %v3478 = vtanh.pop %v3477
    %v3479 = vmul.f32 %v3478, 0.5
    %v3480 = vadd.f32 %v3479, 0.5
    %v3481 = vsel %vm134, %v3478, %v3480
    %v3482 = vmul.f32 %v3481, %v3390
    %3484 = vrot.lane.b32.xlu0 %v3481, 64
    %v3485 = vpop.permute.xlu0 %3484
    %v3487 = vmul.f32 %v3481, %v3485
    %3489 = vrot.lane.b32.xlu0 %v3487, 32
    %v3490 = vpop.permute.xlu0 %3489
    %v3492 = vadd.f32 %v3482, %v3490
    %v3493 = vtanh.pop %v3492
    %3495 = vrot.lane.b32.xlu0 %v3493, 64
    %v3496 = vpop.permute.xlu0 %3495
    %v3498 = vmul.f32 %v3481, %v3496
    %v3499 = vld [vmem:[#allocation2 + $0x21] sm:$0x1]
    %v3500 = vsel %vm57, %v3446, 0
    %3502 = vmatpush.msra.mxu0 0.0
    %3503 = vmatpush.msra.mxu0 0.0
    %3504 = vmatpush.msra.mxu0 0.0
    %3505 = vmatpush.msra.mxu0 0.0
    %3506 = vmatpush.msra.mxu0 0.0
    %3507 = vmatpush.msra.mxu0 0.0
    %3508 = vmatpush.msra.mxu0 0.0
    %3509 = vmatpush.msra.mxu0 0.0
    %3510 = vmatpush.msra.mxu0 0.0
    %3511 = vmatpush.msra.mxu0 0.0
    %3512 = vmatpush.msra.mxu0 0.0
    %3513 = vmatpush.msra.mxu0 0.0
    %3514 = vmatpush.msra.mxu0 %v120
    %3515 = vmatpush.msra.mxu0 %v119
    %3516 = vmatpush.msra.mxu0 %v118
    %3517 = vmatpush.msra.mxu0 %v117
    %3518 = vmatmul.f32.gmra.mxu0 %v3500
    %v3519 = vpop.f32.mrf.mxu0
    %v3520 = vadd.f32 0.0, %v3519
    %3521 = vdwg.mxu0
    %v3522 = vadd.f32 %v3499, %v3520
    %v3523 = vmul.f32 %v3522, 0.5
    %v3524 = vsel %vm134, %v3522, %v3523
    %v3525 = vtanh.pop %v3524
    %v3526 = vmul.f32 %v3525, 0.5
    %v3527 = vadd.f32 %v3526, 0.5
    %v3528 = vsel %vm134, %v3525, %v3527
    %v3529 = vmul.f32 %v3528, %v3437
    %3531 = vrot.lane.b32.xlu0 %v3528, 64
    %v3532 = vpop.permute.xlu0 %3531
    %v3534 = vmul.f32 %v3528, %v3532
    %3536 = vrot.lane.b32.xlu0 %v3534, 32
    %v3537 = vpop.permute.xlu0 %3536
    %v3539 = vadd.f32 %v3529, %v3537
    %v3540 = vtanh.pop %v3539
    %3542 = vrot.lane.b32.xlu0 %v3540, 64
    %v3543 = vpop.permute.xlu0 %3542
    %v3545 = vmul.f32 %v3528, %v3543
    %3547 = vrot.lane.b32.xlu0 %v3545, 32
    %v3548 = vpop.permute.xlu0 %3547
    %3551 = vrot.lane.b32.xlu0 %v3498, 64
    %v3552 = vpop.permute.xlu0 %3551
    %v3554 = vsel %vm57, %v3548, %v3552
    %v3556 = vsel %vm188, %v3554, 0
    %3558 = vmatpush.msra.mxu0 0.0
    %3559 = vmatpush.msra.mxu0 0.0
    %3560 = vmatpush.msra.mxu0 0.0
    %3561 = vmatpush.msra.mxu0 0.0
    %3562 = vmatpush.msra.mxu0 0.0
    %3563 = vmatpush.msra.mxu0 0.0
    %3564 = vmatpush.msra.mxu0 0.0
    %3565 = vmatpush.msra.mxu0 0.0
    %3566 = vmatpush.msra.mxu0 %v128
    %3567 = vmatpush.msra.mxu0 %v127
    %3568 = vmatpush.msra.mxu0 %v126
    %3569 = vmatpush.msra.mxu0 %v125
    %3570 = vmatpush.msra.mxu0 %v124
    %3571 = vmatpush.msra.mxu0 %v123
    %3572 = vmatpush.msra.mxu0 %v122
    %3573 = vmatpush.msra.mxu0 %v121
    %3574 = vmatmul.f32.gmra.mxu0 %v3556
    %v3575 = vpop.f32.mrf.mxu0
    %v3576 = vadd.f32 %v129, %v3575
    %3577 = vdwg.mxu0
    %v3578 = vmul.f32 %v3576, 0.5
    %v3579 = vsel %vm134, %v3576, %v3578
    %v3580 = vtanh.pop %v3579
    %v3581 = vmul.f32 %v3580, 0.5
    %v3582 = vadd.f32 %v3581, 0.5
    %v3583 = vsel %vm134, %v3580, %v3582
    %v3584 = vmul.f32 %v3583, %v3492
    %3586 = vrot.lane.b32.xlu0 %v3583, 64
    %v3587 = vpop.permute.xlu0 %3586
    %v3589 = vmul.f32 %v3583, %v3587
    %3591 = vrot.lane.b32.xlu0 %v3589, 32
    %v3592 = vpop.permute.xlu0 %3591
    %v3594 = vadd.f32 %v3584, %v3592
    %v3595 = vtanh.pop %v3594
    %3597 = vrot.lane.b32.xlu0 %v3595, 64
    %v3598 = vpop.permute.xlu0 %3597
    %v3600 = vmul.f32 %v3583, %v3598
    %v3601 = vld [vmem:[#allocation2 + $0x22] sm:$0x1]
    %v3602 = vsel %vm57, %v3548, 0
    %3604 = vmatpush.msra.mxu0 0.0
    %3605 = vmatpush.msra.mxu0 0.0
    %3606 = vmatpush.msra.mxu0 0.0
    %3607 = vmatpush.msra.mxu0 0.0
    %3608 = vmatpush.msra.mxu0 0.0
    %3609 = vmatpush.msra.mxu0 0.0
    %3610 = vmatpush.msra.mxu0 0.0
    %3611 = vmatpush.msra.mxu0 0.0
    %3612 = vmatpush.msra.mxu0 0.0
    %3613 = vmatpush.msra.mxu0 0.0
    %3614 = vmatpush.msra.mxu0 0.0
    %3615 = vmatpush.msra.mxu0 0.0
    %3616 = vmatpush.msra.mxu0 %v120
    %3617 = vmatpush.msra.mxu0 %v119
    %3618 = vmatpush.msra.mxu0 %v118
    %3619 = vmatpush.msra.mxu0 %v117
    %3620 = vmatmul.f32.gmra.mxu0 %v3602
    %v3621 = vpop.f32.mrf.mxu0
    %v3622 = vadd.f32 0.0, %v3621
    %3623 = vdwg.mxu0
    %v3624 = vadd.f32 %v3601, %v3622
    %v3625 = vmul.f32 %v3624, 0.5
    %v3626 = vsel %vm134, %v3624, %v3625
    %v3627 = vtanh.pop %v3626
    %v3628 = vmul.f32 %v3627, 0.5
    %v3629 = vadd.f32 %v3628, 0.5
    %v3630 = vsel %vm134, %v3627, %v3629
    %v3631 = vmul.f32 %v3630, %v3539
    %3633 = vrot.lane.b32.xlu0 %v3630, 64
    %v3634 = vpop.permute.xlu0 %3633
    %v3636 = vmul.f32 %v3630, %v3634
    %3638 = vrot.lane.b32.xlu0 %v3636, 32
    %v3639 = vpop.permute.xlu0 %3638
    %v3641 = vadd.f32 %v3631, %v3639
    %v3642 = vtanh.pop %v3641
    %3644 = vrot.lane.b32.xlu0 %v3642, 64
    %v3645 = vpop.permute.xlu0 %3644
    %v3647 = vmul.f32 %v3630, %v3645
    %3649 = vrot.lane.b32.xlu0 %v3647, 32
    %v3650 = vpop.permute.xlu0 %3649
    %3653 = vrot.lane.b32.xlu0 %v3600, 64
    %v3654 = vpop.permute.xlu0 %3653
    %v3656 = vsel %vm57, %v3650, %v3654
    %v3658 = vsel %vm188, %v3656, 0
    %3660 = vmatpush.msra.mxu0 0.0
    %3661 = vmatpush.msra.mxu0 0.0
    %3662 = vmatpush.msra.mxu0 0.0
    %3663 = vmatpush.msra.mxu0 0.0
    %3664 = vmatpush.msra.mxu0 0.0
    %3665 = vmatpush.msra.mxu0 0.0
    %3666 = vmatpush.msra.mxu0 0.0
    %3667 = vmatpush.msra.mxu0 0.0
    %3668 = vmatpush.msra.mxu0 %v128
    %3669 = vmatpush.msra.mxu0 %v127
    %3670 = vmatpush.msra.mxu0 %v126
    %3671 = vmatpush.msra.mxu0 %v125
    %3672 = vmatpush.msra.mxu0 %v124
    %3673 = vmatpush.msra.mxu0 %v123
    %3674 = vmatpush.msra.mxu0 %v122
    %3675 = vmatpush.msra.mxu0 %v121
    %3676 = vmatmul.f32.gmra.mxu0 %v3658
    %v3677 = vpop.f32.mrf.mxu0
    %v3678 = vadd.f32 %v129, %v3677
    %3679 = vdwg.mxu0
    %v3680 = vmul.f32 %v3678, 0.5
    %v3681 = vsel %vm134, %v3678, %v3680
    %v3682 = vtanh.pop %v3681
    %v3683 = vmul.f32 %v3682, 0.5
    %v3684 = vadd.f32 %v3683, 0.5
    %v3685 = vsel %vm134, %v3682, %v3684
    %v3686 = vmul.f32 %v3685, %v3594
    %3688 = vrot.lane.b32.xlu0 %v3685, 64
    %v3689 = vpop.permute.xlu0 %3688
    %v3691 = vmul.f32 %v3685, %v3689
    %3693 = vrot.lane.b32.xlu0 %v3691, 32
    %v3694 = vpop.permute.xlu0 %3693
    %v3696 = vadd.f32 %v3686, %v3694
    %v3697 = vtanh.pop %v3696
    %3699 = vrot.lane.b32.xlu0 %v3697, 64
    %v3700 = vpop.permute.xlu0 %3699
    %v3702 = vmul.f32 %v3685, %v3700
    %v3703 = vld [vmem:[#allocation2 + $0x23] sm:$0x1]
    %v3704 = vsel %vm57, %v3650, 0
    %3706 = vmatpush.msra.mxu0 0.0
    %3707 = vmatpush.msra.mxu0 0.0
    %3708 = vmatpush.msra.mxu0 0.0
    %3709 = vmatpush.msra.mxu0 0.0
    %3710 = vmatpush.msra.mxu0 0.0
    %3711 = vmatpush.msra.mxu0 0.0
    %3712 = vmatpush.msra.mxu0 0.0
    %3713 = vmatpush.msra.mxu0 0.0
    %3714 = vmatpush.msra.mxu0 0.0
    %3715 = vmatpush.msra.mxu0 0.0
    %3716 = vmatpush.msra.mxu0 0.0
    %3717 = vmatpush.msra.mxu0 0.0
    %3718 = vmatpush.msra.mxu0 %v120
    %3719 = vmatpush.msra.mxu0 %v119
    %3720 = vmatpush.msra.mxu0 %v118
    %3721 = vmatpush.msra.mxu0 %v117
    %3722 = vmatmul.f32.gmra.mxu0 %v3704
    %v3723 = vpop.f32.mrf.mxu0
    %v3724 = vadd.f32 0.0, %v3723
    %3725 = vdwg.mxu0
    %v3726 = vadd.f32 %v3703, %v3724
    %v3727 = vmul.f32 %v3726, 0.5
    %v3728 = vsel %vm134, %v3726, %v3727
    %v3729 = vtanh.pop %v3728
    %v3730 = vmul.f32 %v3729, 0.5
    %v3731 = vadd.f32 %v3730, 0.5
    %v3732 = vsel %vm134, %v3729, %v3731
    %v3733 = vmul.f32 %v3732, %v3641
    %3735 = vrot.lane.b32.xlu0 %v3732, 64
    %v3736 = vpop.permute.xlu0 %3735
    %v3738 = vmul.f32 %v3732, %v3736
    %3740 = vrot.lane.b32.xlu0 %v3738, 32
    %v3741 = vpop.permute.xlu0 %3740
    %v3743 = vadd.f32 %v3733, %v3741
    %v3744 = vtanh.pop %v3743
    %3746 = vrot.lane.b32.xlu0 %v3744, 64
    %v3747 = vpop.permute.xlu0 %3746
    %v3749 = vmul.f32 %v3732, %v3747
    %3751 = vrot.lane.b32.xlu0 %v3749, 32
    %v3752 = vpop.permute.xlu0 %3751
    %3755 = vrot.lane.b32.xlu0 %v3702, 64
    %v3756 = vpop.permute.xlu0 %3755
    %v3758 = vsel %vm57, %v3752, %v3756
    %v3760 = vsel %vm188, %v3758, 0
    %3762 = vmatpush.msra.mxu0 0.0
    %3763 = vmatpush.msra.mxu0 0.0
    %3764 = vmatpush.msra.mxu0 0.0
    %3765 = vmatpush.msra.mxu0 0.0
    %3766 = vmatpush.msra.mxu0 0.0
    %3767 = vmatpush.msra.mxu0 0.0
    %3768 = vmatpush.msra.mxu0 0.0
    %3769 = vmatpush.msra.mxu0 0.0
    %3770 = vmatpush.msra.mxu0 %v128
    %3771 = vmatpush.msra.mxu0 %v127
    %3772 = vmatpush.msra.mxu0 %v126
    %3773 = vmatpush.msra.mxu0 %v125
    %3774 = vmatpush.msra.mxu0 %v124
    %3775 = vmatpush.msra.mxu0 %v123
    %3776 = vmatpush.msra.mxu0 %v122
    %3777 = vmatpush.msra.mxu0 %v121
    %3778 = vmatmul.f32.gmra.mxu0 %v3760
    %v3779 = vpop.f32.mrf.mxu0
    %v3780 = vadd.f32 %v129, %v3779
    %3781 = vdwg.mxu0
    %v3782 = vmul.f32 %v3780, 0.5
    %v3783 = vsel %vm134, %v3780, %v3782
    %v3784 = vtanh.pop %v3783
    %v3785 = vmul.f32 %v3784, 0.5
    %v3786 = vadd.f32 %v3785, 0.5
    %v3787 = vsel %vm134, %v3784, %v3786
    %v3788 = vmul.f32 %v3787, %v3696
    %3790 = vrot.lane.b32.xlu0 %v3787, 64
    %v3791 = vpop.permute.xlu0 %3790
    %v3793 = vmul.f32 %v3787, %v3791
    %3795 = vrot.lane.b32.xlu0 %v3793, 32
    %v3796 = vpop.permute.xlu0 %3795
    %v3798 = vadd.f32 %v3788, %v3796
    %v3799 = vtanh.pop %v3798
    %3801 = vrot.lane.b32.xlu0 %v3799, 64
    %v3802 = vpop.permute.xlu0 %3801
    %v3804 = vmul.f32 %v3787, %v3802
    %v3805 = vld [vmem:[#allocation2 + $0x24] sm:$0x1]
    %v3806 = vsel %vm57, %v3752, 0
    %3808 = vmatpush.msra.mxu0 0.0
    %3809 = vmatpush.msra.mxu0 0.0
    %3810 = vmatpush.msra.mxu0 0.0
    %3811 = vmatpush.msra.mxu0 0.0
    %3812 = vmatpush.msra.mxu0 0.0
    %3813 = vmatpush.msra.mxu0 0.0
    %3814 = vmatpush.msra.mxu0 0.0
    %3815 = vmatpush.msra.mxu0 0.0
    %3816 = vmatpush.msra.mxu0 0.0
    %3817 = vmatpush.msra.mxu0 0.0
    %3818 = vmatpush.msra.mxu0 0.0
    %3819 = vmatpush.msra.mxu0 0.0
    %3820 = vmatpush.msra.mxu0 %v120
    %3821 = vmatpush.msra.mxu0 %v119
    %3822 = vmatpush.msra.mxu0 %v118
    %3823 = vmatpush.msra.mxu0 %v117
    %3824 = vmatmul.f32.gmra.mxu0 %v3806
    %v3825 = vpop.f32.mrf.mxu0
    %v3826 = vadd.f32 0.0, %v3825
    %3827 = vdwg.mxu0
    %v3828 = vadd.f32 %v3805, %v3826
    %v3829 = vmul.f32 %v3828, 0.5
    %v3830 = vsel %vm134, %v3828, %v3829
    %v3831 = vtanh.pop %v3830
    %v3832 = vmul.f32 %v3831, 0.5
    %v3833 = vadd.f32 %v3832, 0.5
    %v3834 = vsel %vm134, %v3831, %v3833
    %v3835 = vmul.f32 %v3834, %v3743
    %3837 = vrot.lane.b32.xlu0 %v3834, 64
    %v3838 = vpop.permute.xlu0 %3837
    %v3840 = vmul.f32 %v3834, %v3838
    %3842 = vrot.lane.b32.xlu0 %v3840, 32
    %v3843 = vpop.permute.xlu0 %3842
    %v3845 = vadd.f32 %v3835, %v3843
    %v3846 = vtanh.pop %v3845
    %3848 = vrot.lane.b32.xlu0 %v3846, 64
    %v3849 = vpop.permute.xlu0 %3848
    %v3851 = vmul.f32 %v3834, %v3849
    %3853 = vrot.lane.b32.xlu0 %v3851, 32
    %v3854 = vpop.permute.xlu0 %3853
    %3857 = vrot.lane.b32.xlu0 %v3804, 64
    %v3858 = vpop.permute.xlu0 %3857
    %v3860 = vsel %vm57, %v3854, %v3858
    %v3862 = vsel %vm188, %v3860, 0
    %3864 = vmatpush.msra.mxu0 0.0
    %3865 = vmatpush.msra.mxu0 0.0
    %3866 = vmatpush.msra.mxu0 0.0
    %3867 = vmatpush.msra.mxu0 0.0
    %3868 = vmatpush.msra.mxu0 0.0
    %3869 = vmatpush.msra.mxu0 0.0
    %3870 = vmatpush.msra.mxu0 0.0
    %3871 = vmatpush.msra.mxu0 0.0
    %3872 = vmatpush.msra.mxu0 %v128
    %3873 = vmatpush.msra.mxu0 %v127
    %3874 = vmatpush.msra.mxu0 %v126
    %3875 = vmatpush.msra.mxu0 %v125
    %3876 = vmatpush.msra.mxu0 %v124
    %3877 = vmatpush.msra.mxu0 %v123
    %3878 = vmatpush.msra.mxu0 %v122
    %3879 = vmatpush.msra.mxu0 %v121
    %3880 = vmatmul.f32.gmra.mxu0 %v3862
    %v3881 = vpop.f32.mrf.mxu0
    %v3882 = vadd.f32 %v129, %v3881
    %3883 = vdwg.mxu0
    %v3884 = vmul.f32 %v3882, 0.5
    %v3885 = vsel %vm134, %v3882, %v3884
    %v3886 = vtanh.pop %v3885
    %v3887 = vmul.f32 %v3886, 0.5
    %v3888 = vadd.f32 %v3887, 0.5
    %v3889 = vsel %vm134, %v3886, %v3888
    %v3890 = vmul.f32 %v3889, %v3798
    %3892 = vrot.lane.b32.xlu0 %v3889, 64
    %v3893 = vpop.permute.xlu0 %3892
    %v3895 = vmul.f32 %v3889, %v3893
    %3897 = vrot.lane.b32.xlu0 %v3895, 32
    %v3898 = vpop.permute.xlu0 %3897
    %v3900 = vadd.f32 %v3890, %v3898
    %v3901 = vtanh.pop %v3900
    %3903 = vrot.lane.b32.xlu0 %v3901, 64
    %v3904 = vpop.permute.xlu0 %3903
    %v3906 = vmul.f32 %v3889, %v3904
    %v3907 = vld [vmem:[#allocation2 + $0x25] sm:$0x1]
    %v3908 = vsel %vm57, %v3854, 0
    %3910 = vmatpush.msra.mxu0 0.0
    %3911 = vmatpush.msra.mxu0 0.0
    %3912 = vmatpush.msra.mxu0 0.0
    %3913 = vmatpush.msra.mxu0 0.0
    %3914 = vmatpush.msra.mxu0 0.0
    %3915 = vmatpush.msra.mxu0 0.0
    %3916 = vmatpush.msra.mxu0 0.0
    %3917 = vmatpush.msra.mxu0 0.0
    %3918 = vmatpush.msra.mxu0 0.0
    %3919 = vmatpush.msra.mxu0 0.0
    %3920 = vmatpush.msra.mxu0 0.0
    %3921 = vmatpush.msra.mxu0 0.0
    %3922 = vmatpush.msra.mxu0 %v120
    %3923 = vmatpush.msra.mxu0 %v119
    %3924 = vmatpush.msra.mxu0 %v118
    %3925 = vmatpush.msra.mxu0 %v117
    %3926 = vmatmul.f32.gmra.mxu0 %v3908
    %v3927 = vpop.f32.mrf.mxu0
    %v3928 = vadd.f32 0.0, %v3927
    %3929 = vdwg.mxu0
    %v3930 = vadd.f32 %v3907, %v3928
    %v3931 = vmul.f32 %v3930, 0.5
    %v3932 = vsel %vm134, %v3930, %v3931
    %v3933 = vtanh.pop %v3932
    %v3934 = vmul.f32 %v3933, 0.5
    %v3935 = vadd.f32 %v3934, 0.5
    %v3936 = vsel %vm134, %v3933, %v3935
    %v3937 = vmul.f32 %v3936, %v3845
    %3939 = vrot.lane.b32.xlu0 %v3936, 64
    %v3940 = vpop.permute.xlu0 %3939
    %v3942 = vmul.f32 %v3936, %v3940
    %3944 = vrot.lane.b32.xlu0 %v3942, 32
    %v3945 = vpop.permute.xlu0 %3944
    %v3947 = vadd.f32 %v3937, %v3945
    %v3948 = vtanh.pop %v3947
    %3950 = vrot.lane.b32.xlu0 %v3948, 64
    %v3951 = vpop.permute.xlu0 %3950
    %v3953 = vmul.f32 %v3936, %v3951
    %3955 = vrot.lane.b32.xlu0 %v3953, 32
    %v3956 = vpop.permute.xlu0 %3955
    %3959 = vrot.lane.b32.xlu0 %v3906, 64
    %v3960 = vpop.permute.xlu0 %3959
    %v3962 = vsel %vm57, %v3956, %v3960
    %v3964 = vsel %vm188, %v3962, 0
    %3966 = vmatpush.msra.mxu0 0.0
    %3967 = vmatpush.msra.mxu0 0.0
    %3968 = vmatpush.msra.mxu0 0.0
    %3969 = vmatpush.msra.mxu0 0.0
    %3970 = vmatpush.msra.mxu0 0.0
    %3971 = vmatpush.msra.mxu0 0.0
    %3972 = vmatpush.msra.mxu0 0.0
    %3973 = vmatpush.msra.mxu0 0.0
    %3974 = vmatpush.msra.mxu0 %v128
    %3975 = vmatpush.msra.mxu0 %v127
    %3976 = vmatpush.msra.mxu0 %v126
    %3977 = vmatpush.msra.mxu0 %v125
    %3978 = vmatpush.msra.mxu0 %v124
    %3979 = vmatpush.msra.mxu0 %v123
    %3980 = vmatpush.msra.mxu0 %v122
    %3981 = vmatpush.msra.mxu0 %v121
    %3982 = vmatmul.f32.gmra.mxu0 %v3964
    %v3983 = vpop.f32.mrf.mxu0
    %v3984 = vadd.f32 %v129, %v3983
    %3985 = vdwg.mxu0
    %v3986 = vmul.f32 %v3984, 0.5
    %v3987 = vsel %vm134, %v3984, %v3986
    %v3988 = vtanh.pop %v3987
    %v3989 = vmul.f32 %v3988, 0.5
    %v3990 = vadd.f32 %v3989, 0.5
    %v3991 = vsel %vm134, %v3988, %v3990
    %v3992 = vmul.f32 %v3991, %v3900
    %3994 = vrot.lane.b32.xlu0 %v3991, 64
    %v3995 = vpop.permute.xlu0 %3994
    %v3997 = vmul.f32 %v3991, %v3995
    %3999 = vrot.lane.b32.xlu0 %v3997, 32
    %v4000 = vpop.permute.xlu0 %3999
    %v4002 = vadd.f32 %v3992, %v4000
    %v4003 = vtanh.pop %v4002
    %4005 = vrot.lane.b32.xlu0 %v4003, 64
    %v4006 = vpop.permute.xlu0 %4005
    %v4008 = vmul.f32 %v3991, %v4006
    %v4009 = vld [vmem:[#allocation2 + $0x26] sm:$0x1]
    %v4010 = vsel %vm57, %v3956, 0
    %4012 = vmatpush.msra.mxu0 0.0
    %4013 = vmatpush.msra.mxu0 0.0
    %4014 = vmatpush.msra.mxu0 0.0
    %4015 = vmatpush.msra.mxu0 0.0
    %4016 = vmatpush.msra.mxu0 0.0
    %4017 = vmatpush.msra.mxu0 0.0
    %4018 = vmatpush.msra.mxu0 0.0
    %4019 = vmatpush.msra.mxu0 0.0
    %4020 = vmatpush.msra.mxu0 0.0
    %4021 = vmatpush.msra.mxu0 0.0
    %4022 = vmatpush.msra.mxu0 0.0
    %4023 = vmatpush.msra.mxu0 0.0
    %4024 = vmatpush.msra.mxu0 %v120
    %4025 = vmatpush.msra.mxu0 %v119
    %4026 = vmatpush.msra.mxu0 %v118
    %4027 = vmatpush.msra.mxu0 %v117
    %4028 = vmatmul.f32.gmra.mxu0 %v4010
    %v4029 = vpop.f32.mrf.mxu0
    %v4030 = vadd.f32 0.0, %v4029
    %4031 = vdwg.mxu0
    %v4032 = vadd.f32 %v4009, %v4030
    %v4033 = vmul.f32 %v4032, 0.5
    %v4034 = vsel %vm134, %v4032, %v4033
    %v4035 = vtanh.pop %v4034
    %v4036 = vmul.f32 %v4035, 0.5
    %v4037 = vadd.f32 %v4036, 0.5
    %v4038 = vsel %vm134, %v4035, %v4037
    %v4039 = vmul.f32 %v4038, %v3947
    %4041 = vrot.lane.b32.xlu0 %v4038, 64
    %v4042 = vpop.permute.xlu0 %4041
    %v4044 = vmul.f32 %v4038, %v4042
    %4046 = vrot.lane.b32.xlu0 %v4044, 32
    %v4047 = vpop.permute.xlu0 %4046
    %v4049 = vadd.f32 %v4039, %v4047
    %v4050 = vtanh.pop %v4049
    %4052 = vrot.lane.b32.xlu0 %v4050, 64
    %v4053 = vpop.permute.xlu0 %4052
    %v4055 = vmul.f32 %v4038, %v4053
    %4057 = vrot.lane.b32.xlu0 %v4055, 32
    %v4058 = vpop.permute.xlu0 %4057
    %4061 = vrot.lane.b32.xlu0 %v4008, 64
    %v4062 = vpop.permute.xlu0 %4061
    %v4064 = vsel %vm57, %v4058, %v4062
    %v4066 = vsel %vm188, %v4064, 0
    %4068 = vmatpush.msra.mxu0 0.0
    %4069 = vmatpush.msra.mxu0 0.0
    %4070 = vmatpush.msra.mxu0 0.0
    %4071 = vmatpush.msra.mxu0 0.0
    %4072 = vmatpush.msra.mxu0 0.0
    %4073 = vmatpush.msra.mxu0 0.0
    %4074 = vmatpush.msra.mxu0 0.0
    %4075 = vmatpush.msra.mxu0 0.0
    %4076 = vmatpush.msra.mxu0 %v128
    %4077 = vmatpush.msra.mxu0 %v127
    %4078 = vmatpush.msra.mxu0 %v126
    %4079 = vmatpush.msra.mxu0 %v125
    %4080 = vmatpush.msra.mxu0 %v124
    %4081 = vmatpush.msra.mxu0 %v123
    %4082 = vmatpush.msra.mxu0 %v122
    %4083 = vmatpush.msra.mxu0 %v121
    %4084 = vmatmul.f32.gmra.mxu0 %v4066
    %v4085 = vpop.f32.mrf.mxu0
    %v4086 = vadd.f32 %v129, %v4085
    %4087 = vdwg.mxu0
    %v4088 = vmul.f32 %v4086, 0.5
    %v4089 = vsel %vm134, %v4086, %v4088
    %v4090 = vtanh.pop %v4089
    %v4091 = vmul.f32 %v4090, 0.5
    %v4092 = vadd.f32 %v4091, 0.5
    %v4093 = vsel %vm134, %v4090, %v4092
    %v4094 = vmul.f32 %v4093, %v4002
    %4096 = vrot.lane.b32.xlu0 %v4093, 64
    %v4097 = vpop.permute.xlu0 %4096
    %v4099 = vmul.f32 %v4093, %v4097
    %4101 = vrot.lane.b32.xlu0 %v4099, 32
    %v4102 = vpop.permute.xlu0 %4101
    %v4104 = vadd.f32 %v4094, %v4102
    %v4105 = vtanh.pop %v4104
    %4107 = vrot.lane.b32.xlu0 %v4105, 64
    %v4108 = vpop.permute.xlu0 %4107
    %v4110 = vmul.f32 %v4093, %v4108
    %v4111 = vld [vmem:[#allocation2 + $0x27] sm:$0x1]
    %v4112 = vsel %vm57, %v4058, 0
    %4114 = vmatpush.msra.mxu0 0.0
    %4115 = vmatpush.msra.mxu0 0.0
    %4116 = vmatpush.msra.mxu0 0.0
    %4117 = vmatpush.msra.mxu0 0.0
    %4118 = vmatpush.msra.mxu0 0.0
    %4119 = vmatpush.msra.mxu0 0.0
    %4120 = vmatpush.msra.mxu0 0.0
    %4121 = vmatpush.msra.mxu0 0.0
    %4122 = vmatpush.msra.mxu0 0.0
    %4123 = vmatpush.msra.mxu0 0.0
    %4124 = vmatpush.msra.mxu0 0.0
    %4125 = vmatpush.msra.mxu0 0.0
    %4126 = vmatpush.msra.mxu0 %v120
    %4127 = vmatpush.msra.mxu0 %v119
    %4128 = vmatpush.msra.mxu0 %v118
    %4129 = vmatpush.msra.mxu0 %v117
    %4130 = vmatmul.f32.gmra.mxu0 %v4112
    %v4131 = vpop.f32.mrf.mxu0
    %v4132 = vadd.f32 0.0, %v4131
    %4133 = vdwg.mxu0
    %v4134 = vadd.f32 %v4111, %v4132
    %v4135 = vmul.f32 %v4134, 0.5
    %v4136 = vsel %vm134, %v4134, %v4135
    %v4137 = vtanh.pop %v4136
    %v4138 = vmul.f32 %v4137, 0.5
    %v4139 = vadd.f32 %v4138, 0.5
    %v4140 = vsel %vm134, %v4137, %v4139
    %v4141 = vmul.f32 %v4140, %v4049
    %4143 = vrot.lane.b32.xlu0 %v4140, 64
    %v4144 = vpop.permute.xlu0 %4143
    %v4146 = vmul.f32 %v4140, %v4144
    %4148 = vrot.lane.b32.xlu0 %v4146, 32
    %v4149 = vpop.permute.xlu0 %4148
    %v4151 = vadd.f32 %v4141, %v4149
    %v4152 = vtanh.pop %v4151
    %4154 = vrot.lane.b32.xlu0 %v4152, 64
    %v4155 = vpop.permute.xlu0 %4154
    %v4157 = vmul.f32 %v4140, %v4155
    %4159 = vrot.lane.b32.xlu0 %v4157, 32
    %v4160 = vpop.permute.xlu0 %4159
    %4163 = vrot.lane.b32.xlu0 %v4110, 64
    %v4164 = vpop.permute.xlu0 %4163
    %v4166 = vsel %vm57, %v4160, %v4164
    %v4168 = vsel %vm188, %v4166, 0
    %4170 = vmatpush.msra.mxu0 0.0
    %4171 = vmatpush.msra.mxu0 0.0
    %4172 = vmatpush.msra.mxu0 0.0
    %4173 = vmatpush.msra.mxu0 0.0
    %4174 = vmatpush.msra.mxu0 0.0
    %4175 = vmatpush.msra.mxu0 0.0
    %4176 = vmatpush.msra.mxu0 0.0
    %4177 = vmatpush.msra.mxu0 0.0
    %4178 = vmatpush.msra.mxu0 %v128
    %4179 = vmatpush.msra.mxu0 %v127
    %4180 = vmatpush.msra.mxu0 %v126
    %4181 = vmatpush.msra.mxu0 %v125
    %4182 = vmatpush.msra.mxu0 %v124
    %4183 = vmatpush.msra.mxu0 %v123
    %4184 = vmatpush.msra.mxu0 %v122
    %4185 = vmatpush.msra.mxu0 %v121
    %4186 = vmatmul.f32.gmra.mxu0 %v4168
    %v4187 = vpop.f32.mrf.mxu0
    %v4188 = vadd.f32 %v129, %v4187
    %4189 = vdwg.mxu0
    %v4190 = vmul.f32 %v4188, 0.5
    %v4191 = vsel %vm134, %v4188, %v4190
    %v4192 = vtanh.pop %v4191
    %v4193 = vmul.f32 %v4192, 0.5
    %v4194 = vadd.f32 %v4193, 0.5
    %v4195 = vsel %vm134, %v4192, %v4194
    %v4196 = vmul.f32 %v4195, %v4104
    %4198 = vrot.lane.b32.xlu0 %v4195, 64
    %v4199 = vpop.permute.xlu0 %4198
    %v4201 = vmul.f32 %v4195, %v4199
    %4203 = vrot.lane.b32.xlu0 %v4201, 32
    %v4204 = vpop.permute.xlu0 %4203
    %v4206 = vadd.f32 %v4196, %v4204
    %v4207 = vtanh.pop %v4206
    %4209 = vrot.lane.b32.xlu0 %v4207, 64
    %v4210 = vpop.permute.xlu0 %4209
    %v4212 = vmul.f32 %v4195, %v4210
    %v4213 = vld [vmem:[#allocation2 + $0x28] sm:$0x1]
    %v4214 = vsel %vm57, %v4160, 0
    %4216 = vmatpush.msra.mxu0 0.0
    %4217 = vmatpush.msra.mxu0 0.0
    %4218 = vmatpush.msra.mxu0 0.0
    %4219 = vmatpush.msra.mxu0 0.0
    %4220 = vmatpush.msra.mxu0 0.0
    %4221 = vmatpush.msra.mxu0 0.0
    %4222 = vmatpush.msra.mxu0 0.0
    %4223 = vmatpush.msra.mxu0 0.0
    %4224 = vmatpush.msra.mxu0 0.0
    %4225 = vmatpush.msra.mxu0 0.0
    %4226 = vmatpush.msra.mxu0 0.0
    %4227 = vmatpush.msra.mxu0 0.0
    %4228 = vmatpush.msra.mxu0 %v120
    %4229 = vmatpush.msra.mxu0 %v119
    %4230 = vmatpush.msra.mxu0 %v118
    %4231 = vmatpush.msra.mxu0 %v117
    %4232 = vmatmul.f32.gmra.mxu0 %v4214
    %v4233 = vpop.f32.mrf.mxu0
    %v4234 = vadd.f32 0.0, %v4233
    %4235 = vdwg.mxu0
    %v4236 = vadd.f32 %v4213, %v4234
    %v4237 = vmul.f32 %v4236, 0.5
    %v4238 = vsel %vm134, %v4236, %v4237
    %v4239 = vtanh.pop %v4238
    %v4240 = vmul.f32 %v4239, 0.5
    %v4241 = vadd.f32 %v4240, 0.5
    %v4242 = vsel %vm134, %v4239, %v4241
    %v4243 = vmul.f32 %v4242, %v4151
    %4245 = vrot.lane.b32.xlu0 %v4242, 64
    %v4246 = vpop.permute.xlu0 %4245
    %v4248 = vmul.f32 %v4242, %v4246
    %4250 = vrot.lane.b32.xlu0 %v4248, 32
    %v4251 = vpop.permute.xlu0 %4250
    %v4253 = vadd.f32 %v4243, %v4251
    %v4254 = vtanh.pop %v4253
    %4256 = vrot.lane.b32.xlu0 %v4254, 64
    %v4257 = vpop.permute.xlu0 %4256
    %v4259 = vmul.f32 %v4242, %v4257
    %4261 = vrot.lane.b32.xlu0 %v4259, 32
    %v4262 = vpop.permute.xlu0 %4261
    %4265 = vrot.lane.b32.xlu0 %v4212, 64
    %v4266 = vpop.permute.xlu0 %4265
    %v4268 = vsel %vm57, %v4262, %v4266
    %v4270 = vsel %vm188, %v4268, 0
    %4272 = vmatpush.msra.mxu0 0.0
    %4273 = vmatpush.msra.mxu0 0.0
    %4274 = vmatpush.msra.mxu0 0.0
    %4275 = vmatpush.msra.mxu0 0.0
    %4276 = vmatpush.msra.mxu0 0.0
    %4277 = vmatpush.msra.mxu0 0.0
    %4278 = vmatpush.msra.mxu0 0.0
    %4279 = vmatpush.msra.mxu0 0.0
    %4280 = vmatpush.msra.mxu0 %v128
    %4281 = vmatpush.msra.mxu0 %v127
    %4282 = vmatpush.msra.mxu0 %v126
    %4283 = vmatpush.msra.mxu0 %v125
    %4284 = vmatpush.msra.mxu0 %v124
    %4285 = vmatpush.msra.mxu0 %v123
    %4286 = vmatpush.msra.mxu0 %v122
    %4287 = vmatpush.msra.mxu0 %v121
    %4288 = vmatmul.f32.gmra.mxu0 %v4270
    %v4289 = vpop.f32.mrf.mxu0
    %v4290 = vadd.f32 %v129, %v4289
    %4291 = vdwg.mxu0
    %v4292 = vmul.f32 %v4290, 0.5
    %v4293 = vsel %vm134, %v4290, %v4292
    %v4294 = vtanh.pop %v4293
    %v4295 = vmul.f32 %v4294, 0.5
    %v4296 = vadd.f32 %v4295, 0.5
    %v4297 = vsel %vm134, %v4294, %v4296
    %v4298 = vmul.f32 %v4297, %v4206
    %4300 = vrot.lane.b32.xlu0 %v4297, 64
    %v4301 = vpop.permute.xlu0 %4300
    %v4303 = vmul.f32 %v4297, %v4301
    %4305 = vrot.lane.b32.xlu0 %v4303, 32
    %v4306 = vpop.permute.xlu0 %4305
    %v4308 = vadd.f32 %v4298, %v4306
    %v4309 = vtanh.pop %v4308
    %4311 = vrot.lane.b32.xlu0 %v4309, 64
    %v4312 = vpop.permute.xlu0 %4311
    %v4314 = vmul.f32 %v4297, %v4312
    %v4315 = vld [vmem:[#allocation2 + $0x29] sm:$0x1]
    %v4316 = vsel %vm57, %v4262, 0
    %4318 = vmatpush.msra.mxu0 0.0
    %4319 = vmatpush.msra.mxu0 0.0
    %4320 = vmatpush.msra.mxu0 0.0
    %4321 = vmatpush.msra.mxu0 0.0
    %4322 = vmatpush.msra.mxu0 0.0
    %4323 = vmatpush.msra.mxu0 0.0
    %4324 = vmatpush.msra.mxu0 0.0
    %4325 = vmatpush.msra.mxu0 0.0
    %4326 = vmatpush.msra.mxu0 0.0
    %4327 = vmatpush.msra.mxu0 0.0
    %4328 = vmatpush.msra.mxu0 0.0
    %4329 = vmatpush.msra.mxu0 0.0
    %4330 = vmatpush.msra.mxu0 %v120
    %4331 = vmatpush.msra.mxu0 %v119
    %4332 = vmatpush.msra.mxu0 %v118
    %4333 = vmatpush.msra.mxu0 %v117
    %4334 = vmatmul.f32.gmra.mxu0 %v4316
    %v4335 = vpop.f32.mrf.mxu0
    %v4336 = vadd.f32 0.0, %v4335
    %4337 = vdwg.mxu0
    %v4338 = vadd.f32 %v4315, %v4336
    %v4339 = vmul.f32 %v4338, 0.5
    %v4340 = vsel %vm134, %v4338, %v4339
    %v4341 = vtanh.pop %v4340
    %v4342 = vmul.f32 %v4341, 0.5
    %v4343 = vadd.f32 %v4342, 0.5
    %v4344 = vsel %vm134, %v4341, %v4343
    %v4345 = vmul.f32 %v4344, %v4253
    %4347 = vrot.lane.b32.xlu0 %v4344, 64
    %v4348 = vpop.permute.xlu0 %4347
    %v4350 = vmul.f32 %v4344, %v4348
    %4352 = vrot.lane.b32.xlu0 %v4350, 32
    %v4353 = vpop.permute.xlu0 %4352
    %v4355 = vadd.f32 %v4345, %v4353
    %v4356 = vtanh.pop %v4355
    %4358 = vrot.lane.b32.xlu0 %v4356, 64
    %v4359 = vpop.permute.xlu0 %4358
    %v4361 = vmul.f32 %v4344, %v4359
    %4363 = vrot.lane.b32.xlu0 %v4361, 32
    %v4364 = vpop.permute.xlu0 %4363
    %4367 = vrot.lane.b32.xlu0 %v4314, 64
    %v4368 = vpop.permute.xlu0 %4367
    %v4370 = vsel %vm57, %v4364, %v4368
    %v4372 = vsel %vm188, %v4370, 0
    %4374 = vmatpush.msra.mxu0 0.0
    %4375 = vmatpush.msra.mxu0 0.0
    %4376 = vmatpush.msra.mxu0 0.0
    %4377 = vmatpush.msra.mxu0 0.0
    %4378 = vmatpush.msra.mxu0 0.0
    %4379 = vmatpush.msra.mxu0 0.0
    %4380 = vmatpush.msra.mxu0 0.0
    %4381 = vmatpush.msra.mxu0 0.0
    %4382 = vmatpush.msra.mxu0 %v128
    %4383 = vmatpush.msra.mxu0 %v127
    %4384 = vmatpush.msra.mxu0 %v126
    %4385 = vmatpush.msra.mxu0 %v125
    %4386 = vmatpush.msra.mxu0 %v124
    %4387 = vmatpush.msra.mxu0 %v123
    %4388 = vmatpush.msra.mxu0 %v122
    %4389 = vmatpush.msra.mxu0 %v121
    %4390 = vmatmul.f32.gmra.mxu0 %v4372
    %v4391 = vpop.f32.mrf.mxu0
    %v4392 = vadd.f32 %v129, %v4391
    %4393 = vdwg.mxu0
    %v4394 = vmul.f32 %v4392, 0.5
    %v4395 = vsel %vm134, %v4392, %v4394
    %v4396 = vtanh.pop %v4395
    %v4397 = vmul.f32 %v4396, 0.5
    %v4398 = vadd.f32 %v4397, 0.5
    %v4399 = vsel %vm134, %v4396, %v4398
    %v4400 = vmul.f32 %v4399, %v4308
    %4402 = vrot.lane.b32.xlu0 %v4399, 64
    %v4403 = vpop.permute.xlu0 %4402
    %v4405 = vmul.f32 %v4399, %v4403
    %4407 = vrot.lane.b32.xlu0 %v4405, 32
    %v4408 = vpop.permute.xlu0 %4407
    %v4410 = vadd.f32 %v4400, %v4408
    %v4411 = vtanh.pop %v4410
    %4413 = vrot.lane.b32.xlu0 %v4411, 64
    %v4414 = vpop.permute.xlu0 %4413
    %v4416 = vmul.f32 %v4399, %v4414
    %v4417 = vld [vmem:[#allocation2 + $0x2a] sm:$0x1]
    %v4418 = vsel %vm57, %v4364, 0
    %4420 = vmatpush.msra.mxu0 0.0
    %4421 = vmatpush.msra.mxu0 0.0
    %4422 = vmatpush.msra.mxu0 0.0
    %4423 = vmatpush.msra.mxu0 0.0
    %4424 = vmatpush.msra.mxu0 0.0
    %4425 = vmatpush.msra.mxu0 0.0
    %4426 = vmatpush.msra.mxu0 0.0
    %4427 = vmatpush.msra.mxu0 0.0
    %4428 = vmatpush.msra.mxu0 0.0
    %4429 = vmatpush.msra.mxu0 0.0
    %4430 = vmatpush.msra.mxu0 0.0
    %4431 = vmatpush.msra.mxu0 0.0
    %4432 = vmatpush.msra.mxu0 %v120
    %4433 = vmatpush.msra.mxu0 %v119
    %4434 = vmatpush.msra.mxu0 %v118
    %4435 = vmatpush.msra.mxu0 %v117
    %4436 = vmatmul.f32.gmra.mxu0 %v4418
    %v4437 = vpop.f32.mrf.mxu0
    %v4438 = vadd.f32 0.0, %v4437
    %4439 = vdwg.mxu0
    %v4440 = vadd.f32 %v4417, %v4438
    %v4441 = vmul.f32 %v4440, 0.5
    %v4442 = vsel %vm134, %v4440, %v4441
    %v4443 = vtanh.pop %v4442
    %v4444 = vmul.f32 %v4443, 0.5
    %v4445 = vadd.f32 %v4444, 0.5
    %v4446 = vsel %vm134, %v4443, %v4445
    %v4447 = vmul.f32 %v4446, %v4355
    %4449 = vrot.lane.b32.xlu0 %v4446, 64
    %v4450 = vpop.permute.xlu0 %4449
    %v4452 = vmul.f32 %v4446, %v4450
    %4454 = vrot.lane.b32.xlu0 %v4452, 32
    %v4455 = vpop.permute.xlu0 %4454
    %v4457 = vadd.f32 %v4447, %v4455
    %v4458 = vtanh.pop %v4457
    %4460 = vrot.lane.b32.xlu0 %v4458, 64
    %v4461 = vpop.permute.xlu0 %4460
    %v4463 = vmul.f32 %v4446, %v4461
    %4465 = vrot.lane.b32.xlu0 %v4463, 32
    %v4466 = vpop.permute.xlu0 %4465
    %4469 = vrot.lane.b32.xlu0 %v4416, 64
    %v4470 = vpop.permute.xlu0 %4469
    %v4472 = vsel %vm57, %v4466, %v4470
    %v4474 = vsel %vm188, %v4472, 0
    %4476 = vmatpush.msra.mxu0 0.0
    %4477 = vmatpush.msra.mxu0 0.0
    %4478 = vmatpush.msra.mxu0 0.0
    %4479 = vmatpush.msra.mxu0 0.0
    %4480 = vmatpush.msra.mxu0 0.0
    %4481 = vmatpush.msra.mxu0 0.0
    %4482 = vmatpush.msra.mxu0 0.0
    %4483 = vmatpush.msra.mxu0 0.0
    %4484 = vmatpush.msra.mxu0 %v128
    %4485 = vmatpush.msra.mxu0 %v127
    %4486 = vmatpush.msra.mxu0 %v126
    %4487 = vmatpush.msra.mxu0 %v125
    %4488 = vmatpush.msra.mxu0 %v124
    %4489 = vmatpush.msra.mxu0 %v123
    %4490 = vmatpush.msra.mxu0 %v122
    %4491 = vmatpush.msra.mxu0 %v121
    %4492 = vmatmul.f32.gmra.mxu0 %v4474
    %v4493 = vpop.f32.mrf.mxu0
    %v4494 = vadd.f32 %v129, %v4493
    %4495 = vdwg.mxu0
    %v4496 = vmul.f32 %v4494, 0.5
    %v4497 = vsel %vm134, %v4494, %v4496
    %v4498 = vtanh.pop %v4497
    %v4499 = vmul.f32 %v4498, 0.5
    %v4500 = vadd.f32 %v4499, 0.5
    %v4501 = vsel %vm134, %v4498, %v4500
    %v4502 = vmul.f32 %v4501, %v4410
    %4504 = vrot.lane.b32.xlu0 %v4501, 64
    %v4505 = vpop.permute.xlu0 %4504
    %v4507 = vmul.f32 %v4501, %v4505
    %4509 = vrot.lane.b32.xlu0 %v4507, 32
    %v4510 = vpop.permute.xlu0 %4509
    %v4512 = vadd.f32 %v4502, %v4510
    %v4513 = vtanh.pop %v4512
    %4515 = vrot.lane.b32.xlu0 %v4513, 64
    %v4516 = vpop.permute.xlu0 %4515
    %v4518 = vmul.f32 %v4501, %v4516
    %v4519 = vld [vmem:[#allocation2 + $0x2b] sm:$0x1]
    %v4520 = vsel %vm57, %v4466, 0
    %4522 = vmatpush.msra.mxu0 0.0
    %4523 = vmatpush.msra.mxu0 0.0
    %4524 = vmatpush.msra.mxu0 0.0
    %4525 = vmatpush.msra.mxu0 0.0
    %4526 = vmatpush.msra.mxu0 0.0
    %4527 = vmatpush.msra.mxu0 0.0
    %4528 = vmatpush.msra.mxu0 0.0
    %4529 = vmatpush.msra.mxu0 0.0
    %4530 = vmatpush.msra.mxu0 0.0
    %4531 = vmatpush.msra.mxu0 0.0
    %4532 = vmatpush.msra.mxu0 0.0
    %4533 = vmatpush.msra.mxu0 0.0
    %4534 = vmatpush.msra.mxu0 %v120
    %4535 = vmatpush.msra.mxu0 %v119
    %4536 = vmatpush.msra.mxu0 %v118
    %4537 = vmatpush.msra.mxu0 %v117
    %4538 = vmatmul.f32.gmra.mxu0 %v4520
    %v4539 = vpop.f32.mrf.mxu0
    %v4540 = vadd.f32 0.0, %v4539
    %4541 = vdwg.mxu0
    %v4542 = vadd.f32 %v4519, %v4540
    %v4543 = vmul.f32 %v4542, 0.5
    %v4544 = vsel %vm134, %v4542, %v4543
    %v4545 = vtanh.pop %v4544
    %v4546 = vmul.f32 %v4545, 0.5
    %v4547 = vadd.f32 %v4546, 0.5
    %v4548 = vsel %vm134, %v4545, %v4547
    %v4549 = vmul.f32 %v4548, %v4457
    %4551 = vrot.lane.b32.xlu0 %v4548, 64
    %v4552 = vpop.permute.xlu0 %4551
    %v4554 = vmul.f32 %v4548, %v4552
    %4556 = vrot.lane.b32.xlu0 %v4554, 32
    %v4557 = vpop.permute.xlu0 %4556
    %v4559 = vadd.f32 %v4549, %v4557
    %v4560 = vtanh.pop %v4559
    %4562 = vrot.lane.b32.xlu0 %v4560, 64
    %v4563 = vpop.permute.xlu0 %4562
    %v4565 = vmul.f32 %v4548, %v4563
    %4567 = vrot.lane.b32.xlu0 %v4565, 32
    %v4568 = vpop.permute.xlu0 %4567
    %4571 = vrot.lane.b32.xlu0 %v4518, 64
    %v4572 = vpop.permute.xlu0 %4571
    %v4574 = vsel %vm57, %v4568, %v4572
    %v4576 = vsel %vm188, %v4574, 0
    %4578 = vmatpush.msra.mxu0 0.0
    %4579 = vmatpush.msra.mxu0 0.0
    %4580 = vmatpush.msra.mxu0 0.0
    %4581 = vmatpush.msra.mxu0 0.0
    %4582 = vmatpush.msra.mxu0 0.0
    %4583 = vmatpush.msra.mxu0 0.0
    %4584 = vmatpush.msra.mxu0 0.0
    %4585 = vmatpush.msra.mxu0 0.0
    %4586 = vmatpush.msra.mxu0 %v128
    %4587 = vmatpush.msra.mxu0 %v127
    %4588 = vmatpush.msra.mxu0 %v126
    %4589 = vmatpush.msra.mxu0 %v125
    %4590 = vmatpush.msra.mxu0 %v124
    %4591 = vmatpush.msra.mxu0 %v123
    %4592 = vmatpush.msra.mxu0 %v122
    %4593 = vmatpush.msra.mxu0 %v121
    %4594 = vmatmul.f32.gmra.mxu0 %v4576
    %v4595 = vpop.f32.mrf.mxu0
    %v4596 = vadd.f32 %v129, %v4595
    %4597 = vdwg.mxu0
    %v4598 = vmul.f32 %v4596, 0.5
    %v4599 = vsel %vm134, %v4596, %v4598
    %v4600 = vtanh.pop %v4599
    %v4601 = vmul.f32 %v4600, 0.5
    %v4602 = vadd.f32 %v4601, 0.5
    %v4603 = vsel %vm134, %v4600, %v4602
    %v4604 = vmul.f32 %v4603, %v4512
    %4606 = vrot.lane.b32.xlu0 %v4603, 64
    %v4607 = vpop.permute.xlu0 %4606
    %v4609 = vmul.f32 %v4603, %v4607
    %4611 = vrot.lane.b32.xlu0 %v4609, 32
    %v4612 = vpop.permute.xlu0 %4611
    %v4614 = vadd.f32 %v4604, %v4612
    %v4615 = vtanh.pop %v4614
    %4617 = vrot.lane.b32.xlu0 %v4615, 64
    %v4618 = vpop.permute.xlu0 %4617
    %v4620 = vmul.f32 %v4603, %v4618
    %v4621 = vld [vmem:[#allocation2 + $0x2c] sm:$0x1]
    %v4622 = vsel %vm57, %v4568, 0
    %4624 = vmatpush.msra.mxu0 0.0
    %4625 = vmatpush.msra.mxu0 0.0
    %4626 = vmatpush.msra.mxu0 0.0
    %4627 = vmatpush.msra.mxu0 0.0
    %4628 = vmatpush.msra.mxu0 0.0
    %4629 = vmatpush.msra.mxu0 0.0
    %4630 = vmatpush.msra.mxu0 0.0
    %4631 = vmatpush.msra.mxu0 0.0
    %4632 = vmatpush.msra.mxu0 0.0
    %4633 = vmatpush.msra.mxu0 0.0
    %4634 = vmatpush.msra.mxu0 0.0
    %4635 = vmatpush.msra.mxu0 0.0
    %4636 = vmatpush.msra.mxu0 %v120
    %4637 = vmatpush.msra.mxu0 %v119
    %4638 = vmatpush.msra.mxu0 %v118
    %4639 = vmatpush.msra.mxu0 %v117
    %4640 = vmatmul.f32.gmra.mxu0 %v4622
    %v4641 = vpop.f32.mrf.mxu0
    %v4642 = vadd.f32 0.0, %v4641
    %4643 = vdwg.mxu0
    %v4644 = vadd.f32 %v4621, %v4642
    %v4645 = vmul.f32 %v4644, 0.5
    %v4646 = vsel %vm134, %v4644, %v4645
    %v4647 = vtanh.pop %v4646
    %v4648 = vmul.f32 %v4647, 0.5
    %v4649 = vadd.f32 %v4648, 0.5
    %v4650 = vsel %vm134, %v4647, %v4649
    %v4651 = vmul.f32 %v4650, %v4559
    %4653 = vrot.lane.b32.xlu0 %v4650, 64
    %v4654 = vpop.permute.xlu0 %4653
    %v4656 = vmul.f32 %v4650, %v4654
    %4658 = vrot.lane.b32.xlu0 %v4656, 32
    %v4659 = vpop.permute.xlu0 %4658
    %v4661 = vadd.f32 %v4651, %v4659
    %v4662 = vtanh.pop %v4661
    %4664 = vrot.lane.b32.xlu0 %v4662, 64
    %v4665 = vpop.permute.xlu0 %4664
    %v4667 = vmul.f32 %v4650, %v4665
    %4669 = vrot.lane.b32.xlu0 %v4667, 32
    %v4670 = vpop.permute.xlu0 %4669
    %4673 = vrot.lane.b32.xlu0 %v4620, 64
    %v4674 = vpop.permute.xlu0 %4673
    %v4676 = vsel %vm57, %v4670, %v4674
    %v4678 = vsel %vm188, %v4676, 0
    %4680 = vmatpush.msra.mxu0 0.0
    %4681 = vmatpush.msra.mxu0 0.0
    %4682 = vmatpush.msra.mxu0 0.0
    %4683 = vmatpush.msra.mxu0 0.0
    %4684 = vmatpush.msra.mxu0 0.0
    %4685 = vmatpush.msra.mxu0 0.0
    %4686 = vmatpush.msra.mxu0 0.0
    %4687 = vmatpush.msra.mxu0 0.0
    %4688 = vmatpush.msra.mxu0 %v128
    %4689 = vmatpush.msra.mxu0 %v127
    %4690 = vmatpush.msra.mxu0 %v126
    %4691 = vmatpush.msra.mxu0 %v125
    %4692 = vmatpush.msra.mxu0 %v124
    %4693 = vmatpush.msra.mxu0 %v123
    %4694 = vmatpush.msra.mxu0 %v122
    %4695 = vmatpush.msra.mxu0 %v121
    %4696 = vmatmul.f32.gmra.mxu0 %v4678
    %v4697 = vpop.f32.mrf.mxu0
    %v4698 = vadd.f32 %v129, %v4697
    %4699 = vdwg.mxu0
    %v4700 = vmul.f32 %v4698, 0.5
    %v4701 = vsel %vm134, %v4698, %v4700
    %v4702 = vtanh.pop %v4701
    %v4703 = vmul.f32 %v4702, 0.5
    %v4704 = vadd.f32 %v4703, 0.5
    %v4705 = vsel %vm134, %v4702, %v4704
    %v4706 = vmul.f32 %v4705, %v4614
    %4708 = vrot.lane.b32.xlu0 %v4705, 64
    %v4709 = vpop.permute.xlu0 %4708
    %v4711 = vmul.f32 %v4705, %v4709
    %4713 = vrot.lane.b32.xlu0 %v4711, 32
    %v4714 = vpop.permute.xlu0 %4713
    %v4716 = vadd.f32 %v4706, %v4714
    %v4717 = vtanh.pop %v4716
    %4719 = vrot.lane.b32.xlu0 %v4717, 64
    %v4720 = vpop.permute.xlu0 %4719
    %v4722 = vmul.f32 %v4705, %v4720
    %v4723 = vld [vmem:[%s7] sm:$0xff]
    %v4724 = vld [vmem:[%s7 + $0x8] sm:$0xff]
    %v4725 = vld [vmem:[%s7 + $0x10] sm:$0xff]
    %v4726 = vld [vmem:[%s7 + $0x18] sm:$0xff]
    %v4727 = vld [vmem:[%s8] sm:$0x1]
    %4729 = vrot.lane.b32.xlu0 %v4722, 32
    %v4730 = vpop.permute.xlu0 %4729
    %v4731 = vsel %vm57, %v4730, 0
    %4733 = vmatpush.msra.mxu0 0.0
    %4734 = vmatpush.msra.mxu0 0.0
    %4735 = vmatpush.msra.mxu0 0.0
    %4736 = vmatpush.msra.mxu0 0.0
    %4737 = vmatpush.msra.mxu0 0.0
    %4738 = vmatpush.msra.mxu0 0.0
    %4739 = vmatpush.msra.mxu0 0.0
    %4740 = vmatpush.msra.mxu0 0.0
    %4741 = vmatpush.msra.mxu0 0.0
    %4742 = vmatpush.msra.mxu0 0.0
    %4743 = vmatpush.msra.mxu0 0.0
    %4744 = vmatpush.msra.mxu0 0.0
    %4745 = vmatpush.msra.mxu0 %v4726
    %4746 = vmatpush.msra.mxu0 %v4725
    %4747 = vmatpush.msra.mxu0 %v4724
    %4748 = vmatpush.msra.mxu0 %v4723
    %4749 = vmatmul.f32.gmra.mxu0 %v4731
    %v4750 = vpop.f32.mrf.mxu0
    %v4751 = vadd.f32 %v4727, %v4750
    %4752 = vdwg.mxu0
    %vm4753 = vcmask 40960
    %4754 = vst.msk [vmem:[#allocation3] sm:$0x1] %vm4753, %v4751
    // Predicated region
    $region38: #{gated_attention_forward.1} parent=1 // pred_check
      _
    $region39: #{gated_attention_forward.1} parent=1 // pred_check_branch
      %4756 = sbr.rel (0) target = $region41
    $region40: #{gated_attention_forward.1} parent=1 // pred_region
      %4758 = vsyncadd [#allocation4], 0
      %s4760 = sshll.u32 [#allocation3], 4
      %s4761 = int_to_ptr.vmem [resolvable:$true] %s4760
      %s4762 = sshll.u32 %s9, 4
      %s4763 = int_to_ptr.hbm [resolvable:$true] %s4762
      %4765 = dma.vmem_to_hbm [thread:$0]  %s4761, 16, %s4763, [#allocation4]
    $region41: #{gated_attention_forward.1} parent=1 // pred_fallthru
      _
    // Predicated region
    $region42: #{gated_attention_forward.1} parent=1 // pred_check
      _
    $region43: #{gated_attention_forward.1} parent=1 // pred_check_branch
      %4767 = sbr.rel (0) target = $region45
    $region44: #{gated_attention_forward.1} parent=1 // pred_region
      %4769 = dma.done [#allocation4], 16
    $region45: #{gated_attention_forward.1} parent=1 // pred_fallthru
      _
    %4770 = vsyncpa [#allocation4], 1

</llo_original>
